<compile_context>
chip_gen: v5e
topology: v5e:2x2
jax: 0.10.0
libtpu: 0.0.40
codegen_flags: <defaults>
</compile_context>

<pallas_src>
import jax
import jax.numpy as jnp
from jax import lax
from jax.experimental import pallas as pl
from jax.experimental.pallas import tpu as pltpu

EPS = 1e-5  # nn.GroupNorm default eps


def _silu(x):
    return x * jax.nn.sigmoid(x)


def _round_up(x, m):
    return ((x + m - 1) // m) * m


# ---------------------------------------------------------------------------
# Fused kernel factory (one image per grid step)
# ---------------------------------------------------------------------------
def _make_fused_kernel(H, W, Cin_p, Cout_p, has_res_conv, compute_dtype):
    HW = H * W
    inv_hw = 1.0 / HW
    f32 = jnp.float32

    def kernel(xpad_ref, scale_ref, shift_ref,
               w1_ref, b1_ref, g1_ref, be1_ref,
               w2_ref, b2_ref, g2_ref, be2_ref,
               R_ref, Bc_ref, *rest):
        if has_res_conv:
            wr_ref, br_ref, out_ref, hpad_ref, acc_ref = rest
        else:
            out_ref, hpad_ref, acc_ref = rest

        # INVARIANT: all padded channels of x / weights / bias / gamma / beta /
        # scale / shift and the padded rows/cols of R / Bc are EXACTLY zero.
        # GroupNorm of padded channels then yields 0 (centered==0, gamma==0),
        # so zeros propagate through conv2 and the residual add.
        R = R_ref[...]    # (Cp, 128) channel -> group reduce (1/Cpg weights)
        Bc = Bc_ref[...]  # (128, Cp) group   -> channel broadcast

        def shifted_slabs(slab):
            # slab: (H+2, W+2, C). Build 3 dx-shifted flattened slabs; each of
            # the 9 conv taps becomes an aligned row-slice (offset dy*W) of
            # one of them -> 3 relayout copies per conv instead of 9.
            return [slab[:, dx:dx + W, :].reshape((H + 2) * W, slab.shape[-1])
                    for dx in range(3)]

        def conv3x3(slabs, w_ref, b_row):
            # 3x3 conv = 9 accumulating MXU matmuls into one f32 VMEM scratch.
            for tap in range(9):
                dy, dx = divmod(tap, 3)
                patch = slabs[dx][dy * W:dy * W + HW, :]
                c = jnp.dot(patch, w_ref[tap], preferred_element_type=f32)
                if tap == 0:
                    acc_ref[...] = c
                else:
                    acc_ref[...] += c
            return acc_ref[...] + b_row

        def group_norm(v, gamma, beta):
            # Two-pass GroupNorm (E[(x-mean)^2], clamped) -- f32 statistics.
            ch_mean = jnp.sum(v, axis=0, keepdims=True) * inv_hw       # (1,Cp)
            gm = jnp.dot(jnp.dot(ch_mean, R, preferred_element_type=f32),
                         Bc, preferred_element_type=f32)
            centered = v - gm
            ch_var = jnp.sum(centered * centered, axis=0,
                             keepdims=True) * inv_hw
            gvar = jnp.dot(jnp.dot(ch_var, R, preferred_element_type=f32),
                           Bc, preferred_element_type=f32)
            inv = lax.rsqrt(jnp.maximum(gvar, 0.0) + EPS)
            return centered * inv * gamma + beta

        # ---- block 1: conv3x3 -> GN -> (scale+1, shift) -> SiLU ------------
        xs = xpad_ref[0]                                    # (H+2, W+2, Cin_p)
        h = conv3x3(shifted_slabs(xs), w1_ref, b1_ref[...])
        h = group_norm(h, g1_ref[...], be1_ref[...])
        h = _silu(h * (scale_ref[0] + 1.0) + shift_ref[0])            # (HW,Cp)

        # stage h halo-padded (compute_dtype) for the second conv; only the
        # 1-element border is zeroed -- the interior is overwritten each step.
        zr = jnp.zeros((1, W + 2, Cout_p), compute_dtype)
        zc = jnp.zeros((H, 1, Cout_p), compute_dtype)
        hpad_ref[0:1, :, :] = zr
        hpad_ref[H + 1:H + 2, :, :] = zr
        hpad_ref[1:H + 1, 0:1, :] = zc
        hpad_ref[1:H + 1, W + 1:W + 2, :] = zc
        hpad_ref[1:H + 1, 1:W + 1, :] = h.astype(compute_dtype).reshape(
            H, W, Cout_p)

        # ---- block 2: conv3x3 -> GN -> SiLU --------------------------------
        hs = hpad_ref[...]
        h2 = conv3x3(shifted_slabs(hs), w2_ref, b2_ref[...])
        h2 = _silu(group_norm(h2, g2_ref[...], be2_ref[...]))

        # ---- residual -------------------------------------------------------
        x_in = xs[1:H + 1, 1:W + 1, :].reshape(HW, Cin_p)
        if has_res_conv:
            res = jnp.dot(x_in, wr_ref[...],
                          preferred_element_type=f32) + br_ref[...]
        else:
            res = x_in.astype(f32)            # nn.Identity, no matmul

        out_ref[0] = (h2 + res).astype(out_ref.dtype)

    return kernel


# ---------------------------------------------------------------------------
# Glue (plain JAX): layout conversion, channel padding, parameter packing
# ---------------------------------------------------------------------------
def _const_spec(shape):
    # replicated constant: single-buffered (no double-buffer VMEM cost)
    n = len(shape)
    return pl.BlockSpec(tuple(shape), lambda b, _n=n: (0,) * _n,
                        pipeline_mode=pl.Buffered(1))


def _batched_spec(shape):
    n = len(shape)
    return pl.BlockSpec((1,) + tuple(shape[1:]),
                        lambda b, _n=n: (b,) + (0,) * (_n - 1))


def resnet_block_forward(x_nchw, time_emb, p, groups,
                         compute_dtype=jnp.bfloat16):
    """ResnetBlock forward. compute_dtype sets MXU operand / activation-slab
    precision (bf16 default; accumulation and GN/SiLU math stay f32)."""
    B, Cin, H, W = x_nchw.shape
    Cout = p["w1"].shape[0]
    HW = H * W
    f32 = jnp.float32
    cdt = jnp.dtype(compute_dtype)

    Cin_p = _round_up(Cin, 128)     # lane-dense K dims
    Cout_p = _round_up(Cout, 128)   # lane-dense N dims + unmasked stores
    Gp = 128                        # lane-dense padded group dim
    Cpg = Cout // groups
    has_res_conv = (Cin != Cout)    # identity residual skips the 1x1 matmul

    def pad_last(a, n):
        return jnp.pad(a, [(0, 0)] * (a.ndim - 1) + [(0, n - a.shape[-1])])

    def row(v):                     # (C,) -> zero-padded (1, Cout_p) f32
        return pad_last(v.reshape(1, -1).astype(f32), Cout_p)

    # conv weights OIHW -> (9, Cin_p, Cout_p), tap-major (dy, dx)
    def pack_conv3x3(w, cin_p):
        co, ci = w.shape[0], w.shape[1]
        wt = jnp.transpose(w, (2, 3, 1, 0)).reshape(9, ci, co).astype(f32)
        return jnp.zeros((9, cin_p, Cout_p), f32).at[:, :ci, :co].set(
            wt).astype(cdt)

    w1 = pack_conv3x3(p["w1"], Cin_p)
    w2 = pack_conv3x3(p["w2"], Cout_p)
    b1, g1, be1 = row(p["b1"]), row(p["g1"]), row(p["be1"])
    b2, g2, be2 = row(p["b2"]), row(p["g2"]), row(p["be2"])

    # time-embedding MLP hoisted out of the kernel: SiLU(t) @ Wt^T + bt,
    # chunked into (scale, shift), one (1, Cout_p) row per image.
    t = _silu(time_emb.astype(f32)) @ p["wt"].T.astype(f32) + p["bt"].astype(f32)
    scale = pad_last(t[:, :Cout], Cout_p).reshape(B, 1, Cout_p)
    shift = pad_last(t[:, Cout:], Cout_p).reshape(B, 1, Cout_p)

    # skinny group reduce / broadcast matrices (pad rows/cols exactly zero)
    gid = jnp.arange(Cout) // Cpg
    onehot = (gid[:, None] == jnp.arange(groups)[None, :]).astype(f32)
    R = jnp.zeros((Cout_p, Gp), f32).at[:Cout, :groups].set(onehot / Cpg)
    Bc = jnp.zeros((Gp, Cout_p), f32).at[:groups, :Cout].set(onehot.T)

    # input: NCHW -> NHWC (compute_dtype), zero-pad channels, 1-px halo pad.
    x_nhwc = jnp.transpose(x_nchw, (0, 2, 3, 1)).astype(cdt)
    xpad = jnp.pad(pad_last(x_nhwc, Cin_p), ((0, 0), (1, 1), (1, 1), (0, 0)))
    # TODO(synk): for Cin << 128 this DMAs padded channels; DMA the real Cin
    # block and pad into a VMEM scratch inside the kernel instead.

    args = [xpad, scale, shift, w1, b1, g1, be1, w2, b2, g2, be2, R, Bc]
    in_specs = [_batched_spec(xpad.shape), _batched_spec(scale.shape),
                _batched_spec(shift.shape)] + \
               [_const_spec(a.shape) for a in args[3:]]

    if has_res_conv:
        wr = jnp.zeros((Cin_p, Cout_p), f32).at[:Cin, :Cout].set(
            p["wr"][:, :, 0, 0].T.astype(f32)).astype(cdt)
        br = row(p["br"])
        args += [wr, br]
        in_specs += [_const_spec(wr.shape), _const_spec(br.shape)]

    kernel = _make_fused_kernel(H, W, Cin_p, Cout_p, has_res_conv, cdt)

    # VMEM budget: actual footprint (constants single-buffered, per-image
    # blocks double-buffered) + scratch + live temporaries, clamped to chip.
    def nbytes(a):
        return a.size * a.dtype.itemsize
    est = (2 * (nbytes(xpad) // B + nbytes(scale) // B + nbytes(shift) // B)
           + sum(nbytes(a) for a in args[3:])
           + 2 * HW * Cout_p * 4                                 # out block
           + (H + 2) * (W + 2) * Cout_p * cdt.itemsize           # hpad scratch
           + HW * Cout_p * 4                                     # acc scratch
           + 3 * (H + 2) * W * max(Cin_p, Cout_p) * cdt.itemsize  # slabs
           + 4 * HW * Cout_p * 4)                                # f32 temps
    try:
        cap = pltpu.get_tpu_info().vmem_capacity_bytes
    except Exception:
        cap = 64 * 1024 * 1024
    vmem_limit = int(min(max(2 * est, 32 * 1024 * 1024), 0.75 * cap))

    out = pl.pallas_call(
        kernel,
        out_shape=jax.ShapeDtypeStruct((B, HW, Cout_p), f32),
        grid=(B,),
        in_specs=in_specs,
        out_specs=_batched_spec((B, HW, Cout_p)),
        scratch_shapes=[pltpu.VMEM((H + 2, W + 2, Cout_p), cdt),
                        pltpu.VMEM((HW, Cout_p), jnp.float32)],
        compiler_params=pltpu.CompilerParams(
            dimension_semantics=("parallel",),
            vmem_limit_bytes=vmem_limit),
    )(*args)

    out = out[:, :, :Cout].reshape(B, H, W, Cout)
    return jnp.transpose(out, (0, 3, 1, 2)).astype(x_nchw.dtype)   # NCHW


# ---------------------------------------------------------------------------
# Pure-JAX reference (for correctness check)
# ---------------------------------------------------------------------------
def reference_forward(x, time_emb, p, groups):
    def conv2d(x, w, b, pad):
        out = lax.conv_general_dilated(
            x, w, (1, 1), [(pad, pad), (pad, pad)],
            dimension_numbers=("NCHW", "OIHW", "NCHW"))
        return out + b[None, :, None, None]

    def group_norm(x, gamma, beta):
        B, C, H, W = x.shape
        xg = x.reshape(B, groups, -1)
        mu = xg.mean(axis=-1, keepdims=True)
        var = ((xg - mu) ** 2).mean(axis=-1, keepdims=True)
        xn = ((xg - mu) / jnp.sqrt(var + EPS)).reshape(B, C, H, W)
        return xn * gamma[None, :, None, None] + beta[None, :, None, None]

    def silu(v):
        return v * jax.nn.sigmoid(v)

    Cout = p["w1"].shape[0]
    t = silu(time_emb) @ p["wt"].T + p["bt"]
    scale, shift = t[:, :Cout], t[:, Cout:]
    h = conv2d(x, p["w1"], p["b1"], 1)
    h = group_norm(h, p["g1"], p["be1"])
    h = h * (scale[:, :, None, None] + 1.0) + shift[:, :, None, None]
    h = silu(h)
    h = conv2d(h, p["w2"], p["b2"], 1)
    h = silu(group_norm(h, p["g2"], p["be2"]))
    res = conv2d(x, p["wr"], p["br"], 0) if x.shape[1] != Cout else x
    return h + res


# ---------------------------------------------------------------------------
if __name__ == "__main__":
    B, Cin, H, W = 2, 4, 16, 16
    Cout, groups, T = 8, 4, 16

    key = jax.random.PRNGKey(0)
    ks = jax.random.split(key, 16)
    f32 = jnp.float32

    params = {
        # Block 1: Conv2d(Cin, Cout, 3, padding=1) + GroupNorm(groups, Cout)
        "w1": 0.1 * jax.random.normal(ks[0], (Cout, Cin, 3, 3), f32),
        "b1": 0.1 * jax.random.normal(ks[1], (Cout,), f32),
        "g1": 1.0 + 0.1 * jax.random.normal(ks[2], (Cout,), f32),
        "be1": 0.1 * jax.random.normal(ks[3], (Cout,), f32),
        # Block 2: Conv2d(Cout, Cout, 3, padding=1) + GroupNorm(groups, Cout)
        "w2": 0.1 * jax.random.normal(ks[4], (Cout, Cout, 3, 3), f32),
        "b2": 0.1 * jax.random.normal(ks[5], (Cout,), f32),
        "g2": 1.0 + 0.1 * jax.random.normal(ks[6], (Cout,), f32),
        "be2": 0.1 * jax.random.normal(ks[7], (Cout,), f32),
        # time MLP: Linear(T, 2*Cout)
        "wt": 0.1 * jax.random.normal(ks[8], (2 * Cout, T), f32),
        "bt": 0.1 * jax.random.normal(ks[9], (2 * Cout,), f32),
        # res_conv: Conv2d(Cin, Cout, 1)   (dim != dim_out)
        "wr": 0.1 * jax.random.normal(ks[10], (Cout, Cin, 1, 1), f32),
        "br": 0.1 * jax.random.normal(ks[11], (Cout,), f32),
    }

    x = jax.random.normal(ks[12], (B, Cin, H, W), f32)
    time_emb = jax.random.normal(ks[13], (B, T), f32)
    ref = reference_forward(x, time_emb, params, groups)

    # f32 MXU path: tight check against the pure-JAX reference
    out = jax.block_until_ready(
        resnet_block_forward(x, time_emb, params, groups,
                             compute_dtype=jnp.float32))
    assert out.shape == (B, Cout, H, W)
    assert jnp.all(jnp.isfinite(out))
    assert jnp.allclose(out, ref, atol=1e-3, rtol=1e-3), (
        float(jnp.max(jnp.abs(out - ref))))

    # default bf16 MXU/activation path: relative-RMS check
    out_bf = jax.block_until_ready(
        resnet_block_forward(x, time_emb, params, groups))
    assert jnp.all(jnp.isfinite(out_bf))
    rel = float(jnp.linalg.norm(out_bf - ref) / (jnp.linalg.norm(ref) + 1e-12))
    assert rel < 0.05, rel

    # identity-residual specialization (dim == dim_out -> no 1x1 matmul)
    params_id = dict(params)
    params_id["w1"] = 0.1 * jax.random.normal(ks[14], (Cout, Cout, 3, 3), f32)
    x_id = jax.random.normal(ks[15], (B, Cout, H, W), f32)
    out_id = jax.block_until_ready(
        resnet_block_forward(x_id, time_emb, params_id, groups,
                             compute_dtype=jnp.float32))
    ref_id = reference_forward(x_id, time_emb, params_id, groups)
    assert jnp.allclose(out_id, ref_id, atol=1e-3, rtol=1e-3), (
        float(jnp.max(jnp.abs(out_id - ref_id))))

    print("KERNEL_OK")
</pallas_src>

<mosaic_0001>
module attributes {stable_mosaic.version = 11 : i64} {
  func.func @kernel(%arg0: i32, %arg1: memref<1x18x18x128xf32, #tpu.memory_space<vmem>>, %arg2: memref<1x1x128xf32, #tpu.memory_space<vmem>>, %arg3: memref<1x1x128xf32, #tpu.memory_space<vmem>>, %arg4: memref<9x128x128xf32, #tpu.memory_space<vmem>>, %arg5: memref<1x128xf32, #tpu.memory_space<vmem>>, %arg6: memref<1x128xf32, #tpu.memory_space<vmem>>, %arg7: memref<1x128xf32, #tpu.memory_space<vmem>>, %arg8: memref<9x128x128xf32, #tpu.memory_space<vmem>>, %arg9: memref<1x128xf32, #tpu.memory_space<vmem>>, %arg10: memref<1x128xf32, #tpu.memory_space<vmem>>, %arg11: memref<1x128xf32, #tpu.memory_space<vmem>>, %arg12: memref<128x128xf32, #tpu.memory_space<vmem>>, %arg13: memref<128x128xf32, #tpu.memory_space<vmem>>, %arg14: memref<128x128xf32, #tpu.memory_space<vmem>>, %arg15: memref<1x128xf32, #tpu.memory_space<vmem>>, %arg16: memref<1x256x128xf32, #tpu.memory_space<vmem>>, %arg17: memref<18x18x128xf32, #tpu.memory_space<vmem>>, %arg18: memref<256x128xf32, #tpu.memory_space<vmem>>) attributes {dimension_semantics = [#tpu.dimension_semantics<parallel>], iteration_bounds = array<i64: 2>, scalar_prefetch = 0 : i64, scratch_operands = 2 : i64, tpu.core_type = #tpu.core_type<tc>, window_params = [{transform_indices = @transform_0, window_bounds = array<i64: 1, 18, 18, 128>}, {transform_indices = @transform_1, window_bounds = array<i64: 1, 1, 128>}, {transform_indices = @transform_2, window_bounds = array<i64: 1, 1, 128>}, {pipeline_mode = #tpu.pipeline_mode<synchronous>, transform_indices = @transform_3, window_bounds = array<i64: 9, 128, 128>}, {pipeline_mode = #tpu.pipeline_mode<synchronous>, transform_indices = @transform_4, window_bounds = array<i64: 1, 128>}, {pipeline_mode = #tpu.pipeline_mode<synchronous>, transform_indices = @transform_5, window_bounds = array<i64: 1, 128>}, {pipeline_mode = #tpu.pipeline_mode<synchronous>, transform_indices = @transform_6, window_bounds = array<i64: 1, 128>}, {pipeline_mode = #tpu.pipeline_mode<synchronous>, transform_indices = @transform_7, window_bounds = array<i64: 9, 128, 128>}, {pipeline_mode = #tpu.pipeline_mode<synchronous>, transform_indices = @transform_8, window_bounds = array<i64: 1, 128>}, {pipeline_mode = #tpu.pipeline_mode<synchronous>, transform_indices = @transform_9, window_bounds = array<i64: 1, 128>}, {pipeline_mode = #tpu.pipeline_mode<synchronous>, transform_indices = @transform_10, window_bounds = array<i64: 1, 128>}, {pipeline_mode = #tpu.pipeline_mode<synchronous>, transform_indices = @transform_11, window_bounds = array<i64: 128, 128>}, {pipeline_mode = #tpu.pipeline_mode<synchronous>, transform_indices = @transform_12, window_bounds = array<i64: 128, 128>}, {pipeline_mode = #tpu.pipeline_mode<synchronous>, transform_indices = @transform_13, window_bounds = array<i64: 128, 128>}, {pipeline_mode = #tpu.pipeline_mode<synchronous>, transform_indices = @transform_14, window_bounds = array<i64: 1, 128>}, {transform_indices = @transform_15, window_bounds = array<i64: 1, 256, 128>}]} {
    %c0 = arith.constant 0 : index
    %c0_0 = arith.constant 0 : index
    %0 = vector.load %arg12[%c0, %c0_0] : memref<128x128xf32, #tpu.memory_space<vmem>>, vector<128x128xf32>
    %c0_1 = arith.constant 0 : index
    %c0_2 = arith.constant 0 : index
    %1 = vector.load %arg13[%c0_1, %c0_2] : memref<128x128xf32, #tpu.memory_space<vmem>>, vector<128x128xf32>
    %c0_3 = arith.constant 0 : index
    %c0_4 = arith.constant 0 : index
    %c0_5 = arith.constant 0 : index
    %c0_6 = arith.constant 0 : index
    %2 = vector.load %arg1[%c0_3, %c0_4, %c0_5, %c0_6] : memref<1x18x18x128xf32, #tpu.memory_space<vmem>>, vector<1x18x18x128xf32>
    %3 = vector.shape_cast %2 : vector<1x18x18x128xf32> to vector<18x18x128xf32>
    %4 = vector.extract_strided_slice %3 {offsets = [0, 0, 0], sizes = [18, 16, 128], strides = [1, 1, 1]} : vector<18x18x128xf32> to vector<18x16x128xf32>
    %5 = vector.shape_cast %4 : vector<18x16x128xf32> to vector<288x128xf32>
    %6 = vector.extract_strided_slice %3 {offsets = [0, 1, 0], sizes = [18, 16, 128], strides = [1, 1, 1]} : vector<18x18x128xf32> to vector<18x16x128xf32>
    %7 = vector.shape_cast %6 : vector<18x16x128xf32> to vector<288x128xf32>
    %8 = vector.extract_strided_slice %3 {offsets = [0, 2, 0], sizes = [18, 16, 128], strides = [1, 1, 1]} : vector<18x18x128xf32> to vector<18x16x128xf32>
    %9 = vector.shape_cast %8 : vector<18x16x128xf32> to vector<288x128xf32>
    %c0_7 = arith.constant 0 : index
    %c0_8 = arith.constant 0 : index
    %10 = vector.load %arg5[%c0_7, %c0_8] : memref<1x128xf32, #tpu.memory_space<vmem>>, vector<1x128xf32>
    %11 = vector.extract_strided_slice %5 {offsets = [0, 0], sizes = [256, 128], strides = [1, 1]} : vector<288x128xf32> to vector<256x128xf32>
    %c0_9 = arith.constant 0 : index
    %c0_10 = arith.constant 0 : index
    %c0_11 = arith.constant 0 : index
    %12 = vector.load %arg4[%c0_9, %c0_10, %c0_11] : memref<9x128x128xf32, #tpu.memory_space<vmem>>, vector<1x128x128xf32>
    %13 = vector.shape_cast %12 : vector<1x128x128xf32> to vector<128x128xf32>
    %cst = arith.constant dense<0.000000e+00> : vector<256x128xf32>
    %14 = tpu.matmul %11, %13, %cst {dimension_numbers = #tpu.dot_dimension_numbers<[1], [0], [0], [1], [0, 0, 1, 1], [], []>} : vector<256x128xf32>, vector<128x128xf32>, vector<256x128xf32> -> vector<256x128xf32>
    %c0_12 = arith.constant 0 : index
    %c0_13 = arith.constant 0 : index
    %15 = vector.load %arg18[%c0_12, %c0_13] : memref<256x128xf32, #tpu.memory_space<vmem>>, vector<256x128xf32>
    tpu.vector_store %arg18[%c0_12, %c0_13], %14 {strides = array<i32>} : memref<256x128xf32, #tpu.memory_space<vmem>>, vector<256x128xf32>,
    %16 = vector.extract_strided_slice %7 {offsets = [0, 0], sizes = [256, 128], strides = [1, 1]} : vector<288x128xf32> to vector<256x128xf32>
    %c1 = arith.constant 1 : index
    %c0_14 = arith.constant 0 : index
    %c0_15 = arith.constant 0 : index
    %17 = vector.load %arg4[%c1, %c0_14, %c0_15] : memref<9x128x128xf32, #tpu.memory_space<vmem>>, vector<1x128x128xf32>
    %18 = vector.shape_cast %17 : vector<1x128x128xf32> to vector<128x128xf32>
    %cst_16 = arith.constant dense<0.000000e+00> : vector<256x128xf32>
    %19 = tpu.matmul %16, %18, %cst_16 {dimension_numbers = #tpu.dot_dimension_numbers<[1], [0], [0], [1], [0, 0, 1, 1], [], []>} : vector<256x128xf32>, vector<128x128xf32>, vector<256x128xf32> -> vector<256x128xf32>
    %c0_17 = arith.constant 0 : index
    %c0_18 = arith.constant 0 : index
    %20 = vector.load %arg18[%c0_17, %c0_18] : memref<256x128xf32, #tpu.memory_space<vmem>>, vector<256x128xf32>
    %21 = arith.addf %20, %19 : vector<256x128xf32>
    %c0_19 = arith.constant 0 : index
    %c0_20 = arith.constant 0 : index
    %22 = vector.load %arg18[%c0_19, %c0_20] : memref<256x128xf32, #tpu.memory_space<vmem>>, vector<256x128xf32>
    tpu.vector_store %arg18[%c0_19, %c0_20], %21 {strides = array<i32>} : memref<256x128xf32, #tpu.memory_space<vmem>>, vector<256x128xf32>,
    %23 = vector.extract_strided_slice %9 {offsets = [0, 0], sizes = [256, 128], strides = [1, 1]} : vector<288x128xf32> to vector<256x128xf32>
    %c2 = arith.constant 2 : index
    %c0_21 = arith.constant 0 : index
    %c0_22 = arith.constant 0 : index
    %24 = vector.load %arg4[%c2, %c0_21, %c0_22] : memref<9x128x128xf32, #tpu.memory_space<vmem>>, vector<1x128x128xf32>
    %25 = vector.shape_cast %24 : vector<1x128x128xf32> to vector<128x128xf32>
    %cst_23 = arith.constant dense<0.000000e+00> : vector<256x128xf32>
    %26 = tpu.matmul %23, %25, %cst_23 {dimension_numbers = #tpu.dot_dimension_numbers<[1], [0], [0], [1], [0, 0, 1, 1], [], []>} : vector<256x128xf32>, vector<128x128xf32>, vector<256x128xf32> -> vector<256x128xf32>
    %c0_24 = arith.constant 0 : index
    %c0_25 = arith.constant 0 : index
    %27 = vector.load %arg18[%c0_24, %c0_25] : memref<256x128xf32, #tpu.memory_space<vmem>>, vector<256x128xf32>
    %28 = arith.addf %27, %26 : vector<256x128xf32>
    %c0_26 = arith.constant 0 : index
    %c0_27 = arith.constant 0 : index
    %29 = vector.load %arg18[%c0_26, %c0_27] : memref<256x128xf32, #tpu.memory_space<vmem>>, vector<256x128xf32>
    tpu.vector_store %arg18[%c0_26, %c0_27], %28 {strides = array<i32>} : memref<256x128xf32, #tpu.memory_space<vmem>>, vector<256x128xf32>,
    %30 = vector.extract_strided_slice %5 {offsets = [16, 0], sizes = [256, 128], strides = [1, 1]} : vector<288x128xf32> to vector<256x128xf32>
    %c3 = arith.constant 3 : index
    %c0_28 = arith.constant 0 : index
    %c0_29 = arith.constant 0 : index
    %31 = vector.load %arg4[%c3, %c0_28, %c0_29] : memref<9x128x128xf32, #tpu.memory_space<vmem>>, vector<1x128x128xf32>
    %32 = vector.shape_cast %31 : vector<1x128x128xf32> to vector<128x128xf32>
    %cst_30 = arith.constant dense<0.000000e+00> : vector<256x128xf32>
    %33 = tpu.matmul %30, %32, %cst_30 {dimension_numbers = #tpu.dot_dimension_numbers<[1], [0], [0], [1], [0, 0, 1, 1], [], []>} : vector<256x128xf32>, vector<128x128xf32>, vector<256x128xf32> -> vector<256x128xf32>
    %c0_31 = arith.constant 0 : index
    %c0_32 = arith.constant 0 : index
    %34 = vector.load %arg18[%c0_31, %c0_32] : memref<256x128xf32, #tpu.memory_space<vmem>>, vector<256x128xf32>
    %35 = arith.addf %34, %33 : vector<256x128xf32>
    %c0_33 = arith.constant 0 : index
    %c0_34 = arith.constant 0 : index
    %36 = vector.load %arg18[%c0_33, %c0_34] : memref<256x128xf32, #tpu.memory_space<vmem>>, vector<256x128xf32>
    tpu.vector_store %arg18[%c0_33, %c0_34], %35 {strides = array<i32>} : memref<256x128xf32, #tpu.memory_space<vmem>>, vector<256x128xf32>,
    %37 = vector.extract_strided_slice %7 {offsets = [16, 0], sizes = [256, 128], strides = [1, 1]} : vector<288x128xf32> to vector<256x128xf32>
    %c4 = arith.constant 4 : index
    %c0_35 = arith.constant 0 : index
    %c0_36 = arith.constant 0 : index
    %38 = vector.load %arg4[%c4, %c0_35, %c0_36] : memref<9x128x128xf32, #tpu.memory_space<vmem>>, vector<1x128x128xf32>
    %39 = vector.shape_cast %38 : vector<1x128x128xf32> to vector<128x128xf32>
    %cst_37 = arith.constant dense<0.000000e+00> : vector<256x128xf32>
    %40 = tpu.matmul %37, %39, %cst_37 {dimension_numbers = #tpu.dot_dimension_numbers<[1], [0], [0], [1], [0, 0, 1, 1], [], []>} : vector<256x128xf32>, vector<128x128xf32>, vector<256x128xf32> -> vector<256x128xf32>
    %c0_38 = arith.constant 0 : index
    %c0_39 = arith.constant 0 : index
    %41 = vector.load %arg18[%c0_38, %c0_39] : memref<256x128xf32, #tpu.memory_space<vmem>>, vector<256x128xf32>
    %42 = arith.addf %41, %40 : vector<256x128xf32>
    %c0_40 = arith.constant 0 : index
    %c0_41 = arith.constant 0 : index
    %43 = vector.load %arg18[%c0_40, %c0_41] : memref<256x128xf32, #tpu.memory_space<vmem>>, vector<256x128xf32>
    tpu.vector_store %arg18[%c0_40, %c0_41], %42 {strides = array<i32>} : memref<256x128xf32, #tpu.memory_space<vmem>>, vector<256x128xf32>,
    %44 = vector.extract_strided_slice %9 {offsets = [16, 0], sizes = [256, 128], strides = [1, 1]} : vector<288x128xf32> to vector<256x128xf32>
    %c5 = arith.constant 5 : index
    %c0_42 = arith.constant 0 : index
    %c0_43 = arith.constant 0 : index
    %45 = vector.load %arg4[%c5, %c0_42, %c0_43] : memref<9x128x128xf32, #tpu.memory_space<vmem>>, vector<1x128x128xf32>
    %46 = vector.shape_cast %45 : vector<1x128x128xf32> to vector<128x128xf32>
    %cst_44 = arith.constant dense<0.000000e+00> : vector<256x128xf32>
    %47 = tpu.matmul %44, %46, %cst_44 {dimension_numbers = #tpu.dot_dimension_numbers<[1], [0], [0], [1], [0, 0, 1, 1], [], []>} : vector<256x128xf32>, vector<128x128xf32>, vector<256x128xf32> -> vector<256x128xf32>
    %c0_45 = arith.constant 0 : index
    %c0_46 = arith.constant 0 : index
    %48 = vector.load %arg18[%c0_45, %c0_46] : memref<256x128xf32, #tpu.memory_space<vmem>>, vector<256x128xf32>
    %49 = arith.addf %48, %47 : vector<256x128xf32>
    %c0_47 = arith.constant 0 : index
    %c0_48 = arith.constant 0 : index
    %50 = vector.load %arg18[%c0_47, %c0_48] : memref<256x128xf32, #tpu.memory_space<vmem>>, vector<256x128xf32>
    tpu.vector_store %arg18[%c0_47, %c0_48], %49 {strides = array<i32>} : memref<256x128xf32, #tpu.memory_space<vmem>>, vector<256x128xf32>,
    %51 = vector.extract_strided_slice %5 {offsets = [32, 0], sizes = [256, 128], strides = [1, 1]} : vector<288x128xf32> to vector<256x128xf32>
    %c6 = arith.constant 6 : index
    %c0_49 = arith.constant 0 : index
    %c0_50 = arith.constant 0 : index
    %52 = vector.load %arg4[%c6, %c0_49, %c0_50] : memref<9x128x128xf32, #tpu.memory_space<vmem>>, vector<1x128x128xf32>
    %53 = vector.shape_cast %52 : vector<1x128x128xf32> to vector<128x128xf32>
    %cst_51 = arith.constant dense<0.000000e+00> : vector<256x128xf32>
    %54 = tpu.matmul %51, %53, %cst_51 {dimension_numbers = #tpu.dot_dimension_numbers<[1], [0], [0], [1], [0, 0, 1, 1], [], []>} : vector<256x128xf32>, vector<128x128xf32>, vector<256x128xf32> -> vector<256x128xf32>
    %c0_52 = arith.constant 0 : index
    %c0_53 = arith.constant 0 : index
    %55 = vector.load %arg18[%c0_52, %c0_53] : memref<256x128xf32, #tpu.memory_space<vmem>>, vector<256x128xf32>
    %56 = arith.addf %55, %54 : vector<256x128xf32>
    %c0_54 = arith.constant 0 : index
    %c0_55 = arith.constant 0 : index
    %57 = vector.load %arg18[%c0_54, %c0_55] : memref<256x128xf32, #tpu.memory_space<vmem>>, vector<256x128xf32>
    tpu.vector_store %arg18[%c0_54, %c0_55], %56 {strides = array<i32>} : memref<256x128xf32, #tpu.memory_space<vmem>>, vector<256x128xf32>,
    %58 = vector.extract_strided_slice %7 {offsets = [32, 0], sizes = [256, 128], strides = [1, 1]} : vector<288x128xf32> to vector<256x128xf32>
    %c7 = arith.constant 7 : index
    %c0_56 = arith.constant 0 : index
    %c0_57 = arith.constant 0 : index
    %59 = vector.load %arg4[%c7, %c0_56, %c0_57] : memref<9x128x128xf32, #tpu.memory_space<vmem>>, vector<1x128x128xf32>
    %60 = vector.shape_cast %59 : vector<1x128x128xf32> to vector<128x128xf32>
    %cst_58 = arith.constant dense<0.000000e+00> : vector<256x128xf32>
    %61 = tpu.matmul %58, %60, %cst_58 {dimension_numbers = #tpu.dot_dimension_numbers<[1], [0], [0], [1], [0, 0, 1, 1], [], []>} : vector<256x128xf32>, vector<128x128xf32>, vector<256x128xf32> -> vector<256x128xf32>
    %c0_59 = arith.constant 0 : index
    %c0_60 = arith.constant 0 : index
    %62 = vector.load %arg18[%c0_59, %c0_60] : memref<256x128xf32, #tpu.memory_space<vmem>>, vector<256x128xf32>
    %63 = arith.addf %62, %61 : vector<256x128xf32>
    %c0_61 = arith.constant 0 : index
    %c0_62 = arith.constant 0 : index
    %64 = vector.load %arg18[%c0_61, %c0_62] : memref<256x128xf32, #tpu.memory_space<vmem>>, vector<256x128xf32>
    tpu.vector_store %arg18[%c0_61, %c0_62], %63 {strides = array<i32>} : memref<256x128xf32, #tpu.memory_space<vmem>>, vector<256x128xf32>,
    %65 = vector.extract_strided_slice %9 {offsets = [32, 0], sizes = [256, 128], strides = [1, 1]} : vector<288x128xf32> to vector<256x128xf32>
    %c8 = arith.constant 8 : index
    %c0_63 = arith.constant 0 : index
    %c0_64 = arith.constant 0 : index
    %66 = vector.load %arg4[%c8, %c0_63, %c0_64] : memref<9x128x128xf32, #tpu.memory_space<vmem>>, vector<1x128x128xf32>
    %67 = vector.shape_cast %66 : vector<1x128x128xf32> to vector<128x128xf32>
    %cst_65 = arith.constant dense<0.000000e+00> : vector<256x128xf32>
    %68 = tpu.matmul %65, %67, %cst_65 {dimension_numbers = #tpu.dot_dimension_numbers<[1], [0], [0], [1], [0, 0, 1, 1], [], []>} : vector<256x128xf32>, vector<128x128xf32>, vector<256x128xf32> -> vector<256x128xf32>
    %c0_66 = arith.constant 0 : index
    %c0_67 = arith.constant 0 : index
    %69 = vector.load %arg18[%c0_66, %c0_67] : memref<256x128xf32, #tpu.memory_space<vmem>>, vector<256x128xf32>
    %70 = arith.addf %69, %68 : vector<256x128xf32>
    %c0_68 = arith.constant 0 : index
    %c0_69 = arith.constant 0 : index
    %71 = vector.load %arg18[%c0_68, %c0_69] : memref<256x128xf32, #tpu.memory_space<vmem>>, vector<256x128xf32>
    tpu.vector_store %arg18[%c0_68, %c0_69], %70 {strides = array<i32>} : memref<256x128xf32, #tpu.memory_space<vmem>>, vector<256x128xf32>,
    %c0_70 = arith.constant 0 : index
    %c0_71 = arith.constant 0 : index
    %72 = vector.load %arg18[%c0_70, %c0_71] : memref<256x128xf32, #tpu.memory_space<vmem>>, vector<256x128xf32>
    %73 = vector.broadcast %10 : vector<1x128xf32> to vector<256x128xf32>
    %74 = arith.addf %72, %73 : vector<256x128xf32>
    %c0_72 = arith.constant 0 : index
    %c0_73 = arith.constant 0 : index
    %75 = vector.load %arg6[%c0_72, %c0_73] : memref<1x128xf32, #tpu.memory_space<vmem>>, vector<1x128xf32>
    %c0_74 = arith.constant 0 : index
    %c0_75 = arith.constant 0 : index
    %76 = vector.load %arg7[%c0_74, %c0_75] : memref<1x128xf32, #tpu.memory_space<vmem>>, vector<1x128xf32>
    %cst_76 = arith.constant dense<0.000000e+00> : vector<128xf32>
    %77 = vector.multi_reduction <add>, %74, %cst_76 [0] : vector<256x128xf32> to vector<128xf32>
    %78 = vector.shape_cast %77 : vector<128xf32> to vector<1x128xf32>
    %cst_77 = arith.constant 3.906250e-03 : f32
    %79 = vector.broadcast %cst_77 : f32 to vector<1x128xf32>
    %80 = arith.mulf %78, %79 : vector<1x128xf32>
    %cst_78 = arith.constant dense<0.000000e+00> : vector<1x128xf32>
    %81 = tpu.matmul %80, %0, %cst_78 {dimension_numbers = #tpu.dot_dimension_numbers<[1], [0], [0], [1], [0, 0, 1, 1], [], []>} : vector<1x128xf32>, vector<128x128xf32>, vector<1x128xf32> -> vector<1x128xf32>
    %cst_79 = arith.constant dense<0.000000e+00> : vector<1x128xf32>
    %82 = tpu.matmul %81, %1, %cst_79 {dimension_numbers = #tpu.dot_dimension_numbers<[1], [0], [0], [1], [0, 0, 1, 1], [], []>} : vector<1x128xf32>, vector<128x128xf32>, vector<1x128xf32> -> vector<1x128xf32>
    %83 = vector.broadcast %82 : vector<1x128xf32> to vector<256x128xf32>
    %84 = arith.subf %74, %83 : vector<256x128xf32>
    %85 = arith.mulf %84, %84 : vector<256x128xf32>
    %cst_80 = arith.constant dense<0.000000e+00> : vector<128xf32>
    %86 = vector.multi_reduction <add>, %85, %cst_80 [0] : vector<256x128xf32> to vector<128xf32>
    %87 = vector.shape_cast %86 : vector<128xf32> to vector<1x128xf32>
    %cst_81 = arith.constant 3.906250e-03 : f32
    %88 = vector.broadcast %cst_81 : f32 to vector<1x128xf32>
    %89 = arith.mulf %87, %88 : vector<1x128xf32>
    %cst_82 = arith.constant dense<0.000000e+00> : vector<1x128xf32>
    %90 = tpu.matmul %89, %0, %cst_82 {dimension_numbers = #tpu.dot_dimension_numbers<[1], [0], [0], [1], [0, 0, 1, 1], [], []>} : vector<1x128xf32>, vector<128x128xf32>, vector<1x128xf32> -> vector<1x128xf32>
    %cst_83 = arith.constant dense<0.000000e+00> : vector<1x128xf32>
    %91 = tpu.matmul %90, %1, %cst_83 {dimension_numbers = #tpu.dot_dimension_numbers<[1], [0], [0], [1], [0, 0, 1, 1], [], []>} : vector<1x128xf32>, vector<128x128xf32>, vector<1x128xf32> -> vector<1x128xf32>
    %cst_84 = arith.constant 0.000000e+00 : f32
    %92 = vector.broadcast %cst_84 : f32 to vector<1x128xf32>
    %93 = arith.maximumf %91, %92 : vector<1x128xf32>
    %cst_85 = arith.constant 9.99999974E-6 : f32
    %94 = vector.broadcast %cst_85 : f32 to vector<1x128xf32>
    %95 = arith.addf %93, %94 : vector<1x128xf32>
    %96 = math.rsqrt %95 : vector<1x128xf32>
    %97 = vector.broadcast %96 : vector<1x128xf32> to vector<256x128xf32>
    %98 = arith.mulf %84, %97 : vector<256x128xf32>
    %99 = vector.broadcast %75 : vector<1x128xf32> to vector<256x128xf32>
    %100 = arith.mulf %98, %99 : vector<256x128xf32>
    %101 = vector.broadcast %76 : vector<1x128xf32> to vector<256x128xf32>
    %102 = arith.addf %100, %101 : vector<256x128xf32>
    %c0_86 = arith.constant 0 : index
    %c0_87 = arith.constant 0 : index
    %c0_88 = arith.constant 0 : index
    %103 = vector.load %arg2[%c0_86, %c0_87, %c0_88] : memref<1x1x128xf32, #tpu.memory_space<vmem>>, vector<1x1x128xf32>
    %104 = vector.shape_cast %103 : vector<1x1x128xf32> to vector<1x128xf32>
    %cst_89 = arith.constant 1.000000e+00 : f32
    %105 = vector.broadcast %cst_89 : f32 to vector<1x128xf32>
    %106 = arith.addf %104, %105 : vector<1x128xf32>
    %107 = vector.broadcast %106 : vector<1x128xf32> to vector<256x128xf32>
    %108 = arith.mulf %102, %107 : vector<256x128xf32>
    %c0_90 = arith.constant 0 : index
    %c0_91 = arith.constant 0 : index
    %c0_92 = arith.constant 0 : index
    %109 = vector.load %arg3[%c0_90, %c0_91, %c0_92] : memref<1x1x128xf32, #tpu.memory_space<vmem>>, vector<1x1x128xf32>
    %110 = vector.shape_cast %109 : vector<1x1x128xf32> to vector<1x128xf32>
    %111 = vector.broadcast %110 : vector<1x128xf32> to vector<256x128xf32>
    %112 = arith.addf %108, %111 : vector<256x128xf32>
    %113 = arith.negf %112 : vector<256x128xf32>
    %114 = math.exp %113 : vector<256x128xf32>
    %cst_93 = arith.constant 1.000000e+00 : f32
    %115 = vector.broadcast %cst_93 : f32 to vector<256x128xf32>
    %116 = arith.addf %115, %114 : vector<256x128xf32>
    %117 = arith.divf %115, %116 : vector<256x128xf32>
    %118 = arith.mulf %112, %117 : vector<256x128xf32>
    %cst_94 = arith.constant 0.000000e+00 : f32
    %119 = vector.broadcast %cst_94 : f32 to vector<1x18x128xf32>
    %cst_95 = arith.constant 0.000000e+00 : f32
    %120 = vector.broadcast %cst_95 : f32 to vector<16x1x128xf32>
    %c0_96 = arith.constant 0 : index
    %c0_97 = arith.constant 0 : index
    %c0_98 = arith.constant 0 : index
    %121 = vector.load %arg17[%c0_96, %c0_97, %c0_98] : memref<18x18x128xf32, #tpu.memory_space<vmem>>, vector<1x18x128xf32>
    tpu.vector_store %arg17[%c0_96, %c0_97, %c0_98], %119 {strides = array<i32>} : memref<18x18x128xf32, #tpu.memory_space<vmem>>, vector<1x18x128xf32>,
    %c17 = arith.constant 17 : index
    %c0_99 = arith.constant 0 : index
    %c0_100 = arith.constant 0 : index
    %122 = vector.load %arg17[%c17, %c0_99, %c0_100] : memref<18x18x128xf32, #tpu.memory_space<vmem>>, vector<1x18x128xf32>
    tpu.vector_store %arg17[%c17, %c0_99, %c0_100], %119 {strides = array<i32>} : memref<18x18x128xf32, #tpu.memory_space<vmem>>, vector<1x18x128xf32>,
    %c1_101 = arith.constant 1 : index
    %c0_102 = arith.constant 0 : index
    %c0_103 = arith.constant 0 : index
    %123 = vector.load %arg17[%c1_101, %c0_102, %c0_103] : memref<18x18x128xf32, #tpu.memory_space<vmem>>, vector<16x1x128xf32>
    tpu.vector_store %arg17[%c1_101, %c0_102, %c0_103], %120 {strides = array<i32>} : memref<18x18x128xf32, #tpu.memory_space<vmem>>, vector<16x1x128xf32>,
    %c1_104 = arith.constant 1 : index
    %c17_105 = arith.constant 17 : index
    %c0_106 = arith.constant 0 : index
    %124 = vector.load %arg17[%c1_104, %c17_105, %c0_106] : memref<18x18x128xf32, #tpu.memory_space<vmem>>, vector<16x1x128xf32>
    tpu.vector_store %arg17[%c1_104, %c17_105, %c0_106], %120 {strides = array<i32>} : memref<18x18x128xf32, #tpu.memory_space<vmem>>, vector<16x1x128xf32>,
    %125 = vector.shape_cast %118 : vector<256x128xf32> to vector<16x16x128xf32>
    %c1_107 = arith.constant 1 : index
    %c1_108 = arith.constant 1 : index
    %c0_109 = arith.constant 0 : index
    %126 = vector.load %arg17[%c1_107, %c1_108, %c0_109] : memref<18x18x128xf32, #tpu.memory_space<vmem>>, vector<16x16x128xf32>
    tpu.vector_store %arg17[%c1_107, %c1_108, %c0_109], %125 {strides = array<i32>} : memref<18x18x128xf32, #tpu.memory_space<vmem>>, vector<16x16x128xf32>,
    %c0_110 = arith.constant 0 : index
    %c0_111 = arith.constant 0 : index
    %c0_112 = arith.constant 0 : index
    %127 = vector.load %arg17[%c0_110, %c0_111, %c0_112] : memref<18x18x128xf32, #tpu.memory_space<vmem>>, vector<18x18x128xf32>
    %128 = vector.extract_strided_slice %127 {offsets = [0, 0, 0], sizes = [18, 16, 128], strides = [1, 1, 1]} : vector<18x18x128xf32> to vector<18x16x128xf32>
    %129 = vector.shape_cast %128 : vector<18x16x128xf32> to vector<288x128xf32>
    %130 = vector.extract_strided_slice %127 {offsets = [0, 1, 0], sizes = [18, 16, 128], strides = [1, 1, 1]} : vector<18x18x128xf32> to vector<18x16x128xf32>
    %131 = vector.shape_cast %130 : vector<18x16x128xf32> to vector<288x128xf32>
    %132 = vector.extract_strided_slice %127 {offsets = [0, 2, 0], sizes = [18, 16, 128], strides = [1, 1, 1]} : vector<18x18x128xf32> to vector<18x16x128xf32>
    %133 = vector.shape_cast %132 : vector<18x16x128xf32> to vector<288x128xf32>
    %c0_113 = arith.constant 0 : index
    %c0_114 = arith.constant 0 : index
    %134 = vector.load %arg9[%c0_113, %c0_114] : memref<1x128xf32, #tpu.memory_space<vmem>>, vector<1x128xf32>
    %135 = vector.extract_strided_slice %129 {offsets = [0, 0], sizes = [256, 128], strides = [1, 1]} : vector<288x128xf32> to vector<256x128xf32>
    %c0_115 = arith.constant 0 : index
    %c0_116 = arith.constant 0 : index
    %c0_117 = arith.constant 0 : index
    %136 = vector.load %arg8[%c0_115, %c0_116, %c0_117] : memref<9x128x128xf32, #tpu.memory_space<vmem>>, vector<1x128x128xf32>
    %137 = vector.shape_cast %136 : vector<1x128x128xf32> to vector<128x128xf32>
    %cst_118 = arith.constant dense<0.000000e+00> : vector<256x128xf32>
    %138 = tpu.matmul %135, %137, %cst_118 {dimension_numbers = #tpu.dot_dimension_numbers<[1], [0], [0], [1], [0, 0, 1, 1], [], []>} : vector<256x128xf32>, vector<128x128xf32>, vector<256x128xf32> -> vector<256x128xf32>
    %c0_119 = arith.constant 0 : index
    %c0_120 = arith.constant 0 : index
    %139 = vector.load %arg18[%c0_119, %c0_120] : memref<256x128xf32, #tpu.memory_space<vmem>>, vector<256x128xf32>
    tpu.vector_store %arg18[%c0_119, %c0_120], %138 {strides = array<i32>} : memref<256x128xf32, #tpu.memory_space<vmem>>, vector<256x128xf32>,
    %140 = vector.extract_strided_slice %131 {offsets = [0, 0], sizes = [256, 128], strides = [1, 1]} : vector<288x128xf32> to vector<256x128xf32>
    %c1_121 = arith.constant 1 : index
    %c0_122 = arith.constant 0 : index
    %c0_123 = arith.constant 0 : index
    %141 = vector.load %arg8[%c1_121, %c0_122, %c0_123] : memref<9x128x128xf32, #tpu.memory_space<vmem>>, vector<1x128x128xf32>
    %142 = vector.shape_cast %141 : vector<1x128x128xf32> to vector<128x128xf32>
    %cst_124 = arith.constant dense<0.000000e+00> : vector<256x128xf32>
    %143 = tpu.matmul %140, %142, %cst_124 {dimension_numbers = #tpu.dot_dimension_numbers<[1], [0], [0], [1], [0, 0, 1, 1], [], []>} : vector<256x128xf32>, vector<128x128xf32>, vector<256x128xf32> -> vector<256x128xf32>
    %c0_125 = arith.constant 0 : index
    %c0_126 = arith.constant 0 : index
    %144 = vector.load %arg18[%c0_125, %c0_126] : memref<256x128xf32, #tpu.memory_space<vmem>>, vector<256x128xf32>
    %145 = arith.addf %144, %143 : vector<256x128xf32>
    %c0_127 = arith.constant 0 : index
    %c0_128 = arith.constant 0 : index
    %146 = vector.load %arg18[%c0_127, %c0_128] : memref<256x128xf32, #tpu.memory_space<vmem>>, vector<256x128xf32>
    tpu.vector_store %arg18[%c0_127, %c0_128], %145 {strides = array<i32>} : memref<256x128xf32, #tpu.memory_space<vmem>>, vector<256x128xf32>,
    %147 = vector.extract_strided_slice %133 {offsets = [0, 0], sizes = [256, 128], strides = [1, 1]} : vector<288x128xf32> to vector<256x128xf32>
    %c2_129 = arith.constant 2 : index
    %c0_130 = arith.constant 0 : index
    %c0_131 = arith.constant 0 : index
    %148 = vector.load %arg8[%c2_129, %c0_130, %c0_131] : memref<9x128x128xf32, #tpu.memory_space<vmem>>, vector<1x128x128xf32>
    %149 = vector.shape_cast %148 : vector<1x128x128xf32> to vector<128x128xf32>
    %cst_132 = arith.constant dense<0.000000e+00> : vector<256x128xf32>
    %150 = tpu.matmul %147, %149, %cst_132 {dimension_numbers = #tpu.dot_dimension_numbers<[1], [0], [0], [1], [0, 0, 1, 1], [], []>} : vector<256x128xf32>, vector<128x128xf32>, vector<256x128xf32> -> vector<256x128xf32>
    %c0_133 = arith.constant 0 : index
    %c0_134 = arith.constant 0 : index
    %151 = vector.load %arg18[%c0_133, %c0_134] : memref<256x128xf32, #tpu.memory_space<vmem>>, vector<256x128xf32>
    %152 = arith.addf %151, %150 : vector<256x128xf32>
    %c0_135 = arith.constant 0 : index
    %c0_136 = arith.constant 0 : index
    %153 = vector.load %arg18[%c0_135, %c0_136] : memref<256x128xf32, #tpu.memory_space<vmem>>, vector<256x128xf32>
    tpu.vector_store %arg18[%c0_135, %c0_136], %152 {strides = array<i32>} : memref<256x128xf32, #tpu.memory_space<vmem>>, vector<256x128xf32>,
    %154 = vector.extract_strided_slice %129 {offsets = [16, 0], sizes = [256, 128], strides = [1, 1]} : vector<288x128xf32> to vector<256x128xf32>
    %c3_137 = arith.constant 3 : index
    %c0_138 = arith.constant 0 : index
    %c0_139 = arith.constant 0 : index
    %155 = vector.load %arg8[%c3_137, %c0_138, %c0_139] : memref<9x128x128xf32, #tpu.memory_space<vmem>>, vector<1x128x128xf32>
    %156 = vector.shape_cast %155 : vector<1x128x128xf32> to vector<128x128xf32>
    %cst_140 = arith.constant dense<0.000000e+00> : vector<256x128xf32>
    %157 = tpu.matmul %154, %156, %cst_140 {dimension_numbers = #tpu.dot_dimension_numbers<[1], [0], [0], [1], [0, 0, 1, 1], [], []>} : vector<256x128xf32>, vector<128x128xf32>, vector<256x128xf32> -> vector<256x128xf32>
    %c0_141 = arith.constant 0 : index
    %c0_142 = arith.constant 0 : index
    %158 = vector.load %arg18[%c0_141, %c0_142] : memref<256x128xf32, #tpu.memory_space<vmem>>, vector<256x128xf32>
    %159 = arith.addf %158, %157 : vector<256x128xf32>
    %c0_143 = arith.constant 0 : index
    %c0_144 = arith.constant 0 : index
    %160 = vector.load %arg18[%c0_143, %c0_144] : memref<256x128xf32, #tpu.memory_space<vmem>>, vector<256x128xf32>
    tpu.vector_store %arg18[%c0_143, %c0_144], %159 {strides = array<i32>} : memref<256x128xf32, #tpu.memory_space<vmem>>, vector<256x128xf32>,
    %161 = vector.extract_strided_slice %131 {offsets = [16, 0], sizes = [256, 128], strides = [1, 1]} : vector<288x128xf32> to vector<256x128xf32>
    %c4_145 = arith.constant 4 : index
    %c0_146 = arith.constant 0 : index
    %c0_147 = arith.constant 0 : index
    %162 = vector.load %arg8[%c4_145, %c0_146, %c0_147] : memref<9x128x128xf32, #tpu.memory_space<vmem>>, vector<1x128x128xf32>
    %163 = vector.shape_cast %162 : vector<1x128x128xf32> to vector<128x128xf32>
    %cst_148 = arith.constant dense<0.000000e+00> : vector<256x128xf32>
    %164 = tpu.matmul %161, %163, %cst_148 {dimension_numbers = #tpu.dot_dimension_numbers<[1], [0], [0], [1], [0, 0, 1, 1], [], []>} : vector<256x128xf32>, vector<128x128xf32>, vector<256x128xf32> -> vector<256x128xf32>
    %c0_149 = arith.constant 0 : index
    %c0_150 = arith.constant 0 : index
    %165 = vector.load %arg18[%c0_149, %c0_150] : memref<256x128xf32, #tpu.memory_space<vmem>>, vector<256x128xf32>
    %166 = arith.addf %165, %164 : vector<256x128xf32>
    %c0_151 = arith.constant 0 : index
    %c0_152 = arith.constant 0 : index
    %167 = vector.load %arg18[%c0_151, %c0_152] : memref<256x128xf32, #tpu.memory_space<vmem>>, vector<256x128xf32>
    tpu.vector_store %arg18[%c0_151, %c0_152], %166 {strides = array<i32>} : memref<256x128xf32, #tpu.memory_space<vmem>>, vector<256x128xf32>,
    %168 = vector.extract_strided_slice %133 {offsets = [16, 0], sizes = [256, 128], strides = [1, 1]} : vector<288x128xf32> to vector<256x128xf32>
    %c5_153 = arith.constant 5 : index
    %c0_154 = arith.constant 0 : index
    %c0_155 = arith.constant 0 : index
    %169 = vector.load %arg8[%c5_153, %c0_154, %c0_155] : memref<9x128x128xf32, #tpu.memory_space<vmem>>, vector<1x128x128xf32>
    %170 = vector.shape_cast %169 : vector<1x128x128xf32> to vector<128x128xf32>
    %cst_156 = arith.constant dense<0.000000e+00> : vector<256x128xf32>
    %171 = tpu.matmul %168, %170, %cst_156 {dimension_numbers = #tpu.dot_dimension_numbers<[1], [0], [0], [1], [0, 0, 1, 1], [], []>} : vector<256x128xf32>, vector<128x128xf32>, vector<256x128xf32> -> vector<256x128xf32>
    %c0_157 = arith.constant 0 : index
    %c0_158 = arith.constant 0 : index
    %172 = vector.load %arg18[%c0_157, %c0_158] : memref<256x128xf32, #tpu.memory_space<vmem>>, vector<256x128xf32>
    %173 = arith.addf %172, %171 : vector<256x128xf32>
    %c0_159 = arith.constant 0 : index
    %c0_160 = arith.constant 0 : index
    %174 = vector.load %arg18[%c0_159, %c0_160] : memref<256x128xf32, #tpu.memory_space<vmem>>, vector<256x128xf32>
    tpu.vector_store %arg18[%c0_159, %c0_160], %173 {strides = array<i32>} : memref<256x128xf32, #tpu.memory_space<vmem>>, vector<256x128xf32>,
    %175 = vector.extract_strided_slice %129 {offsets = [32, 0], sizes = [256, 128], strides = [1, 1]} : vector<288x128xf32> to vector<256x128xf32>
    %c6_161 = arith.constant 6 : index
    %c0_162 = arith.constant 0 : index
    %c0_163 = arith.constant 0 : index
    %176 = vector.load %arg8[%c6_161, %c0_162, %c0_163] : memref<9x128x128xf32, #tpu.memory_space<vmem>>, vector<1x128x128xf32>
    %177 = vector.shape_cast %176 : vector<1x128x128xf32> to vector<128x128xf32>
    %cst_164 = arith.constant dense<0.000000e+00> : vector<256x128xf32>
    %178 = tpu.matmul %175, %177, %cst_164 {dimension_numbers = #tpu.dot_dimension_numbers<[1], [0], [0], [1], [0, 0, 1, 1], [], []>} : vector<256x128xf32>, vector<128x128xf32>, vector<256x128xf32> -> vector<256x128xf32>
    %c0_165 = arith.constant 0 : index
    %c0_166 = arith.constant 0 : index
    %179 = vector.load %arg18[%c0_165, %c0_166] : memref<256x128xf32, #tpu.memory_space<vmem>>, vector<256x128xf32>
    %180 = arith.addf %179, %178 : vector<256x128xf32>
    %c0_167 = arith.constant 0 : index
    %c0_168 = arith.constant 0 : index
    %181 = vector.load %arg18[%c0_167, %c0_168] : memref<256x128xf32, #tpu.memory_space<vmem>>, vector<256x128xf32>
    tpu.vector_store %arg18[%c0_167, %c0_168], %180 {strides = array<i32>} : memref<256x128xf32, #tpu.memory_space<vmem>>, vector<256x128xf32>,
    %182 = vector.extract_strided_slice %131 {offsets = [32, 0], sizes = [256, 128], strides = [1, 1]} : vector<288x128xf32> to vector<256x128xf32>
    %c7_169 = arith.constant 7 : index
    %c0_170 = arith.constant 0 : index
    %c0_171 = arith.constant 0 : index
    %183 = vector.load %arg8[%c7_169, %c0_170, %c0_171] : memref<9x128x128xf32, #tpu.memory_space<vmem>>, vector<1x128x128xf32>
    %184 = vector.shape_cast %183 : vector<1x128x128xf32> to vector<128x128xf32>
    %cst_172 = arith.constant dense<0.000000e+00> : vector<256x128xf32>
    %185 = tpu.matmul %182, %184, %cst_172 {dimension_numbers = #tpu.dot_dimension_numbers<[1], [0], [0], [1], [0, 0, 1, 1], [], []>} : vector<256x128xf32>, vector<128x128xf32>, vector<256x128xf32> -> vector<256x128xf32>
    %c0_173 = arith.constant 0 : index
    %c0_174 = arith.constant 0 : index
    %186 = vector.load %arg18[%c0_173, %c0_174] : memref<256x128xf32, #tpu.memory_space<vmem>>, vector<256x128xf32>
    %187 = arith.addf %186, %185 : vector<256x128xf32>
    %c0_175 = arith.constant 0 : index
    %c0_176 = arith.constant 0 : index
    %188 = vector.load %arg18[%c0_175, %c0_176] : memref<256x128xf32, #tpu.memory_space<vmem>>, vector<256x128xf32>
    tpu.vector_store %arg18[%c0_175, %c0_176], %187 {strides = array<i32>} : memref<256x128xf32, #tpu.memory_space<vmem>>, vector<256x128xf32>,
    %189 = vector.extract_strided_slice %133 {offsets = [32, 0], sizes = [256, 128], strides = [1, 1]} : vector<288x128xf32> to vector<256x128xf32>
    %c8_177 = arith.constant 8 : index
    %c0_178 = arith.constant 0 : index
    %c0_179 = arith.constant 0 : index
    %190 = vector.load %arg8[%c8_177, %c0_178, %c0_179] : memref<9x128x128xf32, #tpu.memory_space<vmem>>, vector<1x128x128xf32>
    %191 = vector.shape_cast %190 : vector<1x128x128xf32> to vector<128x128xf32>
    %cst_180 = arith.constant dense<0.000000e+00> : vector<256x128xf32>
    %192 = tpu.matmul %189, %191, %cst_180 {dimension_numbers = #tpu.dot_dimension_numbers<[1], [0], [0], [1], [0, 0, 1, 1], [], []>} : vector<256x128xf32>, vector<128x128xf32>, vector<256x128xf32> -> vector<256x128xf32>
    %c0_181 = arith.constant 0 : index
    %c0_182 = arith.constant 0 : index
    %193 = vector.load %arg18[%c0_181, %c0_182] : memref<256x128xf32, #tpu.memory_space<vmem>>, vector<256x128xf32>
    %194 = arith.addf %193, %192 : vector<256x128xf32>
    %c0_183 = arith.constant 0 : index
    %c0_184 = arith.constant 0 : index
    %195 = vector.load %arg18[%c0_183, %c0_184] : memref<256x128xf32, #tpu.memory_space<vmem>>, vector<256x128xf32>
    tpu.vector_store %arg18[%c0_183, %c0_184], %194 {strides = array<i32>} : memref<256x128xf32, #tpu.memory_space<vmem>>, vector<256x128xf32>,
    %c0_185 = arith.constant 0 : index
    %c0_186 = arith.constant 0 : index
    %196 = vector.load %arg18[%c0_185, %c0_186] : memref<256x128xf32, #tpu.memory_space<vmem>>, vector<256x128xf32>
    %197 = vector.broadcast %134 : vector<1x128xf32> to vector<256x128xf32>
    %198 = arith.addf %196, %197 : vector<256x128xf32>
    %c0_187 = arith.constant 0 : index
    %c0_188 = arith.constant 0 : index
    %199 = vector.load %arg10[%c0_187, %c0_188] : memref<1x128xf32, #tpu.memory_space<vmem>>, vector<1x128xf32>
    %c0_189 = arith.constant 0 : index
    %c0_190 = arith.constant 0 : index
    %200 = vector.load %arg11[%c0_189, %c0_190] : memref<1x128xf32, #tpu.memory_space<vmem>>, vector<1x128xf32>
    %cst_191 = arith.constant dense<0.000000e+00> : vector<128xf32>
    %201 = vector.multi_reduction <add>, %198, %cst_191 [0] : vector<256x128xf32> to vector<128xf32>
    %202 = vector.shape_cast %201 : vector<128xf32> to vector<1x128xf32>
    %cst_192 = arith.constant 3.906250e-03 : f32
    %203 = vector.broadcast %cst_192 : f32 to vector<1x128xf32>
    %204 = arith.mulf %202, %203 : vector<1x128xf32>
    %cst_193 = arith.constant dense<0.000000e+00> : vector<1x128xf32>
    %205 = tpu.matmul %204, %0, %cst_193 {dimension_numbers = #tpu.dot_dimension_numbers<[1], [0], [0], [1], [0, 0, 1, 1], [], []>} : vector<1x128xf32>, vector<128x128xf32>, vector<1x128xf32> -> vector<1x128xf32>
    %cst_194 = arith.constant dense<0.000000e+00> : vector<1x128xf32>
    %206 = tpu.matmul %205, %1, %cst_194 {dimension_numbers = #tpu.dot_dimension_numbers<[1], [0], [0], [1], [0, 0, 1, 1], [], []>} : vector<1x128xf32>, vector<128x128xf32>, vector<1x128xf32> -> vector<1x128xf32>
    %207 = vector.broadcast %206 : vector<1x128xf32> to vector<256x128xf32>
    %208 = arith.subf %198, %207 : vector<256x128xf32>
    %209 = arith.mulf %208, %208 : vector<256x128xf32>
    %cst_195 = arith.constant dense<0.000000e+00> : vector<128xf32>
    %210 = vector.multi_reduction <add>, %209, %cst_195 [0] : vector<256x128xf32> to vector<128xf32>
    %211 = vector.shape_cast %210 : vector<128xf32> to vector<1x128xf32>
    %cst_196 = arith.constant 3.906250e-03 : f32
    %212 = vector.broadcast %cst_196 : f32 to vector<1x128xf32>
    %213 = arith.mulf %211, %212 : vector<1x128xf32>
    %cst_197 = arith.constant dense<0.000000e+00> : vector<1x128xf32>
    %214 = tpu.matmul %213, %0, %cst_197 {dimension_numbers = #tpu.dot_dimension_numbers<[1], [0], [0], [1], [0, 0, 1, 1], [], []>} : vector<1x128xf32>, vector<128x128xf32>, vector<1x128xf32> -> vector<1x128xf32>
    %cst_198 = arith.constant dense<0.000000e+00> : vector<1x128xf32>
    %215 = tpu.matmul %214, %1, %cst_198 {dimension_numbers = #tpu.dot_dimension_numbers<[1], [0], [0], [1], [0, 0, 1, 1], [], []>} : vector<1x128xf32>, vector<128x128xf32>, vector<1x128xf32> -> vector<1x128xf32>
    %cst_199 = arith.constant 0.000000e+00 : f32
    %216 = vector.broadcast %cst_199 : f32 to vector<1x128xf32>
    %217 = arith.maximumf %215, %216 : vector<1x128xf32>
    %cst_200 = arith.constant 9.99999974E-6 : f32
    %218 = vector.broadcast %cst_200 : f32 to vector<1x128xf32>
    %219 = arith.addf %217, %218 : vector<1x128xf32>
    %220 = math.rsqrt %219 : vector<1x128xf32>
    %221 = vector.broadcast %220 : vector<1x128xf32> to vector<256x128xf32>
    %222 = arith.mulf %208, %221 : vector<256x128xf32>
    %223 = vector.broadcast %199 : vector<1x128xf32> to vector<256x128xf32>
    %224 = arith.mulf %222, %223 : vector<256x128xf32>
    %225 = vector.broadcast %200 : vector<1x128xf32> to vector<256x128xf32>
    %226 = arith.addf %224, %225 : vector<256x128xf32>
    %227 = arith.negf %226 : vector<256x128xf32>
    %228 = math.exp %227 : vector<256x128xf32>
    %cst_201 = arith.constant 1.000000e+00 : f32
    %229 = vector.broadcast %cst_201 : f32 to vector<256x128xf32>
    %230 = arith.addf %229, %228 : vector<256x128xf32>
    %231 = arith.divf %229, %230 : vector<256x128xf32>
    %232 = arith.mulf %226, %231 : vector<256x128xf32>
    %233 = vector.extract_strided_slice %3 {offsets = [1, 1, 0], sizes = [16, 16, 128], strides = [1, 1, 1]} : vector<18x18x128xf32> to vector<16x16x128xf32>
    %234 = vector.shape_cast %233 : vector<16x16x128xf32> to vector<256x128xf32>
    %c0_202 = arith.constant 0 : index
    %c0_203 = arith.constant 0 : index
    %235 = vector.load %arg14[%c0_202, %c0_203] : memref<128x128xf32, #tpu.memory_space<vmem>>, vector<128x128xf32>
    %cst_204 = arith.constant dense<0.000000e+00> : vector<256x128xf32>
    %236 = tpu.matmul %234, %235, %cst_204 {dimension_numbers = #tpu.dot_dimension_numbers<[1], [0], [0], [1], [0, 0, 1, 1], [], []>} : vector<256x128xf32>, vector<128x128xf32>, vector<256x128xf32> -> vector<256x128xf32>
    %c0_205 = arith.constant 0 : index
    %c0_206 = arith.constant 0 : index
    %237 = vector.load %arg15[%c0_205, %c0_206] : memref<1x128xf32, #tpu.memory_space<vmem>>, vector<1x128xf32>
    %238 = vector.broadcast %237 : vector<1x128xf32> to vector<256x128xf32>
    %239 = arith.addf %236, %238 : vector<256x128xf32>
    %240 = arith.addf %232, %239 : vector<256x128xf32>
    %c0_207 = arith.constant 0 : index
    %c0_208 = arith.constant 0 : index
    %c0_209 = arith.constant 0 : index
    %241 = vector.load %arg16[%c0_207, %c0_208, %c0_209] : memref<1x256x128xf32, #tpu.memory_space<vmem>>, vector<1x256x128xf32>
    %242 = vector.shape_cast %241 : vector<1x256x128xf32> to vector<256x128xf32>
    %243 = vector.shape_cast %240 : vector<256x128xf32> to vector<1x256x128xf32>
    tpu.vector_store %arg16[%c0_207, %c0_208, %c0_209], %243 {strides = array<i32>} : memref<1x256x128xf32, #tpu.memory_space<vmem>>, vector<1x256x128xf32>,
    return
  }
  func.func @transform_0(%arg0: i32) -> (i32, i32, i32, i32) {
    %c0_i32 = arith.constant 0 : i32
    %c0_i32_0 = arith.constant 0 : i32
    %c0_i32_1 = arith.constant 0 : i32
    %c0_i32_2 = arith.constant 0 : i32
    return %arg0, %c0_i32, %c0_i32_0, %c0_i32_1 : i32, i32, i32, i32
  }
  func.func @transform_1(%arg0: i32) -> (i32, i32, i32) {
    %c0_i32 = arith.constant 0 : i32
    %c0_i32_0 = arith.constant 0 : i32
    %c0_i32_1 = arith.constant 0 : i32
    return %arg0, %c0_i32, %c0_i32_0 : i32, i32, i32
  }
  func.func @transform_2(%arg0: i32) -> (i32, i32, i32) {
    %c0_i32 = arith.constant 0 : i32
    %c0_i32_0 = arith.constant 0 : i32
    %c0_i32_1 = arith.constant 0 : i32
    return %arg0, %c0_i32, %c0_i32_0 : i32, i32, i32
  }
  func.func @transform_3(%arg0: i32) -> (i32, i32, i32) {
    %c0_i32 = arith.constant 0 : i32
    %c0_i32_0 = arith.constant 0 : i32
    %c0_i32_1 = arith.constant 0 : i32
    %c0_i32_2 = arith.constant 0 : i32
    return %c0_i32, %c0_i32_0, %c0_i32_1 : i32, i32, i32
  }
  func.func @transform_4(%arg0: i32) -> (i32, i32) {
    %c0_i32 = arith.constant 0 : i32
    %c0_i32_0 = arith.constant 0 : i32
    %c0_i32_1 = arith.constant 0 : i32
    return %c0_i32, %c0_i32_0 : i32, i32
  }
  func.func @transform_5(%arg0: i32) -> (i32, i32) {
    %c0_i32 = arith.constant 0 : i32
    %c0_i32_0 = arith.constant 0 : i32
    %c0_i32_1 = arith.constant 0 : i32
    return %c0_i32, %c0_i32_0 : i32, i32
  }
  func.func @transform_6(%arg0: i32) -> (i32, i32) {
    %c0_i32 = arith.constant 0 : i32
    %c0_i32_0 = arith.constant 0 : i32
    %c0_i32_1 = arith.constant 0 : i32
    return %c0_i32, %c0_i32_0 : i32, i32
  }
  func.func @transform_7(%arg0: i32) -> (i32, i32, i32) {
    %c0_i32 = arith.constant 0 : i32
    %c0_i32_0 = arith.constant 0 : i32
    %c0_i32_1 = arith.constant 0 : i32
    %c0_i32_2 = arith.constant 0 : i32
    return %c0_i32, %c0_i32_0, %c0_i32_1 : i32, i32, i32
  }
  func.func @transform_8(%arg0: i32) -> (i32, i32) {
    %c0_i32 = arith.constant 0 : i32
    %c0_i32_0 = arith.constant 0 : i32
    %c0_i32_1 = arith.constant 0 : i32
    return %c0_i32, %c0_i32_0 : i32, i32
  }
  func.func @transform_9(%arg0: i32) -> (i32, i32) {
    %c0_i32 = arith.constant 0 : i32
    %c0_i32_0 = arith.constant 0 : i32
    %c0_i32_1 = arith.constant 0 : i32
    return %c0_i32, %c0_i32_0 : i32, i32
  }
  func.func @transform_10(%arg0: i32) -> (i32, i32) {
    %c0_i32 = arith.constant 0 : i32
    %c0_i32_0 = arith.constant 0 : i32
    %c0_i32_1 = arith.constant 0 : i32
    return %c0_i32, %c0_i32_0 : i32, i32
  }
  func.func @transform_11(%arg0: i32) -> (i32, i32) {
    %c0_i32 = arith.constant 0 : i32
    %c0_i32_0 = arith.constant 0 : i32
    %c0_i32_1 = arith.constant 0 : i32
    return %c0_i32, %c0_i32_0 : i32, i32
  }
  func.func @transform_12(%arg0: i32) -> (i32, i32) {
    %c0_i32 = arith.constant 0 : i32
    %c0_i32_0 = arith.constant 0 : i32
    %c0_i32_1 = arith.constant 0 : i32
    return %c0_i32, %c0_i32_0 : i32, i32
  }
  func.func @transform_13(%arg0: i32) -> (i32, i32) {
    %c0_i32 = arith.constant 0 : i32
    %c0_i32_0 = arith.constant 0 : i32
    %c0_i32_1 = arith.constant 0 : i32
    return %c0_i32, %c0_i32_0 : i32, i32
  }
  func.func @transform_14(%arg0: i32) -> (i32, i32) {
    %c0_i32 = arith.constant 0 : i32
    %c0_i32_0 = arith.constant 0 : i32
    %c0_i32_1 = arith.constant 0 : i32
    return %c0_i32, %c0_i32_0 : i32, i32
  }
  func.func @transform_15(%arg0: i32) -> (i32, i32, i32) {
    %c0_i32 = arith.constant 0 : i32
    %c0_i32_0 = arith.constant 0 : i32
    %c0_i32_1 = arith.constant 0 : i32
    return %arg0, %c0_i32, %c0_i32_0 : i32, i32, i32
  }
}

</mosaic_0001>

<llo_original>
// kernel: tpu_custom_call.1
$region0: #{tpu_custom_call.1}
  #allocation0 [shape = 'u32[]', space=smem, size = 0x4, offset = 0x4, fixed_abs, tag = 'smem constant byte address 0x4 - core index']
  #allocation1 [shape = 'u32[72,128]{1,0:T(1,128)}', space=vmem, size = 0x9000, scoped, tag = 'internal scratch']
  #allocation2 [shape = 'f32[18,18,128]{2,1,0:T(8,128)}', space=vmem, size = 0x36000, scoped, tag = 'scratch operand']
  #allocation3 [shape = 'f32[256,128]{1,0:T(8,128)}', space=vmem, size = 0x20000, scoped, tag = 'scratch operand']
  %s0 = inlined_call_operand.vmem [shape: f32[2,18,18,128], index: 0, kind: input, shape index: {}]
  %s1 = inlined_call_operand.vmem [shape: f32[2,1,128], index: 1, kind: input, shape index: {}]
  %s2 = inlined_call_operand.vmem [shape: f32[2,1,128], index: 2, kind: input, shape index: {}]
  %s3 = inlined_call_operand.vmem [shape: f32[9,128,128], index: 3, kind: input, shape index: {}]
  %s4 = inlined_call_operand.vmem [shape: f32[1,128], index: 4, kind: input, shape index: {}]
  %s5 = inlined_call_operand.vmem [shape: f32[1,128], index: 5, kind: input, shape index: {}]
  %s6 = inlined_call_operand.vmem [shape: f32[1,128], index: 6, kind: input, shape index: {}]
  %s7 = inlined_call_operand.hbm [shape: f32[9,128,128], index: 7, kind: input, shape index: {}]
  %s8 = inlined_call_operand.vmem [shape: f32[1,128], index: 8, kind: input, shape index: {}]
  %s9 = inlined_call_operand.vmem [shape: f32[1,128], index: 9, kind: input, shape index: {}]
  %s10 = inlined_call_operand.vmem [shape: f32[1,128], index: 10, kind: input, shape index: {}]
  %s11 = inlined_call_operand.vmem [shape: f32[128,128], index: 11, kind: input, shape index: {}]
  %s12 = inlined_call_operand.vmem [shape: f32[128,128], index: 12, kind: input, shape index: {}]
  %s13 = inlined_call_operand.hbm [shape: f32[128,128], index: 13, kind: input, shape index: {}]
  %s14 = inlined_call_operand.vmem [shape: f32[1,128], index: 14, kind: input, shape index: {}]
  %s15 = inlined_call_operand.hbm [shape: f32[2,256,128], index: 15, kind: output, shape index: {}]
  %s16 = sld [smem:[#allocation0]]
  $region101: #{tpu_custom_call.1} parent=0
    _
  %s18 = ssub.s32 1, %s16
  %s19 = scalar_select 0, %s18, %s16
  $region1: #{tpu_custom_call.1} parent=0
    #allocation4 [shape = 'u8[589824]{0}', space=vmem, size = 0x90000, scoped, tag = 'input window, operand 7, single buffered']
    #allocation5 [shape = 's32[2]{0}', space=sflag, size = 0x8, scoped, tag = 'scoped memory for tpu_custom_call.1']
    #allocation6 [shape = 's32[2]{0}', space=sflag, size = 0x8, scoped, tag = 'scoped memory for tpu_custom_call.1']
    #allocation7 [shape = 'u8[65536]{0}', space=vmem, size = 0x10000, scoped, tag = 'input window, operand 13, single buffered']
    #allocation8 [shape = 's32[1]{0}', space=sflag, size = 0x4, scoped, tag = 'scoped memory for tpu_custom_call.1']
    #allocation9 [shape = 'u8[262144]{0}', space=vmem, size = 0x40000, scoped, tag = 'output window, operand 0']
    %20 = vsyncpa [#allocation5], 0
    %21 = vsyncpa [#allocation8], 0
    %22 = vsyncpa [#allocation6], 0
    %s23 = scalar_lea.sflag [#allocation6], 1
    %24 = vsyncpa %s23, 0
    loop: start=0, step=1, limit=4
    $region2: #{tpu_custom_call.1} parent=1 // loop_pre_header
      _
    $region3: #{tpu_custom_call.1} parent=1 // loop_header
      %s26 = sphi 0, %s30
      %p27 = scmp.ge.s32.totalorder %s26, 4
      %s36 = sphi 0, %s38
      %s39 = sphi 0, %s36
      %s40 = sphi 0, %s39
      %s56 = sphi 0, %s40
      %s62 = sphi 0, %s64
      %s65 = sphi 0, %s62
      %s66 = sphi 0, %s65
      %s82 = sphi 0, %s66
      %s88 = sphi 0, %s90
      %s91 = sphi 0, %s88
      %s92 = sphi 0, %s91
      %s108 = sphi 0, %s92
      %s112 = sphi 0, %s112
      %s114 = sphi 0, %s112
      %s115 = sphi 0, %s114
      %s129 = sphi 0, %s115
      %s133 = sphi 0, %s133
      %s135 = sphi 0, %s133
      %s136 = sphi 0, %s135
      %s150 = sphi 0, %s136
      %s154 = sphi 0, %s154
      %s156 = sphi 0, %s154
      %s157 = sphi 0, %s156
      %s171 = sphi 0, %s157
      %s175 = sphi 0, %s175
      %s177 = sphi 0, %s175
      %s178 = sphi 0, %s177
      %s192 = sphi 0, %s178
      %s196 = sphi 0, %s196
      %s198 = sphi 0, %s196
      %s199 = sphi 0, %s198
      %s213 = sphi 0, %s199
      %s217 = sphi 0, %s217
      %s219 = sphi 0, %s217
      %s220 = sphi 0, %s219
      %s234 = sphi 0, %s220
      %s238 = sphi 0, %s238
      %s240 = sphi 0, %s238
      %s241 = sphi 0, %s240
      %s255 = sphi 0, %s241
      %s259 = sphi 0, %s259
      %s261 = sphi 0, %s259
      %s262 = sphi 0, %s261
      %s276 = sphi 0, %s262
      %s280 = sphi 0, %s280
      %s282 = sphi 0, %s280
      %s283 = sphi 0, %s282
      %s297 = sphi 0, %s283
      %s301 = sphi 0, %s301
      %s303 = sphi 0, %s301
      %s304 = sphi 0, %s303
      %s318 = sphi 0, %s304
      %s322 = sphi 0, %s322
      %s324 = sphi 0, %s322
      %s325 = sphi 0, %s324
      %s339 = sphi 0, %s325
      %s343 = sphi 0, %s343
      %s345 = sphi 0, %s343
      %s346 = sphi 0, %s345
      %s360 = sphi 0, %s346
      %s366 = sphi 0, %s368
      %s369 = sphi 0, %s366
      %s370 = sphi 0, %s369
      %s386 = sphi 0, %s370
    $region4: #{tpu_custom_call.1} parent=1 // loop_header_branch
      %29 = sbr.rel (%p27) target = $region8
    $region5: #{tpu_custom_call.1} parent=1 // loop_body
      %s31 = ssub.s32 %s26, 1
      %s32 = ssub.s32 %s26, 2
      %s33 = sadd.s32 %s26, 1
      %s34 = ssub.s32 %s26, %s33
      %p35 = scmp.eq.s32.totalorder %s34, 0
      %s37 = sadd.s32 %s36, 1
      %s38 = scalar_select %p35, %s36, %s37
      %p41 = pneg %p35
      %p42 = scmp.eq.s32.totalorder %s26, 1
      %p43 = por %p41, %p42
      %p44 = scmp.ne.s32.totalorder %s36, %s39
      %p45 = scmp.eq.s32.totalorder %s26, 0
      %p46 = por %p44, %p45
      %p47 = scmp.ne.s32.totalorder %s36, %s39
      %p48 = scmp.eq.s32.totalorder %s31, 1
      %p49 = por %p47, %p48
      %p50 = scmp.ne.s32.totalorder %s39, %s40
      %p51 = scmp.eq.s32.totalorder %s31, 0
      %p52 = por %p50, %p51
      %p53 = scmp.ne.s32.totalorder %s39, %s40
      %p54 = scmp.eq.s32.totalorder %s32, 1
      %p55 = por %p53, %p54
      %p57 = scmp.ne.s32.totalorder %s40, %s56
      %p58 = scmp.eq.s32.totalorder %s32, 0
      %p59 = por %p57, %p58
      %s60 = ssub.s32 %s26, %s33
      %p61 = scmp.eq.s32.totalorder %s60, 0
      %s63 = sadd.s32 %s62, 1
      %s64 = scalar_select %p61, %s62, %s63
      %p67 = pneg %p61
      %p68 = scmp.eq.s32.totalorder %s26, 1
      %p69 = por %p67, %p68
      %p70 = scmp.ne.s32.totalorder %s62, %s65
      %p71 = scmp.eq.s32.totalorder %s26, 0
      %p72 = por %p70, %p71
      %p73 = scmp.ne.s32.totalorder %s62, %s65
      %p74 = scmp.eq.s32.totalorder %s31, 1
      %p75 = por %p73, %p74
      %p76 = scmp.ne.s32.totalorder %s65, %s66
      %p77 = scmp.eq.s32.totalorder %s31, 0
      %p78 = por %p76, %p77
      %p79 = scmp.ne.s32.totalorder %s65, %s66
      %p80 = scmp.eq.s32.totalorder %s32, 1
      %p81 = por %p79, %p80
      %p83 = scmp.ne.s32.totalorder %s66, %s82
      %p84 = scmp.eq.s32.totalorder %s32, 0
      %p85 = por %p83, %p84
      %s86 = ssub.s32 %s26, %s33
      %p87 = scmp.eq.s32.totalorder %s86, 0
      %s89 = sadd.s32 %s88, 1
      %s90 = scalar_select %p87, %s88, %s89
      %p93 = pneg %p87
      %p94 = scmp.eq.s32.totalorder %s26, 1
      %p95 = por %p93, %p94
      %p96 = scmp.ne.s32.totalorder %s88, %s91
      %p97 = scmp.eq.s32.totalorder %s26, 0
      %p98 = por %p96, %p97
      %p99 = scmp.ne.s32.totalorder %s88, %s91
      %p100 = scmp.eq.s32.totalorder %s31, 1
      %p101 = por %p99, %p100
      %p102 = scmp.ne.s32.totalorder %s91, %s92
      %p103 = scmp.eq.s32.totalorder %s31, 0
      %p104 = por %p102, %p103
      %p105 = scmp.ne.s32.totalorder %s91, %s92
      %p106 = scmp.eq.s32.totalorder %s32, 1
      %p107 = por %p105, %p106
      %p109 = scmp.ne.s32.totalorder %s92, %s108
      %p110 = scmp.eq.s32.totalorder %s32, 0
      %p111 = por %p109, %p110
      %s113 = sadd.s32 %s112, 1
      %p116 = scmp.eq.s32.totalorder %s26, 1
      %p117 = scmp.ne.s32.totalorder %s112, %s114
      %p118 = scmp.eq.s32.totalorder %s26, 0
      %p119 = por %p117, %p118
      %p120 = scmp.ne.s32.totalorder %s112, %s114
      %p121 = scmp.eq.s32.totalorder %s31, 1
      %p122 = por %p120, %p121
      %p123 = scmp.ne.s32.totalorder %s114, %s115
      %p124 = scmp.eq.s32.totalorder %s31, 0
      %p125 = por %p123, %p124
      %p126 = scmp.ne.s32.totalorder %s114, %s115
      %p127 = scmp.eq.s32.totalorder %s32, 1
      %p128 = por %p126, %p127
      %p130 = scmp.ne.s32.totalorder %s115, %s129
      %p131 = scmp.eq.s32.totalorder %s32, 0
      %p132 = por %p130, %p131
      %s134 = sadd.s32 %s133, 1
      %p137 = scmp.eq.s32.totalorder %s26, 1
      %p138 = scmp.ne.s32.totalorder %s133, %s135
      %p139 = scmp.eq.s32.totalorder %s26, 0
      %p140 = por %p138, %p139
      %p141 = scmp.ne.s32.totalorder %s133, %s135
      %p142 = scmp.eq.s32.totalorder %s31, 1
      %p143 = por %p141, %p142
      %p144 = scmp.ne.s32.totalorder %s135, %s136
      %p145 = scmp.eq.s32.totalorder %s31, 0
      %p146 = por %p144, %p145
      %p147 = scmp.ne.s32.totalorder %s135, %s136
      %p148 = scmp.eq.s32.totalorder %s32, 1
      %p149 = por %p147, %p148
      %p151 = scmp.ne.s32.totalorder %s136, %s150
      %p152 = scmp.eq.s32.totalorder %s32, 0
      %p153 = por %p151, %p152
      %s155 = sadd.s32 %s154, 1
      %p158 = scmp.eq.s32.totalorder %s26, 1
      %p159 = scmp.ne.s32.totalorder %s154, %s156
      %p160 = scmp.eq.s32.totalorder %s26, 0
      %p161 = por %p159, %p160
      %p162 = scmp.ne.s32.totalorder %s154, %s156
      %p163 = scmp.eq.s32.totalorder %s31, 1
      %p164 = por %p162, %p163
      %p165 = scmp.ne.s32.totalorder %s156, %s157
      %p166 = scmp.eq.s32.totalorder %s31, 0
      %p167 = por %p165, %p166
      %p168 = scmp.ne.s32.totalorder %s156, %s157
      %p169 = scmp.eq.s32.totalorder %s32, 1
      %p170 = por %p168, %p169
      %p172 = scmp.ne.s32.totalorder %s157, %s171
      %p173 = scmp.eq.s32.totalorder %s32, 0
      %p174 = por %p172, %p173
      %s176 = sadd.s32 %s175, 1
      %p179 = scmp.eq.s32.totalorder %s26, 1
      %p180 = scmp.ne.s32.totalorder %s175, %s177
      %p181 = scmp.eq.s32.totalorder %s26, 0
      %p182 = por %p180, %p181
      %p183 = scmp.ne.s32.totalorder %s175, %s177
      %p184 = scmp.eq.s32.totalorder %s31, 1
      %p185 = por %p183, %p184
      %p186 = scmp.ne.s32.totalorder %s177, %s178
      %p187 = scmp.eq.s32.totalorder %s31, 0
      %p188 = por %p186, %p187
      %p189 = scmp.ne.s32.totalorder %s177, %s178
      %p190 = scmp.eq.s32.totalorder %s32, 1
      %p191 = por %p189, %p190
      %p193 = scmp.ne.s32.totalorder %s178, %s192
      %p194 = scmp.eq.s32.totalorder %s32, 0
      %p195 = por %p193, %p194
      %s197 = sadd.s32 %s196, 1
      %p200 = scmp.eq.s32.totalorder %s26, 1
      %p201 = scmp.ne.s32.totalorder %s196, %s198
      %p202 = scmp.eq.s32.totalorder %s26, 0
      %p203 = por %p201, %p202
      %p204 = scmp.ne.s32.totalorder %s196, %s198
      %p205 = scmp.eq.s32.totalorder %s31, 1
      %p206 = por %p204, %p205
      %p207 = scmp.ne.s32.totalorder %s198, %s199
      %p208 = scmp.eq.s32.totalorder %s31, 0
      %p209 = por %p207, %p208
      %p210 = scmp.ne.s32.totalorder %s198, %s199
      %p211 = scmp.eq.s32.totalorder %s32, 1
      %p212 = por %p210, %p211
      %p214 = scmp.ne.s32.totalorder %s199, %s213
      %p215 = scmp.eq.s32.totalorder %s32, 0
      %p216 = por %p214, %p215
      %s218 = sadd.s32 %s217, 1
      %p221 = scmp.eq.s32.totalorder %s26, 1
      %p222 = scmp.ne.s32.totalorder %s217, %s219
      %p223 = scmp.eq.s32.totalorder %s26, 0
      %p224 = por %p222, %p223
      %p225 = scmp.ne.s32.totalorder %s217, %s219
      %p226 = scmp.eq.s32.totalorder %s31, 1
      %p227 = por %p225, %p226
      %p228 = scmp.ne.s32.totalorder %s219, %s220
      %p229 = scmp.eq.s32.totalorder %s31, 0
      %p230 = por %p228, %p229
      %p231 = scmp.ne.s32.totalorder %s219, %s220
      %p232 = scmp.eq.s32.totalorder %s32, 1
      %p233 = por %p231, %p232
      %p235 = scmp.ne.s32.totalorder %s220, %s234
      %p236 = scmp.eq.s32.totalorder %s32, 0
      %p237 = por %p235, %p236
      %s239 = sadd.s32 %s238, 1
      %p242 = scmp.eq.s32.totalorder %s26, 1
      %p243 = scmp.ne.s32.totalorder %s238, %s240
      %p244 = scmp.eq.s32.totalorder %s26, 0
      %p245 = por %p243, %p244
      %p246 = scmp.ne.s32.totalorder %s238, %s240
      %p247 = scmp.eq.s32.totalorder %s31, 1
      %p248 = por %p246, %p247
      %p249 = scmp.ne.s32.totalorder %s240, %s241
      %p250 = scmp.eq.s32.totalorder %s31, 0
      %p251 = por %p249, %p250
      %p252 = scmp.ne.s32.totalorder %s240, %s241
      %p253 = scmp.eq.s32.totalorder %s32, 1
      %p254 = por %p252, %p253
      %p256 = scmp.ne.s32.totalorder %s241, %s255
      %p257 = scmp.eq.s32.totalorder %s32, 0
      %p258 = por %p256, %p257
      %s260 = sadd.s32 %s259, 1
      %p263 = scmp.eq.s32.totalorder %s26, 1
      %p264 = scmp.ne.s32.totalorder %s259, %s261
      %p265 = scmp.eq.s32.totalorder %s26, 0
      %p266 = por %p264, %p265
      %p267 = scmp.ne.s32.totalorder %s259, %s261
      %p268 = scmp.eq.s32.totalorder %s31, 1
      %p269 = por %p267, %p268
      %p270 = scmp.ne.s32.totalorder %s261, %s262
      %p271 = scmp.eq.s32.totalorder %s31, 0
      %p272 = por %p270, %p271
      %p273 = scmp.ne.s32.totalorder %s261, %s262
      %p274 = scmp.eq.s32.totalorder %s32, 1
      %p275 = por %p273, %p274
      %p277 = scmp.ne.s32.totalorder %s262, %s276
      %p278 = scmp.eq.s32.totalorder %s32, 0
      %p279 = por %p277, %p278
      %s281 = sadd.s32 %s280, 1
      %p284 = scmp.eq.s32.totalorder %s26, 1
      %p285 = scmp.ne.s32.totalorder %s280, %s282
      %p286 = scmp.eq.s32.totalorder %s26, 0
      %p287 = por %p285, %p286
      %p288 = scmp.ne.s32.totalorder %s280, %s282
      %p289 = scmp.eq.s32.totalorder %s31, 1
      %p290 = por %p288, %p289
      %p291 = scmp.ne.s32.totalorder %s282, %s283
      %p292 = scmp.eq.s32.totalorder %s31, 0
      %p293 = por %p291, %p292
      %p294 = scmp.ne.s32.totalorder %s282, %s283
      %p295 = scmp.eq.s32.totalorder %s32, 1
      %p296 = por %p294, %p295
      %p298 = scmp.ne.s32.totalorder %s283, %s297
      %p299 = scmp.eq.s32.totalorder %s32, 0
      %p300 = por %p298, %p299
      %s302 = sadd.s32 %s301, 1
      %p305 = scmp.eq.s32.totalorder %s26, 1
      %p306 = scmp.ne.s32.totalorder %s301, %s303
      %p307 = scmp.eq.s32.totalorder %s26, 0
      %p308 = por %p306, %p307
      %p309 = scmp.ne.s32.totalorder %s301, %s303
      %p310 = scmp.eq.s32.totalorder %s31, 1
      %p311 = por %p309, %p310
      %p312 = scmp.ne.s32.totalorder %s303, %s304
      %p313 = scmp.eq.s32.totalorder %s31, 0
      %p314 = por %p312, %p313
      %p315 = scmp.ne.s32.totalorder %s303, %s304
      %p316 = scmp.eq.s32.totalorder %s32, 1
      %p317 = por %p315, %p316
      %p319 = scmp.ne.s32.totalorder %s304, %s318
      %p320 = scmp.eq.s32.totalorder %s32, 0
      %p321 = por %p319, %p320
      %s323 = sadd.s32 %s322, 1
      %p326 = scmp.eq.s32.totalorder %s26, 1
      %p327 = scmp.ne.s32.totalorder %s322, %s324
      %p328 = scmp.eq.s32.totalorder %s26, 0
      %p329 = por %p327, %p328
      %p330 = scmp.ne.s32.totalorder %s322, %s324
      %p331 = scmp.eq.s32.totalorder %s31, 1
      %p332 = por %p330, %p331
      %p333 = scmp.ne.s32.totalorder %s324, %s325
      %p334 = scmp.eq.s32.totalorder %s31, 0
      %p335 = por %p333, %p334
      %p336 = scmp.ne.s32.totalorder %s324, %s325
      %p337 = scmp.eq.s32.totalorder %s32, 1
      %p338 = por %p336, %p337
      %p340 = scmp.ne.s32.totalorder %s325, %s339
      %p341 = scmp.eq.s32.totalorder %s32, 0
      %p342 = por %p340, %p341
      %s344 = sadd.s32 %s343, 1
      %p347 = scmp.eq.s32.totalorder %s26, 1
      %p348 = scmp.ne.s32.totalorder %s343, %s345
      %p349 = scmp.eq.s32.totalorder %s26, 0
      %p350 = por %p348, %p349
      %p351 = scmp.ne.s32.totalorder %s343, %s345
      %p352 = scmp.eq.s32.totalorder %s31, 1
      %p353 = por %p351, %p352
      %p354 = scmp.ne.s32.totalorder %s345, %s346
      %p355 = scmp.eq.s32.totalorder %s31, 0
      %p356 = por %p354, %p355
      %p357 = scmp.ne.s32.totalorder %s345, %s346
      %p358 = scmp.eq.s32.totalorder %s32, 1
      %p359 = por %p357, %p358
      %p361 = scmp.ne.s32.totalorder %s346, %s360
      %p362 = scmp.eq.s32.totalorder %s32, 0
      %p363 = por %p361, %p362
      %s364 = ssub.s32 %s26, %s33
      %p365 = scmp.eq.s32.totalorder %s364, 0
      %s367 = sadd.s32 %s366, 1
      %s368 = scalar_select %p365, %s366, %s367
      %p371 = pneg %p365
      %p372 = scmp.eq.s32.totalorder %s26, 1
      %p373 = por %p371, %p372
      %p374 = scmp.ne.s32.totalorder %s366, %s369
      %p375 = scmp.eq.s32.totalorder %s26, 0
      %p376 = por %p374, %p375
      %p377 = scmp.ne.s32.totalorder %s366, %s369
      %p378 = scmp.eq.s32.totalorder %s31, 1
      %p379 = por %p377, %p378
      %p380 = scmp.ne.s32.totalorder %s369, %s370
      %p381 = scmp.eq.s32.totalorder %s31, 0
      %p382 = por %p380, %p381
      %p383 = scmp.ne.s32.totalorder %s369, %s370
      %p384 = scmp.eq.s32.totalorder %s32, 1
      %p385 = por %p383, %p384
      %p387 = scmp.ne.s32.totalorder %s370, %s386
      %p388 = scmp.eq.s32.totalorder %s32, 0
      %p389 = por %p387, %p388
      %p390 = scmp.le.s32.totalorder 1, %s26
      %p391 = scmp.lt.s32.totalorder %s26, 3
      %p392 = pnand %p390, %p391
      %p393 = pneg %p392
      // Predicated region
      $region9: #{tpu_custom_call.1} parent=5 // pred_check
        _
      $region10: #{tpu_custom_call.1} parent=5 // pred_check_branch
        %395 = sbr.rel (%p392) target = $region12
      $region11: #{tpu_custom_call.1} parent=5 // pred_region
        %s396 = ssub.s32 %s26, 1
        // Predicated region
        $region13: #{tpu_custom_call.1} parent=11 // pred_check
          %p397 = pneg %p125
        $region14: #{tpu_custom_call.1} parent=11 // pred_check_branch
          %399 = sbr.rel (%p397) target = $region16
        $region15: #{tpu_custom_call.1} parent=11 // pred_region
          _
        $region16: #{tpu_custom_call.1} parent=11 // pred_fallthru
          _
        // Predicated region
        $region17: #{tpu_custom_call.1} parent=11 // pred_check
          %p400 = pneg %p146
        $region18: #{tpu_custom_call.1} parent=11 // pred_check_branch
          %402 = sbr.rel (%p400) target = $region20
        $region19: #{tpu_custom_call.1} parent=11 // pred_region
          _
        $region20: #{tpu_custom_call.1} parent=11 // pred_fallthru
          _
        // Predicated region
        $region21: #{tpu_custom_call.1} parent=11 // pred_check
          %p403 = pneg %p167
        $region22: #{tpu_custom_call.1} parent=11 // pred_check_branch
          %405 = sbr.rel (%p403) target = $region24
        $region23: #{tpu_custom_call.1} parent=11 // pred_region
          _
        $region24: #{tpu_custom_call.1} parent=11 // pred_fallthru
          _
        // Predicated region
        $region25: #{tpu_custom_call.1} parent=11 // pred_check
          %p406 = pneg %p188
        $region26: #{tpu_custom_call.1} parent=11 // pred_check_branch
          %408 = sbr.rel (%p406) target = $region28
        $region27: #{tpu_custom_call.1} parent=11 // pred_region
          _
        $region28: #{tpu_custom_call.1} parent=11 // pred_fallthru
          _
        // Predicated region
        $region29: #{tpu_custom_call.1} parent=11 // pred_check
          %p409 = pneg %p209
        $region30: #{tpu_custom_call.1} parent=11 // pred_check_branch
          %411 = sbr.rel (%p409) target = $region32
        $region31: #{tpu_custom_call.1} parent=11 // pred_region
          %413 = vsyncadd [#allocation5], 0
          %s414 = sshll.u32 %s7, 4
          %s415 = int_to_ptr.hbm [resolvable:$true] %s414
          %s416 = sshll.u32 [#allocation4], 4
          %s417 = int_to_ptr.vmem [resolvable:$true] %s416
          %422 = dma.hbm_to_vmem [thread:$0]  %s415, 18432, %s417, [#allocation5], 128, 128, 8
        $region32: #{tpu_custom_call.1} parent=11 // pred_fallthru
          _
        // Predicated region
        $region33: #{tpu_custom_call.1} parent=11 // pred_check
          %p423 = pneg %p230
        $region34: #{tpu_custom_call.1} parent=11 // pred_check_branch
          %425 = sbr.rel (%p423) target = $region36
        $region35: #{tpu_custom_call.1} parent=11 // pred_region
          _
        $region36: #{tpu_custom_call.1} parent=11 // pred_fallthru
          _
        // Predicated region
        $region37: #{tpu_custom_call.1} parent=11 // pred_check
          %p426 = pneg %p251
        $region38: #{tpu_custom_call.1} parent=11 // pred_check_branch
          %428 = sbr.rel (%p426) target = $region40
        $region39: #{tpu_custom_call.1} parent=11 // pred_region
          _
        $region40: #{tpu_custom_call.1} parent=11 // pred_fallthru
          _
        // Predicated region
        $region41: #{tpu_custom_call.1} parent=11 // pred_check
          %p429 = pneg %p272
        $region42: #{tpu_custom_call.1} parent=11 // pred_check_branch
          %431 = sbr.rel (%p429) target = $region44
        $region43: #{tpu_custom_call.1} parent=11 // pred_region
          _
        $region44: #{tpu_custom_call.1} parent=11 // pred_fallthru
          _
        // Predicated region
        $region45: #{tpu_custom_call.1} parent=11 // pred_check
          %p432 = pneg %p293
        $region46: #{tpu_custom_call.1} parent=11 // pred_check_branch
          %434 = sbr.rel (%p432) target = $region48
        $region47: #{tpu_custom_call.1} parent=11 // pred_region
          _
        $region48: #{tpu_custom_call.1} parent=11 // pred_fallthru
          _
        // Predicated region
        $region49: #{tpu_custom_call.1} parent=11 // pred_check
          %p435 = pneg %p314
        $region50: #{tpu_custom_call.1} parent=11 // pred_check_branch
          %437 = sbr.rel (%p435) target = $region52
        $region51: #{tpu_custom_call.1} parent=11 // pred_region
          _
        $region52: #{tpu_custom_call.1} parent=11 // pred_fallthru
          _
        // Predicated region
        $region53: #{tpu_custom_call.1} parent=11 // pred_check
          %p438 = pneg %p335
        $region54: #{tpu_custom_call.1} parent=11 // pred_check_branch
          %440 = sbr.rel (%p438) target = $region56
        $region55: #{tpu_custom_call.1} parent=11 // pred_region
          %442 = vsyncadd [#allocation8], 0
          %s443 = sshll.u32 %s13, 4
          %s444 = int_to_ptr.hbm [resolvable:$true] %s443
          %s445 = sshll.u32 [#allocation7], 4
          %s446 = int_to_ptr.vmem [resolvable:$true] %s445
          %451 = dma.hbm_to_vmem [thread:$0]  %s444, 2048, %s446, [#allocation8], 128, 128, 8
        $region56: #{tpu_custom_call.1} parent=11 // pred_fallthru
          _
        // Predicated region
        $region57: #{tpu_custom_call.1} parent=11 // pred_check
          %p452 = pneg %p356
        $region58: #{tpu_custom_call.1} parent=11 // pred_check_branch
          %454 = sbr.rel (%p452) target = $region60
        $region59: #{tpu_custom_call.1} parent=11 // pred_region
          _
        $region60: #{tpu_custom_call.1} parent=11 // pred_fallthru
          _
      $region12: #{tpu_custom_call.1} parent=5 // pred_fallthru
        _
      %p455 = scmp.lt.s32.totalorder %s26, 2
      // Predicated region
      $region61: #{tpu_custom_call.1} parent=5 // pred_check
        %p456 = pneg %p455
      $region62: #{tpu_custom_call.1} parent=5 // pred_check_branch
        %458 = sbr.rel (%p456) target = $region64
      $region63: #{tpu_custom_call.1} parent=5 // pred_region
        // Predicated region
        $region65: #{tpu_custom_call.1} parent=63 // pred_check
          %p459 = pneg %p46
        $region66: #{tpu_custom_call.1} parent=63 // pred_check_branch
          %461 = sbr.rel (%p459) target = $region68
        $region67: #{tpu_custom_call.1} parent=63 // pred_region
          %p462 = scmp.lt.s32.totalorder %s26, 1
          %s463 = scalar_select %p462, %s26, 1
          %s464 = smul.addr %s463, 54
          %s465 = smul.addr %s464, 8
          %s466 = scalar_lea.vmem %s0, %s465
        $region68: #{tpu_custom_call.1} parent=63 // pred_fallthru
          _
        // Predicated region
        $region69: #{tpu_custom_call.1} parent=63 // pred_check
          %p467 = pneg %p72
        $region70: #{tpu_custom_call.1} parent=63 // pred_check_branch
          %469 = sbr.rel (%p467) target = $region72
        $region71: #{tpu_custom_call.1} parent=63 // pred_region
          %p470 = scmp.lt.s32.totalorder %s26, 1
          %s471 = scalar_select %p470, %s26, 1
          %s472 = scalar_lea.vmem %s1, %s471
        $region72: #{tpu_custom_call.1} parent=63 // pred_fallthru
          _
        // Predicated region
        $region73: #{tpu_custom_call.1} parent=63 // pred_check
          %p473 = pneg %p98
        $region74: #{tpu_custom_call.1} parent=63 // pred_check_branch
          %475 = sbr.rel (%p473) target = $region76
        $region75: #{tpu_custom_call.1} parent=63 // pred_region
          %p476 = scmp.lt.s32.totalorder %s26, 1
          %s477 = scalar_select %p476, %s26, 1
          %s478 = scalar_lea.vmem %s2, %s477
        $region76: #{tpu_custom_call.1} parent=63 // pred_fallthru
          _
      $region64: #{tpu_custom_call.1} parent=5 // pred_fallthru
        _
      %p479 = scmp.le.s32.totalorder 1, %s26
      %p480 = scmp.lt.s32.totalorder %s26, 3
      %p481 = pnand %p479, %p480
      %p482 = pneg %p481
      // Predicated region
      $region77: #{tpu_custom_call.1} parent=5 // pred_check
        _
      $region78: #{tpu_custom_call.1} parent=5 // pred_check_branch
        %484 = sbr.rel (%p481) target = $region80
      $region79: #{tpu_custom_call.1} parent=5 // pred_region
        %s485 = ssub.s32 %s26, 1
        // Predicated region
        $region81: #{tpu_custom_call.1} parent=79 // pred_check
          %p486 = pneg %p209
        $region82: #{tpu_custom_call.1} parent=79 // pred_check_branch
          %488 = sbr.rel (%p486) target = $region84
        $region83: #{tpu_custom_call.1} parent=79 // pred_region
          %490 = dma.done [#allocation5], 18432
        $region84: #{tpu_custom_call.1} parent=79 // pred_fallthru
          _
        // Predicated region
        $region85: #{tpu_custom_call.1} parent=79 // pred_check
          %p491 = pneg %p335
        $region86: #{tpu_custom_call.1} parent=79 // pred_check_branch
          %493 = sbr.rel (%p491) target = $region88
        $region87: #{tpu_custom_call.1} parent=79 // pred_region
          %495 = dma.done [#allocation8], 2048
        $region88: #{tpu_custom_call.1} parent=79 // pred_fallthru
          _
        %p496 = scmp.lt.s32.totalorder %s31, 1
        %s497 = scalar_select %p496, %s31, 1
        %s498 = smul.addr %s497, 54
        %s499 = smul.addr %s498, 8
        %s500 = scalar_lea.vmem %s0, %s499
        %p501 = pneg %p52
        %p502 = pneg %p49
        %p503 = scmp.lt.s32.totalorder %s31, 1
        %s504 = scalar_select %p503, %s31, 1
        %s505 = scalar_lea.vmem %s1, %s504
        %p506 = pneg %p78
        %p507 = pneg %p75
        %p508 = scmp.lt.s32.totalorder %s31, 1
        %s509 = scalar_select %p508, %s31, 1
        %s510 = scalar_lea.vmem %s2, %s509
        %p511 = pneg %p104
        %p512 = pneg %p101
        %p513 = pneg %p125
        %p514 = pneg %p122
        %p515 = pneg %p146
        %p516 = pneg %p143
        %p517 = pneg %p167
        %p518 = pneg %p164
        %p519 = pneg %p188
        %p520 = pneg %p185
        %p521 = pneg %p209
        %p522 = pneg %p206
        %p523 = pneg %p230
        %p524 = pneg %p227
        %p525 = pneg %p251
        %p526 = pneg %p248
        %p527 = pneg %p272
        %p528 = pneg %p269
        %p529 = pneg %p293
        %p530 = pneg %p290
        %p531 = pneg %p314
        %p532 = pneg %p311
        %p533 = pneg %p335
        %p534 = pneg %p332
        %p535 = pneg %p356
        %p536 = pneg %p353
        %p537 = pneg %p382
        %p538 = pneg %p379
        %s539 = sand.u32 %s369, 1
        %s540 = scalar_lea.sflag [#allocation6], %s539
        %s541 = sand.u32 %s369, 1
        %s542 = smul.addr %s541, 256
        %s543 = scalar_lea.vmem [#allocation9], %s542
        %p544 = scmp.lt.s32.totalorder %s31, 1
        %s545 = scalar_select %p544, %s31, 1
        %s546 = smul.addr %s545, 54
        %s547 = smul.addr %s546, 8
        %s548 = scalar_lea.vmem %s0, %s547
        %p549 = scmp.lt.s32.totalorder %s31, 1
        %s550 = scalar_select %p549, %s31, 1
        %s551 = scalar_lea.vmem %s1, %s550
        %p552 = scmp.lt.s32.totalorder %s31, 1
        %s553 = scalar_select %p552, %s31, 1
        %s554 = scalar_lea.vmem %s2, %s553
        %v555 = vld [vmem:[%s11] sm:$0xff]
        %v556 = vld [vmem:[%s11 + $0x8] sm:$0xff]
        %v557 = vld [vmem:[%s11 + $0x10] sm:$0xff]
        %v558 = vld [vmem:[%s11 + $0x18] sm:$0xff]
        %v559 = vld [vmem:[%s11 + $0x20] sm:$0xff]
        %v560 = vld [vmem:[%s11 + $0x28] sm:$0xff]
        %v561 = vld [vmem:[%s11 + $0x30] sm:$0xff]
        %v562 = vld [vmem:[%s11 + $0x38] sm:$0xff]
        %v563 = vld [vmem:[%s11 + $0x40] sm:$0xff]
        %v564 = vld [vmem:[%s11 + $0x48] sm:$0xff]
        %v565 = vld [vmem:[%s11 + $0x50] sm:$0xff]
        %v566 = vld [vmem:[%s11 + $0x58] sm:$0xff]
        %v567 = vld [vmem:[%s11 + $0x60] sm:$0xff]
        %v568 = vld [vmem:[%s11 + $0x68] sm:$0xff]
        %v569 = vld [vmem:[%s11 + $0x70] sm:$0xff]
        %v570 = vld [vmem:[%s11 + $0x78] sm:$0xff]
        %v571 = vld [vmem:[%s12] sm:$0xff]
        %v572 = vld [vmem:[%s12 + $0x8] sm:$0xff]
        %v573 = vld [vmem:[%s12 + $0x10] sm:$0xff]
        %v574 = vld [vmem:[%s12 + $0x18] sm:$0xff]
        %v575 = vld [vmem:[%s12 + $0x20] sm:$0xff]
        %v576 = vld [vmem:[%s12 + $0x28] sm:$0xff]
        %v577 = vld [vmem:[%s12 + $0x30] sm:$0xff]
        %v578 = vld [vmem:[%s12 + $0x38] sm:$0xff]
        %v579 = vld [vmem:[%s12 + $0x40] sm:$0xff]
        %v580 = vld [vmem:[%s12 + $0x48] sm:$0xff]
        %v581 = vld [vmem:[%s12 + $0x50] sm:$0xff]
        %v582 = vld [vmem:[%s12 + $0x58] sm:$0xff]
        %v583 = vld [vmem:[%s12 + $0x60] sm:$0xff]
        %v584 = vld [vmem:[%s12 + $0x68] sm:$0xff]
        %v585 = vld [vmem:[%s12 + $0x70] sm:$0xff]
        %v586 = vld [vmem:[%s12 + $0x78] sm:$0xff]
        %v587 = vld [vmem:[%s548] sm:$0xff]
        %v588 = vld [vmem:[%s548 + $0x8] sm:$0xff]
        %v589 = vld [vmem:[%s548 + $0x10] sm:$0x3]
        %v590 = vld [vmem:[%s548 + $0x18] sm:$0xff]
        %v591 = vld [vmem:[%s548 + $0x20] sm:$0xff]
        %v592 = vld [vmem:[%s548 + $0x28] sm:$0x3]
        %v593 = vld [vmem:[%s548 + $0x30] sm:$0xff]
        %v594 = vld [vmem:[%s548 + $0x38] sm:$0xff]
        %v595 = vld [vmem:[%s548 + $0x40] sm:$0x3]
        %v596 = vld [vmem:[%s548 + $0x48] sm:$0xff]
        %v597 = vld [vmem:[%s548 + $0x50] sm:$0xff]
        %v598 = vld [vmem:[%s548 + $0x58] sm:$0x3]
        %v599 = vld [vmem:[%s548 + $0x60] sm:$0xff]
        %v600 = vld [vmem:[%s548 + $0x68] sm:$0xff]
        %v601 = vld [vmem:[%s548 + $0x70] sm:$0x3]
        %v602 = vld [vmem:[%s548 + $0x78] sm:$0xff]
        %v603 = vld [vmem:[%s548 + $0x80] sm:$0xff]
        %v604 = vld [vmem:[%s548 + $0x88] sm:$0x3]
        %v605 = vld [vmem:[%s548 + $0x90] sm:$0xff]
        %v606 = vld [vmem:[%s548 + $0x98] sm:$0xff]
        %v607 = vld [vmem:[%s548 + $0xa0] sm:$0x3]
        %v608 = vld [vmem:[%s548 + $0xa8] sm:$0xff]
        %v609 = vld [vmem:[%s548 + $0xb0] sm:$0xff]
        %v610 = vld [vmem:[%s548 + $0xb8] sm:$0x3]
        %v611 = vld [vmem:[%s548 + $0xc0] sm:$0xff]
        %v612 = vld [vmem:[%s548 + $0xc8] sm:$0xff]
        %v613 = vld [vmem:[%s548 + $0xd0] sm:$0x3]
        %v614 = vld [vmem:[%s548 + $0xd8] sm:$0xff]
        %v615 = vld [vmem:[%s548 + $0xe0] sm:$0xff]
        %v616 = vld [vmem:[%s548 + $0xe8] sm:$0x3]
        %v617 = vld [vmem:[%s548 + $0xf0] sm:$0xff]
        %v618 = vld [vmem:[%s548 + $0xf8] sm:$0xff]
        %v619 = vld [vmem:[%s548 + $0x100] sm:$0x3]
        %v620 = vld [vmem:[%s548 + $0x108] sm:$0xff]
        %v621 = vld [vmem:[%s548 + $0x110] sm:$0xff]
        %v622 = vld [vmem:[%s548 + $0x118] sm:$0x3]
        %v623 = vld [vmem:[%s548 + $0x120] sm:$0xff]
        %v624 = vld [vmem:[%s548 + $0x128] sm:$0xff]
        %v625 = vld [vmem:[%s548 + $0x130] sm:$0x3]
        %v626 = vld [vmem:[%s548 + $0x138] sm:$0xff]
        %v627 = vld [vmem:[%s548 + $0x140] sm:$0xff]
        %v628 = vld [vmem:[%s548 + $0x148] sm:$0x3]
        %v629 = vld [vmem:[%s548 + $0x150] sm:$0xff]
        %v630 = vld [vmem:[%s548 + $0x158] sm:$0xff]
        %v631 = vld [vmem:[%s548 + $0x160] sm:$0x3]
        %v632 = vld [vmem:[%s548 + $0x168] sm:$0xff]
        %v633 = vld [vmem:[%s548 + $0x170] sm:$0xff]
        %v634 = vld [vmem:[%s548 + $0x178] sm:$0x3]
        %v635 = vld [vmem:[%s548 + $0x180] sm:$0xff]
        %v636 = vld [vmem:[%s548 + $0x188] sm:$0xff]
        %v637 = vld [vmem:[%s548 + $0x190] sm:$0x3]
        %v638 = vld [vmem:[%s548 + $0x198] sm:$0xff]
        %v639 = vld [vmem:[%s548 + $0x1a0] sm:$0xff]
        %v640 = vld [vmem:[%s548 + $0x1a8] sm:$0x3]
        %vm695 = vcmask 1046528
        %v696 = vrot.slane %v587, 1
        %v697 = vrot.slane %v588, 1
        %v698 = vsel %vm695, %v696, %v697
        %v699 = vrot.slane %v589, 1
        %v700 = vsel %vm695, %v697, %v699
        %v701 = vrot.slane %v590, 1
        %v702 = vrot.slane %v591, 1
        %v703 = vsel %vm695, %v701, %v702
        %v704 = vrot.slane %v592, 1
        %v705 = vsel %vm695, %v702, %v704
        %v706 = vrot.slane %v593, 1
        %v707 = vrot.slane %v594, 1
        %v708 = vsel %vm695, %v706, %v707
        %v709 = vrot.slane %v595, 1
        %v710 = vsel %vm695, %v707, %v709
        %v711 = vrot.slane %v596, 1
        %v712 = vrot.slane %v597, 1
        %v713 = vsel %vm695, %v711, %v712
        %v714 = vrot.slane %v598, 1
        %v715 = vsel %vm695, %v712, %v714
        %v716 = vrot.slane %v599, 1
        %v717 = vrot.slane %v600, 1
        %v718 = vsel %vm695, %v716, %v717
        %v719 = vrot.slane %v601, 1
        %v720 = vsel %vm695, %v717, %v719
        %v721 = vrot.slane %v602, 1
        %v722 = vrot.slane %v603, 1
        %v723 = vsel %vm695, %v721, %v722
        %v724 = vrot.slane %v604, 1
        %v725 = vsel %vm695, %v722, %v724
        %v726 = vrot.slane %v605, 1
        %v727 = vrot.slane %v606, 1
        %v728 = vsel %vm695, %v726, %v727
        %v729 = vrot.slane %v607, 1
        %v730 = vsel %vm695, %v727, %v729
        %v731 = vrot.slane %v608, 1
        %v732 = vrot.slane %v609, 1
        %v733 = vsel %vm695, %v731, %v732
        %v734 = vrot.slane %v610, 1
        %v735 = vsel %vm695, %v732, %v734
        %v736 = vrot.slane %v611, 1
        %v737 = vrot.slane %v612, 1
        %v738 = vsel %vm695, %v736, %v737
        %v739 = vrot.slane %v613, 1
        %v740 = vsel %vm695, %v737, %v739
        %v741 = vrot.slane %v614, 1
        %v742 = vrot.slane %v615, 1
        %v743 = vsel %vm695, %v741, %v742
        %v744 = vrot.slane %v616, 1
        %v745 = vsel %vm695, %v742, %v744
        %v746 = vrot.slane %v617, 1
        %v747 = vrot.slane %v618, 1
        %v748 = vsel %vm695, %v746, %v747
        %v749 = vrot.slane %v619, 1
        %v750 = vsel %vm695, %v747, %v749
        %v751 = vrot.slane %v620, 1
        %v752 = vrot.slane %v621, 1
        %v753 = vsel %vm695, %v751, %v752
        %v754 = vrot.slane %v622, 1
        %v755 = vsel %vm695, %v752, %v754
        %v756 = vrot.slane %v623, 1
        %v757 = vrot.slane %v624, 1
        %v758 = vsel %vm695, %v756, %v757
        %v759 = vrot.slane %v625, 1
        %v760 = vsel %vm695, %v757, %v759
        %v761 = vrot.slane %v626, 1
        %v762 = vrot.slane %v627, 1
        %v763 = vsel %vm695, %v761, %v762
        %v764 = vrot.slane %v628, 1
        %v765 = vsel %vm695, %v762, %v764
        %v766 = vrot.slane %v629, 1
        %v767 = vrot.slane %v630, 1
        %v768 = vsel %vm695, %v766, %v767
        %v769 = vrot.slane %v631, 1
        %v770 = vsel %vm695, %v767, %v769
        %v771 = vrot.slane %v632, 1
        %v772 = vrot.slane %v633, 1
        %v773 = vsel %vm695, %v771, %v772
        %v774 = vrot.slane %v634, 1
        %v775 = vsel %vm695, %v772, %v774
        %v776 = vrot.slane %v635, 1
        %v777 = vrot.slane %v636, 1
        %v778 = vsel %vm695, %v776, %v777
        %v779 = vrot.slane %v637, 1
        %v780 = vsel %vm695, %v777, %v779
        %v781 = vrot.slane %v638, 1
        %v782 = vrot.slane %v639, 1
        %v783 = vsel %vm695, %v781, %v782
        %v784 = vrot.slane %v640, 1
        %v785 = vsel %vm695, %v782, %v784
        %vm822 = vcmask 1045504
        %v823 = vrot.slane %v587, 2
        %v824 = vrot.slane %v588, 2
        %v825 = vsel %vm822, %v823, %v824
        %v826 = vrot.slane %v589, 2
        %v827 = vsel %vm822, %v824, %v826
        %v828 = vrot.slane %v590, 2
        %v829 = vrot.slane %v591, 2
        %v830 = vsel %vm822, %v828, %v829
        %v831 = vrot.slane %v592, 2
        %v832 = vsel %vm822, %v829, %v831
        %v833 = vrot.slane %v593, 2
        %v834 = vrot.slane %v594, 2
        %v835 = vsel %vm822, %v833, %v834
        %v836 = vrot.slane %v595, 2
        %v837 = vsel %vm822, %v834, %v836
        %v838 = vrot.slane %v596, 2
        %v839 = vrot.slane %v597, 2
        %v840 = vsel %vm822, %v838, %v839
        %v841 = vrot.slane %v598, 2
        %v842 = vsel %vm822, %v839, %v841
        %v843 = vrot.slane %v599, 2
        %v844 = vrot.slane %v600, 2
        %v845 = vsel %vm822, %v843, %v844
        %v846 = vrot.slane %v601, 2
        %v847 = vsel %vm822, %v844, %v846
        %v848 = vrot.slane %v602, 2
        %v849 = vrot.slane %v603, 2
        %v850 = vsel %vm822, %v848, %v849
        %v851 = vrot.slane %v604, 2
        %v852 = vsel %vm822, %v849, %v851
        %v853 = vrot.slane %v605, 2
        %v854 = vrot.slane %v606, 2
        %v855 = vsel %vm822, %v853, %v854
        %v856 = vrot.slane %v607, 2
        %v857 = vsel %vm822, %v854, %v856
        %v858 = vrot.slane %v608, 2
        %v859 = vrot.slane %v609, 2
        %v860 = vsel %vm822, %v858, %v859
        %v861 = vrot.slane %v610, 2
        %v862 = vsel %vm822, %v859, %v861
        %v863 = vrot.slane %v611, 2
        %v864 = vrot.slane %v612, 2
        %v865 = vsel %vm822, %v863, %v864
        %v866 = vrot.slane %v613, 2
        %v867 = vsel %vm822, %v864, %v866
        %v868 = vrot.slane %v614, 2
        %v869 = vrot.slane %v615, 2
        %v870 = vsel %vm822, %v868, %v869
        %v871 = vrot.slane %v616, 2
        %v872 = vsel %vm822, %v869, %v871
        %v873 = vrot.slane %v617, 2
        %v874 = vrot.slane %v618, 2
        %v875 = vsel %vm822, %v873, %v874
        %v876 = vrot.slane %v619, 2
        %v877 = vsel %vm822, %v874, %v876
        %v878 = vrot.slane %v620, 2
        %v879 = vrot.slane %v621, 2
        %v880 = vsel %vm822, %v878, %v879
        %v881 = vrot.slane %v622, 2
        %v882 = vsel %vm822, %v879, %v881
        %v883 = vrot.slane %v623, 2
        %v884 = vrot.slane %v624, 2
        %v885 = vsel %vm822, %v883, %v884
        %v886 = vrot.slane %v625, 2
        %v887 = vsel %vm822, %v884, %v886
        %v888 = vrot.slane %v626, 2
        %v889 = vrot.slane %v627, 2
        %v890 = vsel %vm822, %v888, %v889
        %v891 = vrot.slane %v628, 2
        %v892 = vsel %vm822, %v889, %v891
        %v893 = vrot.slane %v629, 2
        %v894 = vrot.slane %v630, 2
        %v895 = vsel %vm822, %v893, %v894
        %v896 = vrot.slane %v631, 2
        %v897 = vsel %vm822, %v894, %v896
        %v898 = vrot.slane %v632, 2
        %v899 = vrot.slane %v633, 2
        %v900 = vsel %vm822, %v898, %v899
        %v901 = vrot.slane %v634, 2
        %v902 = vsel %vm822, %v899, %v901
        %v903 = vrot.slane %v635, 2
        %v904 = vrot.slane %v636, 2
        %v905 = vsel %vm822, %v903, %v904
        %v906 = vrot.slane %v637, 2
        %v907 = vsel %vm822, %v904, %v906
        %v908 = vrot.slane %v638, 2
        %v909 = vrot.slane %v639, 2
        %v910 = vsel %vm822, %v908, %v909
        %v911 = vrot.slane %v640, 2
        %v912 = vsel %vm822, %v909, %v911
        %v949 = vld [vmem:[%s4] sm:$0x1]
        %v950 = vld [vmem:[%s3] sm:$0xff]
        %v951 = vld [vmem:[%s3 + $0x8] sm:$0xff]
        %v952 = vld [vmem:[%s3 + $0x10] sm:$0xff]
        %v953 = vld [vmem:[%s3 + $0x18] sm:$0xff]
        %v954 = vld [vmem:[%s3 + $0x20] sm:$0xff]
        %v955 = vld [vmem:[%s3 + $0x28] sm:$0xff]
        %v956 = vld [vmem:[%s3 + $0x30] sm:$0xff]
        %v957 = vld [vmem:[%s3 + $0x38] sm:$0xff]
        %v958 = vld [vmem:[%s3 + $0x40] sm:$0xff]
        %v959 = vld [vmem:[%s3 + $0x48] sm:$0xff]
        %v960 = vld [vmem:[%s3 + $0x50] sm:$0xff]
        %v961 = vld [vmem:[%s3 + $0x58] sm:$0xff]
        %v962 = vld [vmem:[%s3 + $0x60] sm:$0xff]
        %v963 = vld [vmem:[%s3 + $0x68] sm:$0xff]
        %v964 = vld [vmem:[%s3 + $0x70] sm:$0xff]
        %v965 = vld [vmem:[%s3 + $0x78] sm:$0xff]
        %966 = vmatpush.msra.mxu0 %v965
        %967 = vmatpush.msra.mxu0 %v964
        %968 = vmatpush.msra.mxu0 %v963
        %969 = vmatpush.msra.mxu0 %v962
        %970 = vmatpush.msra.mxu0 %v961
        %971 = vmatpush.msra.mxu0 %v960
        %972 = vmatpush.msra.mxu0 %v959
        %973 = vmatpush.msra.mxu0 %v958
        %974 = vmatpush.msra.mxu0 %v957
        %975 = vmatpush.msra.mxu0 %v956
        %976 = vmatpush.msra.mxu0 %v955
        %977 = vmatpush.msra.mxu0 %v954
        %978 = vmatpush.msra.mxu0 %v953
        %979 = vmatpush.msra.mxu0 %v952
        %980 = vmatpush.msra.mxu0 %v951
        %981 = vmatpush.msra.mxu0 %v950
        %982 = vmatmul.f32.gmra.mxu0 %v587
        %v983 = vpop.f32.mrf.mxu0
        %v984 = vadd.f32 0.0, %v983
        %985 = vmatmul.f32.gmra.mxu0 %v588
        %v986 = vpop.f32.mrf.mxu0
        %v987 = vadd.f32 0.0, %v986
        %988 = vmatmul.f32.gmra.mxu0 %v590
        %v989 = vpop.f32.mrf.mxu0
        %v990 = vadd.f32 0.0, %v989
        %991 = vmatmul.f32.gmra.mxu0 %v591
        %v992 = vpop.f32.mrf.mxu0
        %v993 = vadd.f32 0.0, %v992
        %994 = vmatmul.f32.gmra.mxu0 %v593
        %v995 = vpop.f32.mrf.mxu0
        %v996 = vadd.f32 0.0, %v995
        %997 = vmatmul.f32.gmra.mxu0 %v594
        %v998 = vpop.f32.mrf.mxu0
        %v999 = vadd.f32 0.0, %v998
        %1000 = vmatmul.f32.gmra.mxu0 %v596
        %v1001 = vpop.f32.mrf.mxu0
        %v1002 = vadd.f32 0.0, %v1001
        %1003 = vmatmul.f32.gmra.mxu0 %v597
        %v1004 = vpop.f32.mrf.mxu0
        %v1005 = vadd.f32 0.0, %v1004
        %1006 = vmatmul.f32.gmra.mxu0 %v599
        %v1007 = vpop.f32.mrf.mxu0
        %v1008 = vadd.f32 0.0, %v1007
        %1009 = vmatmul.f32.gmra.mxu0 %v600
        %v1010 = vpop.f32.mrf.mxu0
        %v1011 = vadd.f32 0.0, %v1010
        %1012 = vmatmul.f32.gmra.mxu0 %v602
        %v1013 = vpop.f32.mrf.mxu0
        %v1014 = vadd.f32 0.0, %v1013
        %1015 = vmatmul.f32.gmra.mxu0 %v603
        %v1016 = vpop.f32.mrf.mxu0
        %v1017 = vadd.f32 0.0, %v1016
        %1018 = vmatmul.f32.gmra.mxu0 %v605
        %v1019 = vpop.f32.mrf.mxu0
        %v1020 = vadd.f32 0.0, %v1019
        %1021 = vmatmul.f32.gmra.mxu0 %v606
        %v1022 = vpop.f32.mrf.mxu0
        %v1023 = vadd.f32 0.0, %v1022
        %1024 = vmatmul.f32.gmra.mxu0 %v608
        %v1025 = vpop.f32.mrf.mxu0
        %v1026 = vadd.f32 0.0, %v1025
        %1027 = vmatmul.f32.gmra.mxu0 %v609
        %v1028 = vpop.f32.mrf.mxu0
        %v1029 = vadd.f32 0.0, %v1028
        %1030 = vmatmul.f32.gmra.mxu0 %v611
        %v1031 = vpop.f32.mrf.mxu0
        %v1032 = vadd.f32 0.0, %v1031
        %1033 = vmatmul.f32.gmra.mxu0 %v612
        %v1034 = vpop.f32.mrf.mxu0
        %v1035 = vadd.f32 0.0, %v1034
        %1036 = vmatmul.f32.gmra.mxu0 %v614
        %v1037 = vpop.f32.mrf.mxu0
        %v1038 = vadd.f32 0.0, %v1037
        %1039 = vmatmul.f32.gmra.mxu0 %v615
        %v1040 = vpop.f32.mrf.mxu0
        %v1041 = vadd.f32 0.0, %v1040
        %1042 = vmatmul.f32.gmra.mxu0 %v617
        %v1043 = vpop.f32.mrf.mxu0
        %v1044 = vadd.f32 0.0, %v1043
        %1045 = vmatmul.f32.gmra.mxu0 %v618
        %v1046 = vpop.f32.mrf.mxu0
        %v1047 = vadd.f32 0.0, %v1046
        %1048 = vmatmul.f32.gmra.mxu0 %v620
        %v1049 = vpop.f32.mrf.mxu0
        %v1050 = vadd.f32 0.0, %v1049
        %1051 = vmatmul.f32.gmra.mxu0 %v621
        %v1052 = vpop.f32.mrf.mxu0
        %v1053 = vadd.f32 0.0, %v1052
        %1054 = vmatmul.f32.gmra.mxu0 %v623
        %v1055 = vpop.f32.mrf.mxu0
        %v1056 = vadd.f32 0.0, %v1055
        %1057 = vmatmul.f32.gmra.mxu0 %v624
        %v1058 = vpop.f32.mrf.mxu0
        %v1059 = vadd.f32 0.0, %v1058
        %1060 = vmatmul.f32.gmra.mxu0 %v626
        %v1061 = vpop.f32.mrf.mxu0
        %v1062 = vadd.f32 0.0, %v1061
        %1063 = vmatmul.f32.gmra.mxu0 %v627
        %v1064 = vpop.f32.mrf.mxu0
        %v1065 = vadd.f32 0.0, %v1064
        %1066 = vmatmul.f32.gmra.mxu0 %v629
        %v1067 = vpop.f32.mrf.mxu0
        %v1068 = vadd.f32 0.0, %v1067
        %1069 = vmatmul.f32.gmra.mxu0 %v630
        %v1070 = vpop.f32.mrf.mxu0
        %v1071 = vadd.f32 0.0, %v1070
        %1072 = vmatmul.f32.gmra.mxu0 %v632
        %v1073 = vpop.f32.mrf.mxu0
        %v1074 = vadd.f32 0.0, %v1073
        %1075 = vmatmul.f32.gmra.mxu0 %v633
        %v1076 = vpop.f32.mrf.mxu0
        %v1077 = vadd.f32 0.0, %v1076
        %1078 = vdwg.mxu0
        %1079 = vst [vmem:[#allocation3] sm:$0xff] %v984
        %1080 = vst [vmem:[#allocation3 + $0x8] sm:$0xff] %v987
        %1081 = vst [vmem:[#allocation3 + $0x10] sm:$0xff] %v990
        %1082 = vst [vmem:[#allocation3 + $0x18] sm:$0xff] %v993
        %1083 = vst [vmem:[#allocation3 + $0x20] sm:$0xff] %v996
        %1084 = vst [vmem:[#allocation3 + $0x28] sm:$0xff] %v999
        %1085 = vst [vmem:[#allocation3 + $0x30] sm:$0xff] %v1002
        %1086 = vst [vmem:[#allocation3 + $0x38] sm:$0xff] %v1005
        %1087 = vst [vmem:[#allocation3 + $0x40] sm:$0xff] %v1008
        %1088 = vst [vmem:[#allocation3 + $0x48] sm:$0xff] %v1011
        %1089 = vst [vmem:[#allocation3 + $0x50] sm:$0xff] %v1014
        %1090 = vst [vmem:[#allocation3 + $0x58] sm:$0xff] %v1017
        %1091 = vst [vmem:[#allocation3 + $0x60] sm:$0xff] %v1020
        %1092 = vst [vmem:[#allocation3 + $0x68] sm:$0xff] %v1023
        %1093 = vst [vmem:[#allocation3 + $0x70] sm:$0xff] %v1026
        %1094 = vst [vmem:[#allocation3 + $0x78] sm:$0xff] %v1029
        %1095 = vst [vmem:[#allocation3 + $0x80] sm:$0xff] %v1032
        %1096 = vst [vmem:[#allocation3 + $0x88] sm:$0xff] %v1035
        %1097 = vst [vmem:[#allocation3 + $0x90] sm:$0xff] %v1038
        %1098 = vst [vmem:[#allocation3 + $0x98] sm:$0xff] %v1041
        %1099 = vst [vmem:[#allocation3 + $0xa0] sm:$0xff] %v1044
        %1100 = vst [vmem:[#allocation3 + $0xa8] sm:$0xff] %v1047
        %1101 = vst [vmem:[#allocation3 + $0xb0] sm:$0xff] %v1050
        %1102 = vst [vmem:[#allocation3 + $0xb8] sm:$0xff] %v1053
        %1103 = vst [vmem:[#allocation3 + $0xc0] sm:$0xff] %v1056
        %1104 = vst [vmem:[#allocation3 + $0xc8] sm:$0xff] %v1059
        %1105 = vst [vmem:[#allocation3 + $0xd0] sm:$0xff] %v1062
        %1106 = vst [vmem:[#allocation3 + $0xd8] sm:$0xff] %v1065
        %1107 = vst [vmem:[#allocation3 + $0xe0] sm:$0xff] %v1068
        %1108 = vst [vmem:[#allocation3 + $0xe8] sm:$0xff] %v1071
        %1109 = vst [vmem:[#allocation3 + $0xf0] sm:$0xff] %v1074
        %1110 = vst [vmem:[#allocation3 + $0xf8] sm:$0xff] %v1077
        %s1111 = scalar_lea.vmem %s3, 128
        %v1112 = vld [vmem:[%s1111] sm:$0xff]
        %v1113 = vld [vmem:[%s1111 + $0x8] sm:$0xff]
        %v1114 = vld [vmem:[%s1111 + $0x10] sm:$0xff]
        %v1115 = vld [vmem:[%s1111 + $0x18] sm:$0xff]
        %v1116 = vld [vmem:[%s1111 + $0x20] sm:$0xff]
        %v1117 = vld [vmem:[%s1111 + $0x28] sm:$0xff]
        %v1118 = vld [vmem:[%s1111 + $0x30] sm:$0xff]
        %v1119 = vld [vmem:[%s1111 + $0x38] sm:$0xff]
        %v1120 = vld [vmem:[%s1111 + $0x40] sm:$0xff]
        %v1121 = vld [vmem:[%s1111 + $0x48] sm:$0xff]
        %v1122 = vld [vmem:[%s1111 + $0x50] sm:$0xff]
        %v1123 = vld [vmem:[%s1111 + $0x58] sm:$0xff]
        %v1124 = vld [vmem:[%s1111 + $0x60] sm:$0xff]
        %v1125 = vld [vmem:[%s1111 + $0x68] sm:$0xff]
        %v1126 = vld [vmem:[%s1111 + $0x70] sm:$0xff]
        %v1127 = vld [vmem:[%s1111 + $0x78] sm:$0xff]
        %1128 = vmatpush.msra.mxu0 %v1127
        %1129 = vmatpush.msra.mxu0 %v1126
        %1130 = vmatpush.msra.mxu0 %v1125
        %1131 = vmatpush.msra.mxu0 %v1124
        %1132 = vmatpush.msra.mxu0 %v1123
        %1133 = vmatpush.msra.mxu0 %v1122
        %1134 = vmatpush.msra.mxu0 %v1121
        %1135 = vmatpush.msra.mxu0 %v1120
        %1136 = vmatpush.msra.mxu0 %v1119
        %1137 = vmatpush.msra.mxu0 %v1118
        %1138 = vmatpush.msra.mxu0 %v1117
        %1139 = vmatpush.msra.mxu0 %v1116
        %1140 = vmatpush.msra.mxu0 %v1115
        %1141 = vmatpush.msra.mxu0 %v1114
        %1142 = vmatpush.msra.mxu0 %v1113
        %1143 = vmatpush.msra.mxu0 %v1112
        %1144 = vmatmul.f32.gmra.mxu0 %v698
        %v1145 = vpop.f32.mrf.mxu0
        %v1146 = vadd.f32 0.0, %v1145
        %1147 = vmatmul.f32.gmra.mxu0 %v700
        %v1148 = vpop.f32.mrf.mxu0
        %v1149 = vadd.f32 0.0, %v1148
        %1150 = vmatmul.f32.gmra.mxu0 %v703
        %v1151 = vpop.f32.mrf.mxu0
        %v1152 = vadd.f32 0.0, %v1151
        %1153 = vmatmul.f32.gmra.mxu0 %v705
        %v1154 = vpop.f32.mrf.mxu0
        %v1155 = vadd.f32 0.0, %v1154
        %1156 = vmatmul.f32.gmra.mxu0 %v708
        %v1157 = vpop.f32.mrf.mxu0
        %v1158 = vadd.f32 0.0, %v1157
        %1159 = vmatmul.f32.gmra.mxu0 %v710
        %v1160 = vpop.f32.mrf.mxu0
        %v1161 = vadd.f32 0.0, %v1160
        %1162 = vmatmul.f32.gmra.mxu0 %v713
        %v1163 = vpop.f32.mrf.mxu0
        %v1164 = vadd.f32 0.0, %v1163
        %1165 = vmatmul.f32.gmra.mxu0 %v715
        %v1166 = vpop.f32.mrf.mxu0
        %v1167 = vadd.f32 0.0, %v1166
        %1168 = vmatmul.f32.gmra.mxu0 %v718
        %v1169 = vpop.f32.mrf.mxu0
        %v1170 = vadd.f32 0.0, %v1169
        %1171 = vmatmul.f32.gmra.mxu0 %v720
        %v1172 = vpop.f32.mrf.mxu0
        %v1173 = vadd.f32 0.0, %v1172
        %1174 = vmatmul.f32.gmra.mxu0 %v723
        %v1175 = vpop.f32.mrf.mxu0
        %v1176 = vadd.f32 0.0, %v1175
        %1177 = vmatmul.f32.gmra.mxu0 %v725
        %v1178 = vpop.f32.mrf.mxu0
        %v1179 = vadd.f32 0.0, %v1178
        %1180 = vmatmul.f32.gmra.mxu0 %v728
        %v1181 = vpop.f32.mrf.mxu0
        %v1182 = vadd.f32 0.0, %v1181
        %1183 = vmatmul.f32.gmra.mxu0 %v730
        %v1184 = vpop.f32.mrf.mxu0
        %v1185 = vadd.f32 0.0, %v1184
        %1186 = vmatmul.f32.gmra.mxu0 %v733
        %v1187 = vpop.f32.mrf.mxu0
        %v1188 = vadd.f32 0.0, %v1187
        %1189 = vmatmul.f32.gmra.mxu0 %v735
        %v1190 = vpop.f32.mrf.mxu0
        %v1191 = vadd.f32 0.0, %v1190
        %1192 = vmatmul.f32.gmra.mxu0 %v738
        %v1193 = vpop.f32.mrf.mxu0
        %v1194 = vadd.f32 0.0, %v1193
        %1195 = vmatmul.f32.gmra.mxu0 %v740
        %v1196 = vpop.f32.mrf.mxu0
        %v1197 = vadd.f32 0.0, %v1196
        %1198 = vmatmul.f32.gmra.mxu0 %v743
        %v1199 = vpop.f32.mrf.mxu0
        %v1200 = vadd.f32 0.0, %v1199
        %1201 = vmatmul.f32.gmra.mxu0 %v745
        %v1202 = vpop.f32.mrf.mxu0
        %v1203 = vadd.f32 0.0, %v1202
        %1204 = vmatmul.f32.gmra.mxu0 %v748
        %v1205 = vpop.f32.mrf.mxu0
        %v1206 = vadd.f32 0.0, %v1205
        %1207 = vmatmul.f32.gmra.mxu0 %v750
        %v1208 = vpop.f32.mrf.mxu0
        %v1209 = vadd.f32 0.0, %v1208
        %1210 = vmatmul.f32.gmra.mxu0 %v753
        %v1211 = vpop.f32.mrf.mxu0
        %v1212 = vadd.f32 0.0, %v1211
        %1213 = vmatmul.f32.gmra.mxu0 %v755
        %v1214 = vpop.f32.mrf.mxu0
        %v1215 = vadd.f32 0.0, %v1214
        %1216 = vmatmul.f32.gmra.mxu0 %v758
        %v1217 = vpop.f32.mrf.mxu0
        %v1218 = vadd.f32 0.0, %v1217
        %1219 = vmatmul.f32.gmra.mxu0 %v760
        %v1220 = vpop.f32.mrf.mxu0
        %v1221 = vadd.f32 0.0, %v1220
        %1222 = vmatmul.f32.gmra.mxu0 %v763
        %v1223 = vpop.f32.mrf.mxu0
        %v1224 = vadd.f32 0.0, %v1223
        %1225 = vmatmul.f32.gmra.mxu0 %v765
        %v1226 = vpop.f32.mrf.mxu0
        %v1227 = vadd.f32 0.0, %v1226
        %1228 = vmatmul.f32.gmra.mxu0 %v768
        %v1229 = vpop.f32.mrf.mxu0
        %v1230 = vadd.f32 0.0, %v1229
        %1231 = vmatmul.f32.gmra.mxu0 %v770
        %v1232 = vpop.f32.mrf.mxu0
        %v1233 = vadd.f32 0.0, %v1232
        %1234 = vmatmul.f32.gmra.mxu0 %v773
        %v1235 = vpop.f32.mrf.mxu0
        %v1236 = vadd.f32 0.0, %v1235
        %1237 = vmatmul.f32.gmra.mxu0 %v775
        %v1238 = vpop.f32.mrf.mxu0
        %v1239 = vadd.f32 0.0, %v1238
        %1240 = vdwg.mxu0
        %v1241 = vld [vmem:[#allocation3] sm:$0xff]
        %v1242 = vld [vmem:[#allocation3 + $0x8] sm:$0xff]
        %v1243 = vld [vmem:[#allocation3 + $0x10] sm:$0xff]
        %v1244 = vld [vmem:[#allocation3 + $0x18] sm:$0xff]
        %v1245 = vld [vmem:[#allocation3 + $0x20] sm:$0xff]
        %v1246 = vld [vmem:[#allocation3 + $0x28] sm:$0xff]
        %v1247 = vld [vmem:[#allocation3 + $0x30] sm:$0xff]
        %v1248 = vld [vmem:[#allocation3 + $0x38] sm:$0xff]
        %v1249 = vld [vmem:[#allocation3 + $0x40] sm:$0xff]
        %v1250 = vld [vmem:[#allocation3 + $0x48] sm:$0xff]
        %v1251 = vld [vmem:[#allocation3 + $0x50] sm:$0xff]
        %v1252 = vld [vmem:[#allocation3 + $0x58] sm:$0xff]
        %v1253 = vld [vmem:[#allocation3 + $0x60] sm:$0xff]
        %v1254 = vld [vmem:[#allocation3 + $0x68] sm:$0xff]
        %v1255 = vld [vmem:[#allocation3 + $0x70] sm:$0xff]
        %v1256 = vld [vmem:[#allocation3 + $0x78] sm:$0xff]
        %v1257 = vld [vmem:[#allocation3 + $0x80] sm:$0xff]
        %v1258 = vld [vmem:[#allocation3 + $0x88] sm:$0xff]
        %v1259 = vld [vmem:[#allocation3 + $0x90] sm:$0xff]
        %v1260 = vld [vmem:[#allocation3 + $0x98] sm:$0xff]
        %v1261 = vld [vmem:[#allocation3 + $0xa0] sm:$0xff]
        %v1262 = vld [vmem:[#allocation3 + $0xa8] sm:$0xff]
        %v1263 = vld [vmem:[#allocation3 + $0xb0] sm:$0xff]
        %v1264 = vld [vmem:[#allocation3 + $0xb8] sm:$0xff]
        %v1265 = vld [vmem:[#allocation3 + $0xc0] sm:$0xff]
        %v1266 = vld [vmem:[#allocation3 + $0xc8] sm:$0xff]
        %v1267 = vld [vmem:[#allocation3 + $0xd0] sm:$0xff]
        %v1268 = vld [vmem:[#allocation3 + $0xd8] sm:$0xff]
        %v1269 = vld [vmem:[#allocation3 + $0xe0] sm:$0xff]
        %v1270 = vld [vmem:[#allocation3 + $0xe8] sm:$0xff]
        %v1271 = vld [vmem:[#allocation3 + $0xf0] sm:$0xff]
        %v1272 = vld [vmem:[#allocation3 + $0xf8] sm:$0xff]
        %v1273 = vadd.f32 %v1241, %v1146
        %v1274 = vadd.f32 %v1242, %v1149
        %v1275 = vadd.f32 %v1243, %v1152
        %v1276 = vadd.f32 %v1244, %v1155
        %v1277 = vadd.f32 %v1245, %v1158
        %v1278 = vadd.f32 %v1246, %v1161
        %v1279 = vadd.f32 %v1247, %v1164
        %v1280 = vadd.f32 %v1248, %v1167
        %v1281 = vadd.f32 %v1249, %v1170
        %v1282 = vadd.f32 %v1250, %v1173
        %v1283 = vadd.f32 %v1251, %v1176
        %v1284 = vadd.f32 %v1252, %v1179
        %v1285 = vadd.f32 %v1253, %v1182
        %v1286 = vadd.f32 %v1254, %v1185
        %v1287 = vadd.f32 %v1255, %v1188
        %v1288 = vadd.f32 %v1256, %v1191
        %v1289 = vadd.f32 %v1257, %v1194
        %v1290 = vadd.f32 %v1258, %v1197
        %v1291 = vadd.f32 %v1259, %v1200
        %v1292 = vadd.f32 %v1260, %v1203
        %v1293 = vadd.f32 %v1261, %v1206
        %v1294 = vadd.f32 %v1262, %v1209
        %v1295 = vadd.f32 %v1263, %v1212
        %v1296 = vadd.f32 %v1264, %v1215
        %v1297 = vadd.f32 %v1265, %v1218
        %v1298 = vadd.f32 %v1266, %v1221
        %v1299 = vadd.f32 %v1267, %v1224
        %v1300 = vadd.f32 %v1268, %v1227
        %v1301 = vadd.f32 %v1269, %v1230
        %v1302 = vadd.f32 %v1270, %v1233
        %v1303 = vadd.f32 %v1271, %v1236
        %v1304 = vadd.f32 %v1272, %v1239
        %1305 = vst [vmem:[#allocation3] sm:$0xff] %v1273
        %1306 = vst [vmem:[#allocation3 + $0x8] sm:$0xff] %v1274
        %1307 = vst [vmem:[#allocation3 + $0x10] sm:$0xff] %v1275
        %1308 = vst [vmem:[#allocation3 + $0x18] sm:$0xff] %v1276
        %1309 = vst [vmem:[#allocation3 + $0x20] sm:$0xff] %v1277
        %1310 = vst [vmem:[#allocation3 + $0x28] sm:$0xff] %v1278
        %1311 = vst [vmem:[#allocation3 + $0x30] sm:$0xff] %v1279
        %1312 = vst [vmem:[#allocation3 + $0x38] sm:$0xff] %v1280
        %1313 = vst [vmem:[#allocation3 + $0x40] sm:$0xff] %v1281
        %1314 = vst [vmem:[#allocation3 + $0x48] sm:$0xff] %v1282
        %1315 = vst [vmem:[#allocation3 + $0x50] sm:$0xff] %v1283
        %1316 = vst [vmem:[#allocation3 + $0x58] sm:$0xff] %v1284
        %1317 = vst [vmem:[#allocation3 + $0x60] sm:$0xff] %v1285
        %1318 = vst [vmem:[#allocation3 + $0x68] sm:$0xff] %v1286
        %1319 = vst [vmem:[#allocation3 + $0x70] sm:$0xff] %v1287
        %1320 = vst [vmem:[#allocation3 + $0x78] sm:$0xff] %v1288
        %1321 = vst [vmem:[#allocation3 + $0x80] sm:$0xff] %v1289
        %1322 = vst [vmem:[#allocation3 + $0x88] sm:$0xff] %v1290
        %1323 = vst [vmem:[#allocation3 + $0x90] sm:$0xff] %v1291
        %1324 = vst [vmem:[#allocation3 + $0x98] sm:$0xff] %v1292
        %1325 = vst [vmem:[#allocation3 + $0xa0] sm:$0xff] %v1293
        %1326 = vst [vmem:[#allocation3 + $0xa8] sm:$0xff] %v1294
        %1327 = vst [vmem:[#allocation3 + $0xb0] sm:$0xff] %v1295
        %1328 = vst [vmem:[#allocation3 + $0xb8] sm:$0xff] %v1296
        %1329 = vst [vmem:[#allocation3 + $0xc0] sm:$0xff] %v1297
        %1330 = vst [vmem:[#allocation3 + $0xc8] sm:$0xff] %v1298
        %1331 = vst [vmem:[#allocation3 + $0xd0] sm:$0xff] %v1299
        %1332 = vst [vmem:[#allocation3 + $0xd8] sm:$0xff] %v1300
        %1333 = vst [vmem:[#allocation3 + $0xe0] sm:$0xff] %v1301
        %1334 = vst [vmem:[#allocation3 + $0xe8] sm:$0xff] %v1302
        %1335 = vst [vmem:[#allocation3 + $0xf0] sm:$0xff] %v1303
        %1336 = vst [vmem:[#allocation3 + $0xf8] sm:$0xff] %v1304
        %s1337 = scalar_lea.vmem %s3, 256
        %v1338 = vld [vmem:[%s1337] sm:$0xff]
        %v1339 = vld [vmem:[%s1337 + $0x8] sm:$0xff]
        %v1340 = vld [vmem:[%s1337 + $0x10] sm:$0xff]
        %v1341 = vld [vmem:[%s1337 + $0x18] sm:$0xff]
        %v1342 = vld [vmem:[%s1337 + $0x20] sm:$0xff]
        %v1343 = vld [vmem:[%s1337 + $0x28] sm:$0xff]
        %v1344 = vld [vmem:[%s1337 + $0x30] sm:$0xff]
        %v1345 = vld [vmem:[%s1337 + $0x38] sm:$0xff]
        %v1346 = vld [vmem:[%s1337 + $0x40] sm:$0xff]
        %v1347 = vld [vmem:[%s1337 + $0x48] sm:$0xff]
        %v1348 = vld [vmem:[%s1337 + $0x50] sm:$0xff]
        %v1349 = vld [vmem:[%s1337 + $0x58] sm:$0xff]
        %v1350 = vld [vmem:[%s1337 + $0x60] sm:$0xff]
        %v1351 = vld [vmem:[%s1337 + $0x68] sm:$0xff]
        %v1352 = vld [vmem:[%s1337 + $0x70] sm:$0xff]
        %v1353 = vld [vmem:[%s1337 + $0x78] sm:$0xff]
        %1354 = vmatpush.msra.mxu0 %v1353
        %1355 = vmatpush.msra.mxu0 %v1352
        %1356 = vmatpush.msra.mxu0 %v1351
        %1357 = vmatpush.msra.mxu0 %v1350
        %1358 = vmatpush.msra.mxu0 %v1349
        %1359 = vmatpush.msra.mxu0 %v1348
        %1360 = vmatpush.msra.mxu0 %v1347
        %1361 = vmatpush.msra.mxu0 %v1346
        %1362 = vmatpush.msra.mxu0 %v1345
        %1363 = vmatpush.msra.mxu0 %v1344
        %1364 = vmatpush.msra.mxu0 %v1343
        %1365 = vmatpush.msra.mxu0 %v1342
        %1366 = vmatpush.msra.mxu0 %v1341
        %1367 = vmatpush.msra.mxu0 %v1340
        %1368 = vmatpush.msra.mxu0 %v1339
        %1369 = vmatpush.msra.mxu0 %v1338
        %1370 = vmatmul.f32.gmra.mxu0 %v825
        %v1371 = vpop.f32.mrf.mxu0
        %v1372 = vadd.f32 0.0, %v1371
        %1373 = vmatmul.f32.gmra.mxu0 %v827
        %v1374 = vpop.f32.mrf.mxu0
        %v1375 = vadd.f32 0.0, %v1374
        %1376 = vmatmul.f32.gmra.mxu0 %v830
        %v1377 = vpop.f32.mrf.mxu0
        %v1378 = vadd.f32 0.0, %v1377
        %1379 = vmatmul.f32.gmra.mxu0 %v832
        %v1380 = vpop.f32.mrf.mxu0
        %v1381 = vadd.f32 0.0, %v1380
        %1382 = vmatmul.f32.gmra.mxu0 %v835
        %v1383 = vpop.f32.mrf.mxu0
        %v1384 = vadd.f32 0.0, %v1383
        %1385 = vmatmul.f32.gmra.mxu0 %v837
        %v1386 = vpop.f32.mrf.mxu0
        %v1387 = vadd.f32 0.0, %v1386
        %1388 = vmatmul.f32.gmra.mxu0 %v840
        %v1389 = vpop.f32.mrf.mxu0
        %v1390 = vadd.f32 0.0, %v1389
        %1391 = vmatmul.f32.gmra.mxu0 %v842
        %v1392 = vpop.f32.mrf.mxu0
        %v1393 = vadd.f32 0.0, %v1392
        %1394 = vmatmul.f32.gmra.mxu0 %v845
        %v1395 = vpop.f32.mrf.mxu0
        %v1396 = vadd.f32 0.0, %v1395
        %1397 = vmatmul.f32.gmra.mxu0 %v847
        %v1398 = vpop.f32.mrf.mxu0
        %v1399 = vadd.f32 0.0, %v1398
        %1400 = vmatmul.f32.gmra.mxu0 %v850
        %v1401 = vpop.f32.mrf.mxu0
        %v1402 = vadd.f32 0.0, %v1401
        %1403 = vmatmul.f32.gmra.mxu0 %v852
        %v1404 = vpop.f32.mrf.mxu0
        %v1405 = vadd.f32 0.0, %v1404
        %1406 = vmatmul.f32.gmra.mxu0 %v855
        %v1407 = vpop.f32.mrf.mxu0
        %v1408 = vadd.f32 0.0, %v1407
        %1409 = vmatmul.f32.gmra.mxu0 %v857
        %v1410 = vpop.f32.mrf.mxu0
        %v1411 = vadd.f32 0.0, %v1410
        %1412 = vmatmul.f32.gmra.mxu0 %v860
        %v1413 = vpop.f32.mrf.mxu0
        %v1414 = vadd.f32 0.0, %v1413
        %1415 = vmatmul.f32.gmra.mxu0 %v862
        %v1416 = vpop.f32.mrf.mxu0
        %v1417 = vadd.f32 0.0, %v1416
        %1418 = vmatmul.f32.gmra.mxu0 %v865
        %v1419 = vpop.f32.mrf.mxu0
        %v1420 = vadd.f32 0.0, %v1419
        %1421 = vmatmul.f32.gmra.mxu0 %v867
        %v1422 = vpop.f32.mrf.mxu0
        %v1423 = vadd.f32 0.0, %v1422
        %1424 = vmatmul.f32.gmra.mxu0 %v870
        %v1425 = vpop.f32.mrf.mxu0
        %v1426 = vadd.f32 0.0, %v1425
        %1427 = vmatmul.f32.gmra.mxu0 %v872
        %v1428 = vpop.f32.mrf.mxu0
        %v1429 = vadd.f32 0.0, %v1428
        %1430 = vmatmul.f32.gmra.mxu0 %v875
        %v1431 = vpop.f32.mrf.mxu0
        %v1432 = vadd.f32 0.0, %v1431
        %1433 = vmatmul.f32.gmra.mxu0 %v877
        %v1434 = vpop.f32.mrf.mxu0
        %v1435 = vadd.f32 0.0, %v1434
        %1436 = vmatmul.f32.gmra.mxu0 %v880
        %v1437 = vpop.f32.mrf.mxu0
        %v1438 = vadd.f32 0.0, %v1437
        %1439 = vmatmul.f32.gmra.mxu0 %v882
        %v1440 = vpop.f32.mrf.mxu0
        %v1441 = vadd.f32 0.0, %v1440
        %1442 = vmatmul.f32.gmra.mxu0 %v885
        %v1443 = vpop.f32.mrf.mxu0
        %v1444 = vadd.f32 0.0, %v1443
        %1445 = vmatmul.f32.gmra.mxu0 %v887
        %v1446 = vpop.f32.mrf.mxu0
        %v1447 = vadd.f32 0.0, %v1446
        %1448 = vmatmul.f32.gmra.mxu0 %v890
        %v1449 = vpop.f32.mrf.mxu0
        %v1450 = vadd.f32 0.0, %v1449
        %1451 = vmatmul.f32.gmra.mxu0 %v892
        %v1452 = vpop.f32.mrf.mxu0
        %v1453 = vadd.f32 0.0, %v1452
        %1454 = vmatmul.f32.gmra.mxu0 %v895
        %v1455 = vpop.f32.mrf.mxu0
        %v1456 = vadd.f32 0.0, %v1455
        %1457 = vmatmul.f32.gmra.mxu0 %v897
        %v1458 = vpop.f32.mrf.mxu0
        %v1459 = vadd.f32 0.0, %v1458
        %1460 = vmatmul.f32.gmra.mxu0 %v900
        %v1461 = vpop.f32.mrf.mxu0
        %v1462 = vadd.f32 0.0, %v1461
        %1463 = vmatmul.f32.gmra.mxu0 %v902
        %v1464 = vpop.f32.mrf.mxu0
        %v1465 = vadd.f32 0.0, %v1464
        %1466 = vdwg.mxu0
        %v1467 = vld [vmem:[#allocation3] sm:$0xff]
        %v1468 = vld [vmem:[#allocation3 + $0x8] sm:$0xff]
        %v1469 = vld [vmem:[#allocation3 + $0x10] sm:$0xff]
        %v1470 = vld [vmem:[#allocation3 + $0x18] sm:$0xff]
        %v1471 = vld [vmem:[#allocation3 + $0x20] sm:$0xff]
        %v1472 = vld [vmem:[#allocation3 + $0x28] sm:$0xff]
        %v1473 = vld [vmem:[#allocation3 + $0x30] sm:$0xff]
        %v1474 = vld [vmem:[#allocation3 + $0x38] sm:$0xff]
        %v1475 = vld [vmem:[#allocation3 + $0x40] sm:$0xff]
        %v1476 = vld [vmem:[#allocation3 + $0x48] sm:$0xff]
        %v1477 = vld [vmem:[#allocation3 + $0x50] sm:$0xff]
        %v1478 = vld [vmem:[#allocation3 + $0x58] sm:$0xff]
        %v1479 = vld [vmem:[#allocation3 + $0x60] sm:$0xff]
        %v1480 = vld [vmem:[#allocation3 + $0x68] sm:$0xff]
        %v1481 = vld [vmem:[#allocation3 + $0x70] sm:$0xff]
        %v1482 = vld [vmem:[#allocation3 + $0x78] sm:$0xff]
        %v1483 = vld [vmem:[#allocation3 + $0x80] sm:$0xff]
        %v1484 = vld [vmem:[#allocation3 + $0x88] sm:$0xff]
        %v1485 = vld [vmem:[#allocation3 + $0x90] sm:$0xff]
        %v1486 = vld [vmem:[#allocation3 + $0x98] sm:$0xff]
        %v1487 = vld [vmem:[#allocation3 + $0xa0] sm:$0xff]
        %v1488 = vld [vmem:[#allocation3 + $0xa8] sm:$0xff]
        %v1489 = vld [vmem:[#allocation3 + $0xb0] sm:$0xff]
        %v1490 = vld [vmem:[#allocation3 + $0xb8] sm:$0xff]
        %v1491 = vld [vmem:[#allocation3 + $0xc0] sm:$0xff]
        %v1492 = vld [vmem:[#allocation3 + $0xc8] sm:$0xff]
        %v1493 = vld [vmem:[#allocation3 + $0xd0] sm:$0xff]
        %v1494 = vld [vmem:[#allocation3 + $0xd8] sm:$0xff]
        %v1495 = vld [vmem:[#allocation3 + $0xe0] sm:$0xff]
        %v1496 = vld [vmem:[#allocation3 + $0xe8] sm:$0xff]
        %v1497 = vld [vmem:[#allocation3 + $0xf0] sm:$0xff]
        %v1498 = vld [vmem:[#allocation3 + $0xf8] sm:$0xff]
        %v1499 = vadd.f32 %v1467, %v1372
        %v1500 = vadd.f32 %v1468, %v1375
        %v1501 = vadd.f32 %v1469, %v1378
        %v1502 = vadd.f32 %v1470, %v1381
        %v1503 = vadd.f32 %v1471, %v1384
        %v1504 = vadd.f32 %v1472, %v1387
        %v1505 = vadd.f32 %v1473, %v1390
        %v1506 = vadd.f32 %v1474, %v1393
        %v1507 = vadd.f32 %v1475, %v1396
        %v1508 = vadd.f32 %v1476, %v1399
        %v1509 = vadd.f32 %v1477, %v1402
        %v1510 = vadd.f32 %v1478, %v1405
        %v1511 = vadd.f32 %v1479, %v1408
        %v1512 = vadd.f32 %v1480, %v1411
        %v1513 = vadd.f32 %v1481, %v1414
        %v1514 = vadd.f32 %v1482, %v1417
        %v1515 = vadd.f32 %v1483, %v1420
        %v1516 = vadd.f32 %v1484, %v1423
        %v1517 = vadd.f32 %v1485, %v1426
        %v1518 = vadd.f32 %v1486, %v1429
        %v1519 = vadd.f32 %v1487, %v1432
        %v1520 = vadd.f32 %v1488, %v1435
        %v1521 = vadd.f32 %v1489, %v1438
        %v1522 = vadd.f32 %v1490, %v1441
        %v1523 = vadd.f32 %v1491, %v1444
        %v1524 = vadd.f32 %v1492, %v1447
        %v1525 = vadd.f32 %v1493, %v1450
        %v1526 = vadd.f32 %v1494, %v1453
        %v1527 = vadd.f32 %v1495, %v1456
        %v1528 = vadd.f32 %v1496, %v1459
        %v1529 = vadd.f32 %v1497, %v1462
        %v1530 = vadd.f32 %v1498, %v1465
        %1531 = vst [vmem:[#allocation3] sm:$0xff] %v1499
        %1532 = vst [vmem:[#allocation3 + $0x8] sm:$0xff] %v1500
        %1533 = vst [vmem:[#allocation3 + $0x10] sm:$0xff] %v1501
        %1534 = vst [vmem:[#allocation3 + $0x18] sm:$0xff] %v1502
        %1535 = vst [vmem:[#allocation3 + $0x20] sm:$0xff] %v1503
        %1536 = vst [vmem:[#allocation3 + $0x28] sm:$0xff] %v1504
        %1537 = vst [vmem:[#allocation3 + $0x30] sm:$0xff] %v1505
        %1538 = vst [vmem:[#allocation3 + $0x38] sm:$0xff] %v1506
        %1539 = vst [vmem:[#allocation3 + $0x40] sm:$0xff] %v1507
        %1540 = vst [vmem:[#allocation3 + $0x48] sm:$0xff] %v1508
        %1541 = vst [vmem:[#allocation3 + $0x50] sm:$0xff] %v1509
        %1542 = vst [vmem:[#allocation3 + $0x58] sm:$0xff] %v1510
        %1543 = vst [vmem:[#allocation3 + $0x60] sm:$0xff] %v1511
        %1544 = vst [vmem:[#allocation3 + $0x68] sm:$0xff] %v1512
        %1545 = vst [vmem:[#allocation3 + $0x70] sm:$0xff] %v1513
        %1546 = vst [vmem:[#allocation3 + $0x78] sm:$0xff] %v1514
        %1547 = vst [vmem:[#allocation3 + $0x80] sm:$0xff] %v1515
        %1548 = vst [vmem:[#allocation3 + $0x88] sm:$0xff] %v1516
        %1549 = vst [vmem:[#allocation3 + $0x90] sm:$0xff] %v1517
        %1550 = vst [vmem:[#allocation3 + $0x98] sm:$0xff] %v1518
        %1551 = vst [vmem:[#allocation3 + $0xa0] sm:$0xff] %v1519
        %1552 = vst [vmem:[#allocation3 + $0xa8] sm:$0xff] %v1520
        %1553 = vst [vmem:[#allocation3 + $0xb0] sm:$0xff] %v1521
        %1554 = vst [vmem:[#allocation3 + $0xb8] sm:$0xff] %v1522
        %1555 = vst [vmem:[#allocation3 + $0xc0] sm:$0xff] %v1523
        %1556 = vst [vmem:[#allocation3 + $0xc8] sm:$0xff] %v1524
        %1557 = vst [vmem:[#allocation3 + $0xd0] sm:$0xff] %v1525
        %1558 = vst [vmem:[#allocation3 + $0xd8] sm:$0xff] %v1526
        %1559 = vst [vmem:[#allocation3 + $0xe0] sm:$0xff] %v1527
        %1560 = vst [vmem:[#allocation3 + $0xe8] sm:$0xff] %v1528
        %1561 = vst [vmem:[#allocation3 + $0xf0] sm:$0xff] %v1529
        %1562 = vst [vmem:[#allocation3 + $0xf8] sm:$0xff] %v1530
        %s1563 = scalar_lea.vmem %s3, 384
        %v1564 = vld [vmem:[%s1563] sm:$0xff]
        %v1565 = vld [vmem:[%s1563 + $0x8] sm:$0xff]
        %v1566 = vld [vmem:[%s1563 + $0x10] sm:$0xff]
        %v1567 = vld [vmem:[%s1563 + $0x18] sm:$0xff]
        %v1568 = vld [vmem:[%s1563 + $0x20] sm:$0xff]
        %v1569 = vld [vmem:[%s1563 + $0x28] sm:$0xff]
        %v1570 = vld [vmem:[%s1563 + $0x30] sm:$0xff]
        %v1571 = vld [vmem:[%s1563 + $0x38] sm:$0xff]
        %v1572 = vld [vmem:[%s1563 + $0x40] sm:$0xff]
        %v1573 = vld [vmem:[%s1563 + $0x48] sm:$0xff]
        %v1574 = vld [vmem:[%s1563 + $0x50] sm:$0xff]
        %v1575 = vld [vmem:[%s1563 + $0x58] sm:$0xff]
        %v1576 = vld [vmem:[%s1563 + $0x60] sm:$0xff]
        %v1577 = vld [vmem:[%s1563 + $0x68] sm:$0xff]
        %v1578 = vld [vmem:[%s1563 + $0x70] sm:$0xff]
        %v1579 = vld [vmem:[%s1563 + $0x78] sm:$0xff]
        %1580 = vmatpush.msra.mxu0 %v1579
        %1581 = vmatpush.msra.mxu0 %v1578
        %1582 = vmatpush.msra.mxu0 %v1577
        %1583 = vmatpush.msra.mxu0 %v1576
        %1584 = vmatpush.msra.mxu0 %v1575
        %1585 = vmatpush.msra.mxu0 %v1574
        %1586 = vmatpush.msra.mxu0 %v1573
        %1587 = vmatpush.msra.mxu0 %v1572
        %1588 = vmatpush.msra.mxu0 %v1571
        %1589 = vmatpush.msra.mxu0 %v1570
        %1590 = vmatpush.msra.mxu0 %v1569
        %1591 = vmatpush.msra.mxu0 %v1568
        %1592 = vmatpush.msra.mxu0 %v1567
        %1593 = vmatpush.msra.mxu0 %v1566
        %1594 = vmatpush.msra.mxu0 %v1565
        %1595 = vmatpush.msra.mxu0 %v1564
        %1596 = vmatmul.f32.gmra.mxu0 %v590
        %v1597 = vpop.f32.mrf.mxu0
        %v1598 = vadd.f32 0.0, %v1597
        %1599 = vmatmul.f32.gmra.mxu0 %v591
        %v1600 = vpop.f32.mrf.mxu0
        %v1601 = vadd.f32 0.0, %v1600
        %1602 = vmatmul.f32.gmra.mxu0 %v593
        %v1603 = vpop.f32.mrf.mxu0
        %v1604 = vadd.f32 0.0, %v1603
        %1605 = vmatmul.f32.gmra.mxu0 %v594
        %v1606 = vpop.f32.mrf.mxu0
        %v1607 = vadd.f32 0.0, %v1606
        %1608 = vmatmul.f32.gmra.mxu0 %v596
        %v1609 = vpop.f32.mrf.mxu0
        %v1610 = vadd.f32 0.0, %v1609
        %1611 = vmatmul.f32.gmra.mxu0 %v597
        %v1612 = vpop.f32.mrf.mxu0
        %v1613 = vadd.f32 0.0, %v1612
        %1614 = vmatmul.f32.gmra.mxu0 %v599
        %v1615 = vpop.f32.mrf.mxu0
        %v1616 = vadd.f32 0.0, %v1615
        %1617 = vmatmul.f32.gmra.mxu0 %v600
        %v1618 = vpop.f32.mrf.mxu0
        %v1619 = vadd.f32 0.0, %v1618
        %1620 = vmatmul.f32.gmra.mxu0 %v602
        %v1621 = vpop.f32.mrf.mxu0
        %v1622 = vadd.f32 0.0, %v1621
        %1623 = vmatmul.f32.gmra.mxu0 %v603
        %v1624 = vpop.f32.mrf.mxu0
        %v1625 = vadd.f32 0.0, %v1624
        %1626 = vmatmul.f32.gmra.mxu0 %v605
        %v1627 = vpop.f32.mrf.mxu0
        %v1628 = vadd.f32 0.0, %v1627
        %1629 = vmatmul.f32.gmra.mxu0 %v606
        %v1630 = vpop.f32.mrf.mxu0
        %v1631 = vadd.f32 0.0, %v1630
        %1632 = vmatmul.f32.gmra.mxu0 %v608
        %v1633 = vpop.f32.mrf.mxu0
        %v1634 = vadd.f32 0.0, %v1633
        %1635 = vmatmul.f32.gmra.mxu0 %v609
        %v1636 = vpop.f32.mrf.mxu0
        %v1637 = vadd.f32 0.0, %v1636
        %1638 = vmatmul.f32.gmra.mxu0 %v611
        %v1639 = vpop.f32.mrf.mxu0
        %v1640 = vadd.f32 0.0, %v1639
        %1641 = vmatmul.f32.gmra.mxu0 %v612
        %v1642 = vpop.f32.mrf.mxu0
        %v1643 = vadd.f32 0.0, %v1642
        %1644 = vmatmul.f32.gmra.mxu0 %v614
        %v1645 = vpop.f32.mrf.mxu0
        %v1646 = vadd.f32 0.0, %v1645
        %1647 = vmatmul.f32.gmra.mxu0 %v615
        %v1648 = vpop.f32.mrf.mxu0
        %v1649 = vadd.f32 0.0, %v1648
        %1650 = vmatmul.f32.gmra.mxu0 %v617
        %v1651 = vpop.f32.mrf.mxu0
        %v1652 = vadd.f32 0.0, %v1651
        %1653 = vmatmul.f32.gmra.mxu0 %v618
        %v1654 = vpop.f32.mrf.mxu0
        %v1655 = vadd.f32 0.0, %v1654
        %1656 = vmatmul.f32.gmra.mxu0 %v620
        %v1657 = vpop.f32.mrf.mxu0
        %v1658 = vadd.f32 0.0, %v1657
        %1659 = vmatmul.f32.gmra.mxu0 %v621
        %v1660 = vpop.f32.mrf.mxu0
        %v1661 = vadd.f32 0.0, %v1660
        %1662 = vmatmul.f32.gmra.mxu0 %v623
        %v1663 = vpop.f32.mrf.mxu0
        %v1664 = vadd.f32 0.0, %v1663
        %1665 = vmatmul.f32.gmra.mxu0 %v624
        %v1666 = vpop.f32.mrf.mxu0
        %v1667 = vadd.f32 0.0, %v1666
        %1668 = vmatmul.f32.gmra.mxu0 %v626
        %v1669 = vpop.f32.mrf.mxu0
        %v1670 = vadd.f32 0.0, %v1669
        %1671 = vmatmul.f32.gmra.mxu0 %v627
        %v1672 = vpop.f32.mrf.mxu0
        %v1673 = vadd.f32 0.0, %v1672
        %1674 = vmatmul.f32.gmra.mxu0 %v629
        %v1675 = vpop.f32.mrf.mxu0
        %v1676 = vadd.f32 0.0, %v1675
        %1677 = vmatmul.f32.gmra.mxu0 %v630
        %v1678 = vpop.f32.mrf.mxu0
        %v1679 = vadd.f32 0.0, %v1678
        %1680 = vmatmul.f32.gmra.mxu0 %v632
        %v1681 = vpop.f32.mrf.mxu0
        %v1682 = vadd.f32 0.0, %v1681
        %1683 = vmatmul.f32.gmra.mxu0 %v633
        %v1684 = vpop.f32.mrf.mxu0
        %v1685 = vadd.f32 0.0, %v1684
        %1686 = vmatmul.f32.gmra.mxu0 %v635
        %v1687 = vpop.f32.mrf.mxu0
        %v1688 = vadd.f32 0.0, %v1687
        %1689 = vmatmul.f32.gmra.mxu0 %v636
        %v1690 = vpop.f32.mrf.mxu0
        %v1691 = vadd.f32 0.0, %v1690
        %1692 = vdwg.mxu0
        %v1693 = vld [vmem:[#allocation3] sm:$0xff]
        %v1694 = vld [vmem:[#allocation3 + $0x8] sm:$0xff]
        %v1695 = vld [vmem:[#allocation3 + $0x10] sm:$0xff]
        %v1696 = vld [vmem:[#allocation3 + $0x18] sm:$0xff]
        %v1697 = vld [vmem:[#allocation3 + $0x20] sm:$0xff]
        %v1698 = vld [vmem:[#allocation3 + $0x28] sm:$0xff]
        %v1699 = vld [vmem:[#allocation3 + $0x30] sm:$0xff]
        %v1700 = vld [vmem:[#allocation3 + $0x38] sm:$0xff]
        %v1701 = vld [vmem:[#allocation3 + $0x40] sm:$0xff]
        %v1702 = vld [vmem:[#allocation3 + $0x48] sm:$0xff]
        %v1703 = vld [vmem:[#allocation3 + $0x50] sm:$0xff]
        %v1704 = vld [vmem:[#allocation3 + $0x58] sm:$0xff]
        %v1705 = vld [vmem:[#allocation3 + $0x60] sm:$0xff]
        %v1706 = vld [vmem:[#allocation3 + $0x68] sm:$0xff]
        %v1707 = vld [vmem:[#allocation3 + $0x70] sm:$0xff]
        %v1708 = vld [vmem:[#allocation3 + $0x78] sm:$0xff]
        %v1709 = vld [vmem:[#allocation3 + $0x80] sm:$0xff]
        %v1710 = vld [vmem:[#allocation3 + $0x88] sm:$0xff]
        %v1711 = vld [vmem:[#allocation3 + $0x90] sm:$0xff]
        %v1712 = vld [vmem:[#allocation3 + $0x98] sm:$0xff]
        %v1713 = vld [vmem:[#allocation3 + $0xa0] sm:$0xff]
        %v1714 = vld [vmem:[#allocation3 + $0xa8] sm:$0xff]
        %v1715 = vld [vmem:[#allocation3 + $0xb0] sm:$0xff]
        %v1716 = vld [vmem:[#allocation3 + $0xb8] sm:$0xff]
        %v1717 = vld [vmem:[#allocation3 + $0xc0] sm:$0xff]
        %v1718 = vld [vmem:[#allocation3 + $0xc8] sm:$0xff]
        %v1719 = vld [vmem:[#allocation3 + $0xd0] sm:$0xff]
        %v1720 = vld [vmem:[#allocation3 + $0xd8] sm:$0xff]
        %v1721 = vld [vmem:[#allocation3 + $0xe0] sm:$0xff]
        %v1722 = vld [vmem:[#allocation3 + $0xe8] sm:$0xff]
        %v1723 = vld [vmem:[#allocation3 + $0xf0] sm:$0xff]
        %v1724 = vld [vmem:[#allocation3 + $0xf8] sm:$0xff]
        %v1725 = vadd.f32 %v1693, %v1598
        %v1726 = vadd.f32 %v1694, %v1601
        %v1727 = vadd.f32 %v1695, %v1604
        %v1728 = vadd.f32 %v1696, %v1607
        %v1729 = vadd.f32 %v1697, %v1610
        %v1730 = vadd.f32 %v1698, %v1613
        %v1731 = vadd.f32 %v1699, %v1616
        %v1732 = vadd.f32 %v1700, %v1619
        %v1733 = vadd.f32 %v1701, %v1622
        %v1734 = vadd.f32 %v1702, %v1625
        %v1735 = vadd.f32 %v1703, %v1628
        %v1736 = vadd.f32 %v1704, %v1631
        %v1737 = vadd.f32 %v1705, %v1634
        %v1738 = vadd.f32 %v1706, %v1637
        %v1739 = vadd.f32 %v1707, %v1640
        %v1740 = vadd.f32 %v1708, %v1643
        %v1741 = vadd.f32 %v1709, %v1646
        %v1742 = vadd.f32 %v1710, %v1649
        %v1743 = vadd.f32 %v1711, %v1652
        %v1744 = vadd.f32 %v1712, %v1655
        %v1745 = vadd.f32 %v1713, %v1658
        %v1746 = vadd.f32 %v1714, %v1661
        %v1747 = vadd.f32 %v1715, %v1664
        %v1748 = vadd.f32 %v1716, %v1667
        %v1749 = vadd.f32 %v1717, %v1670
        %v1750 = vadd.f32 %v1718, %v1673
        %v1751 = vadd.f32 %v1719, %v1676
        %v1752 = vadd.f32 %v1720, %v1679
        %v1753 = vadd.f32 %v1721, %v1682
        %v1754 = vadd.f32 %v1722, %v1685
        %v1755 = vadd.f32 %v1723, %v1688
        %v1756 = vadd.f32 %v1724, %v1691
        %1757 = vst [vmem:[#allocation3] sm:$0xff] %v1725
        %1758 = vst [vmem:[#allocation3 + $0x8] sm:$0xff] %v1726
        %1759 = vst [vmem:[#allocation3 + $0x10] sm:$0xff] %v1727
        %1760 = vst [vmem:[#allocation3 + $0x18] sm:$0xff] %v1728
        %1761 = vst [vmem:[#allocation3 + $0x20] sm:$0xff] %v1729
        %1762 = vst [vmem:[#allocation3 + $0x28] sm:$0xff] %v1730
        %1763 = vst [vmem:[#allocation3 + $0x30] sm:$0xff] %v1731
        %1764 = vst [vmem:[#allocation3 + $0x38] sm:$0xff] %v1732
        %1765 = vst [vmem:[#allocation3 + $0x40] sm:$0xff] %v1733
        %1766 = vst [vmem:[#allocation3 + $0x48] sm:$0xff] %v1734
        %1767 = vst [vmem:[#allocation3 + $0x50] sm:$0xff] %v1735
        %1768 = vst [vmem:[#allocation3 + $0x58] sm:$0xff] %v1736
        %1769 = vst [vmem:[#allocation3 + $0x60] sm:$0xff] %v1737
        %1770 = vst [vmem:[#allocation3 + $0x68] sm:$0xff] %v1738
        %1771 = vst [vmem:[#allocation3 + $0x70] sm:$0xff] %v1739
        %1772 = vst [vmem:[#allocation3 + $0x78] sm:$0xff] %v1740
        %1773 = vst [vmem:[#allocation3 + $0x80] sm:$0xff] %v1741
        %1774 = vst [vmem:[#allocation3 + $0x88] sm:$0xff] %v1742
        %1775 = vst [vmem:[#allocation3 + $0x90] sm:$0xff] %v1743
        %1776 = vst [vmem:[#allocation3 + $0x98] sm:$0xff] %v1744
        %1777 = vst [vmem:[#allocation3 + $0xa0] sm:$0xff] %v1745
        %1778 = vst [vmem:[#allocation3 + $0xa8] sm:$0xff] %v1746
        %1779 = vst [vmem:[#allocation3 + $0xb0] sm:$0xff] %v1747
        %1780 = vst [vmem:[#allocation3 + $0xb8] sm:$0xff] %v1748
        %1781 = vst [vmem:[#allocation3 + $0xc0] sm:$0xff] %v1749
        %1782 = vst [vmem:[#allocation3 + $0xc8] sm:$0xff] %v1750
        %1783 = vst [vmem:[#allocation3 + $0xd0] sm:$0xff] %v1751
        %1784 = vst [vmem:[#allocation3 + $0xd8] sm:$0xff] %v1752
        %1785 = vst [vmem:[#allocation3 + $0xe0] sm:$0xff] %v1753
        %1786 = vst [vmem:[#allocation3 + $0xe8] sm:$0xff] %v1754
        %1787 = vst [vmem:[#allocation3 + $0xf0] sm:$0xff] %v1755
        %1788 = vst [vmem:[#allocation3 + $0xf8] sm:$0xff] %v1756
        %s1789 = scalar_lea.vmem %s3, 512
        %v1790 = vld [vmem:[%s1789] sm:$0xff]
        %v1791 = vld [vmem:[%s1789 + $0x8] sm:$0xff]
        %v1792 = vld [vmem:[%s1789 + $0x10] sm:$0xff]
        %v1793 = vld [vmem:[%s1789 + $0x18] sm:$0xff]
        %v1794 = vld [vmem:[%s1789 + $0x20] sm:$0xff]
        %v1795 = vld [vmem:[%s1789 + $0x28] sm:$0xff]
        %v1796 = vld [vmem:[%s1789 + $0x30] sm:$0xff]
        %v1797 = vld [vmem:[%s1789 + $0x38] sm:$0xff]
        %v1798 = vld [vmem:[%s1789 + $0x40] sm:$0xff]
        %v1799 = vld [vmem:[%s1789 + $0x48] sm:$0xff]
        %v1800 = vld [vmem:[%s1789 + $0x50] sm:$0xff]
        %v1801 = vld [vmem:[%s1789 + $0x58] sm:$0xff]
        %v1802 = vld [vmem:[%s1789 + $0x60] sm:$0xff]
        %v1803 = vld [vmem:[%s1789 + $0x68] sm:$0xff]
        %v1804 = vld [vmem:[%s1789 + $0x70] sm:$0xff]
        %v1805 = vld [vmem:[%s1789 + $0x78] sm:$0xff]
        %1806 = vmatpush.msra.mxu0 %v1805
        %1807 = vmatpush.msra.mxu0 %v1804
        %1808 = vmatpush.msra.mxu0 %v1803
        %1809 = vmatpush.msra.mxu0 %v1802
        %1810 = vmatpush.msra.mxu0 %v1801
        %1811 = vmatpush.msra.mxu0 %v1800
        %1812 = vmatpush.msra.mxu0 %v1799
        %1813 = vmatpush.msra.mxu0 %v1798
        %1814 = vmatpush.msra.mxu0 %v1797
        %1815 = vmatpush.msra.mxu0 %v1796
        %1816 = vmatpush.msra.mxu0 %v1795
        %1817 = vmatpush.msra.mxu0 %v1794
        %1818 = vmatpush.msra.mxu0 %v1793
        %1819 = vmatpush.msra.mxu0 %v1792
        %1820 = vmatpush.msra.mxu0 %v1791
        %1821 = vmatpush.msra.mxu0 %v1790
        %1822 = vmatmul.f32.gmra.mxu0 %v703
        %v1823 = vpop.f32.mrf.mxu0
        %v1824 = vadd.f32 0.0, %v1823
        %1825 = vmatmul.f32.gmra.mxu0 %v705
        %v1826 = vpop.f32.mrf.mxu0
        %v1827 = vadd.f32 0.0, %v1826
        %1828 = vmatmul.f32.gmra.mxu0 %v708
        %v1829 = vpop.f32.mrf.mxu0
        %v1830 = vadd.f32 0.0, %v1829
        %1831 = vmatmul.f32.gmra.mxu0 %v710
        %v1832 = vpop.f32.mrf.mxu0
        %v1833 = vadd.f32 0.0, %v1832
        %1834 = vmatmul.f32.gmra.mxu0 %v713
        %v1835 = vpop.f32.mrf.mxu0
        %v1836 = vadd.f32 0.0, %v1835
        %1837 = vmatmul.f32.gmra.mxu0 %v715
        %v1838 = vpop.f32.mrf.mxu0
        %v1839 = vadd.f32 0.0, %v1838
        %1840 = vmatmul.f32.gmra.mxu0 %v718
        %v1841 = vpop.f32.mrf.mxu0
        %v1842 = vadd.f32 0.0, %v1841
        %1843 = vmatmul.f32.gmra.mxu0 %v720
        %v1844 = vpop.f32.mrf.mxu0
        %v1845 = vadd.f32 0.0, %v1844
        %1846 = vmatmul.f32.gmra.mxu0 %v723
        %v1847 = vpop.f32.mrf.mxu0
        %v1848 = vadd.f32 0.0, %v1847
        %1849 = vmatmul.f32.gmra.mxu0 %v725
        %v1850 = vpop.f32.mrf.mxu0
        %v1851 = vadd.f32 0.0, %v1850
        %1852 = vmatmul.f32.gmra.mxu0 %v728
        %v1853 = vpop.f32.mrf.mxu0
        %v1854 = vadd.f32 0.0, %v1853
        %1855 = vmatmul.f32.gmra.mxu0 %v730
        %v1856 = vpop.f32.mrf.mxu0
        %v1857 = vadd.f32 0.0, %v1856
        %1858 = vmatmul.f32.gmra.mxu0 %v733
        %v1859 = vpop.f32.mrf.mxu0
        %v1860 = vadd.f32 0.0, %v1859
        %1861 = vmatmul.f32.gmra.mxu0 %v735
        %v1862 = vpop.f32.mrf.mxu0
        %v1863 = vadd.f32 0.0, %v1862
        %1864 = vmatmul.f32.gmra.mxu0 %v738
        %v1865 = vpop.f32.mrf.mxu0
        %v1866 = vadd.f32 0.0, %v1865
        %1867 = vmatmul.f32.gmra.mxu0 %v740
        %v1868 = vpop.f32.mrf.mxu0
        %v1869 = vadd.f32 0.0, %v1868
        %1870 = vmatmul.f32.gmra.mxu0 %v743
        %v1871 = vpop.f32.mrf.mxu0
        %v1872 = vadd.f32 0.0, %v1871
        %1873 = vmatmul.f32.gmra.mxu0 %v745
        %v1874 = vpop.f32.mrf.mxu0
        %v1875 = vadd.f32 0.0, %v1874
        %1876 = vmatmul.f32.gmra.mxu0 %v748
        %v1877 = vpop.f32.mrf.mxu0
        %v1878 = vadd.f32 0.0, %v1877
        %1879 = vmatmul.f32.gmra.mxu0 %v750
        %v1880 = vpop.f32.mrf.mxu0
        %v1881 = vadd.f32 0.0, %v1880
        %1882 = vmatmul.f32.gmra.mxu0 %v753
        %v1883 = vpop.f32.mrf.mxu0
        %v1884 = vadd.f32 0.0, %v1883
        %1885 = vmatmul.f32.gmra.mxu0 %v755
        %v1886 = vpop.f32.mrf.mxu0
        %v1887 = vadd.f32 0.0, %v1886
        %1888 = vmatmul.f32.gmra.mxu0 %v758
        %v1889 = vpop.f32.mrf.mxu0
        %v1890 = vadd.f32 0.0, %v1889
        %1891 = vmatmul.f32.gmra.mxu0 %v760
        %v1892 = vpop.f32.mrf.mxu0
        %v1893 = vadd.f32 0.0, %v1892
        %1894 = vmatmul.f32.gmra.mxu0 %v763
        %v1895 = vpop.f32.mrf.mxu0
        %v1896 = vadd.f32 0.0, %v1895
        %1897 = vmatmul.f32.gmra.mxu0 %v765
        %v1898 = vpop.f32.mrf.mxu0
        %v1899 = vadd.f32 0.0, %v1898
        %1900 = vmatmul.f32.gmra.mxu0 %v768
        %v1901 = vpop.f32.mrf.mxu0
        %v1902 = vadd.f32 0.0, %v1901
        %1903 = vmatmul.f32.gmra.mxu0 %v770
        %v1904 = vpop.f32.mrf.mxu0
        %v1905 = vadd.f32 0.0, %v1904
        %1906 = vmatmul.f32.gmra.mxu0 %v773
        %v1907 = vpop.f32.mrf.mxu0
        %v1908 = vadd.f32 0.0, %v1907
        %1909 = vmatmul.f32.gmra.mxu0 %v775
        %v1910 = vpop.f32.mrf.mxu0
        %v1911 = vadd.f32 0.0, %v1910
        %1912 = vmatmul.f32.gmra.mxu0 %v778
        %v1913 = vpop.f32.mrf.mxu0
        %v1914 = vadd.f32 0.0, %v1913
        %1915 = vmatmul.f32.gmra.mxu0 %v780
        %v1916 = vpop.f32.mrf.mxu0
        %v1917 = vadd.f32 0.0, %v1916
        %1918 = vdwg.mxu0
        %v1919 = vld [vmem:[#allocation3] sm:$0xff]
        %v1920 = vld [vmem:[#allocation3 + $0x8] sm:$0xff]
        %v1921 = vld [vmem:[#allocation3 + $0x10] sm:$0xff]
        %v1922 = vld [vmem:[#allocation3 + $0x18] sm:$0xff]
        %v1923 = vld [vmem:[#allocation3 + $0x20] sm:$0xff]
        %v1924 = vld [vmem:[#allocation3 + $0x28] sm:$0xff]
        %v1925 = vld [vmem:[#allocation3 + $0x30] sm:$0xff]
        %v1926 = vld [vmem:[#allocation3 + $0x38] sm:$0xff]
        %v1927 = vld [vmem:[#allocation3 + $0x40] sm:$0xff]
        %v1928 = vld [vmem:[#allocation3 + $0x48] sm:$0xff]
        %v1929 = vld [vmem:[#allocation3 + $0x50] sm:$0xff]
        %v1930 = vld [vmem:[#allocation3 + $0x58] sm:$0xff]
        %v1931 = vld [vmem:[#allocation3 + $0x60] sm:$0xff]
        %v1932 = vld [vmem:[#allocation3 + $0x68] sm:$0xff]
        %v1933 = vld [vmem:[#allocation3 + $0x70] sm:$0xff]
        %v1934 = vld [vmem:[#allocation3 + $0x78] sm:$0xff]
        %v1935 = vld [vmem:[#allocation3 + $0x80] sm:$0xff]
        %v1936 = vld [vmem:[#allocation3 + $0x88] sm:$0xff]
        %v1937 = vld [vmem:[#allocation3 + $0x90] sm:$0xff]
        %v1938 = vld [vmem:[#allocation3 + $0x98] sm:$0xff]
        %v1939 = vld [vmem:[#allocation3 + $0xa0] sm:$0xff]
        %v1940 = vld [vmem:[#allocation3 + $0xa8] sm:$0xff]
        %v1941 = vld [vmem:[#allocation3 + $0xb0] sm:$0xff]
        %v1942 = vld [vmem:[#allocation3 + $0xb8] sm:$0xff]
        %v1943 = vld [vmem:[#allocation3 + $0xc0] sm:$0xff]
        %v1944 = vld [vmem:[#allocation3 + $0xc8] sm:$0xff]
        %v1945 = vld [vmem:[#allocation3 + $0xd0] sm:$0xff]
        %v1946 = vld [vmem:[#allocation3 + $0xd8] sm:$0xff]
        %v1947 = vld [vmem:[#allocation3 + $0xe0] sm:$0xff]
        %v1948 = vld [vmem:[#allocation3 + $0xe8] sm:$0xff]
        %v1949 = vld [vmem:[#allocation3 + $0xf0] sm:$0xff]
        %v1950 = vld [vmem:[#allocation3 + $0xf8] sm:$0xff]
        %v1951 = vadd.f32 %v1919, %v1824
        %v1952 = vadd.f32 %v1920, %v1827
        %v1953 = vadd.f32 %v1921, %v1830
        %v1954 = vadd.f32 %v1922, %v1833
        %v1955 = vadd.f32 %v1923, %v1836
        %v1956 = vadd.f32 %v1924, %v1839
        %v1957 = vadd.f32 %v1925, %v1842
        %v1958 = vadd.f32 %v1926, %v1845
        %v1959 = vadd.f32 %v1927, %v1848
        %v1960 = vadd.f32 %v1928, %v1851
        %v1961 = vadd.f32 %v1929, %v1854
        %v1962 = vadd.f32 %v1930, %v1857
        %v1963 = vadd.f32 %v1931, %v1860
        %v1964 = vadd.f32 %v1932, %v1863
        %v1965 = vadd.f32 %v1933, %v1866
        %v1966 = vadd.f32 %v1934, %v1869
        %v1967 = vadd.f32 %v1935, %v1872
        %v1968 = vadd.f32 %v1936, %v1875
        %v1969 = vadd.f32 %v1937, %v1878
        %v1970 = vadd.f32 %v1938, %v1881
        %v1971 = vadd.f32 %v1939, %v1884
        %v1972 = vadd.f32 %v1940, %v1887
        %v1973 = vadd.f32 %v1941, %v1890
        %v1974 = vadd.f32 %v1942, %v1893
        %v1975 = vadd.f32 %v1943, %v1896
        %v1976 = vadd.f32 %v1944, %v1899
        %v1977 = vadd.f32 %v1945, %v1902
        %v1978 = vadd.f32 %v1946, %v1905
        %v1979 = vadd.f32 %v1947, %v1908
        %v1980 = vadd.f32 %v1948, %v1911
        %v1981 = vadd.f32 %v1949, %v1914
        %v1982 = vadd.f32 %v1950, %v1917
        %1983 = vst [vmem:[#allocation3] sm:$0xff] %v1951
        %1984 = vst [vmem:[#allocation3 + $0x8] sm:$0xff] %v1952
        %1985 = vst [vmem:[#allocation3 + $0x10] sm:$0xff] %v1953
        %1986 = vst [vmem:[#allocation3 + $0x18] sm:$0xff] %v1954
        %1987 = vst [vmem:[#allocation3 + $0x20] sm:$0xff] %v1955
        %1988 = vst [vmem:[#allocation3 + $0x28] sm:$0xff] %v1956
        %1989 = vst [vmem:[#allocation3 + $0x30] sm:$0xff] %v1957
        %1990 = vst [vmem:[#allocation3 + $0x38] sm:$0xff] %v1958
        %1991 = vst [vmem:[#allocation3 + $0x40] sm:$0xff] %v1959
        %1992 = vst [vmem:[#allocation3 + $0x48] sm:$0xff] %v1960
        %1993 = vst [vmem:[#allocation3 + $0x50] sm:$0xff] %v1961
        %1994 = vst [vmem:[#allocation3 + $0x58] sm:$0xff] %v1962
        %1995 = vst [vmem:[#allocation3 + $0x60] sm:$0xff] %v1963
        %1996 = vst [vmem:[#allocation3 + $0x68] sm:$0xff] %v1964
        %1997 = vst [vmem:[#allocation3 + $0x70] sm:$0xff] %v1965
        %1998 = vst [vmem:[#allocation3 + $0x78] sm:$0xff] %v1966
        %1999 = vst [vmem:[#allocation3 + $0x80] sm:$0xff] %v1967
        %2000 = vst [vmem:[#allocation3 + $0x88] sm:$0xff] %v1968
        %2001 = vst [vmem:[#allocation3 + $0x90] sm:$0xff] %v1969
        %2002 = vst [vmem:[#allocation3 + $0x98] sm:$0xff] %v1970
        %2003 = vst [vmem:[#allocation3 + $0xa0] sm:$0xff] %v1971
        %2004 = vst [vmem:[#allocation3 + $0xa8] sm:$0xff] %v1972
        %2005 = vst [vmem:[#allocation3 + $0xb0] sm:$0xff] %v1973
        %2006 = vst [vmem:[#allocation3 + $0xb8] sm:$0xff] %v1974
        %2007 = vst [vmem:[#allocation3 + $0xc0] sm:$0xff] %v1975
        %2008 = vst [vmem:[#allocation3 + $0xc8] sm:$0xff] %v1976
        %2009 = vst [vmem:[#allocation3 + $0xd0] sm:$0xff] %v1977
        %2010 = vst [vmem:[#allocation3 + $0xd8] sm:$0xff] %v1978
        %2011 = vst [vmem:[#allocation3 + $0xe0] sm:$0xff] %v1979
        %2012 = vst [vmem:[#allocation3 + $0xe8] sm:$0xff] %v1980
        %2013 = vst [vmem:[#allocation3 + $0xf0] sm:$0xff] %v1981
        %2014 = vst [vmem:[#allocation3 + $0xf8] sm:$0xff] %v1982
        %s2015 = scalar_lea.vmem %s3, 640
        %v2016 = vld [vmem:[%s2015] sm:$0xff]
        %v2017 = vld [vmem:[%s2015 + $0x8] sm:$0xff]
        %v2018 = vld [vmem:[%s2015 + $0x10] sm:$0xff]
        %v2019 = vld [vmem:[%s2015 + $0x18] sm:$0xff]
        %v2020 = vld [vmem:[%s2015 + $0x20] sm:$0xff]
        %v2021 = vld [vmem:[%s2015 + $0x28] sm:$0xff]
        %v2022 = vld [vmem:[%s2015 + $0x30] sm:$0xff]
        %v2023 = vld [vmem:[%s2015 + $0x38] sm:$0xff]
        %v2024 = vld [vmem:[%s2015 + $0x40] sm:$0xff]
        %v2025 = vld [vmem:[%s2015 + $0x48] sm:$0xff]
        %v2026 = vld [vmem:[%s2015 + $0x50] sm:$0xff]
        %v2027 = vld [vmem:[%s2015 + $0x58] sm:$0xff]
        %v2028 = vld [vmem:[%s2015 + $0x60] sm:$0xff]
        %v2029 = vld [vmem:[%s2015 + $0x68] sm:$0xff]
        %v2030 = vld [vmem:[%s2015 + $0x70] sm:$0xff]
        %v2031 = vld [vmem:[%s2015 + $0x78] sm:$0xff]
        %2032 = vmatpush.msra.mxu0 %v2031
        %2033 = vmatpush.msra.mxu0 %v2030
        %2034 = vmatpush.msra.mxu0 %v2029
        %2035 = vmatpush.msra.mxu0 %v2028
        %2036 = vmatpush.msra.mxu0 %v2027
        %2037 = vmatpush.msra.mxu0 %v2026
        %2038 = vmatpush.msra.mxu0 %v2025
        %2039 = vmatpush.msra.mxu0 %v2024
        %2040 = vmatpush.msra.mxu0 %v2023
        %2041 = vmatpush.msra.mxu0 %v2022
        %2042 = vmatpush.msra.mxu0 %v2021
        %2043 = vmatpush.msra.mxu0 %v2020
        %2044 = vmatpush.msra.mxu0 %v2019
        %2045 = vmatpush.msra.mxu0 %v2018
        %2046 = vmatpush.msra.mxu0 %v2017
        %2047 = vmatpush.msra.mxu0 %v2016
        %2048 = vmatmul.f32.gmra.mxu0 %v830
        %v2049 = vpop.f32.mrf.mxu0
        %v2050 = vadd.f32 0.0, %v2049
        %2051 = vmatmul.f32.gmra.mxu0 %v832
        %v2052 = vpop.f32.mrf.mxu0
        %v2053 = vadd.f32 0.0, %v2052
        %2054 = vmatmul.f32.gmra.mxu0 %v835
        %v2055 = vpop.f32.mrf.mxu0
        %v2056 = vadd.f32 0.0, %v2055
        %2057 = vmatmul.f32.gmra.mxu0 %v837
        %v2058 = vpop.f32.mrf.mxu0
        %v2059 = vadd.f32 0.0, %v2058
        %2060 = vmatmul.f32.gmra.mxu0 %v840
        %v2061 = vpop.f32.mrf.mxu0
        %v2062 = vadd.f32 0.0, %v2061
        %2063 = vmatmul.f32.gmra.mxu0 %v842
        %v2064 = vpop.f32.mrf.mxu0
        %v2065 = vadd.f32 0.0, %v2064
        %2066 = vmatmul.f32.gmra.mxu0 %v845
        %v2067 = vpop.f32.mrf.mxu0
        %v2068 = vadd.f32 0.0, %v2067
        %2069 = vmatmul.f32.gmra.mxu0 %v847
        %v2070 = vpop.f32.mrf.mxu0
        %v2071 = vadd.f32 0.0, %v2070
        %2072 = vmatmul.f32.gmra.mxu0 %v850
        %v2073 = vpop.f32.mrf.mxu0
        %v2074 = vadd.f32 0.0, %v2073
        %2075 = vmatmul.f32.gmra.mxu0 %v852
        %v2076 = vpop.f32.mrf.mxu0
        %v2077 = vadd.f32 0.0, %v2076
        %2078 = vmatmul.f32.gmra.mxu0 %v855
        %v2079 = vpop.f32.mrf.mxu0
        %v2080 = vadd.f32 0.0, %v2079
        %2081 = vmatmul.f32.gmra.mxu0 %v857
        %v2082 = vpop.f32.mrf.mxu0
        %v2083 = vadd.f32 0.0, %v2082
        %2084 = vmatmul.f32.gmra.mxu0 %v860
        %v2085 = vpop.f32.mrf.mxu0
        %v2086 = vadd.f32 0.0, %v2085
        %2087 = vmatmul.f32.gmra.mxu0 %v862
        %v2088 = vpop.f32.mrf.mxu0
        %v2089 = vadd.f32 0.0, %v2088
        %2090 = vmatmul.f32.gmra.mxu0 %v865
        %v2091 = vpop.f32.mrf.mxu0
        %v2092 = vadd.f32 0.0, %v2091
        %2093 = vmatmul.f32.gmra.mxu0 %v867
        %v2094 = vpop.f32.mrf.mxu0
        %v2095 = vadd.f32 0.0, %v2094
        %2096 = vmatmul.f32.gmra.mxu0 %v870
        %v2097 = vpop.f32.mrf.mxu0
        %v2098 = vadd.f32 0.0, %v2097
        %2099 = vmatmul.f32.gmra.mxu0 %v872
        %v2100 = vpop.f32.mrf.mxu0
        %v2101 = vadd.f32 0.0, %v2100
        %2102 = vmatmul.f32.gmra.mxu0 %v875
        %v2103 = vpop.f32.mrf.mxu0
        %v2104 = vadd.f32 0.0, %v2103
        %2105 = vmatmul.f32.gmra.mxu0 %v877
        %v2106 = vpop.f32.mrf.mxu0
        %v2107 = vadd.f32 0.0, %v2106
        %2108 = vmatmul.f32.gmra.mxu0 %v880
        %v2109 = vpop.f32.mrf.mxu0
        %v2110 = vadd.f32 0.0, %v2109
        %2111 = vmatmul.f32.gmra.mxu0 %v882
        %v2112 = vpop.f32.mrf.mxu0
        %v2113 = vadd.f32 0.0, %v2112
        %2114 = vmatmul.f32.gmra.mxu0 %v885
        %v2115 = vpop.f32.mrf.mxu0
        %v2116 = vadd.f32 0.0, %v2115
        %2117 = vmatmul.f32.gmra.mxu0 %v887
        %v2118 = vpop.f32.mrf.mxu0
        %v2119 = vadd.f32 0.0, %v2118
        %2120 = vmatmul.f32.gmra.mxu0 %v890
        %v2121 = vpop.f32.mrf.mxu0
        %v2122 = vadd.f32 0.0, %v2121
        %2123 = vmatmul.f32.gmra.mxu0 %v892
        %v2124 = vpop.f32.mrf.mxu0
        %v2125 = vadd.f32 0.0, %v2124
        %2126 = vmatmul.f32.gmra.mxu0 %v895
        %v2127 = vpop.f32.mrf.mxu0
        %v2128 = vadd.f32 0.0, %v2127
        %2129 = vmatmul.f32.gmra.mxu0 %v897
        %v2130 = vpop.f32.mrf.mxu0
        %v2131 = vadd.f32 0.0, %v2130
        %2132 = vmatmul.f32.gmra.mxu0 %v900
        %v2133 = vpop.f32.mrf.mxu0
        %v2134 = vadd.f32 0.0, %v2133
        %2135 = vmatmul.f32.gmra.mxu0 %v902
        %v2136 = vpop.f32.mrf.mxu0
        %v2137 = vadd.f32 0.0, %v2136
        %2138 = vmatmul.f32.gmra.mxu0 %v905
        %v2139 = vpop.f32.mrf.mxu0
        %v2140 = vadd.f32 0.0, %v2139
        %2141 = vmatmul.f32.gmra.mxu0 %v907
        %v2142 = vpop.f32.mrf.mxu0
        %v2143 = vadd.f32 0.0, %v2142
        %2144 = vdwg.mxu0
        %v2145 = vld [vmem:[#allocation3] sm:$0xff]
        %v2146 = vld [vmem:[#allocation3 + $0x8] sm:$0xff]
        %v2147 = vld [vmem:[#allocation3 + $0x10] sm:$0xff]
        %v2148 = vld [vmem:[#allocation3 + $0x18] sm:$0xff]
        %v2149 = vld [vmem:[#allocation3 + $0x20] sm:$0xff]
        %v2150 = vld [vmem:[#allocation3 + $0x28] sm:$0xff]
        %v2151 = vld [vmem:[#allocation3 + $0x30] sm:$0xff]
        %v2152 = vld [vmem:[#allocation3 + $0x38] sm:$0xff]
        %v2153 = vld [vmem:[#allocation3 + $0x40] sm:$0xff]
        %v2154 = vld [vmem:[#allocation3 + $0x48] sm:$0xff]
        %v2155 = vld [vmem:[#allocation3 + $0x50] sm:$0xff]
        %v2156 = vld [vmem:[#allocation3 + $0x58] sm:$0xff]
        %v2157 = vld [vmem:[#allocation3 + $0x60] sm:$0xff]
        %v2158 = vld [vmem:[#allocation3 + $0x68] sm:$0xff]
        %v2159 = vld [vmem:[#allocation3 + $0x70] sm:$0xff]
        %v2160 = vld [vmem:[#allocation3 + $0x78] sm:$0xff]
        %v2161 = vld [vmem:[#allocation3 + $0x80] sm:$0xff]
        %v2162 = vld [vmem:[#allocation3 + $0x88] sm:$0xff]
        %v2163 = vld [vmem:[#allocation3 + $0x90] sm:$0xff]
        %v2164 = vld [vmem:[#allocation3 + $0x98] sm:$0xff]
        %v2165 = vld [vmem:[#allocation3 + $0xa0] sm:$0xff]
        %v2166 = vld [vmem:[#allocation3 + $0xa8] sm:$0xff]
        %v2167 = vld [vmem:[#allocation3 + $0xb0] sm:$0xff]
        %v2168 = vld [vmem:[#allocation3 + $0xb8] sm:$0xff]
        %v2169 = vld [vmem:[#allocation3 + $0xc0] sm:$0xff]
        %v2170 = vld [vmem:[#allocation3 + $0xc8] sm:$0xff]
        %v2171 = vld [vmem:[#allocation3 + $0xd0] sm:$0xff]
        %v2172 = vld [vmem:[#allocation3 + $0xd8] sm:$0xff]
        %v2173 = vld [vmem:[#allocation3 + $0xe0] sm:$0xff]
        %v2174 = vld [vmem:[#allocation3 + $0xe8] sm:$0xff]
        %v2175 = vld [vmem:[#allocation3 + $0xf0] sm:$0xff]
        %v2176 = vld [vmem:[#allocation3 + $0xf8] sm:$0xff]
        %v2177 = vadd.f32 %v2145, %v2050
        %v2178 = vadd.f32 %v2146, %v2053
        %v2179 = vadd.f32 %v2147, %v2056
        %v2180 = vadd.f32 %v2148, %v2059
        %v2181 = vadd.f32 %v2149, %v2062
        %v2182 = vadd.f32 %v2150, %v2065
        %v2183 = vadd.f32 %v2151, %v2068
        %v2184 = vadd.f32 %v2152, %v2071
        %v2185 = vadd.f32 %v2153, %v2074
        %v2186 = vadd.f32 %v2154, %v2077
        %v2187 = vadd.f32 %v2155, %v2080
        %v2188 = vadd.f32 %v2156, %v2083
        %v2189 = vadd.f32 %v2157, %v2086
        %v2190 = vadd.f32 %v2158, %v2089
        %v2191 = vadd.f32 %v2159, %v2092
        %v2192 = vadd.f32 %v2160, %v2095
        %v2193 = vadd.f32 %v2161, %v2098
        %v2194 = vadd.f32 %v2162, %v2101
        %v2195 = vadd.f32 %v2163, %v2104
        %v2196 = vadd.f32 %v2164, %v2107
        %v2197 = vadd.f32 %v2165, %v2110
        %v2198 = vadd.f32 %v2166, %v2113
        %v2199 = vadd.f32 %v2167, %v2116
        %v2200 = vadd.f32 %v2168, %v2119
        %v2201 = vadd.f32 %v2169, %v2122
        %v2202 = vadd.f32 %v2170, %v2125
        %v2203 = vadd.f32 %v2171, %v2128
        %v2204 = vadd.f32 %v2172, %v2131
        %v2205 = vadd.f32 %v2173, %v2134
        %v2206 = vadd.f32 %v2174, %v2137
        %v2207 = vadd.f32 %v2175, %v2140
        %v2208 = vadd.f32 %v2176, %v2143
        %2209 = vst [vmem:[#allocation3] sm:$0xff] %v2177
        %2210 = vst [vmem:[#allocation3 + $0x8] sm:$0xff] %v2178
        %2211 = vst [vmem:[#allocation3 + $0x10] sm:$0xff] %v2179
        %2212 = vst [vmem:[#allocation3 + $0x18] sm:$0xff] %v2180
        %2213 = vst [vmem:[#allocation3 + $0x20] sm:$0xff] %v2181
        %2214 = vst [vmem:[#allocation3 + $0x28] sm:$0xff] %v2182
        %2215 = vst [vmem:[#allocation3 + $0x30] sm:$0xff] %v2183
        %2216 = vst [vmem:[#allocation3 + $0x38] sm:$0xff] %v2184
        %2217 = vst [vmem:[#allocation3 + $0x40] sm:$0xff] %v2185
        %2218 = vst [vmem:[#allocation3 + $0x48] sm:$0xff] %v2186
        %2219 = vst [vmem:[#allocation3 + $0x50] sm:$0xff] %v2187
        %2220 = vst [vmem:[#allocation3 + $0x58] sm:$0xff] %v2188
        %2221 = vst [vmem:[#allocation3 + $0x60] sm:$0xff] %v2189
        %2222 = vst [vmem:[#allocation3 + $0x68] sm:$0xff] %v2190
        %2223 = vst [vmem:[#allocation3 + $0x70] sm:$0xff] %v2191
        %2224 = vst [vmem:[#allocation3 + $0x78] sm:$0xff] %v2192
        %2225 = vst [vmem:[#allocation3 + $0x80] sm:$0xff] %v2193
        %2226 = vst [vmem:[#allocation3 + $0x88] sm:$0xff] %v2194
        %2227 = vst [vmem:[#allocation3 + $0x90] sm:$0xff] %v2195
        %2228 = vst [vmem:[#allocation3 + $0x98] sm:$0xff] %v2196
        %2229 = vst [vmem:[#allocation3 + $0xa0] sm:$0xff] %v2197
        %2230 = vst [vmem:[#allocation3 + $0xa8] sm:$0xff] %v2198
        %2231 = vst [vmem:[#allocation3 + $0xb0] sm:$0xff] %v2199
        %2232 = vst [vmem:[#allocation3 + $0xb8] sm:$0xff] %v2200
        %2233 = vst [vmem:[#allocation3 + $0xc0] sm:$0xff] %v2201
        %2234 = vst [vmem:[#allocation3 + $0xc8] sm:$0xff] %v2202
        %2235 = vst [vmem:[#allocation3 + $0xd0] sm:$0xff] %v2203
        %2236 = vst [vmem:[#allocation3 + $0xd8] sm:$0xff] %v2204
        %2237 = vst [vmem:[#allocation3 + $0xe0] sm:$0xff] %v2205
        %2238 = vst [vmem:[#allocation3 + $0xe8] sm:$0xff] %v2206
        %2239 = vst [vmem:[#allocation3 + $0xf0] sm:$0xff] %v2207
        %2240 = vst [vmem:[#allocation3 + $0xf8] sm:$0xff] %v2208
        %s2241 = scalar_lea.vmem %s3, 768
        %v2242 = vld [vmem:[%s2241] sm:$0xff]
        %v2243 = vld [vmem:[%s2241 + $0x8] sm:$0xff]
        %v2244 = vld [vmem:[%s2241 + $0x10] sm:$0xff]
        %v2245 = vld [vmem:[%s2241 + $0x18] sm:$0xff]
        %v2246 = vld [vmem:[%s2241 + $0x20] sm:$0xff]
        %v2247 = vld [vmem:[%s2241 + $0x28] sm:$0xff]
        %v2248 = vld [vmem:[%s2241 + $0x30] sm:$0xff]
        %v2249 = vld [vmem:[%s2241 + $0x38] sm:$0xff]
        %v2250 = vld [vmem:[%s2241 + $0x40] sm:$0xff]
        %v2251 = vld [vmem:[%s2241 + $0x48] sm:$0xff]
        %v2252 = vld [vmem:[%s2241 + $0x50] sm:$0xff]
        %v2253 = vld [vmem:[%s2241 + $0x58] sm:$0xff]
        %v2254 = vld [vmem:[%s2241 + $0x60] sm:$0xff]
        %v2255 = vld [vmem:[%s2241 + $0x68] sm:$0xff]
        %v2256 = vld [vmem:[%s2241 + $0x70] sm:$0xff]
        %v2257 = vld [vmem:[%s2241 + $0x78] sm:$0xff]
        %2258 = vmatpush.msra.mxu0 %v2257
        %2259 = vmatpush.msra.mxu0 %v2256
        %2260 = vmatpush.msra.mxu0 %v2255
        %2261 = vmatpush.msra.mxu0 %v2254
        %2262 = vmatpush.msra.mxu0 %v2253
        %2263 = vmatpush.msra.mxu0 %v2252
        %2264 = vmatpush.msra.mxu0 %v2251
        %2265 = vmatpush.msra.mxu0 %v2250
        %2266 = vmatpush.msra.mxu0 %v2249
        %2267 = vmatpush.msra.mxu0 %v2248
        %2268 = vmatpush.msra.mxu0 %v2247
        %2269 = vmatpush.msra.mxu0 %v2246
        %2270 = vmatpush.msra.mxu0 %v2245
        %2271 = vmatpush.msra.mxu0 %v2244
        %2272 = vmatpush.msra.mxu0 %v2243
        %2273 = vmatpush.msra.mxu0 %v2242
        %2274 = vmatmul.f32.gmra.mxu0 %v593
        %v2275 = vpop.f32.mrf.mxu0
        %v2276 = vadd.f32 0.0, %v2275
        %2277 = vmatmul.f32.gmra.mxu0 %v594
        %v2278 = vpop.f32.mrf.mxu0
        %v2279 = vadd.f32 0.0, %v2278
        %2280 = vmatmul.f32.gmra.mxu0 %v596
        %v2281 = vpop.f32.mrf.mxu0
        %v2282 = vadd.f32 0.0, %v2281
        %2283 = vmatmul.f32.gmra.mxu0 %v597
        %v2284 = vpop.f32.mrf.mxu0
        %v2285 = vadd.f32 0.0, %v2284
        %2286 = vmatmul.f32.gmra.mxu0 %v599
        %v2287 = vpop.f32.mrf.mxu0
        %v2288 = vadd.f32 0.0, %v2287
        %2289 = vmatmul.f32.gmra.mxu0 %v600
        %v2290 = vpop.f32.mrf.mxu0
        %v2291 = vadd.f32 0.0, %v2290
        %2292 = vmatmul.f32.gmra.mxu0 %v602
        %v2293 = vpop.f32.mrf.mxu0
        %v2294 = vadd.f32 0.0, %v2293
        %2295 = vmatmul.f32.gmra.mxu0 %v603
        %v2296 = vpop.f32.mrf.mxu0
        %v2297 = vadd.f32 0.0, %v2296
        %2298 = vmatmul.f32.gmra.mxu0 %v605
        %v2299 = vpop.f32.mrf.mxu0
        %v2300 = vadd.f32 0.0, %v2299
        %2301 = vmatmul.f32.gmra.mxu0 %v606
        %v2302 = vpop.f32.mrf.mxu0
        %v2303 = vadd.f32 0.0, %v2302
        %2304 = vmatmul.f32.gmra.mxu0 %v608
        %v2305 = vpop.f32.mrf.mxu0
        %v2306 = vadd.f32 0.0, %v2305
        %2307 = vmatmul.f32.gmra.mxu0 %v609
        %v2308 = vpop.f32.mrf.mxu0
        %v2309 = vadd.f32 0.0, %v2308
        %2310 = vmatmul.f32.gmra.mxu0 %v611
        %v2311 = vpop.f32.mrf.mxu0
        %v2312 = vadd.f32 0.0, %v2311
        %2313 = vmatmul.f32.gmra.mxu0 %v612
        %v2314 = vpop.f32.mrf.mxu0
        %v2315 = vadd.f32 0.0, %v2314
        %2316 = vmatmul.f32.gmra.mxu0 %v614
        %v2317 = vpop.f32.mrf.mxu0
        %v2318 = vadd.f32 0.0, %v2317
        %2319 = vmatmul.f32.gmra.mxu0 %v615
        %v2320 = vpop.f32.mrf.mxu0
        %v2321 = vadd.f32 0.0, %v2320
        %2322 = vmatmul.f32.gmra.mxu0 %v617
        %v2323 = vpop.f32.mrf.mxu0
        %v2324 = vadd.f32 0.0, %v2323
        %2325 = vmatmul.f32.gmra.mxu0 %v618
        %v2326 = vpop.f32.mrf.mxu0
        %v2327 = vadd.f32 0.0, %v2326
        %2328 = vmatmul.f32.gmra.mxu0 %v620
        %v2329 = vpop.f32.mrf.mxu0
        %v2330 = vadd.f32 0.0, %v2329
        %2331 = vmatmul.f32.gmra.mxu0 %v621
        %v2332 = vpop.f32.mrf.mxu0
        %v2333 = vadd.f32 0.0, %v2332
        %2334 = vmatmul.f32.gmra.mxu0 %v623
        %v2335 = vpop.f32.mrf.mxu0
        %v2336 = vadd.f32 0.0, %v2335
        %2337 = vmatmul.f32.gmra.mxu0 %v624
        %v2338 = vpop.f32.mrf.mxu0
        %v2339 = vadd.f32 0.0, %v2338
        %2340 = vmatmul.f32.gmra.mxu0 %v626
        %v2341 = vpop.f32.mrf.mxu0
        %v2342 = vadd.f32 0.0, %v2341
        %2343 = vmatmul.f32.gmra.mxu0 %v627
        %v2344 = vpop.f32.mrf.mxu0
        %v2345 = vadd.f32 0.0, %v2344
        %2346 = vmatmul.f32.gmra.mxu0 %v629
        %v2347 = vpop.f32.mrf.mxu0
        %v2348 = vadd.f32 0.0, %v2347
        %2349 = vmatmul.f32.gmra.mxu0 %v630
        %v2350 = vpop.f32.mrf.mxu0
        %v2351 = vadd.f32 0.0, %v2350
        %2352 = vmatmul.f32.gmra.mxu0 %v632
        %v2353 = vpop.f32.mrf.mxu0
        %v2354 = vadd.f32 0.0, %v2353
        %2355 = vmatmul.f32.gmra.mxu0 %v633
        %v2356 = vpop.f32.mrf.mxu0
        %v2357 = vadd.f32 0.0, %v2356
        %2358 = vmatmul.f32.gmra.mxu0 %v635
        %v2359 = vpop.f32.mrf.mxu0
        %v2360 = vadd.f32 0.0, %v2359
        %2361 = vmatmul.f32.gmra.mxu0 %v636
        %v2362 = vpop.f32.mrf.mxu0
        %v2363 = vadd.f32 0.0, %v2362
        %2364 = vmatmul.f32.gmra.mxu0 %v638
        %v2365 = vpop.f32.mrf.mxu0
        %v2366 = vadd.f32 0.0, %v2365
        %2367 = vmatmul.f32.gmra.mxu0 %v639
        %v2368 = vpop.f32.mrf.mxu0
        %v2369 = vadd.f32 0.0, %v2368
        %2370 = vdwg.mxu0
        %v2371 = vld [vmem:[#allocation3] sm:$0xff]
        %v2372 = vld [vmem:[#allocation3 + $0x8] sm:$0xff]
        %v2373 = vld [vmem:[#allocation3 + $0x10] sm:$0xff]
        %v2374 = vld [vmem:[#allocation3 + $0x18] sm:$0xff]
        %v2375 = vld [vmem:[#allocation3 + $0x20] sm:$0xff]
        %v2376 = vld [vmem:[#allocation3 + $0x28] sm:$0xff]
        %v2377 = vld [vmem:[#allocation3 + $0x30] sm:$0xff]
        %v2378 = vld [vmem:[#allocation3 + $0x38] sm:$0xff]
        %v2379 = vld [vmem:[#allocation3 + $0x40] sm:$0xff]
        %v2380 = vld [vmem:[#allocation3 + $0x48] sm:$0xff]
        %v2381 = vld [vmem:[#allocation3 + $0x50] sm:$0xff]
        %v2382 = vld [vmem:[#allocation3 + $0x58] sm:$0xff]
        %v2383 = vld [vmem:[#allocation3 + $0x60] sm:$0xff]
        %v2384 = vld [vmem:[#allocation3 + $0x68] sm:$0xff]
        %v2385 = vld [vmem:[#allocation3 + $0x70] sm:$0xff]
        %v2386 = vld [vmem:[#allocation3 + $0x78] sm:$0xff]
        %v2387 = vld [vmem:[#allocation3 + $0x80] sm:$0xff]
        %v2388 = vld [vmem:[#allocation3 + $0x88] sm:$0xff]
        %v2389 = vld [vmem:[#allocation3 + $0x90] sm:$0xff]
        %v2390 = vld [vmem:[#allocation3 + $0x98] sm:$0xff]
        %v2391 = vld [vmem:[#allocation3 + $0xa0] sm:$0xff]
        %v2392 = vld [vmem:[#allocation3 + $0xa8] sm:$0xff]
        %v2393 = vld [vmem:[#allocation3 + $0xb0] sm:$0xff]
        %v2394 = vld [vmem:[#allocation3 + $0xb8] sm:$0xff]
        %v2395 = vld [vmem:[#allocation3 + $0xc0] sm:$0xff]
        %v2396 = vld [vmem:[#allocation3 + $0xc8] sm:$0xff]
        %v2397 = vld [vmem:[#allocation3 + $0xd0] sm:$0xff]
        %v2398 = vld [vmem:[#allocation3 + $0xd8] sm:$0xff]
        %v2399 = vld [vmem:[#allocation3 + $0xe0] sm:$0xff]
        %v2400 = vld [vmem:[#allocation3 + $0xe8] sm:$0xff]
        %v2401 = vld [vmem:[#allocation3 + $0xf0] sm:$0xff]
        %v2402 = vld [vmem:[#allocation3 + $0xf8] sm:$0xff]
        %v2403 = vadd.f32 %v2371, %v2276
        %v2404 = vadd.f32 %v2372, %v2279
        %v2405 = vadd.f32 %v2373, %v2282
        %v2406 = vadd.f32 %v2374, %v2285
        %v2407 = vadd.f32 %v2375, %v2288
        %v2408 = vadd.f32 %v2376, %v2291
        %v2409 = vadd.f32 %v2377, %v2294
        %v2410 = vadd.f32 %v2378, %v2297
        %v2411 = vadd.f32 %v2379, %v2300
        %v2412 = vadd.f32 %v2380, %v2303
        %v2413 = vadd.f32 %v2381, %v2306
        %v2414 = vadd.f32 %v2382, %v2309
        %v2415 = vadd.f32 %v2383, %v2312
        %v2416 = vadd.f32 %v2384, %v2315
        %v2417 = vadd.f32 %v2385, %v2318
        %v2418 = vadd.f32 %v2386, %v2321
        %v2419 = vadd.f32 %v2387, %v2324
        %v2420 = vadd.f32 %v2388, %v2327
        %v2421 = vadd.f32 %v2389, %v2330
        %v2422 = vadd.f32 %v2390, %v2333
        %v2423 = vadd.f32 %v2391, %v2336
        %v2424 = vadd.f32 %v2392, %v2339
        %v2425 = vadd.f32 %v2393, %v2342
        %v2426 = vadd.f32 %v2394, %v2345
        %v2427 = vadd.f32 %v2395, %v2348
        %v2428 = vadd.f32 %v2396, %v2351
        %v2429 = vadd.f32 %v2397, %v2354
        %v2430 = vadd.f32 %v2398, %v2357
        %v2431 = vadd.f32 %v2399, %v2360
        %v2432 = vadd.f32 %v2400, %v2363
        %v2433 = vadd.f32 %v2401, %v2366
        %v2434 = vadd.f32 %v2402, %v2369
        %2435 = vst [vmem:[#allocation3] sm:$0xff] %v2403
        %2436 = vst [vmem:[#allocation3 + $0x8] sm:$0xff] %v2404
        %2437 = vst [vmem:[#allocation3 + $0x10] sm:$0xff] %v2405
        %2438 = vst [vmem:[#allocation3 + $0x18] sm:$0xff] %v2406
        %2439 = vst [vmem:[#allocation3 + $0x20] sm:$0xff] %v2407
        %2440 = vst [vmem:[#allocation3 + $0x28] sm:$0xff] %v2408
        %2441 = vst [vmem:[#allocation3 + $0x30] sm:$0xff] %v2409
        %2442 = vst [vmem:[#allocation3 + $0x38] sm:$0xff] %v2410
        %2443 = vst [vmem:[#allocation3 + $0x40] sm:$0xff] %v2411
        %2444 = vst [vmem:[#allocation3 + $0x48] sm:$0xff] %v2412
        %2445 = vst [vmem:[#allocation3 + $0x50] sm:$0xff] %v2413
        %2446 = vst [vmem:[#allocation3 + $0x58] sm:$0xff] %v2414
        %2447 = vst [vmem:[#allocation3 + $0x60] sm:$0xff] %v2415
        %2448 = vst [vmem:[#allocation3 + $0x68] sm:$0xff] %v2416
        %2449 = vst [vmem:[#allocation3 + $0x70] sm:$0xff] %v2417
        %2450 = vst [vmem:[#allocation3 + $0x78] sm:$0xff] %v2418
        %2451 = vst [vmem:[#allocation3 + $0x80] sm:$0xff] %v2419
        %2452 = vst [vmem:[#allocation3 + $0x88] sm:$0xff] %v2420
        %2453 = vst [vmem:[#allocation3 + $0x90] sm:$0xff] %v2421
        %2454 = vst [vmem:[#allocation3 + $0x98] sm:$0xff] %v2422
        %2455 = vst [vmem:[#allocation3 + $0xa0] sm:$0xff] %v2423
        %2456 = vst [vmem:[#allocation3 + $0xa8] sm:$0xff] %v2424
        %2457 = vst [vmem:[#allocation3 + $0xb0] sm:$0xff] %v2425
        %2458 = vst [vmem:[#allocation3 + $0xb8] sm:$0xff] %v2426
        %2459 = vst [vmem:[#allocation3 + $0xc0] sm:$0xff] %v2427
        %2460 = vst [vmem:[#allocation3 + $0xc8] sm:$0xff] %v2428
        %2461 = vst [vmem:[#allocation3 + $0xd0] sm:$0xff] %v2429
        %2462 = vst [vmem:[#allocation3 + $0xd8] sm:$0xff] %v2430
        %2463 = vst [vmem:[#allocation3 + $0xe0] sm:$0xff] %v2431
        %2464 = vst [vmem:[#allocation3 + $0xe8] sm:$0xff] %v2432
        %2465 = vst [vmem:[#allocation3 + $0xf0] sm:$0xff] %v2433
        %2466 = vst [vmem:[#allocation3 + $0xf8] sm:$0xff] %v2434
        %s2467 = scalar_lea.vmem %s3, 896
        %v2468 = vld [vmem:[%s2467] sm:$0xff]
        %v2469 = vld [vmem:[%s2467 + $0x8] sm:$0xff]
        %v2470 = vld [vmem:[%s2467 + $0x10] sm:$0xff]
        %v2471 = vld [vmem:[%s2467 + $0x18] sm:$0xff]
        %v2472 = vld [vmem:[%s2467 + $0x20] sm:$0xff]
        %v2473 = vld [vmem:[%s2467 + $0x28] sm:$0xff]
        %v2474 = vld [vmem:[%s2467 + $0x30] sm:$0xff]
        %v2475 = vld [vmem:[%s2467 + $0x38] sm:$0xff]
        %v2476 = vld [vmem:[%s2467 + $0x40] sm:$0xff]
        %v2477 = vld [vmem:[%s2467 + $0x48] sm:$0xff]
        %v2478 = vld [vmem:[%s2467 + $0x50] sm:$0xff]
        %v2479 = vld [vmem:[%s2467 + $0x58] sm:$0xff]
        %v2480 = vld [vmem:[%s2467 + $0x60] sm:$0xff]
        %v2481 = vld [vmem:[%s2467 + $0x68] sm:$0xff]
        %v2482 = vld [vmem:[%s2467 + $0x70] sm:$0xff]
        %v2483 = vld [vmem:[%s2467 + $0x78] sm:$0xff]
        %2484 = vmatpush.msra.mxu0 %v2483
        %2485 = vmatpush.msra.mxu0 %v2482
        %2486 = vmatpush.msra.mxu0 %v2481
        %2487 = vmatpush.msra.mxu0 %v2480
        %2488 = vmatpush.msra.mxu0 %v2479
        %2489 = vmatpush.msra.mxu0 %v2478
        %2490 = vmatpush.msra.mxu0 %v2477
        %2491 = vmatpush.msra.mxu0 %v2476
        %2492 = vmatpush.msra.mxu0 %v2475
        %2493 = vmatpush.msra.mxu0 %v2474
        %2494 = vmatpush.msra.mxu0 %v2473
        %2495 = vmatpush.msra.mxu0 %v2472
        %2496 = vmatpush.msra.mxu0 %v2471
        %2497 = vmatpush.msra.mxu0 %v2470
        %2498 = vmatpush.msra.mxu0 %v2469
        %2499 = vmatpush.msra.mxu0 %v2468
        %2500 = vmatmul.f32.gmra.mxu0 %v708
        %v2501 = vpop.f32.mrf.mxu0
        %v2502 = vadd.f32 0.0, %v2501
        %2503 = vmatmul.f32.gmra.mxu0 %v710
        %v2504 = vpop.f32.mrf.mxu0
        %v2505 = vadd.f32 0.0, %v2504
        %2506 = vmatmul.f32.gmra.mxu0 %v713
        %v2507 = vpop.f32.mrf.mxu0
        %v2508 = vadd.f32 0.0, %v2507
        %2509 = vmatmul.f32.gmra.mxu0 %v715
        %v2510 = vpop.f32.mrf.mxu0
        %v2511 = vadd.f32 0.0, %v2510
        %2512 = vmatmul.f32.gmra.mxu0 %v718
        %v2513 = vpop.f32.mrf.mxu0
        %v2514 = vadd.f32 0.0, %v2513
        %2515 = vmatmul.f32.gmra.mxu0 %v720
        %v2516 = vpop.f32.mrf.mxu0
        %v2517 = vadd.f32 0.0, %v2516
        %2518 = vmatmul.f32.gmra.mxu0 %v723
        %v2519 = vpop.f32.mrf.mxu0
        %v2520 = vadd.f32 0.0, %v2519
        %2521 = vmatmul.f32.gmra.mxu0 %v725
        %v2522 = vpop.f32.mrf.mxu0
        %v2523 = vadd.f32 0.0, %v2522
        %2524 = vmatmul.f32.gmra.mxu0 %v728
        %v2525 = vpop.f32.mrf.mxu0
        %v2526 = vadd.f32 0.0, %v2525
        %2527 = vmatmul.f32.gmra.mxu0 %v730
        %v2528 = vpop.f32.mrf.mxu0
        %v2529 = vadd.f32 0.0, %v2528
        %2530 = vmatmul.f32.gmra.mxu0 %v733
        %v2531 = vpop.f32.mrf.mxu0
        %v2532 = vadd.f32 0.0, %v2531
        %2533 = vmatmul.f32.gmra.mxu0 %v735
        %v2534 = vpop.f32.mrf.mxu0
        %v2535 = vadd.f32 0.0, %v2534
        %2536 = vmatmul.f32.gmra.mxu0 %v738
        %v2537 = vpop.f32.mrf.mxu0
        %v2538 = vadd.f32 0.0, %v2537
        %2539 = vmatmul.f32.gmra.mxu0 %v740
        %v2540 = vpop.f32.mrf.mxu0
        %v2541 = vadd.f32 0.0, %v2540
        %2542 = vmatmul.f32.gmra.mxu0 %v743
        %v2543 = vpop.f32.mrf.mxu0
        %v2544 = vadd.f32 0.0, %v2543
        %2545 = vmatmul.f32.gmra.mxu0 %v745
        %v2546 = vpop.f32.mrf.mxu0
        %v2547 = vadd.f32 0.0, %v2546
        %2548 = vmatmul.f32.gmra.mxu0 %v748
        %v2549 = vpop.f32.mrf.mxu0
        %v2550 = vadd.f32 0.0, %v2549
        %2551 = vmatmul.f32.gmra.mxu0 %v750
        %v2552 = vpop.f32.mrf.mxu0
        %v2553 = vadd.f32 0.0, %v2552
        %2554 = vmatmul.f32.gmra.mxu0 %v753
        %v2555 = vpop.f32.mrf.mxu0
        %v2556 = vadd.f32 0.0, %v2555
        %2557 = vmatmul.f32.gmra.mxu0 %v755
        %v2558 = vpop.f32.mrf.mxu0
        %v2559 = vadd.f32 0.0, %v2558
        %2560 = vmatmul.f32.gmra.mxu0 %v758
        %v2561 = vpop.f32.mrf.mxu0
        %v2562 = vadd.f32 0.0, %v2561
        %2563 = vmatmul.f32.gmra.mxu0 %v760
        %v2564 = vpop.f32.mrf.mxu0
        %v2565 = vadd.f32 0.0, %v2564
        %2566 = vmatmul.f32.gmra.mxu0 %v763
        %v2567 = vpop.f32.mrf.mxu0
        %v2568 = vadd.f32 0.0, %v2567
        %2569 = vmatmul.f32.gmra.mxu0 %v765
        %v2570 = vpop.f32.mrf.mxu0
        %v2571 = vadd.f32 0.0, %v2570
        %2572 = vmatmul.f32.gmra.mxu0 %v768
        %v2573 = vpop.f32.mrf.mxu0
        %v2574 = vadd.f32 0.0, %v2573
        %2575 = vmatmul.f32.gmra.mxu0 %v770
        %v2576 = vpop.f32.mrf.mxu0
        %v2577 = vadd.f32 0.0, %v2576
        %2578 = vmatmul.f32.gmra.mxu0 %v773
        %v2579 = vpop.f32.mrf.mxu0
        %v2580 = vadd.f32 0.0, %v2579
        %2581 = vmatmul.f32.gmra.mxu0 %v775
        %v2582 = vpop.f32.mrf.mxu0
        %v2583 = vadd.f32 0.0, %v2582
        %2584 = vmatmul.f32.gmra.mxu0 %v778
        %v2585 = vpop.f32.mrf.mxu0
        %v2586 = vadd.f32 0.0, %v2585
        %2587 = vmatmul.f32.gmra.mxu0 %v780
        %v2588 = vpop.f32.mrf.mxu0
        %v2589 = vadd.f32 0.0, %v2588
        %2590 = vmatmul.f32.gmra.mxu0 %v783
        %v2591 = vpop.f32.mrf.mxu0
        %v2592 = vadd.f32 0.0, %v2591
        %2593 = vmatmul.f32.gmra.mxu0 %v785
        %v2594 = vpop.f32.mrf.mxu0
        %v2595 = vadd.f32 0.0, %v2594
        %2596 = vdwg.mxu0
        %v2597 = vld [vmem:[#allocation3] sm:$0xff]
        %v2598 = vld [vmem:[#allocation3 + $0x8] sm:$0xff]
        %v2599 = vld [vmem:[#allocation3 + $0x10] sm:$0xff]
        %v2600 = vld [vmem:[#allocation3 + $0x18] sm:$0xff]
        %v2601 = vld [vmem:[#allocation3 + $0x20] sm:$0xff]
        %v2602 = vld [vmem:[#allocation3 + $0x28] sm:$0xff]
        %v2603 = vld [vmem:[#allocation3 + $0x30] sm:$0xff]
        %v2604 = vld [vmem:[#allocation3 + $0x38] sm:$0xff]
        %v2605 = vld [vmem:[#allocation3 + $0x40] sm:$0xff]
        %v2606 = vld [vmem:[#allocation3 + $0x48] sm:$0xff]
        %v2607 = vld [vmem:[#allocation3 + $0x50] sm:$0xff]
        %v2608 = vld [vmem:[#allocation3 + $0x58] sm:$0xff]
        %v2609 = vld [vmem:[#allocation3 + $0x60] sm:$0xff]
        %v2610 = vld [vmem:[#allocation3 + $0x68] sm:$0xff]
        %v2611 = vld [vmem:[#allocation3 + $0x70] sm:$0xff]
        %v2612 = vld [vmem:[#allocation3 + $0x78] sm:$0xff]
        %v2613 = vld [vmem:[#allocation3 + $0x80] sm:$0xff]
        %v2614 = vld [vmem:[#allocation3 + $0x88] sm:$0xff]
        %v2615 = vld [vmem:[#allocation3 + $0x90] sm:$0xff]
        %v2616 = vld [vmem:[#allocation3 + $0x98] sm:$0xff]
        %v2617 = vld [vmem:[#allocation3 + $0xa0] sm:$0xff]
        %v2618 = vld [vmem:[#allocation3 + $0xa8] sm:$0xff]
        %v2619 = vld [vmem:[#allocation3 + $0xb0] sm:$0xff]
        %v2620 = vld [vmem:[#allocation3 + $0xb8] sm:$0xff]
        %v2621 = vld [vmem:[#allocation3 + $0xc0] sm:$0xff]
        %v2622 = vld [vmem:[#allocation3 + $0xc8] sm:$0xff]
        %v2623 = vld [vmem:[#allocation3 + $0xd0] sm:$0xff]
        %v2624 = vld [vmem:[#allocation3 + $0xd8] sm:$0xff]
        %v2625 = vld [vmem:[#allocation3 + $0xe0] sm:$0xff]
        %v2626 = vld [vmem:[#allocation3 + $0xe8] sm:$0xff]
        %v2627 = vld [vmem:[#allocation3 + $0xf0] sm:$0xff]
        %v2628 = vld [vmem:[#allocation3 + $0xf8] sm:$0xff]
        %v2629 = vadd.f32 %v2597, %v2502
        %v2630 = vadd.f32 %v2598, %v2505
        %v2631 = vadd.f32 %v2599, %v2508
        %v2632 = vadd.f32 %v2600, %v2511
        %v2633 = vadd.f32 %v2601, %v2514
        %v2634 = vadd.f32 %v2602, %v2517
        %v2635 = vadd.f32 %v2603, %v2520
        %v2636 = vadd.f32 %v2604, %v2523
        %v2637 = vadd.f32 %v2605, %v2526
        %v2638 = vadd.f32 %v2606, %v2529
        %v2639 = vadd.f32 %v2607, %v2532
        %v2640 = vadd.f32 %v2608, %v2535
        %v2641 = vadd.f32 %v2609, %v2538
        %v2642 = vadd.f32 %v2610, %v2541
        %v2643 = vadd.f32 %v2611, %v2544
        %v2644 = vadd.f32 %v2612, %v2547
        %v2645 = vadd.f32 %v2613, %v2550
        %v2646 = vadd.f32 %v2614, %v2553
        %v2647 = vadd.f32 %v2615, %v2556
        %v2648 = vadd.f32 %v2616, %v2559
        %v2649 = vadd.f32 %v2617, %v2562
        %v2650 = vadd.f32 %v2618, %v2565
        %v2651 = vadd.f32 %v2619, %v2568
        %v2652 = vadd.f32 %v2620, %v2571
        %v2653 = vadd.f32 %v2621, %v2574
        %v2654 = vadd.f32 %v2622, %v2577
        %v2655 = vadd.f32 %v2623, %v2580
        %v2656 = vadd.f32 %v2624, %v2583
        %v2657 = vadd.f32 %v2625, %v2586
        %v2658 = vadd.f32 %v2626, %v2589
        %v2659 = vadd.f32 %v2627, %v2592
        %v2660 = vadd.f32 %v2628, %v2595
        %2661 = vst [vmem:[#allocation3] sm:$0xff] %v2629
        %2662 = vst [vmem:[#allocation3 + $0x8] sm:$0xff] %v2630
        %2663 = vst [vmem:[#allocation3 + $0x10] sm:$0xff] %v2631
        %2664 = vst [vmem:[#allocation3 + $0x18] sm:$0xff] %v2632
        %2665 = vst [vmem:[#allocation3 + $0x20] sm:$0xff] %v2633
        %2666 = vst [vmem:[#allocation3 + $0x28] sm:$0xff] %v2634
        %2667 = vst [vmem:[#allocation3 + $0x30] sm:$0xff] %v2635
        %2668 = vst [vmem:[#allocation3 + $0x38] sm:$0xff] %v2636
        %2669 = vst [vmem:[#allocation3 + $0x40] sm:$0xff] %v2637
        %2670 = vst [vmem:[#allocation3 + $0x48] sm:$0xff] %v2638
        %2671 = vst [vmem:[#allocation3 + $0x50] sm:$0xff] %v2639
        %2672 = vst [vmem:[#allocation3 + $0x58] sm:$0xff] %v2640
        %2673 = vst [vmem:[#allocation3 + $0x60] sm:$0xff] %v2641
        %2674 = vst [vmem:[#allocation3 + $0x68] sm:$0xff] %v2642
        %2675 = vst [vmem:[#allocation3 + $0x70] sm:$0xff] %v2643
        %2676 = vst [vmem:[#allocation3 + $0x78] sm:$0xff] %v2644
        %2677 = vst [vmem:[#allocation3 + $0x80] sm:$0xff] %v2645
        %2678 = vst [vmem:[#allocation3 + $0x88] sm:$0xff] %v2646
        %2679 = vst [vmem:[#allocation3 + $0x90] sm:$0xff] %v2647
        %2680 = vst [vmem:[#allocation3 + $0x98] sm:$0xff] %v2648
        %2681 = vst [vmem:[#allocation3 + $0xa0] sm:$0xff] %v2649
        %2682 = vst [vmem:[#allocation3 + $0xa8] sm:$0xff] %v2650
        %2683 = vst [vmem:[#allocation3 + $0xb0] sm:$0xff] %v2651
        %2684 = vst [vmem:[#allocation3 + $0xb8] sm:$0xff] %v2652
        %2685 = vst [vmem:[#allocation3 + $0xc0] sm:$0xff] %v2653
        %2686 = vst [vmem:[#allocation3 + $0xc8] sm:$0xff] %v2654
        %2687 = vst [vmem:[#allocation3 + $0xd0] sm:$0xff] %v2655
        %2688 = vst [vmem:[#allocation3 + $0xd8] sm:$0xff] %v2656
        %2689 = vst [vmem:[#allocation3 + $0xe0] sm:$0xff] %v2657
        %2690 = vst [vmem:[#allocation3 + $0xe8] sm:$0xff] %v2658
        %2691 = vst [vmem:[#allocation3 + $0xf0] sm:$0xff] %v2659
        %2692 = vst [vmem:[#allocation3 + $0xf8] sm:$0xff] %v2660
        %s2693 = scalar_lea.vmem %s3, 1024
        %v2694 = vld [vmem:[%s2693] sm:$0xff]
        %v2695 = vld [vmem:[%s2693 + $0x8] sm:$0xff]
        %v2696 = vld [vmem:[%s2693 + $0x10] sm:$0xff]
        %v2697 = vld [vmem:[%s2693 + $0x18] sm:$0xff]
        %v2698 = vld [vmem:[%s2693 + $0x20] sm:$0xff]
        %v2699 = vld [vmem:[%s2693 + $0x28] sm:$0xff]
        %v2700 = vld [vmem:[%s2693 + $0x30] sm:$0xff]
        %v2701 = vld [vmem:[%s2693 + $0x38] sm:$0xff]
        %v2702 = vld [vmem:[%s2693 + $0x40] sm:$0xff]
        %v2703 = vld [vmem:[%s2693 + $0x48] sm:$0xff]
        %v2704 = vld [vmem:[%s2693 + $0x50] sm:$0xff]
        %v2705 = vld [vmem:[%s2693 + $0x58] sm:$0xff]
        %v2706 = vld [vmem:[%s2693 + $0x60] sm:$0xff]
        %v2707 = vld [vmem:[%s2693 + $0x68] sm:$0xff]
        %v2708 = vld [vmem:[%s2693 + $0x70] sm:$0xff]
        %v2709 = vld [vmem:[%s2693 + $0x78] sm:$0xff]
        %2710 = vmatpush.msra.mxu0 %v2709
        %2711 = vmatpush.msra.mxu0 %v2708
        %2712 = vmatpush.msra.mxu0 %v2707
        %2713 = vmatpush.msra.mxu0 %v2706
        %2714 = vmatpush.msra.mxu0 %v2705
        %2715 = vmatpush.msra.mxu0 %v2704
        %2716 = vmatpush.msra.mxu0 %v2703
        %2717 = vmatpush.msra.mxu0 %v2702
        %2718 = vmatpush.msra.mxu0 %v2701
        %2719 = vmatpush.msra.mxu0 %v2700
        %2720 = vmatpush.msra.mxu0 %v2699
        %2721 = vmatpush.msra.mxu0 %v2698
        %2722 = vmatpush.msra.mxu0 %v2697
        %2723 = vmatpush.msra.mxu0 %v2696
        %2724 = vmatpush.msra.mxu0 %v2695
        %2725 = vmatpush.msra.mxu0 %v2694
        %2726 = vmatmul.f32.gmra.mxu0 %v835
        %v2727 = vpop.f32.mrf.mxu0
        %v2728 = vadd.f32 0.0, %v2727
        %2729 = vmatmul.f32.gmra.mxu0 %v837
        %v2730 = vpop.f32.mrf.mxu0
        %v2731 = vadd.f32 0.0, %v2730
        %2732 = vmatmul.f32.gmra.mxu0 %v840
        %v2733 = vpop.f32.mrf.mxu0
        %v2734 = vadd.f32 0.0, %v2733
        %2735 = vmatmul.f32.gmra.mxu0 %v842
        %v2736 = vpop.f32.mrf.mxu0
        %v2737 = vadd.f32 0.0, %v2736
        %2738 = vmatmul.f32.gmra.mxu0 %v845
        %v2739 = vpop.f32.mrf.mxu0
        %v2740 = vadd.f32 0.0, %v2739
        %2741 = vmatmul.f32.gmra.mxu0 %v847
        %v2742 = vpop.f32.mrf.mxu0
        %v2743 = vadd.f32 0.0, %v2742
        %2744 = vmatmul.f32.gmra.mxu0 %v850
        %v2745 = vpop.f32.mrf.mxu0
        %v2746 = vadd.f32 0.0, %v2745
        %2747 = vmatmul.f32.gmra.mxu0 %v852
        %v2748 = vpop.f32.mrf.mxu0
        %v2749 = vadd.f32 0.0, %v2748
        %2750 = vmatmul.f32.gmra.mxu0 %v855
        %v2751 = vpop.f32.mrf.mxu0
        %v2752 = vadd.f32 0.0, %v2751
        %2753 = vmatmul.f32.gmra.mxu0 %v857
        %v2754 = vpop.f32.mrf.mxu0
        %v2755 = vadd.f32 0.0, %v2754
        %2756 = vmatmul.f32.gmra.mxu0 %v860
        %v2757 = vpop.f32.mrf.mxu0
        %v2758 = vadd.f32 0.0, %v2757
        %2759 = vmatmul.f32.gmra.mxu0 %v862
        %v2760 = vpop.f32.mrf.mxu0
        %v2761 = vadd.f32 0.0, %v2760
        %2762 = vmatmul.f32.gmra.mxu0 %v865
        %v2763 = vpop.f32.mrf.mxu0
        %v2764 = vadd.f32 0.0, %v2763
        %2765 = vmatmul.f32.gmra.mxu0 %v867
        %v2766 = vpop.f32.mrf.mxu0
        %v2767 = vadd.f32 0.0, %v2766
        %2768 = vmatmul.f32.gmra.mxu0 %v870
        %v2769 = vpop.f32.mrf.mxu0
        %v2770 = vadd.f32 0.0, %v2769
        %2771 = vmatmul.f32.gmra.mxu0 %v872
        %v2772 = vpop.f32.mrf.mxu0
        %v2773 = vadd.f32 0.0, %v2772
        %2774 = vmatmul.f32.gmra.mxu0 %v875
        %v2775 = vpop.f32.mrf.mxu0
        %v2776 = vadd.f32 0.0, %v2775
        %2777 = vmatmul.f32.gmra.mxu0 %v877
        %v2778 = vpop.f32.mrf.mxu0
        %v2779 = vadd.f32 0.0, %v2778
        %2780 = vmatmul.f32.gmra.mxu0 %v880
        %v2781 = vpop.f32.mrf.mxu0
        %v2782 = vadd.f32 0.0, %v2781
        %2783 = vmatmul.f32.gmra.mxu0 %v882
        %v2784 = vpop.f32.mrf.mxu0
        %v2785 = vadd.f32 0.0, %v2784
        %2786 = vmatmul.f32.gmra.mxu0 %v885
        %v2787 = vpop.f32.mrf.mxu0
        %v2788 = vadd.f32 0.0, %v2787
        %2789 = vmatmul.f32.gmra.mxu0 %v887
        %v2790 = vpop.f32.mrf.mxu0
        %v2791 = vadd.f32 0.0, %v2790
        %2792 = vmatmul.f32.gmra.mxu0 %v890
        %v2793 = vpop.f32.mrf.mxu0
        %v2794 = vadd.f32 0.0, %v2793
        %2795 = vmatmul.f32.gmra.mxu0 %v892
        %v2796 = vpop.f32.mrf.mxu0
        %v2797 = vadd.f32 0.0, %v2796
        %2798 = vmatmul.f32.gmra.mxu0 %v895
        %v2799 = vpop.f32.mrf.mxu0
        %v2800 = vadd.f32 0.0, %v2799
        %2801 = vmatmul.f32.gmra.mxu0 %v897
        %v2802 = vpop.f32.mrf.mxu0
        %v2803 = vadd.f32 0.0, %v2802
        %2804 = vmatmul.f32.gmra.mxu0 %v900
        %v2805 = vpop.f32.mrf.mxu0
        %v2806 = vadd.f32 0.0, %v2805
        %2807 = vmatmul.f32.gmra.mxu0 %v902
        %v2808 = vpop.f32.mrf.mxu0
        %v2809 = vadd.f32 0.0, %v2808
        %2810 = vmatmul.f32.gmra.mxu0 %v905
        %v2811 = vpop.f32.mrf.mxu0
        %v2812 = vadd.f32 0.0, %v2811
        %2813 = vmatmul.f32.gmra.mxu0 %v907
        %v2814 = vpop.f32.mrf.mxu0
        %v2815 = vadd.f32 0.0, %v2814
        %2816 = vmatmul.f32.gmra.mxu0 %v910
        %v2817 = vpop.f32.mrf.mxu0
        %v2818 = vadd.f32 0.0, %v2817
        %2819 = vmatmul.f32.gmra.mxu0 %v912
        %v2820 = vpop.f32.mrf.mxu0
        %v2821 = vadd.f32 0.0, %v2820
        %2822 = vdwg.mxu0
        %v2823 = vld [vmem:[#allocation3] sm:$0xff]
        %v2824 = vld [vmem:[#allocation3 + $0x8] sm:$0xff]
        %v2825 = vld [vmem:[#allocation3 + $0x10] sm:$0xff]
        %v2826 = vld [vmem:[#allocation3 + $0x18] sm:$0xff]
        %v2827 = vld [vmem:[#allocation3 + $0x20] sm:$0xff]
        %v2828 = vld [vmem:[#allocation3 + $0x28] sm:$0xff]
        %v2829 = vld [vmem:[#allocation3 + $0x30] sm:$0xff]
        %v2830 = vld [vmem:[#allocation3 + $0x38] sm:$0xff]
        %v2831 = vld [vmem:[#allocation3 + $0x40] sm:$0xff]
        %v2832 = vld [vmem:[#allocation3 + $0x48] sm:$0xff]
        %v2833 = vld [vmem:[#allocation3 + $0x50] sm:$0xff]
        %v2834 = vld [vmem:[#allocation3 + $0x58] sm:$0xff]
        %v2835 = vld [vmem:[#allocation3 + $0x60] sm:$0xff]
        %v2836 = vld [vmem:[#allocation3 + $0x68] sm:$0xff]
        %v2837 = vld [vmem:[#allocation3 + $0x70] sm:$0xff]
        %v2838 = vld [vmem:[#allocation3 + $0x78] sm:$0xff]
        %v2839 = vld [vmem:[#allocation3 + $0x80] sm:$0xff]
        %v2840 = vld [vmem:[#allocation3 + $0x88] sm:$0xff]
        %v2841 = vld [vmem:[#allocation3 + $0x90] sm:$0xff]
        %v2842 = vld [vmem:[#allocation3 + $0x98] sm:$0xff]
        %v2843 = vld [vmem:[#allocation3 + $0xa0] sm:$0xff]
        %v2844 = vld [vmem:[#allocation3 + $0xa8] sm:$0xff]
        %v2845 = vld [vmem:[#allocation3 + $0xb0] sm:$0xff]
        %v2846 = vld [vmem:[#allocation3 + $0xb8] sm:$0xff]
        %v2847 = vld [vmem:[#allocation3 + $0xc0] sm:$0xff]
        %v2848 = vld [vmem:[#allocation3 + $0xc8] sm:$0xff]
        %v2849 = vld [vmem:[#allocation3 + $0xd0] sm:$0xff]
        %v2850 = vld [vmem:[#allocation3 + $0xd8] sm:$0xff]
        %v2851 = vld [vmem:[#allocation3 + $0xe0] sm:$0xff]
        %v2852 = vld [vmem:[#allocation3 + $0xe8] sm:$0xff]
        %v2853 = vld [vmem:[#allocation3 + $0xf0] sm:$0xff]
        %v2854 = vld [vmem:[#allocation3 + $0xf8] sm:$0xff]
        %v2855 = vadd.f32 %v2823, %v2728
        %v2856 = vadd.f32 %v2824, %v2731
        %v2857 = vadd.f32 %v2825, %v2734
        %v2858 = vadd.f32 %v2826, %v2737
        %v2859 = vadd.f32 %v2827, %v2740
        %v2860 = vadd.f32 %v2828, %v2743
        %v2861 = vadd.f32 %v2829, %v2746
        %v2862 = vadd.f32 %v2830, %v2749
        %v2863 = vadd.f32 %v2831, %v2752
        %v2864 = vadd.f32 %v2832, %v2755
        %v2865 = vadd.f32 %v2833, %v2758
        %v2866 = vadd.f32 %v2834, %v2761
        %v2867 = vadd.f32 %v2835, %v2764
        %v2868 = vadd.f32 %v2836, %v2767
        %v2869 = vadd.f32 %v2837, %v2770
        %v2870 = vadd.f32 %v2838, %v2773
        %v2871 = vadd.f32 %v2839, %v2776
        %v2872 = vadd.f32 %v2840, %v2779
        %v2873 = vadd.f32 %v2841, %v2782
        %v2874 = vadd.f32 %v2842, %v2785
        %v2875 = vadd.f32 %v2843, %v2788
        %v2876 = vadd.f32 %v2844, %v2791
        %v2877 = vadd.f32 %v2845, %v2794
        %v2878 = vadd.f32 %v2846, %v2797
        %v2879 = vadd.f32 %v2847, %v2800
        %v2880 = vadd.f32 %v2848, %v2803
        %v2881 = vadd.f32 %v2849, %v2806
        %v2882 = vadd.f32 %v2850, %v2809
        %v2883 = vadd.f32 %v2851, %v2812
        %v2884 = vadd.f32 %v2852, %v2815
        %v2885 = vadd.f32 %v2853, %v2818
        %v2886 = vadd.f32 %v2854, %v2821
        %2887 = vst [vmem:[#allocation3] sm:$0xff] %v2855
        %2888 = vst [vmem:[#allocation3 + $0x8] sm:$0xff] %v2856
        %2889 = vst [vmem:[#allocation3 + $0x10] sm:$0xff] %v2857
        %2890 = vst [vmem:[#allocation3 + $0x18] sm:$0xff] %v2858
        %2891 = vst [vmem:[#allocation3 + $0x20] sm:$0xff] %v2859
        %2892 = vst [vmem:[#allocation3 + $0x28] sm:$0xff] %v2860
        %2893 = vst [vmem:[#allocation3 + $0x30] sm:$0xff] %v2861
        %2894 = vst [vmem:[#allocation3 + $0x38] sm:$0xff] %v2862
        %2895 = vst [vmem:[#allocation3 + $0x40] sm:$0xff] %v2863
        %2896 = vst [vmem:[#allocation3 + $0x48] sm:$0xff] %v2864
        %2897 = vst [vmem:[#allocation3 + $0x50] sm:$0xff] %v2865
        %2898 = vst [vmem:[#allocation3 + $0x58] sm:$0xff] %v2866
        %2899 = vst [vmem:[#allocation3 + $0x60] sm:$0xff] %v2867
        %2900 = vst [vmem:[#allocation3 + $0x68] sm:$0xff] %v2868
        %2901 = vst [vmem:[#allocation3 + $0x70] sm:$0xff] %v2869
        %2902 = vst [vmem:[#allocation3 + $0x78] sm:$0xff] %v2870
        %2903 = vst [vmem:[#allocation3 + $0x80] sm:$0xff] %v2871
        %2904 = vst [vmem:[#allocation3 + $0x88] sm:$0xff] %v2872
        %2905 = vst [vmem:[#allocation3 + $0x90] sm:$0xff] %v2873
        %2906 = vst [vmem:[#allocation3 + $0x98] sm:$0xff] %v2874
        %2907 = vst [vmem:[#allocation3 + $0xa0] sm:$0xff] %v2875
        %2908 = vst [vmem:[#allocation3 + $0xa8] sm:$0xff] %v2876
        %2909 = vst [vmem:[#allocation3 + $0xb0] sm:$0xff] %v2877
        %2910 = vst [vmem:[#allocation3 + $0xb8] sm:$0xff] %v2878
        %2911 = vst [vmem:[#allocation3 + $0xc0] sm:$0xff] %v2879
        %2912 = vst [vmem:[#allocation3 + $0xc8] sm:$0xff] %v2880
        %2913 = vst [vmem:[#allocation3 + $0xd0] sm:$0xff] %v2881
        %2914 = vst [vmem:[#allocation3 + $0xd8] sm:$0xff] %v2882
        %2915 = vst [vmem:[#allocation3 + $0xe0] sm:$0xff] %v2883
        %2916 = vst [vmem:[#allocation3 + $0xe8] sm:$0xff] %v2884
        %2917 = vst [vmem:[#allocation3 + $0xf0] sm:$0xff] %v2885
        %2918 = vst [vmem:[#allocation3 + $0xf8] sm:$0xff] %v2886
        %v2919 = vld [vmem:[#allocation3] sm:$0xff]
        %v2920 = vld [vmem:[#allocation3 + $0x8] sm:$0xff]
        %v2921 = vld [vmem:[#allocation3 + $0x10] sm:$0xff]
        %v2922 = vld [vmem:[#allocation3 + $0x18] sm:$0xff]
        %v2923 = vld [vmem:[#allocation3 + $0x20] sm:$0xff]
        %v2924 = vld [vmem:[#allocation3 + $0x28] sm:$0xff]
        %v2925 = vld [vmem:[#allocation3 + $0x30] sm:$0xff]
        %v2926 = vld [vmem:[#allocation3 + $0x38] sm:$0xff]
        %v2927 = vld [vmem:[#allocation3 + $0x40] sm:$0xff]
        %v2928 = vld [vmem:[#allocation3 + $0x48] sm:$0xff]
        %v2929 = vld [vmem:[#allocation3 + $0x50] sm:$0xff]
        %v2930 = vld [vmem:[#allocation3 + $0x58] sm:$0xff]
        %v2931 = vld [vmem:[#allocation3 + $0x60] sm:$0xff]
        %v2932 = vld [vmem:[#allocation3 + $0x68] sm:$0xff]
        %v2933 = vld [vmem:[#allocation3 + $0x70] sm:$0xff]
        %v2934 = vld [vmem:[#allocation3 + $0x78] sm:$0xff]
        %v2935 = vld [vmem:[#allocation3 + $0x80] sm:$0xff]
        %v2936 = vld [vmem:[#allocation3 + $0x88] sm:$0xff]
        %v2937 = vld [vmem:[#allocation3 + $0x90] sm:$0xff]
        %v2938 = vld [vmem:[#allocation3 + $0x98] sm:$0xff]
        %v2939 = vld [vmem:[#allocation3 + $0xa0] sm:$0xff]
        %v2940 = vld [vmem:[#allocation3 + $0xa8] sm:$0xff]
        %v2941 = vld [vmem:[#allocation3 + $0xb0] sm:$0xff]
        %v2942 = vld [vmem:[#allocation3 + $0xb8] sm:$0xff]
        %v2943 = vld [vmem:[#allocation3 + $0xc0] sm:$0xff]
        %v2944 = vld [vmem:[#allocation3 + $0xc8] sm:$0xff]
        %v2945 = vld [vmem:[#allocation3 + $0xd0] sm:$0xff]
        %v2946 = vld [vmem:[#allocation3 + $0xd8] sm:$0xff]
        %v2947 = vld [vmem:[#allocation3 + $0xe0] sm:$0xff]
        %v2948 = vld [vmem:[#allocation3 + $0xe8] sm:$0xff]
        %v2949 = vld [vmem:[#allocation3 + $0xf0] sm:$0xff]
        %v2950 = vld [vmem:[#allocation3 + $0xf8] sm:$0xff]
        %v2952 = vperm.slane %v949, 0
        %v2954 = vadd.f32 %v2919, %v2952
        %v2955 = vadd.f32 %v2920, %v2952
        %v2956 = vadd.f32 %v2921, %v2952
        %v2957 = vadd.f32 %v2922, %v2952
        %v2958 = vadd.f32 %v2923, %v2952
        %v2959 = vadd.f32 %v2924, %v2952
        %v2960 = vadd.f32 %v2925, %v2952
        %v2961 = vadd.f32 %v2926, %v2952
        %v2962 = vadd.f32 %v2927, %v2952
        %v2963 = vadd.f32 %v2928, %v2952
        %v2964 = vadd.f32 %v2929, %v2952
        %v2965 = vadd.f32 %v2930, %v2952
        %v2966 = vadd.f32 %v2931, %v2952
        %v2967 = vadd.f32 %v2932, %v2952
        %v2968 = vadd.f32 %v2933, %v2952
        %v2969 = vadd.f32 %v2934, %v2952
        %v2970 = vadd.f32 %v2935, %v2952
        %v2971 = vadd.f32 %v2936, %v2952
        %v2972 = vadd.f32 %v2937, %v2952
        %v2973 = vadd.f32 %v2938, %v2952
        %v2974 = vadd.f32 %v2939, %v2952
        %v2975 = vadd.f32 %v2940, %v2952
        %v2976 = vadd.f32 %v2941, %v2952
        %v2977 = vadd.f32 %v2942, %v2952
        %v2978 = vadd.f32 %v2943, %v2952
        %v2979 = vadd.f32 %v2944, %v2952
        %v2980 = vadd.f32 %v2945, %v2952
        %v2981 = vadd.f32 %v2946, %v2952
        %v2982 = vadd.f32 %v2947, %v2952
        %v2983 = vadd.f32 %v2948, %v2952
        %v2984 = vadd.f32 %v2949, %v2952
        %v2985 = vadd.f32 %v2950, %v2952
        %v2986 = vld [vmem:[%s5] sm:$0x1]
        %v2987 = vld [vmem:[%s6] sm:$0x1]
        %v2988 = vadd.f32 %v2954, %v2955
        %v2989 = vadd.f32 %v2988, %v2956
        %v2990 = vadd.f32 %v2989, %v2957
        %v2991 = vadd.f32 %v2990, %v2958
        %v2992 = vadd.f32 %v2991, %v2959
        %v2993 = vadd.f32 %v2992, %v2960
        %v2994 = vadd.f32 %v2993, %v2961
        %v2995 = vadd.f32 %v2994, %v2962
        %v2996 = vadd.f32 %v2995, %v2963
        %v2997 = vadd.f32 %v2996, %v2964
        %v2998 = vadd.f32 %v2997, %v2965
        %v2999 = vadd.f32 %v2998, %v2966
        %v3000 = vadd.f32 %v2999, %v2967
        %v3001 = vadd.f32 %v3000, %v2968
        %v3002 = vadd.f32 %v3001, %v2969
        %v3003 = vadd.f32 %v3002, %v2970
        %v3004 = vadd.f32 %v3003, %v2971
        %v3005 = vadd.f32 %v3004, %v2972
        %v3006 = vadd.f32 %v3005, %v2973
        %v3007 = vadd.f32 %v3006, %v2974
        %v3008 = vadd.f32 %v3007, %v2975
        %v3009 = vadd.f32 %v3008, %v2976
        %v3010 = vadd.f32 %v3009, %v2977
        %v3011 = vadd.f32 %v3010, %v2978
        %v3012 = vadd.f32 %v3011, %v2979
        %v3013 = vadd.f32 %v3012, %v2980
        %v3014 = vadd.f32 %v3013, %v2981
        %v3015 = vadd.f32 %v3014, %v2982
        %v3016 = vadd.f32 %v3015, %v2983
        %v3017 = vadd.f32 %v3016, %v2984
        %v3018 = vadd.f32 %v3017, %v2985
        %v3019 = vrot.slane %v3018, 4
        %v3020 = vadd.f32 %v3018, %v3019
        %v3021 = vrot.slane %v3020, 2
        %v3022 = vadd.f32 %v3020, %v3021
        %v3023 = vrot.slane %v3022, 1
        %v3024 = vadd.f32 %v3022, %v3023
        %v3025 = vmul.f32 %v3024, 0.00390625
        %3026 = vmatpush.msra.mxu0 %v570
        %3027 = vmatpush.msra.mxu0 %v569
        %3028 = vmatpush.msra.mxu0 %v568
        %3029 = vmatpush.msra.mxu0 %v567
        %3030 = vmatpush.msra.mxu0 %v566
        %3031 = vmatpush.msra.mxu0 %v565
        %3032 = vmatpush.msra.mxu0 %v564
        %3033 = vmatpush.msra.mxu0 %v563
        %3034 = vmatpush.msra.mxu0 %v562
        %3035 = vmatpush.msra.mxu0 %v561
        %3036 = vmatpush.msra.mxu0 %v560
        %3037 = vmatpush.msra.mxu0 %v559
        %3038 = vmatpush.msra.mxu0 %v558
        %3039 = vmatpush.msra.mxu0 %v557
        %3040 = vmatpush.msra.mxu0 %v556
        %3041 = vmatpush.msra.mxu0 %v555
        %3042 = vmatmul.f32.gmra.mxu0 %v3025
        %v3043 = vpop.f32.mrf.mxu0
        %v3044 = vadd.f32 0.0, %v3043
        %3045 = vdwg.mxu0
        %3046 = vmatpush.msra.mxu0 %v586
        %3047 = vmatpush.msra.mxu0 %v585
        %3048 = vmatpush.msra.mxu0 %v584
        %3049 = vmatpush.msra.mxu0 %v583
        %3050 = vmatpush.msra.mxu0 %v582
        %3051 = vmatpush.msra.mxu0 %v581
        %3052 = vmatpush.msra.mxu0 %v580
        %3053 = vmatpush.msra.mxu0 %v579
        %3054 = vmatpush.msra.mxu0 %v578
        %3055 = vmatpush.msra.mxu0 %v577
        %3056 = vmatpush.msra.mxu0 %v576
        %3057 = vmatpush.msra.mxu0 %v575
        %3058 = vmatpush.msra.mxu0 %v574
        %3059 = vmatpush.msra.mxu0 %v573
        %3060 = vmatpush.msra.mxu0 %v572
        %3061 = vmatpush.msra.mxu0 %v571
        %3062 = vmatmul.f32.gmra.mxu0 %v3044
        %v3063 = vpop.f32.mrf.mxu0
        %v3064 = vadd.f32 0.0, %v3063
        %3065 = vdwg.mxu0
        %v3066 = vperm.slane %v3064, 0
        %v3067 = vsub.f32 %v2954, %v3066
        %v3068 = vsub.f32 %v2955, %v3066
        %v3069 = vsub.f32 %v2956, %v3066
        %v3070 = vsub.f32 %v2957, %v3066
        %v3071 = vsub.f32 %v2958, %v3066
        %v3072 = vsub.f32 %v2959, %v3066
        %v3073 = vsub.f32 %v2960, %v3066
        %v3074 = vsub.f32 %v2961, %v3066
        %v3075 = vsub.f32 %v2962, %v3066
        %v3076 = vsub.f32 %v2963, %v3066
        %v3077 = vsub.f32 %v2964, %v3066
        %v3078 = vsub.f32 %v2965, %v3066
        %v3079 = vsub.f32 %v2966, %v3066
        %v3080 = vsub.f32 %v2967, %v3066
        %v3081 = vsub.f32 %v2968, %v3066
        %v3082 = vsub.f32 %v2969, %v3066
        %v3083 = vsub.f32 %v2970, %v3066
        %v3084 = vsub.f32 %v2971, %v3066
        %v3085 = vsub.f32 %v2972, %v3066
        %v3086 = vsub.f32 %v2973, %v3066
        %v3087 = vsub.f32 %v2974, %v3066
        %v3088 = vsub.f32 %v2975, %v3066
        %v3089 = vsub.f32 %v2976, %v3066
        %v3090 = vsub.f32 %v2977, %v3066
        %v3091 = vsub.f32 %v2978, %v3066
        %v3092 = vsub.f32 %v2979, %v3066
        %v3093 = vsub.f32 %v2980, %v3066
        %v3094 = vsub.f32 %v2981, %v3066
        %v3095 = vsub.f32 %v2982, %v3066
        %v3096 = vsub.f32 %v2983, %v3066
        %v3097 = vsub.f32 %v2984, %v3066
        %v3098 = vsub.f32 %v2985, %v3066
        %v3099 = vmul.f32 %v3067, %v3067
        %v3100 = vmul.f32 %v3068, %v3068
        %v3101 = vmul.f32 %v3069, %v3069
        %v3102 = vmul.f32 %v3070, %v3070
        %v3103 = vmul.f32 %v3071, %v3071
        %v3104 = vmul.f32 %v3072, %v3072
        %v3105 = vmul.f32 %v3073, %v3073
        %v3106 = vmul.f32 %v3074, %v3074
        %v3107 = vmul.f32 %v3075, %v3075
        %v3108 = vmul.f32 %v3076, %v3076
        %v3109 = vmul.f32 %v3077, %v3077
        %v3110 = vmul.f32 %v3078, %v3078
        %v3111 = vmul.f32 %v3079, %v3079
        %v3112 = vmul.f32 %v3080, %v3080
        %v3113 = vmul.f32 %v3081, %v3081
        %v3114 = vmul.f32 %v3082, %v3082
        %v3115 = vmul.f32 %v3083, %v3083
        %v3116 = vmul.f32 %v3084, %v3084
        %v3117 = vmul.f32 %v3085, %v3085
        %v3118 = vmul.f32 %v3086, %v3086
        %v3119 = vmul.f32 %v3087, %v3087
        %v3120 = vmul.f32 %v3088, %v3088
        %v3121 = vmul.f32 %v3089, %v3089
        %v3122 = vmul.f32 %v3090, %v3090
        %v3123 = vmul.f32 %v3091, %v3091
        %v3124 = vmul.f32 %v3092, %v3092
        %v3125 = vmul.f32 %v3093, %v3093
        %v3126 = vmul.f32 %v3094, %v3094
        %v3127 = vmul.f32 %v3095, %v3095
        %v3128 = vmul.f32 %v3096, %v3096
        %v3129 = vmul.f32 %v3097, %v3097
        %v3130 = vmul.f32 %v3098, %v3098
        %v3131 = vadd.f32 %v3099, %v3100
        %v3132 = vadd.f32 %v3131, %v3101
        %v3133 = vadd.f32 %v3132, %v3102
        %v3134 = vadd.f32 %v3133, %v3103
        %v3135 = vadd.f32 %v3134, %v3104
        %v3136 = vadd.f32 %v3135, %v3105
        %v3137 = vadd.f32 %v3136, %v3106
        %v3138 = vadd.f32 %v3137, %v3107
        %v3139 = vadd.f32 %v3138, %v3108
        %v3140 = vadd.f32 %v3139, %v3109
        %v3141 = vadd.f32 %v3140, %v3110
        %v3142 = vadd.f32 %v3141, %v3111
        %v3143 = vadd.f32 %v3142, %v3112
        %v3144 = vadd.f32 %v3143, %v3113
        %v3145 = vadd.f32 %v3144, %v3114
        %v3146 = vadd.f32 %v3145, %v3115
        %v3147 = vadd.f32 %v3146, %v3116
        %v3148 = vadd.f32 %v3147, %v3117
        %v3149 = vadd.f32 %v3148, %v3118
        %v3150 = vadd.f32 %v3149, %v3119
        %v3151 = vadd.f32 %v3150, %v3120
        %v3152 = vadd.f32 %v3151, %v3121
        %v3153 = vadd.f32 %v3152, %v3122
        %v3154 = vadd.f32 %v3153, %v3123
        %v3155 = vadd.f32 %v3154, %v3124
        %v3156 = vadd.f32 %v3155, %v3125
        %v3157 = vadd.f32 %v3156, %v3126
        %v3158 = vadd.f32 %v3157, %v3127
        %v3159 = vadd.f32 %v3158, %v3128
        %v3160 = vadd.f32 %v3159, %v3129
        %v3161 = vadd.f32 %v3160, %v3130
        %v3162 = vrot.slane %v3161, 4
        %v3163 = vadd.f32 %v3161, %v3162
        %v3164 = vrot.slane %v3163, 2
        %v3165 = vadd.f32 %v3163, %v3164
        %v3166 = vrot.slane %v3165, 1
        %v3167 = vadd.f32 %v3165, %v3166
        %v3168 = vmul.f32 %v3167, 0.00390625
        %3169 = vmatpush.msra.mxu0 %v570
        %3170 = vmatpush.msra.mxu0 %v569
        %3171 = vmatpush.msra.mxu0 %v568
        %3172 = vmatpush.msra.mxu0 %v567
        %3173 = vmatpush.msra.mxu0 %v566
        %3174 = vmatpush.msra.mxu0 %v565
        %3175 = vmatpush.msra.mxu0 %v564
        %3176 = vmatpush.msra.mxu0 %v563
        %3177 = vmatpush.msra.mxu0 %v562
        %3178 = vmatpush.msra.mxu0 %v561
        %3179 = vmatpush.msra.mxu0 %v560
        %3180 = vmatpush.msra.mxu0 %v559
        %3181 = vmatpush.msra.mxu0 %v558
        %3182 = vmatpush.msra.mxu0 %v557
        %3183 = vmatpush.msra.mxu0 %v556
        %3184 = vmatpush.msra.mxu0 %v555
        %3185 = vmatmul.f32.gmra.mxu0 %v3168
        %v3186 = vpop.f32.mrf.mxu0
        %v3187 = vadd.f32 0.0, %v3186
        %3188 = vdwg.mxu0
        %3189 = vmatpush.msra.mxu0 %v586
        %3190 = vmatpush.msra.mxu0 %v585
        %3191 = vmatpush.msra.mxu0 %v584
        %3192 = vmatpush.msra.mxu0 %v583
        %3193 = vmatpush.msra.mxu0 %v582
        %3194 = vmatpush.msra.mxu0 %v581
        %3195 = vmatpush.msra.mxu0 %v580
        %3196 = vmatpush.msra.mxu0 %v579
        %3197 = vmatpush.msra.mxu0 %v578
        %3198 = vmatpush.msra.mxu0 %v577
        %3199 = vmatpush.msra.mxu0 %v576
        %3200 = vmatpush.msra.mxu0 %v575
        %3201 = vmatpush.msra.mxu0 %v574
        %3202 = vmatpush.msra.mxu0 %v573
        %3203 = vmatpush.msra.mxu0 %v572
        %3204 = vmatpush.msra.mxu0 %v571
        %3205 = vmatmul.f32.gmra.mxu0 %v3187
        %v3206 = vpop.f32.mrf.mxu0
        %v3207 = vadd.f32 0.0, %v3206
        %3208 = vdwg.mxu0
        %v3209 = vmax.f32 %v3207, 0.0
        %v3210 = vadd.f32 %v3209, 1e-05
        %v3211 = vrsqrt.pop %v3210
        %v3212 = vmul.f32 %v3211, %v3210
        %v3213 = vmul.f32 %v3212, %v3211
        %v3214 = vmul.f32 0.5, %v3213
        %v3215 = vsub.f32 1.5, %v3214
        %v3216 = vmul.f32 %v3211, %v3215
        %vm3217 = vweird.f32 %v3210
        %vm3218 = vweird.f32 %v3211
        %vm3219 = vmor %vm3217, %vm3218
        %v3220 = vsel %vm3219, %v3211, %v3216
        %v3221 = vperm.slane %v3220, 0
        %v3222 = vmul.f32 %v3067, %v3221
        %v3223 = vmul.f32 %v3068, %v3221
        %v3224 = vmul.f32 %v3069, %v3221
        %v3225 = vmul.f32 %v3070, %v3221
        %v3226 = vmul.f32 %v3071, %v3221
        %v3227 = vmul.f32 %v3072, %v3221
        %v3228 = vmul.f32 %v3073, %v3221
        %v3229 = vmul.f32 %v3074, %v3221
        %v3230 = vmul.f32 %v3075, %v3221
        %v3231 = vmul.f32 %v3076, %v3221
        %v3232 = vmul.f32 %v3077, %v3221
        %v3233 = vmul.f32 %v3078, %v3221
        %v3234 = vmul.f32 %v3079, %v3221
        %v3235 = vmul.f32 %v3080, %v3221
        %v3236 = vmul.f32 %v3081, %v3221
        %v3237 = vmul.f32 %v3082, %v3221
        %v3238 = vmul.f32 %v3083, %v3221
        %v3239 = vmul.f32 %v3084, %v3221
        %v3240 = vmul.f32 %v3085, %v3221
        %v3241 = vmul.f32 %v3086, %v3221
        %v3242 = vmul.f32 %v3087, %v3221
        %v3243 = vmul.f32 %v3088, %v3221
        %v3244 = vmul.f32 %v3089, %v3221
        %v3245 = vmul.f32 %v3090, %v3221
        %v3246 = vmul.f32 %v3091, %v3221
        %v3247 = vmul.f32 %v3092, %v3221
        %v3248 = vmul.f32 %v3093, %v3221
        %v3249 = vmul.f32 %v3094, %v3221
        %v3250 = vmul.f32 %v3095, %v3221
        %v3251 = vmul.f32 %v3096, %v3221
        %v3252 = vmul.f32 %v3097, %v3221
        %v3253 = vmul.f32 %v3098, %v3221
        %v3255 = vperm.slane %v2986, 0
        %v3257 = vmul.f32 %v3222, %v3255
        %v3258 = vmul.f32 %v3223, %v3255
        %v3259 = vmul.f32 %v3224, %v3255
        %v3260 = vmul.f32 %v3225, %v3255
        %v3261 = vmul.f32 %v3226, %v3255
        %v3262 = vmul.f32 %v3227, %v3255
        %v3263 = vmul.f32 %v3228, %v3255
        %v3264 = vmul.f32 %v3229, %v3255
        %v3265 = vmul.f32 %v3230, %v3255
        %v3266 = vmul.f32 %v3231, %v3255
        %v3267 = vmul.f32 %v3232, %v3255
        %v3268 = vmul.f32 %v3233, %v3255
        %v3269 = vmul.f32 %v3234, %v3255
        %v3270 = vmul.f32 %v3235, %v3255
        %v3271 = vmul.f32 %v3236, %v3255
        %v3272 = vmul.f32 %v3237, %v3255
        %v3273 = vmul.f32 %v3238, %v3255
        %v3274 = vmul.f32 %v3239, %v3255
        %v3275 = vmul.f32 %v3240, %v3255
        %v3276 = vmul.f32 %v3241, %v3255
        %v3277 = vmul.f32 %v3242, %v3255
        %v3278 = vmul.f32 %v3243, %v3255
        %v3279 = vmul.f32 %v3244, %v3255
        %v3280 = vmul.f32 %v3245, %v3255
        %v3281 = vmul.f32 %v3246, %v3255
        %v3282 = vmul.f32 %v3247, %v3255
        %v3283 = vmul.f32 %v3248, %v3255
        %v3284 = vmul.f32 %v3249, %v3255
        %v3285 = vmul.f32 %v3250, %v3255
        %v3286 = vmul.f32 %v3251, %v3255
        %v3287 = vmul.f32 %v3252, %v3255
        %v3288 = vmul.f32 %v3253, %v3255
        %v3290 = vperm.slane %v2987, 0
        %v3292 = vadd.f32 %v3257, %v3290
        %v3293 = vadd.f32 %v3258, %v3290
        %v3294 = vadd.f32 %v3259, %v3290
        %v3295 = vadd.f32 %v3260, %v3290
        %v3296 = vadd.f32 %v3261, %v3290
        %v3297 = vadd.f32 %v3262, %v3290
        %v3298 = vadd.f32 %v3263, %v3290
        %v3299 = vadd.f32 %v3264, %v3290
        %v3300 = vadd.f32 %v3265, %v3290
        %v3301 = vadd.f32 %v3266, %v3290
        %v3302 = vadd.f32 %v3267, %v3290
        %v3303 = vadd.f32 %v3268, %v3290
        %v3304 = vadd.f32 %v3269, %v3290
        %v3305 = vadd.f32 %v3270, %v3290
        %v3306 = vadd.f32 %v3271, %v3290
        %v3307 = vadd.f32 %v3272, %v3290
        %v3308 = vadd.f32 %v3273, %v3290
        %v3309 = vadd.f32 %v3274, %v3290
        %v3310 = vadd.f32 %v3275, %v3290
        %v3311 = vadd.f32 %v3276, %v3290
        %v3312 = vadd.f32 %v3277, %v3290
        %v3313 = vadd.f32 %v3278, %v3290
        %v3314 = vadd.f32 %v3279, %v3290
        %v3315 = vadd.f32 %v3280, %v3290
        %v3316 = vadd.f32 %v3281, %v3290
        %v3317 = vadd.f32 %v3282, %v3290
        %v3318 = vadd.f32 %v3283, %v3290
        %v3319 = vadd.f32 %v3284, %v3290
        %v3320 = vadd.f32 %v3285, %v3290
        %v3321 = vadd.f32 %v3286, %v3290
        %v3322 = vadd.f32 %v3287, %v3290
        %v3323 = vadd.f32 %v3288, %v3290
        %v3324 = vld [vmem:[%s551] sm:$0x1]
        %v3325 = vadd.f32 %v3324, 1.0
        %v3327 = vperm.slane %v3325, 0
        %v3329 = vmul.f32 %v3292, %v3327
        %v3330 = vmul.f32 %v3293, %v3327
        %v3331 = vmul.f32 %v3294, %v3327
        %v3332 = vmul.f32 %v3295, %v3327
        %v3333 = vmul.f32 %v3296, %v3327
        %v3334 = vmul.f32 %v3297, %v3327
        %v3335 = vmul.f32 %v3298, %v3327
        %v3336 = vmul.f32 %v3299, %v3327
        %v3337 = vmul.f32 %v3300, %v3327
        %v3338 = vmul.f32 %v3301, %v3327
        %v3339 = vmul.f32 %v3302, %v3327
        %v3340 = vmul.f32 %v3303, %v3327
        %v3341 = vmul.f32 %v3304, %v3327
        %v3342 = vmul.f32 %v3305, %v3327
        %v3343 = vmul.f32 %v3306, %v3327
        %v3344 = vmul.f32 %v3307, %v3327
        %v3345 = vmul.f32 %v3308, %v3327
        %v3346 = vmul.f32 %v3309, %v3327
        %v3347 = vmul.f32 %v3310, %v3327
        %v3348 = vmul.f32 %v3311, %v3327
        %v3349 = vmul.f32 %v3312, %v3327
        %v3350 = vmul.f32 %v3313, %v3327
        %v3351 = vmul.f32 %v3314, %v3327
        %v3352 = vmul.f32 %v3315, %v3327
        %v3353 = vmul.f32 %v3316, %v3327
        %v3354 = vmul.f32 %v3317, %v3327
        %v3355 = vmul.f32 %v3318, %v3327
        %v3356 = vmul.f32 %v3319, %v3327
        %v3357 = vmul.f32 %v3320, %v3327
        %v3358 = vmul.f32 %v3321, %v3327
        %v3359 = vmul.f32 %v3322, %v3327
        %v3360 = vmul.f32 %v3323, %v3327
        %v3361 = vld [vmem:[%s554] sm:$0x1]
        %v3363 = vperm.slane %v3361, 0
        %v3365 = vadd.f32 %v3329, %v3363
        %v3366 = vadd.f32 %v3330, %v3363
        %v3367 = vadd.f32 %v3331, %v3363
        %v3368 = vadd.f32 %v3332, %v3363
        %v3369 = vadd.f32 %v3333, %v3363
        %v3370 = vadd.f32 %v3334, %v3363
        %v3371 = vadd.f32 %v3335, %v3363
        %v3372 = vadd.f32 %v3336, %v3363
        %v3373 = vadd.f32 %v3337, %v3363
        %v3374 = vadd.f32 %v3338, %v3363
        %v3375 = vadd.f32 %v3339, %v3363
        %v3376 = vadd.f32 %v3340, %v3363
        %v3377 = vadd.f32 %v3341, %v3363
        %v3378 = vadd.f32 %v3342, %v3363
        %v3379 = vadd.f32 %v3343, %v3363
        %v3380 = vadd.f32 %v3344, %v3363
        %v3381 = vadd.f32 %v3345, %v3363
        %v3382 = vadd.f32 %v3346, %v3363
        %v3383 = vadd.f32 %v3347, %v3363
        %v3384 = vadd.f32 %v3348, %v3363
        %v3385 = vadd.f32 %v3349, %v3363
        %v3386 = vadd.f32 %v3350, %v3363
        %v3387 = vadd.f32 %v3351, %v3363
        %v3388 = vadd.f32 %v3352, %v3363
        %v3389 = vadd.f32 %v3353, %v3363
        %v3390 = vadd.f32 %v3354, %v3363
        %v3391 = vadd.f32 %v3355, %v3363
        %v3392 = vadd.f32 %v3356, %v3363
        %v3393 = vadd.f32 %v3357, %v3363
        %v3394 = vadd.f32 %v3358, %v3363
        %v3395 = vadd.f32 %v3359, %v3363
        %v3396 = vadd.f32 %v3360, %v3363
        %v3397 = vxor.u32 %v3365, 2147483648
        %v3398 = vxor.u32 %v3366, 2147483648
        %v3399 = vxor.u32 %v3367, 2147483648
        %v3400 = vxor.u32 %v3368, 2147483648
        %v3401 = vxor.u32 %v3369, 2147483648
        %v3402 = vxor.u32 %v3370, 2147483648
        %v3403 = vxor.u32 %v3371, 2147483648
        %v3404 = vxor.u32 %v3372, 2147483648
        %v3405 = vxor.u32 %v3373, 2147483648
        %v3406 = vxor.u32 %v3374, 2147483648
        %v3407 = vxor.u32 %v3375, 2147483648
        %v3408 = vxor.u32 %v3376, 2147483648
        %v3409 = vxor.u32 %v3377, 2147483648
        %v3410 = vxor.u32 %v3378, 2147483648
        %v3411 = vxor.u32 %v3379, 2147483648
        %v3412 = vxor.u32 %v3380, 2147483648
        %v3413 = vxor.u32 %v3381, 2147483648
        %v3414 = vxor.u32 %v3382, 2147483648
        %v3415 = vxor.u32 %v3383, 2147483648
        %v3416 = vxor.u32 %v3384, 2147483648
        %v3417 = vxor.u32 %v3385, 2147483648
        %v3418 = vxor.u32 %v3386, 2147483648
        %v3419 = vxor.u32 %v3387, 2147483648
        %v3420 = vxor.u32 %v3388, 2147483648
        %v3421 = vxor.u32 %v3389, 2147483648
        %v3422 = vxor.u32 %v3390, 2147483648
        %v3423 = vxor.u32 %v3391, 2147483648
        %v3424 = vxor.u32 %v3392, 2147483648
        %v3425 = vxor.u32 %v3393, 2147483648
        %v3426 = vxor.u32 %v3394, 2147483648
        %v3427 = vxor.u32 %v3395, 2147483648
        %v3428 = vxor.u32 %v3396, 2147483648
        %v3429 = vmul.f32 %v3397, 1.442695
        %v3430 = vpow.pop %v3429
        %v3431 = vmul.f32 %v3398, 1.442695
        %v3432 = vpow.pop %v3431
        %v3433 = vmul.f32 %v3399, 1.442695
        %v3434 = vpow.pop %v3433
        %v3435 = vmul.f32 %v3400, 1.442695
        %v3436 = vpow.pop %v3435
        %v3437 = vmul.f32 %v3401, 1.442695
        %v3438 = vpow.pop %v3437
        %v3439 = vmul.f32 %v3402, 1.442695
        %v3440 = vpow.pop %v3439
        %v3441 = vmul.f32 %v3403, 1.442695
        %v3442 = vpow.pop %v3441
        %v3443 = vmul.f32 %v3404, 1.442695
        %v3444 = vpow.pop %v3443
        %v3445 = vmul.f32 %v3405, 1.442695
        %v3446 = vpow.pop %v3445
        %v3447 = vmul.f32 %v3406, 1.442695
        %v3448 = vpow.pop %v3447
        %v3449 = vmul.f32 %v3407, 1.442695
        %v3450 = vpow.pop %v3449
        %v3451 = vmul.f32 %v3408, 1.442695
        %v3452 = vpow.pop %v3451
        %v3453 = vmul.f32 %v3409, 1.442695
        %v3454 = vpow.pop %v3453
        %v3455 = vmul.f32 %v3410, 1.442695
        %v3456 = vpow.pop %v3455
        %v3457 = vmul.f32 %v3411, 1.442695
        %v3458 = vpow.pop %v3457
        %v3459 = vmul.f32 %v3412, 1.442695
        %v3460 = vpow.pop %v3459
        %v3461 = vmul.f32 %v3413, 1.442695
        %v3462 = vpow.pop %v3461
        %v3463 = vmul.f32 %v3414, 1.442695
        %v3464 = vpow.pop %v3463
        %v3465 = vmul.f32 %v3415, 1.442695
        %v3466 = vpow.pop %v3465
        %v3467 = vmul.f32 %v3416, 1.442695
        %v3468 = vpow.pop %v3467
        %v3469 = vmul.f32 %v3417, 1.442695
        %v3470 = vpow.pop %v3469
        %v3471 = vmul.f32 %v3418, 1.442695
        %v3472 = vpow.pop %v3471
        %v3473 = vmul.f32 %v3419, 1.442695
        %v3474 = vpow.pop %v3473
        %v3475 = vmul.f32 %v3420, 1.442695
        %v3476 = vpow.pop %v3475
        %v3477 = vmul.f32 %v3421, 1.442695
        %v3478 = vpow.pop %v3477
        %v3479 = vmul.f32 %v3422, 1.442695
        %v3480 = vpow.pop %v3479
        %v3481 = vmul.f32 %v3423, 1.442695
        %v3482 = vpow.pop %v3481
        %v3483 = vmul.f32 %v3424, 1.442695
        %v3484 = vpow.pop %v3483
        %v3485 = vmul.f32 %v3425, 1.442695
        %v3486 = vpow.pop %v3485
        %v3487 = vmul.f32 %v3426, 1.442695
        %v3488 = vpow.pop %v3487
        %v3489 = vmul.f32 %v3427, 1.442695
        %v3490 = vpow.pop %v3489
        %v3491 = vmul.f32 %v3428, 1.442695
        %v3492 = vpow.pop %v3491
        %v3493 = vadd.f32 %v3430, 1.0
        %v3494 = vadd.f32 %v3432, 1.0
        %v3495 = vadd.f32 %v3434, 1.0
        %v3496 = vadd.f32 %v3436, 1.0
        %v3497 = vadd.f32 %v3438, 1.0
        %v3498 = vadd.f32 %v3440, 1.0
        %v3499 = vadd.f32 %v3442, 1.0
        %v3500 = vadd.f32 %v3444, 1.0
        %v3501 = vadd.f32 %v3446, 1.0
        %v3502 = vadd.f32 %v3448, 1.0
        %v3503 = vadd.f32 %v3450, 1.0
        %v3504 = vadd.f32 %v3452, 1.0
        %v3505 = vadd.f32 %v3454, 1.0
        %v3506 = vadd.f32 %v3456, 1.0
        %v3507 = vadd.f32 %v3458, 1.0
        %v3508 = vadd.f32 %v3460, 1.0
        %v3509 = vadd.f32 %v3462, 1.0
        %v3510 = vadd.f32 %v3464, 1.0
        %v3511 = vadd.f32 %v3466, 1.0
        %v3512 = vadd.f32 %v3468, 1.0
        %v3513 = vadd.f32 %v3470, 1.0
        %v3514 = vadd.f32 %v3472, 1.0
        %v3515 = vadd.f32 %v3474, 1.0
        %v3516 = vadd.f32 %v3476, 1.0
        %v3517 = vadd.f32 %v3478, 1.0
        %v3518 = vadd.f32 %v3480, 1.0
        %v3519 = vadd.f32 %v3482, 1.0
        %v3520 = vadd.f32 %v3484, 1.0
        %v3521 = vadd.f32 %v3486, 1.0
        %v3522 = vadd.f32 %v3488, 1.0
        %v3523 = vadd.f32 %v3490, 1.0
        %v3524 = vadd.f32 %v3492, 1.0
        %v3525 = vrcp.pop %v3493
        %v3526 = vmul.f32 %v3493, %v3525
        %v3527 = vsub.f32 1.0, %v3526
        %v3528 = vmul.f32 %v3525, %v3527
        %v3529 = vadd.f32 %v3525, %v3528
        %vm3530 = vweird.f32 %v3493
        %vm3531 = vweird.f32 %v3525
        %vm3532 = vmor %vm3530, %vm3531
        %v3533 = vsel %vm3532, %v3525, %v3529
        %v3534 = vand.u32 2147483647, %v3493
        %vm3535 = vcmp.eq.f32.partialorder %v3534, 8.507059e+37
        %v3536 = vand.u32 %v3493, 2147483648
        %v3537 = vor.u32 1.1754944e-38, %v3536
        %v3538 = vsel %vm3535, %v3537, %v3533
        %v3539 = vmul.f32 1.0, %v3538
        %v3540 = vrcp.pop %v3494
        %v3541 = vmul.f32 %v3494, %v3540
        %v3542 = vsub.f32 1.0, %v3541
        %v3543 = vmul.f32 %v3540, %v3542
        %v3544 = vadd.f32 %v3540, %v3543
        %vm3545 = vweird.f32 %v3494
        %vm3546 = vweird.f32 %v3540
        %vm3547 = vmor %vm3545, %vm3546
        %v3548 = vsel %vm3547, %v3540, %v3544
        %v3549 = vand.u32 2147483647, %v3494
        %vm3550 = vcmp.eq.f32.partialorder %v3549, 8.507059e+37
        %v3551 = vand.u32 %v3494, 2147483648
        %v3552 = vor.u32 1.1754944e-38, %v3551
        %v3553 = vsel %vm3550, %v3552, %v3548
        %v3554 = vmul.f32 1.0, %v3553
        %v3555 = vrcp.pop %v3495
        %v3556 = vmul.f32 %v3495, %v3555
        %v3557 = vsub.f32 1.0, %v3556
        %v3558 = vmul.f32 %v3555, %v3557
        %v3559 = vadd.f32 %v3555, %v3558
        %vm3560 = vweird.f32 %v3495
        %vm3561 = vweird.f32 %v3555
        %vm3562 = vmor %vm3560, %vm3561
        %v3563 = vsel %vm3562, %v3555, %v3559
        %v3564 = vand.u32 2147483647, %v3495
        %vm3565 = vcmp.eq.f32.partialorder %v3564, 8.507059e+37
        %v3566 = vand.u32 %v3495, 2147483648
        %v3567 = vor.u32 1.1754944e-38, %v3566
        %v3568 = vsel %vm3565, %v3567, %v3563
        %v3569 = vmul.f32 1.0, %v3568
        %v3570 = vrcp.pop %v3496
        %v3571 = vmul.f32 %v3496, %v3570
        %v3572 = vsub.f32 1.0, %v3571
        %v3573 = vmul.f32 %v3570, %v3572
        %v3574 = vadd.f32 %v3570, %v3573
        %vm3575 = vweird.f32 %v3496
        %vm3576 = vweird.f32 %v3570
        %vm3577 = vmor %vm3575, %vm3576
        %v3578 = vsel %vm3577, %v3570, %v3574
        %v3579 = vand.u32 2147483647, %v3496
        %vm3580 = vcmp.eq.f32.partialorder %v3579, 8.507059e+37
        %v3581 = vand.u32 %v3496, 2147483648
        %v3582 = vor.u32 1.1754944e-38, %v3581
        %v3583 = vsel %vm3580, %v3582, %v3578
        %v3584 = vmul.f32 1.0, %v3583
        %v3585 = vrcp.pop %v3497
        %v3586 = vmul.f32 %v3497, %v3585
        %v3587 = vsub.f32 1.0, %v3586
        %v3588 = vmul.f32 %v3585, %v3587
        %v3589 = vadd.f32 %v3585, %v3588
        %vm3590 = vweird.f32 %v3497
        %vm3591 = vweird.f32 %v3585
        %vm3592 = vmor %vm3590, %vm3591
        %v3593 = vsel %vm3592, %v3585, %v3589
        %v3594 = vand.u32 2147483647, %v3497
        %vm3595 = vcmp.eq.f32.partialorder %v3594, 8.507059e+37
        %v3596 = vand.u32 %v3497, 2147483648
        %v3597 = vor.u32 1.1754944e-38, %v3596
        %v3598 = vsel %vm3595, %v3597, %v3593
        %v3599 = vmul.f32 1.0, %v3598
        %v3600 = vrcp.pop %v3498
        %v3601 = vmul.f32 %v3498, %v3600
        %v3602 = vsub.f32 1.0, %v3601
        %v3603 = vmul.f32 %v3600, %v3602
        %v3604 = vadd.f32 %v3600, %v3603
        %vm3605 = vweird.f32 %v3498
        %vm3606 = vweird.f32 %v3600
        %vm3607 = vmor %vm3605, %vm3606
        %v3608 = vsel %vm3607, %v3600, %v3604
        %v3609 = vand.u32 2147483647, %v3498
        %vm3610 = vcmp.eq.f32.partialorder %v3609, 8.507059e+37
        %v3611 = vand.u32 %v3498, 2147483648
        %v3612 = vor.u32 1.1754944e-38, %v3611
        %v3613 = vsel %vm3610, %v3612, %v3608
        %v3614 = vmul.f32 1.0, %v3613
        %v3615 = vrcp.pop %v3499
        %v3616 = vmul.f32 %v3499, %v3615
        %v3617 = vsub.f32 1.0, %v3616
        %v3618 = vmul.f32 %v3615, %v3617
        %v3619 = vadd.f32 %v3615, %v3618
        %vm3620 = vweird.f32 %v3499
        %vm3621 = vweird.f32 %v3615
        %vm3622 = vmor %vm3620, %vm3621
        %v3623 = vsel %vm3622, %v3615, %v3619
        %v3624 = vand.u32 2147483647, %v3499
        %vm3625 = vcmp.eq.f32.partialorder %v3624, 8.507059e+37
        %v3626 = vand.u32 %v3499, 2147483648
        %v3627 = vor.u32 1.1754944e-38, %v3626
        %v3628 = vsel %vm3625, %v3627, %v3623
        %v3629 = vmul.f32 1.0, %v3628
        %v3630 = vrcp.pop %v3500
        %v3631 = vmul.f32 %v3500, %v3630
        %v3632 = vsub.f32 1.0, %v3631
        %v3633 = vmul.f32 %v3630, %v3632
        %v3634 = vadd.f32 %v3630, %v3633
        %vm3635 = vweird.f32 %v3500
        %vm3636 = vweird.f32 %v3630
        %vm3637 = vmor %vm3635, %vm3636
        %v3638 = vsel %vm3637, %v3630, %v3634
        %v3639 = vand.u32 2147483647, %v3500
        %vm3640 = vcmp.eq.f32.partialorder %v3639, 8.507059e+37
        %v3641 = vand.u32 %v3500, 2147483648
        %v3642 = vor.u32 1.1754944e-38, %v3641
        %v3643 = vsel %vm3640, %v3642, %v3638
        %v3644 = vmul.f32 1.0, %v3643
        %v3645 = vrcp.pop %v3501
        %v3646 = vmul.f32 %v3501, %v3645
        %v3647 = vsub.f32 1.0, %v3646
        %v3648 = vmul.f32 %v3645, %v3647
        %v3649 = vadd.f32 %v3645, %v3648
        %vm3650 = vweird.f32 %v3501
        %vm3651 = vweird.f32 %v3645
        %vm3652 = vmor %vm3650, %vm3651
        %v3653 = vsel %vm3652, %v3645, %v3649
        %v3654 = vand.u32 2147483647, %v3501
        %vm3655 = vcmp.eq.f32.partialorder %v3654, 8.507059e+37
        %v3656 = vand.u32 %v3501, 2147483648
        %v3657 = vor.u32 1.1754944e-38, %v3656
        %v3658 = vsel %vm3655, %v3657, %v3653
        %v3659 = vmul.f32 1.0, %v3658
        %v3660 = vrcp.pop %v3502
        %v3661 = vmul.f32 %v3502, %v3660
        %v3662 = vsub.f32 1.0, %v3661
        %v3663 = vmul.f32 %v3660, %v3662
        %v3664 = vadd.f32 %v3660, %v3663
        %vm3665 = vweird.f32 %v3502
        %vm3666 = vweird.f32 %v3660
        %vm3667 = vmor %vm3665, %vm3666
        %v3668 = vsel %vm3667, %v3660, %v3664
        %v3669 = vand.u32 2147483647, %v3502
        %vm3670 = vcmp.eq.f32.partialorder %v3669, 8.507059e+37
        %v3671 = vand.u32 %v3502, 2147483648
        %v3672 = vor.u32 1.1754944e-38, %v3671
        %v3673 = vsel %vm3670, %v3672, %v3668
        %v3674 = vmul.f32 1.0, %v3673
        %v3675 = vrcp.pop %v3503
        %v3676 = vmul.f32 %v3503, %v3675
        %v3677 = vsub.f32 1.0, %v3676
        %v3678 = vmul.f32 %v3675, %v3677
        %v3679 = vadd.f32 %v3675, %v3678
        %vm3680 = vweird.f32 %v3503
        %vm3681 = vweird.f32 %v3675
        %vm3682 = vmor %vm3680, %vm3681
        %v3683 = vsel %vm3682, %v3675, %v3679
        %v3684 = vand.u32 2147483647, %v3503
        %vm3685 = vcmp.eq.f32.partialorder %v3684, 8.507059e+37
        %v3686 = vand.u32 %v3503, 2147483648
        %v3687 = vor.u32 1.1754944e-38, %v3686
        %v3688 = vsel %vm3685, %v3687, %v3683
        %v3689 = vmul.f32 1.0, %v3688
        %v3690 = vrcp.pop %v3504
        %v3691 = vmul.f32 %v3504, %v3690
        %v3692 = vsub.f32 1.0, %v3691
        %v3693 = vmul.f32 %v3690, %v3692
        %v3694 = vadd.f32 %v3690, %v3693
        %vm3695 = vweird.f32 %v3504
        %vm3696 = vweird.f32 %v3690
        %vm3697 = vmor %vm3695, %vm3696
        %v3698 = vsel %vm3697, %v3690, %v3694
        %v3699 = vand.u32 2147483647, %v3504
        %vm3700 = vcmp.eq.f32.partialorder %v3699, 8.507059e+37
        %v3701 = vand.u32 %v3504, 2147483648
        %v3702 = vor.u32 1.1754944e-38, %v3701
        %v3703 = vsel %vm3700, %v3702, %v3698
        %v3704 = vmul.f32 1.0, %v3703
        %v3705 = vrcp.pop %v3505
        %v3706 = vmul.f32 %v3505, %v3705
        %v3707 = vsub.f32 1.0, %v3706
        %v3708 = vmul.f32 %v3705, %v3707
        %v3709 = vadd.f32 %v3705, %v3708
        %vm3710 = vweird.f32 %v3505
        %vm3711 = vweird.f32 %v3705
        %vm3712 = vmor %vm3710, %vm3711
        %v3713 = vsel %vm3712, %v3705, %v3709
        %v3714 = vand.u32 2147483647, %v3505
        %vm3715 = vcmp.eq.f32.partialorder %v3714, 8.507059e+37
        %v3716 = vand.u32 %v3505, 2147483648
        %v3717 = vor.u32 1.1754944e-38, %v3716
        %v3718 = vsel %vm3715, %v3717, %v3713
        %v3719 = vmul.f32 1.0, %v3718
        %v3720 = vrcp.pop %v3506
        %v3721 = vmul.f32 %v3506, %v3720
        %v3722 = vsub.f32 1.0, %v3721
        %v3723 = vmul.f32 %v3720, %v3722
        %v3724 = vadd.f32 %v3720, %v3723
        %vm3725 = vweird.f32 %v3506
        %vm3726 = vweird.f32 %v3720
        %vm3727 = vmor %vm3725, %vm3726
        %v3728 = vsel %vm3727, %v3720, %v3724
        %v3729 = vand.u32 2147483647, %v3506
        %vm3730 = vcmp.eq.f32.partialorder %v3729, 8.507059e+37
        %v3731 = vand.u32 %v3506, 2147483648
        %v3732 = vor.u32 1.1754944e-38, %v3731
        %v3733 = vsel %vm3730, %v3732, %v3728
        %v3734 = vmul.f32 1.0, %v3733
        %v3735 = vrcp.pop %v3507
        %v3736 = vmul.f32 %v3507, %v3735
        %v3737 = vsub.f32 1.0, %v3736
        %v3738 = vmul.f32 %v3735, %v3737
        %v3739 = vadd.f32 %v3735, %v3738
        %vm3740 = vweird.f32 %v3507
        %vm3741 = vweird.f32 %v3735
        %vm3742 = vmor %vm3740, %vm3741
        %v3743 = vsel %vm3742, %v3735, %v3739
        %v3744 = vand.u32 2147483647, %v3507
        %vm3745 = vcmp.eq.f32.partialorder %v3744, 8.507059e+37
        %v3746 = vand.u32 %v3507, 2147483648
        %v3747 = vor.u32 1.1754944e-38, %v3746
        %v3748 = vsel %vm3745, %v3747, %v3743
        %v3749 = vmul.f32 1.0, %v3748
        %v3750 = vrcp.pop %v3508
        %v3751 = vmul.f32 %v3508, %v3750
        %v3752 = vsub.f32 1.0, %v3751
        %v3753 = vmul.f32 %v3750, %v3752
        %v3754 = vadd.f32 %v3750, %v3753
        %vm3755 = vweird.f32 %v3508
        %vm3756 = vweird.f32 %v3750
        %vm3757 = vmor %vm3755, %vm3756
        %v3758 = vsel %vm3757, %v3750, %v3754
        %v3759 = vand.u32 2147483647, %v3508
        %vm3760 = vcmp.eq.f32.partialorder %v3759, 8.507059e+37
        %v3761 = vand.u32 %v3508, 2147483648
        %v3762 = vor.u32 1.1754944e-38, %v3761
        %v3763 = vsel %vm3760, %v3762, %v3758
        %v3764 = vmul.f32 1.0, %v3763
        %v3765 = vrcp.pop %v3509
        %v3766 = vmul.f32 %v3509, %v3765
        %v3767 = vsub.f32 1.0, %v3766
        %v3768 = vmul.f32 %v3765, %v3767
        %v3769 = vadd.f32 %v3765, %v3768
        %vm3770 = vweird.f32 %v3509
        %vm3771 = vweird.f32 %v3765
        %vm3772 = vmor %vm3770, %vm3771
        %v3773 = vsel %vm3772, %v3765, %v3769
        %v3774 = vand.u32 2147483647, %v3509
        %vm3775 = vcmp.eq.f32.partialorder %v3774, 8.507059e+37
        %v3776 = vand.u32 %v3509, 2147483648
        %v3777 = vor.u32 1.1754944e-38, %v3776
        %v3778 = vsel %vm3775, %v3777, %v3773
        %v3779 = vmul.f32 1.0, %v3778
        %v3780 = vrcp.pop %v3510
        %v3781 = vmul.f32 %v3510, %v3780
        %v3782 = vsub.f32 1.0, %v3781
        %v3783 = vmul.f32 %v3780, %v3782
        %v3784 = vadd.f32 %v3780, %v3783
        %vm3785 = vweird.f32 %v3510
        %vm3786 = vweird.f32 %v3780
        %vm3787 = vmor %vm3785, %vm3786
        %v3788 = vsel %vm3787, %v3780, %v3784
        %v3789 = vand.u32 2147483647, %v3510
        %vm3790 = vcmp.eq.f32.partialorder %v3789, 8.507059e+37
        %v3791 = vand.u32 %v3510, 2147483648
        %v3792 = vor.u32 1.1754944e-38, %v3791
        %v3793 = vsel %vm3790, %v3792, %v3788
        %v3794 = vmul.f32 1.0, %v3793
        %v3795 = vrcp.pop %v3511
        %v3796 = vmul.f32 %v3511, %v3795
        %v3797 = vsub.f32 1.0, %v3796
        %v3798 = vmul.f32 %v3795, %v3797
        %v3799 = vadd.f32 %v3795, %v3798
        %vm3800 = vweird.f32 %v3511
        %vm3801 = vweird.f32 %v3795
        %vm3802 = vmor %vm3800, %vm3801
        %v3803 = vsel %vm3802, %v3795, %v3799
        %v3804 = vand.u32 2147483647, %v3511
        %vm3805 = vcmp.eq.f32.partialorder %v3804, 8.507059e+37
        %v3806 = vand.u32 %v3511, 2147483648
        %v3807 = vor.u32 1.1754944e-38, %v3806
        %v3808 = vsel %vm3805, %v3807, %v3803
        %v3809 = vmul.f32 1.0, %v3808
        %v3810 = vrcp.pop %v3512
        %v3811 = vmul.f32 %v3512, %v3810
        %v3812 = vsub.f32 1.0, %v3811
        %v3813 = vmul.f32 %v3810, %v3812
        %v3814 = vadd.f32 %v3810, %v3813
        %vm3815 = vweird.f32 %v3512
        %vm3816 = vweird.f32 %v3810
        %vm3817 = vmor %vm3815, %vm3816
        %v3818 = vsel %vm3817, %v3810, %v3814
        %v3819 = vand.u32 2147483647, %v3512
        %vm3820 = vcmp.eq.f32.partialorder %v3819, 8.507059e+37
        %v3821 = vand.u32 %v3512, 2147483648
        %v3822 = vor.u32 1.1754944e-38, %v3821
        %v3823 = vsel %vm3820, %v3822, %v3818
        %v3824 = vmul.f32 1.0, %v3823
        %v3825 = vrcp.pop %v3513
        %v3826 = vmul.f32 %v3513, %v3825
        %v3827 = vsub.f32 1.0, %v3826
        %v3828 = vmul.f32 %v3825, %v3827
        %v3829 = vadd.f32 %v3825, %v3828
        %vm3830 = vweird.f32 %v3513
        %vm3831 = vweird.f32 %v3825
        %vm3832 = vmor %vm3830, %vm3831
        %v3833 = vsel %vm3832, %v3825, %v3829
        %v3834 = vand.u32 2147483647, %v3513
        %vm3835 = vcmp.eq.f32.partialorder %v3834, 8.507059e+37
        %v3836 = vand.u32 %v3513, 2147483648
        %v3837 = vor.u32 1.1754944e-38, %v3836
        %v3838 = vsel %vm3835, %v3837, %v3833
        %v3839 = vmul.f32 1.0, %v3838
        %v3840 = vrcp.pop %v3514
        %v3841 = vmul.f32 %v3514, %v3840
        %v3842 = vsub.f32 1.0, %v3841
        %v3843 = vmul.f32 %v3840, %v3842
        %v3844 = vadd.f32 %v3840, %v3843
        %vm3845 = vweird.f32 %v3514
        %vm3846 = vweird.f32 %v3840
        %vm3847 = vmor %vm3845, %vm3846
        %v3848 = vsel %vm3847, %v3840, %v3844
        %v3849 = vand.u32 2147483647, %v3514
        %vm3850 = vcmp.eq.f32.partialorder %v3849, 8.507059e+37
        %v3851 = vand.u32 %v3514, 2147483648
        %v3852 = vor.u32 1.1754944e-38, %v3851
        %v3853 = vsel %vm3850, %v3852, %v3848
        %v3854 = vmul.f32 1.0, %v3853
        %v3855 = vrcp.pop %v3515
        %v3856 = vmul.f32 %v3515, %v3855
        %v3857 = vsub.f32 1.0, %v3856
        %v3858 = vmul.f32 %v3855, %v3857
        %v3859 = vadd.f32 %v3855, %v3858
        %vm3860 = vweird.f32 %v3515
        %vm3861 = vweird.f32 %v3855
        %vm3862 = vmor %vm3860, %vm3861
        %v3863 = vsel %vm3862, %v3855, %v3859
        %v3864 = vand.u32 2147483647, %v3515
        %vm3865 = vcmp.eq.f32.partialorder %v3864, 8.507059e+37
        %v3866 = vand.u32 %v3515, 2147483648
        %v3867 = vor.u32 1.1754944e-38, %v3866
        %v3868 = vsel %vm3865, %v3867, %v3863
        %v3869 = vmul.f32 1.0, %v3868
        %v3870 = vrcp.pop %v3516
        %v3871 = vmul.f32 %v3516, %v3870
        %v3872 = vsub.f32 1.0, %v3871
        %v3873 = vmul.f32 %v3870, %v3872
        %v3874 = vadd.f32 %v3870, %v3873
        %vm3875 = vweird.f32 %v3516
        %vm3876 = vweird.f32 %v3870
        %vm3877 = vmor %vm3875, %vm3876
        %v3878 = vsel %vm3877, %v3870, %v3874
        %v3879 = vand.u32 2147483647, %v3516
        %vm3880 = vcmp.eq.f32.partialorder %v3879, 8.507059e+37
        %v3881 = vand.u32 %v3516, 2147483648
        %v3882 = vor.u32 1.1754944e-38, %v3881
        %v3883 = vsel %vm3880, %v3882, %v3878
        %v3884 = vmul.f32 1.0, %v3883
        %v3885 = vrcp.pop %v3517
        %v3886 = vmul.f32 %v3517, %v3885
        %v3887 = vsub.f32 1.0, %v3886
        %v3888 = vmul.f32 %v3885, %v3887
        %v3889 = vadd.f32 %v3885, %v3888
        %vm3890 = vweird.f32 %v3517
        %vm3891 = vweird.f32 %v3885
        %vm3892 = vmor %vm3890, %vm3891
        %v3893 = vsel %vm3892, %v3885, %v3889
        %v3894 = vand.u32 2147483647, %v3517
        %vm3895 = vcmp.eq.f32.partialorder %v3894, 8.507059e+37
        %v3896 = vand.u32 %v3517, 2147483648
        %v3897 = vor.u32 1.1754944e-38, %v3896
        %v3898 = vsel %vm3895, %v3897, %v3893
        %v3899 = vmul.f32 1.0, %v3898
        %v3900 = vrcp.pop %v3518
        %v3901 = vmul.f32 %v3518, %v3900
        %v3902 = vsub.f32 1.0, %v3901
        %v3903 = vmul.f32 %v3900, %v3902
        %v3904 = vadd.f32 %v3900, %v3903
        %vm3905 = vweird.f32 %v3518
        %vm3906 = vweird.f32 %v3900
        %vm3907 = vmor %vm3905, %vm3906
        %v3908 = vsel %vm3907, %v3900, %v3904
        %v3909 = vand.u32 2147483647, %v3518
        %vm3910 = vcmp.eq.f32.partialorder %v3909, 8.507059e+37
        %v3911 = vand.u32 %v3518, 2147483648
        %v3912 = vor.u32 1.1754944e-38, %v3911
        %v3913 = vsel %vm3910, %v3912, %v3908
        %v3914 = vmul.f32 1.0, %v3913
        %v3915 = vrcp.pop %v3519
        %v3916 = vmul.f32 %v3519, %v3915
        %v3917 = vsub.f32 1.0, %v3916
        %v3918 = vmul.f32 %v3915, %v3917
        %v3919 = vadd.f32 %v3915, %v3918
        %vm3920 = vweird.f32 %v3519
        %vm3921 = vweird.f32 %v3915
        %vm3922 = vmor %vm3920, %vm3921
        %v3923 = vsel %vm3922, %v3915, %v3919
        %v3924 = vand.u32 2147483647, %v3519
        %vm3925 = vcmp.eq.f32.partialorder %v3924, 8.507059e+37
        %v3926 = vand.u32 %v3519, 2147483648
        %v3927 = vor.u32 1.1754944e-38, %v3926
        %v3928 = vsel %vm3925, %v3927, %v3923
        %v3929 = vmul.f32 1.0, %v3928
        %v3930 = vrcp.pop %v3520
        %v3931 = vmul.f32 %v3520, %v3930
        %v3932 = vsub.f32 1.0, %v3931
        %v3933 = vmul.f32 %v3930, %v3932
        %v3934 = vadd.f32 %v3930, %v3933
        %vm3935 = vweird.f32 %v3520
        %vm3936 = vweird.f32 %v3930
        %vm3937 = vmor %vm3935, %vm3936
        %v3938 = vsel %vm3937, %v3930, %v3934
        %v3939 = vand.u32 2147483647, %v3520
        %vm3940 = vcmp.eq.f32.partialorder %v3939, 8.507059e+37
        %v3941 = vand.u32 %v3520, 2147483648
        %v3942 = vor.u32 1.1754944e-38, %v3941
        %v3943 = vsel %vm3940, %v3942, %v3938
        %v3944 = vmul.f32 1.0, %v3943
        %v3945 = vrcp.pop %v3521
        %v3946 = vmul.f32 %v3521, %v3945
        %v3947 = vsub.f32 1.0, %v3946
        %v3948 = vmul.f32 %v3945, %v3947
        %v3949 = vadd.f32 %v3945, %v3948
        %vm3950 = vweird.f32 %v3521
        %vm3951 = vweird.f32 %v3945
        %vm3952 = vmor %vm3950, %vm3951
        %v3953 = vsel %vm3952, %v3945, %v3949
        %v3954 = vand.u32 2147483647, %v3521
        %vm3955 = vcmp.eq.f32.partialorder %v3954, 8.507059e+37
        %v3956 = vand.u32 %v3521, 2147483648
        %v3957 = vor.u32 1.1754944e-38, %v3956
        %v3958 = vsel %vm3955, %v3957, %v3953
        %v3959 = vmul.f32 1.0, %v3958
        %v3960 = vrcp.pop %v3522
        %v3961 = vmul.f32 %v3522, %v3960
        %v3962 = vsub.f32 1.0, %v3961
        %v3963 = vmul.f32 %v3960, %v3962
        %v3964 = vadd.f32 %v3960, %v3963
        %vm3965 = vweird.f32 %v3522
        %vm3966 = vweird.f32 %v3960
        %vm3967 = vmor %vm3965, %vm3966
        %v3968 = vsel %vm3967, %v3960, %v3964
        %v3969 = vand.u32 2147483647, %v3522
        %vm3970 = vcmp.eq.f32.partialorder %v3969, 8.507059e+37
        %v3971 = vand.u32 %v3522, 2147483648
        %v3972 = vor.u32 1.1754944e-38, %v3971
        %v3973 = vsel %vm3970, %v3972, %v3968
        %v3974 = vmul.f32 1.0, %v3973
        %v3975 = vrcp.pop %v3523
        %v3976 = vmul.f32 %v3523, %v3975
        %v3977 = vsub.f32 1.0, %v3976
        %v3978 = vmul.f32 %v3975, %v3977
        %v3979 = vadd.f32 %v3975, %v3978
        %vm3980 = vweird.f32 %v3523
        %vm3981 = vweird.f32 %v3975
        %vm3982 = vmor %vm3980, %vm3981
        %v3983 = vsel %vm3982, %v3975, %v3979
        %v3984 = vand.u32 2147483647, %v3523
        %vm3985 = vcmp.eq.f32.partialorder %v3984, 8.507059e+37
        %v3986 = vand.u32 %v3523, 2147483648
        %v3987 = vor.u32 1.1754944e-38, %v3986
        %v3988 = vsel %vm3985, %v3987, %v3983
        %v3989 = vmul.f32 1.0, %v3988
        %v3990 = vrcp.pop %v3524
        %v3991 = vmul.f32 %v3524, %v3990
        %v3992 = vsub.f32 1.0, %v3991
        %v3993 = vmul.f32 %v3990, %v3992
        %v3994 = vadd.f32 %v3990, %v3993
        %vm3995 = vweird.f32 %v3524
        %vm3996 = vweird.f32 %v3990
        %vm3997 = vmor %vm3995, %vm3996
        %v3998 = vsel %vm3997, %v3990, %v3994
        %v3999 = vand.u32 2147483647, %v3524
        %vm4000 = vcmp.eq.f32.partialorder %v3999, 8.507059e+37
        %v4001 = vand.u32 %v3524, 2147483648
        %v4002 = vor.u32 1.1754944e-38, %v4001
        %v4003 = vsel %vm4000, %v4002, %v3998
        %v4004 = vmul.f32 1.0, %v4003
        %v4005 = vmul.f32 %v3365, %v3539
        %v4006 = vmul.f32 %v3366, %v3554
        %v4007 = vmul.f32 %v3367, %v3569
        %v4008 = vmul.f32 %v3368, %v3584
        %v4009 = vmul.f32 %v3369, %v3599
        %v4010 = vmul.f32 %v3370, %v3614
        %v4011 = vmul.f32 %v3371, %v3629
        %v4012 = vmul.f32 %v3372, %v3644
        %v4013 = vmul.f32 %v3373, %v3659
        %v4014 = vmul.f32 %v3374, %v3674
        %v4015 = vmul.f32 %v3375, %v3689
        %v4016 = vmul.f32 %v3376, %v3704
        %v4017 = vmul.f32 %v3377, %v3719
        %v4018 = vmul.f32 %v3378, %v3734
        %v4019 = vmul.f32 %v3379, %v3749
        %v4020 = vmul.f32 %v3380, %v3764
        %v4021 = vmul.f32 %v3381, %v3779
        %v4022 = vmul.f32 %v3382, %v3794
        %v4023 = vmul.f32 %v3383, %v3809
        %v4024 = vmul.f32 %v3384, %v3824
        %v4025 = vmul.f32 %v3385, %v3839
        %v4026 = vmul.f32 %v3386, %v3854
        %v4027 = vmul.f32 %v3387, %v3869
        %v4028 = vmul.f32 %v3388, %v3884
        %v4029 = vmul.f32 %v3389, %v3899
        %v4030 = vmul.f32 %v3390, %v3914
        %v4031 = vmul.f32 %v3391, %v3929
        %v4032 = vmul.f32 %v3392, %v3944
        %v4033 = vmul.f32 %v3393, %v3959
        %v4034 = vmul.f32 %v3394, %v3974
        %v4035 = vmul.f32 %v3395, %v3989
        %v4036 = vmul.f32 %v3396, %v4004
        %4037 = vst [vmem:[#allocation2] sm:$0xff] 0.0
        %4038 = vst [vmem:[#allocation2 + $0x8] sm:$0xff] 0.0
        %4039 = vst [vmem:[#allocation2 + $0x10] sm:$0x3] 0.0
        %s4040 = scalar_lea.vmem [#allocation2], 408
        %4041 = vst [vmem:[%s4040] sm:$0xff] 0.0
        %4042 = vst [vmem:[%s4040 + $0x8] sm:$0xff] 0.0
        %4043 = vst [vmem:[%s4040 + $0x10] sm:$0x3] 0.0
        %s4044 = scalar_lea.vmem [#allocation2], 24
        %4045 = vst [vmem:[%s4044] sm:$0x1] 0.0
        %4046 = vst [vmem:[%s4044 + $0x18] sm:$0x1] 0.0
        %4047 = vst [vmem:[%s4044 + $0x30] sm:$0x1] 0.0
        %4048 = vst [vmem:[%s4044 + $0x48] sm:$0x1] 0.0
        %4049 = vst [vmem:[%s4044 + $0x60] sm:$0x1] 0.0
        %4050 = vst [vmem:[%s4044 + $0x78] sm:$0x1] 0.0
        %4051 = vst [vmem:[%s4044 + $0x90] sm:$0x1] 0.0
        %4052 = vst [vmem:[%s4044 + $0xa8] sm:$0x1] 0.0
        %4053 = vst [vmem:[%s4044 + $0xc0] sm:$0x1] 0.0
        %4054 = vst [vmem:[%s4044 + $0xd8] sm:$0x1] 0.0
        %4055 = vst [vmem:[%s4044 + $0xf0] sm:$0x1] 0.0
        %4056 = vst [vmem:[%s4044 + $0x108] sm:$0x1] 0.0
        %4057 = vst [vmem:[%s4044 + $0x120] sm:$0x1] 0.0
        %4058 = vst [vmem:[%s4044 + $0x138] sm:$0x1] 0.0
        %4059 = vst [vmem:[%s4044 + $0x150] sm:$0x1] 0.0
        %4060 = vst [vmem:[%s4044 + $0x168] sm:$0x1] 0.0
        %4061 = vst [vmem:[%s4044 + $0x11] sm:$0x1] 0.0
        %4062 = vst [vmem:[%s4044 + $0x29] sm:$0x1] 0.0
        %4063 = vst [vmem:[%s4044 + $0x41] sm:$0x1] 0.0
        %4064 = vst [vmem:[%s4044 + $0x59] sm:$0x1] 0.0
        %4065 = vst [vmem:[%s4044 + $0x71] sm:$0x1] 0.0
        %4066 = vst [vmem:[%s4044 + $0x89] sm:$0x1] 0.0
        %4067 = vst [vmem:[%s4044 + $0xa1] sm:$0x1] 0.0
        %4068 = vst [vmem:[%s4044 + $0xb9] sm:$0x1] 0.0
        %4069 = vst [vmem:[%s4044 + $0xd1] sm:$0x1] 0.0
        %4070 = vst [vmem:[%s4044 + $0xe9] sm:$0x1] 0.0
        %4071 = vst [vmem:[%s4044 + $0x101] sm:$0x1] 0.0
        %4072 = vst [vmem:[%s4044 + $0x119] sm:$0x1] 0.0
        %4073 = vst [vmem:[%s4044 + $0x131] sm:$0x1] 0.0
        %4074 = vst [vmem:[%s4044 + $0x149] sm:$0x1] 0.0
        %4075 = vst [vmem:[%s4044 + $0x161] sm:$0x1] 0.0
        %4076 = vst [vmem:[%s4044 + $0x179] sm:$0x1] 0.0
        %4077 = vst [vmem:[%s4044 + $0x1] sm:$0xff] %v4005
        %4078 = vst [vmem:[%s4044 + $0x9] sm:$0xff] %v4006
        %4079 = vst [vmem:[%s4044 + $0x19] sm:$0xff] %v4007
        %4080 = vst [vmem:[%s4044 + $0x21] sm:$0xff] %v4008
        %4081 = vst [vmem:[%s4044 + $0x31] sm:$0xff] %v4009
        %4082 = vst [vmem:[%s4044 + $0x39] sm:$0xff] %v4010
        %4083 = vst [vmem:[%s4044 + $0x49] sm:$0xff] %v4011
        %4084 = vst [vmem:[%s4044 + $0x51] sm:$0xff] %v4012
        %4085 = vst [vmem:[%s4044 + $0x61] sm:$0xff] %v4013
        %4086 = vst [vmem:[%s4044 + $0x69] sm:$0xff] %v4014
        %4087 = vst [vmem:[%s4044 + $0x79] sm:$0xff] %v4015
        %4088 = vst [vmem:[%s4044 + $0x81] sm:$0xff] %v4016
        %4089 = vst [vmem:[%s4044 + $0x91] sm:$0xff] %v4017
        %4090 = vst [vmem:[%s4044 + $0x99] sm:$0xff] %v4018
        %4091 = vst [vmem:[%s4044 + $0xa9] sm:$0xff] %v4019
        %4092 = vst [vmem:[%s4044 + $0xb1] sm:$0xff] %v4020
        %4093 = vst [vmem:[%s4044 + $0xc1] sm:$0xff] %v4021
        %4094 = vst [vmem:[%s4044 + $0xc9] sm:$0xff] %v4022
        %4095 = vst [vmem:[%s4044 + $0xd9] sm:$0xff] %v4023
        %4096 = vst [vmem:[%s4044 + $0xe1] sm:$0xff] %v4024
        %4097 = vst [vmem:[%s4044 + $0xf1] sm:$0xff] %v4025
        %4098 = vst [vmem:[%s4044 + $0xf9] sm:$0xff] %v4026
        %4099 = vst [vmem:[%s4044 + $0x109] sm:$0xff] %v4027
        %4100 = vst [vmem:[%s4044 + $0x111] sm:$0xff] %v4028
        %4101 = vst [vmem:[%s4044 + $0x121] sm:$0xff] %v4029
        %4102 = vst [vmem:[%s4044 + $0x129] sm:$0xff] %v4030
        %4103 = vst [vmem:[%s4044 + $0x139] sm:$0xff] %v4031
        %4104 = vst [vmem:[%s4044 + $0x141] sm:$0xff] %v4032
        %4105 = vst [vmem:[%s4044 + $0x151] sm:$0xff] %v4033
        %4106 = vst [vmem:[%s4044 + $0x159] sm:$0xff] %v4034
        %4107 = vst [vmem:[%s4044 + $0x169] sm:$0xff] %v4035
        %4108 = vst [vmem:[%s4044 + $0x171] sm:$0xff] %v4036
        %v4109 = vld [vmem:[#allocation2] sm:$0xff]
        %v4110 = vld [vmem:[#allocation2 + $0x8] sm:$0xff]
        %v4111 = vld [vmem:[#allocation2 + $0x10] sm:$0x3]
        %v4112 = vld [vmem:[#allocation2 + $0x18] sm:$0xff]
        %v4113 = vld [vmem:[#allocation2 + $0x20] sm:$0xff]
        %v4114 = vld [vmem:[#allocation2 + $0x28] sm:$0x3]
        %v4115 = vld [vmem:[#allocation2 + $0x30] sm:$0xff]
        %v4116 = vld [vmem:[#allocation2 + $0x38] sm:$0xff]
        %v4117 = vld [vmem:[#allocation2 + $0x40] sm:$0x3]
        %v4118 = vld [vmem:[#allocation2 + $0x48] sm:$0xff]
        %v4119 = vld [vmem:[#allocation2 + $0x50] sm:$0xff]
        %v4120 = vld [vmem:[#allocation2 + $0x58] sm:$0x3]
        %v4121 = vld [vmem:[#allocation2 + $0x60] sm:$0xff]
        %v4122 = vld [vmem:[#allocation2 + $0x68] sm:$0xff]
        %v4123 = vld [vmem:[#allocation2 + $0x70] sm:$0x3]
        %v4124 = vld [vmem:[#allocation2 + $0x78] sm:$0xff]
        %v4125 = vld [vmem:[#allocation2 + $0x80] sm:$0xff]
        %v4126 = vld [vmem:[#allocation2 + $0x88] sm:$0x3]
        %v4127 = vld [vmem:[#allocation2 + $0x90] sm:$0xff]
        %v4128 = vld [vmem:[#allocation2 + $0x98] sm:$0xff]
        %v4129 = vld [vmem:[#allocation2 + $0xa0] sm:$0x3]
        %v4130 = vld [vmem:[#allocation2 + $0xa8] sm:$0xff]
        %v4131 = vld [vmem:[#allocation2 + $0xb0] sm:$0xff]
        %v4132 = vld [vmem:[#allocation2 + $0xb8] sm:$0x3]
        %v4133 = vld [vmem:[#allocation2 + $0xc0] sm:$0xff]
        %v4134 = vld [vmem:[#allocation2 + $0xc8] sm:$0xff]
        %v4135 = vld [vmem:[#allocation2 + $0xd0] sm:$0x3]
        %v4136 = vld [vmem:[#allocation2 + $0xd8] sm:$0xff]
        %v4137 = vld [vmem:[#allocation2 + $0xe0] sm:$0xff]
        %v4138 = vld [vmem:[#allocation2 + $0xe8] sm:$0x3]
        %v4139 = vld [vmem:[#allocation2 + $0xf0] sm:$0xff]
        %v4140 = vld [vmem:[#allocation2 + $0xf8] sm:$0xff]
        %v4141 = vld [vmem:[#allocation2 + $0x100] sm:$0x3]
        %v4142 = vld [vmem:[#allocation2 + $0x108] sm:$0xff]
        %v4143 = vld [vmem:[#allocation2 + $0x110] sm:$0xff]
        %v4144 = vld [vmem:[#allocation2 + $0x118] sm:$0x3]
        %v4145 = vld [vmem:[#allocation2 + $0x120] sm:$0xff]
        %v4146 = vld [vmem:[#allocation2 + $0x128] sm:$0xff]
        %v4147 = vld [vmem:[#allocation2 + $0x130] sm:$0x3]
        %v4148 = vld [vmem:[#allocation2 + $0x138] sm:$0xff]
        %v4149 = vld [vmem:[#allocation2 + $0x140] sm:$0xff]
        %v4150 = vld [vmem:[#allocation2 + $0x148] sm:$0x3]
        %v4151 = vld [vmem:[#allocation2 + $0x150] sm:$0xff]
        %v4152 = vld [vmem:[#allocation2 + $0x158] sm:$0xff]
        %v4153 = vld [vmem:[#allocation2 + $0x160] sm:$0x3]
        %v4154 = vld [vmem:[#allocation2 + $0x168] sm:$0xff]
        %v4155 = vld [vmem:[#allocation2 + $0x170] sm:$0xff]
        %v4156 = vld [vmem:[#allocation2 + $0x178] sm:$0x3]
        %v4157 = vld [vmem:[#allocation2 + $0x180] sm:$0xff]
        %v4158 = vld [vmem:[#allocation2 + $0x188] sm:$0xff]
        %v4159 = vld [vmem:[#allocation2 + $0x190] sm:$0x3]
        %v4160 = vld [vmem:[#allocation2 + $0x198] sm:$0xff]
        %v4161 = vld [vmem:[#allocation2 + $0x1a0] sm:$0xff]
        %v4162 = vld [vmem:[#allocation2 + $0x1a8] sm:$0x3]
        %v4217 = vrot.slane %v4109, 1
        %v4218 = vrot.slane %v4110, 1
        %v4219 = vsel %vm695, %v4217, %v4218
        %v4220 = vrot.slane %v4111, 1
        %v4221 = vsel %vm695, %v4218, %v4220
        %v4222 = vrot.slane %v4112, 1
        %v4223 = vrot.slane %v4113, 1
        %v4224 = vsel %vm695, %v4222, %v4223
        %v4225 = vrot.slane %v4114, 1
        %v4226 = vsel %vm695, %v4223, %v4225
        %v4227 = vrot.slane %v4115, 1
        %v4228 = vrot.slane %v4116, 1
        %v4229 = vsel %vm695, %v4227, %v4228
        %v4230 = vrot.slane %v4117, 1
        %v4231 = vsel %vm695, %v4228, %v4230
        %v4232 = vrot.slane %v4118, 1
        %v4233 = vrot.slane %v4119, 1
        %v4234 = vsel %vm695, %v4232, %v4233
        %v4235 = vrot.slane %v4120, 1
        %v4236 = vsel %vm695, %v4233, %v4235
        %v4237 = vrot.slane %v4121, 1
        %v4238 = vrot.slane %v4122, 1
        %v4239 = vsel %vm695, %v4237, %v4238
        %v4240 = vrot.slane %v4123, 1
        %v4241 = vsel %vm695, %v4238, %v4240
        %v4242 = vrot.slane %v4124, 1
        %v4243 = vrot.slane %v4125, 1
        %v4244 = vsel %vm695, %v4242, %v4243
        %v4245 = vrot.slane %v4126, 1
        %v4246 = vsel %vm695, %v4243, %v4245
        %v4247 = vrot.slane %v4127, 1
        %v4248 = vrot.slane %v4128, 1
        %v4249 = vsel %vm695, %v4247, %v4248
        %v4250 = vrot.slane %v4129, 1
        %v4251 = vsel %vm695, %v4248, %v4250
        %v4252 = vrot.slane %v4130, 1
        %v4253 = vrot.slane %v4131, 1
        %v4254 = vsel %vm695, %v4252, %v4253
        %v4255 = vrot.slane %v4132, 1
        %v4256 = vsel %vm695, %v4253, %v4255
        %v4257 = vrot.slane %v4133, 1
        %v4258 = vrot.slane %v4134, 1
        %v4259 = vsel %vm695, %v4257, %v4258
        %v4260 = vrot.slane %v4135, 1
        %v4261 = vsel %vm695, %v4258, %v4260
        %v4262 = vrot.slane %v4136, 1
        %v4263 = vrot.slane %v4137, 1
        %v4264 = vsel %vm695, %v4262, %v4263
        %v4265 = vrot.slane %v4138, 1
        %v4266 = vsel %vm695, %v4263, %v4265
        %v4267 = vrot.slane %v4139, 1
        %v4268 = vrot.slane %v4140, 1
        %v4269 = vsel %vm695, %v4267, %v4268
        %v4270 = vrot.slane %v4141, 1
        %v4271 = vsel %vm695, %v4268, %v4270
        %v4272 = vrot.slane %v4142, 1
        %v4273 = vrot.slane %v4143, 1
        %v4274 = vsel %vm695, %v4272, %v4273
        %v4275 = vrot.slane %v4144, 1
        %v4276 = vsel %vm695, %v4273, %v4275
        %v4277 = vrot.slane %v4145, 1
        %v4278 = vrot.slane %v4146, 1
        %v4279 = vsel %vm695, %v4277, %v4278
        %v4280 = vrot.slane %v4147, 1
        %v4281 = vsel %vm695, %v4278, %v4280
        %v4282 = vrot.slane %v4148, 1
        %v4283 = vrot.slane %v4149, 1
        %v4284 = vsel %vm695, %v4282, %v4283
        %v4285 = vrot.slane %v4150, 1
        %v4286 = vsel %vm695, %v4283, %v4285
        %v4287 = vrot.slane %v4151, 1
        %v4288 = vrot.slane %v4152, 1
        %v4289 = vsel %vm695, %v4287, %v4288
        %v4290 = vrot.slane %v4153, 1
        %v4291 = vsel %vm695, %v4288, %v4290
        %v4292 = vrot.slane %v4154, 1
        %v4293 = vrot.slane %v4155, 1
        %v4294 = vsel %vm695, %v4292, %v4293
        %v4295 = vrot.slane %v4156, 1
        %v4296 = vsel %vm695, %v4293, %v4295
        %v4297 = vrot.slane %v4157, 1
        %v4298 = vrot.slane %v4158, 1
        %v4299 = vsel %vm695, %v4297, %v4298
        %v4300 = vrot.slane %v4159, 1
        %v4301 = vsel %vm695, %v4298, %v4300
        %v4302 = vrot.slane %v4160, 1
        %v4303 = vrot.slane %v4161, 1
        %v4304 = vsel %vm695, %v4302, %v4303
        %v4305 = vrot.slane %v4162, 1
        %v4306 = vsel %vm695, %v4303, %v4305
        %v4343 = vrot.slane %v4109, 2
        %v4344 = vrot.slane %v4110, 2
        %v4345 = vsel %vm822, %v4343, %v4344
        %v4346 = vrot.slane %v4111, 2
        %v4347 = vsel %vm822, %v4344, %v4346
        %v4348 = vrot.slane %v4112, 2
        %v4349 = vrot.slane %v4113, 2
        %v4350 = vsel %vm822, %v4348, %v4349
        %v4351 = vrot.slane %v4114, 2
        %v4352 = vsel %vm822, %v4349, %v4351
        %v4353 = vrot.slane %v4115, 2
        %v4354 = vrot.slane %v4116, 2
        %v4355 = vsel %vm822, %v4353, %v4354
        %v4356 = vrot.slane %v4117, 2
        %v4357 = vsel %vm822, %v4354, %v4356
        %v4358 = vrot.slane %v4118, 2
        %v4359 = vrot.slane %v4119, 2
        %v4360 = vsel %vm822, %v4358, %v4359
        %v4361 = vrot.slane %v4120, 2
        %v4362 = vsel %vm822, %v4359, %v4361
        %v4363 = vrot.slane %v4121, 2
        %v4364 = vrot.slane %v4122, 2
        %v4365 = vsel %vm822, %v4363, %v4364
        %v4366 = vrot.slane %v4123, 2
        %v4367 = vsel %vm822, %v4364, %v4366
        %v4368 = vrot.slane %v4124, 2
        %v4369 = vrot.slane %v4125, 2
        %v4370 = vsel %vm822, %v4368, %v4369
        %v4371 = vrot.slane %v4126, 2
        %v4372 = vsel %vm822, %v4369, %v4371
        %v4373 = vrot.slane %v4127, 2
        %v4374 = vrot.slane %v4128, 2
        %v4375 = vsel %vm822, %v4373, %v4374
        %v4376 = vrot.slane %v4129, 2
        %v4377 = vsel %vm822, %v4374, %v4376
        %v4378 = vrot.slane %v4130, 2
        %v4379 = vrot.slane %v4131, 2
        %v4380 = vsel %vm822, %v4378, %v4379
        %v4381 = vrot.slane %v4132, 2
        %v4382 = vsel %vm822, %v4379, %v4381
        %v4383 = vrot.slane %v4133, 2
        %v4384 = vrot.slane %v4134, 2
        %v4385 = vsel %vm822, %v4383, %v4384
        %v4386 = vrot.slane %v4135, 2
        %v4387 = vsel %vm822, %v4384, %v4386
        %v4388 = vrot.slane %v4136, 2
        %v4389 = vrot.slane %v4137, 2
        %v4390 = vsel %vm822, %v4388, %v4389
        %v4391 = vrot.slane %v4138, 2
        %v4392 = vsel %vm822, %v4389, %v4391
        %v4393 = vrot.slane %v4139, 2
        %v4394 = vrot.slane %v4140, 2
        %v4395 = vsel %vm822, %v4393, %v4394
        %v4396 = vrot.slane %v4141, 2
        %v4397 = vsel %vm822, %v4394, %v4396
        %v4398 = vrot.slane %v4142, 2
        %v4399 = vrot.slane %v4143, 2
        %v4400 = vsel %vm822, %v4398, %v4399
        %v4401 = vrot.slane %v4144, 2
        %v4402 = vsel %vm822, %v4399, %v4401
        %v4403 = vrot.slane %v4145, 2
        %v4404 = vrot.slane %v4146, 2
        %v4405 = vsel %vm822, %v4403, %v4404
        %v4406 = vrot.slane %v4147, 2
        %v4407 = vsel %vm822, %v4404, %v4406
        %v4408 = vrot.slane %v4148, 2
        %v4409 = vrot.slane %v4149, 2
        %v4410 = vsel %vm822, %v4408, %v4409
        %v4411 = vrot.slane %v4150, 2
        %v4412 = vsel %vm822, %v4409, %v4411
        %v4413 = vrot.slane %v4151, 2
        %v4414 = vrot.slane %v4152, 2
        %v4415 = vsel %vm822, %v4413, %v4414
        %v4416 = vrot.slane %v4153, 2
        %v4417 = vsel %vm822, %v4414, %v4416
        %v4418 = vrot.slane %v4154, 2
        %v4419 = vrot.slane %v4155, 2
        %v4420 = vsel %vm822, %v4418, %v4419
        %v4421 = vrot.slane %v4156, 2
        %v4422 = vsel %vm822, %v4419, %v4421
        %v4423 = vrot.slane %v4157, 2
        %v4424 = vrot.slane %v4158, 2
        %v4425 = vsel %vm822, %v4423, %v4424
        %v4426 = vrot.slane %v4159, 2
        %v4427 = vsel %vm822, %v4424, %v4426
        %v4428 = vrot.slane %v4160, 2
        %v4429 = vrot.slane %v4161, 2
        %v4430 = vsel %vm822, %v4428, %v4429
        %v4431 = vrot.slane %v4162, 2
        %v4432 = vsel %vm822, %v4429, %v4431
        %v4469 = vld [vmem:[%s8] sm:$0x1]
        %v4470 = vld [vmem:[#allocation4] sm:$0xff]
        %v4471 = vld [vmem:[#allocation4 + $0x8] sm:$0xff]
        %v4472 = vld [vmem:[#allocation4 + $0x10] sm:$0xff]
        %v4473 = vld [vmem:[#allocation4 + $0x18] sm:$0xff]
        %v4474 = vld [vmem:[#allocation4 + $0x20] sm:$0xff]
        %v4475 = vld [vmem:[#allocation4 + $0x28] sm:$0xff]
        %v4476 = vld [vmem:[#allocation4 + $0x30] sm:$0xff]
        %v4477 = vld [vmem:[#allocation4 + $0x38] sm:$0xff]
        %v4478 = vld [vmem:[#allocation4 + $0x40] sm:$0xff]
        %v4479 = vld [vmem:[#allocation4 + $0x48] sm:$0xff]
        %v4480 = vld [vmem:[#allocation4 + $0x50] sm:$0xff]
        %v4481 = vld [vmem:[#allocation4 + $0x58] sm:$0xff]
        %v4482 = vld [vmem:[#allocation4 + $0x60] sm:$0xff]
        %v4483 = vld [vmem:[#allocation4 + $0x68] sm:$0xff]
        %v4484 = vld [vmem:[#allocation4 + $0x70] sm:$0xff]
        %v4485 = vld [vmem:[#allocation4 + $0x78] sm:$0xff]
        %4486 = vmatpush.msra.mxu0 %v4485
        %4487 = vmatpush.msra.mxu0 %v4484
        %4488 = vmatpush.msra.mxu0 %v4483
        %4489 = vmatpush.msra.mxu0 %v4482
        %4490 = vmatpush.msra.mxu0 %v4481
        %4491 = vmatpush.msra.mxu0 %v4480
        %4492 = vmatpush.msra.mxu0 %v4479
        %4493 = vmatpush.msra.mxu0 %v4478
        %4494 = vmatpush.msra.mxu0 %v4477
        %4495 = vmatpush.msra.mxu0 %v4476
        %4496 = vmatpush.msra.mxu0 %v4475
        %4497 = vmatpush.msra.mxu0 %v4474
        %4498 = vmatpush.msra.mxu0 %v4473
        %4499 = vmatpush.msra.mxu0 %v4472
        %4500 = vmatpush.msra.mxu0 %v4471
        %4501 = vmatpush.msra.mxu0 %v4470
        %4502 = vmatmul.f32.gmra.mxu0 %v4109
        %v4503 = vpop.f32.mrf.mxu0
        %v4504 = vadd.f32 0.0, %v4503
        %4505 = vmatmul.f32.gmra.mxu0 %v4110
        %v4506 = vpop.f32.mrf.mxu0
        %v4507 = vadd.f32 0.0, %v4506
        %4508 = vmatmul.f32.gmra.mxu0 %v4112
        %v4509 = vpop.f32.mrf.mxu0
        %v4510 = vadd.f32 0.0, %v4509
        %4511 = vmatmul.f32.gmra.mxu0 %v4113
        %v4512 = vpop.f32.mrf.mxu0
        %v4513 = vadd.f32 0.0, %v4512
        %4514 = vmatmul.f32.gmra.mxu0 %v4115
        %v4515 = vpop.f32.mrf.mxu0
        %v4516 = vadd.f32 0.0, %v4515
        %4517 = vmatmul.f32.gmra.mxu0 %v4116
        %v4518 = vpop.f32.mrf.mxu0
        %v4519 = vadd.f32 0.0, %v4518
        %4520 = vmatmul.f32.gmra.mxu0 %v4118
        %v4521 = vpop.f32.mrf.mxu0
        %v4522 = vadd.f32 0.0, %v4521
        %4523 = vmatmul.f32.gmra.mxu0 %v4119
        %v4524 = vpop.f32.mrf.mxu0
        %v4525 = vadd.f32 0.0, %v4524
        %4526 = vmatmul.f32.gmra.mxu0 %v4121
        %v4527 = vpop.f32.mrf.mxu0
        %v4528 = vadd.f32 0.0, %v4527
        %4529 = vmatmul.f32.gmra.mxu0 %v4122
        %v4530 = vpop.f32.mrf.mxu0
        %v4531 = vadd.f32 0.0, %v4530
        %4532 = vmatmul.f32.gmra.mxu0 %v4124
        %v4533 = vpop.f32.mrf.mxu0
        %v4534 = vadd.f32 0.0, %v4533
        %4535 = vmatmul.f32.gmra.mxu0 %v4125
        %v4536 = vpop.f32.mrf.mxu0
        %v4537 = vadd.f32 0.0, %v4536
        %4538 = vmatmul.f32.gmra.mxu0 %v4127
        %v4539 = vpop.f32.mrf.mxu0
        %v4540 = vadd.f32 0.0, %v4539
        %4541 = vmatmul.f32.gmra.mxu0 %v4128
        %v4542 = vpop.f32.mrf.mxu0
        %v4543 = vadd.f32 0.0, %v4542
        %4544 = vmatmul.f32.gmra.mxu0 %v4130
        %v4545 = vpop.f32.mrf.mxu0
        %v4546 = vadd.f32 0.0, %v4545
        %4547 = vmatmul.f32.gmra.mxu0 %v4131
        %v4548 = vpop.f32.mrf.mxu0
        %v4549 = vadd.f32 0.0, %v4548
        %4550 = vmatmul.f32.gmra.mxu0 %v4133
        %v4551 = vpop.f32.mrf.mxu0
        %v4552 = vadd.f32 0.0, %v4551
        %4553 = vmatmul.f32.gmra.mxu0 %v4134
        %v4554 = vpop.f32.mrf.mxu0
        %v4555 = vadd.f32 0.0, %v4554
        %4556 = vmatmul.f32.gmra.mxu0 %v4136
        %v4557 = vpop.f32.mrf.mxu0
        %v4558 = vadd.f32 0.0, %v4557
        %4559 = vmatmul.f32.gmra.mxu0 %v4137
        %v4560 = vpop.f32.mrf.mxu0
        %v4561 = vadd.f32 0.0, %v4560
        %4562 = vmatmul.f32.gmra.mxu0 %v4139
        %v4563 = vpop.f32.mrf.mxu0
        %v4564 = vadd.f32 0.0, %v4563
        %4565 = vmatmul.f32.gmra.mxu0 %v4140
        %v4566 = vpop.f32.mrf.mxu0
        %v4567 = vadd.f32 0.0, %v4566
        %4568 = vmatmul.f32.gmra.mxu0 %v4142
        %v4569 = vpop.f32.mrf.mxu0
        %v4570 = vadd.f32 0.0, %v4569
        %4571 = vmatmul.f32.gmra.mxu0 %v4143
        %v4572 = vpop.f32.mrf.mxu0
        %v4573 = vadd.f32 0.0, %v4572
        %4574 = vmatmul.f32.gmra.mxu0 %v4145
        %v4575 = vpop.f32.mrf.mxu0
        %v4576 = vadd.f32 0.0, %v4575
        %4577 = vmatmul.f32.gmra.mxu0 %v4146
        %v4578 = vpop.f32.mrf.mxu0
        %v4579 = vadd.f32 0.0, %v4578
        %4580 = vmatmul.f32.gmra.mxu0 %v4148
        %v4581 = vpop.f32.mrf.mxu0
        %v4582 = vadd.f32 0.0, %v4581
        %4583 = vmatmul.f32.gmra.mxu0 %v4149
        %v4584 = vpop.f32.mrf.mxu0
        %v4585 = vadd.f32 0.0, %v4584
        %4586 = vmatmul.f32.gmra.mxu0 %v4151
        %v4587 = vpop.f32.mrf.mxu0
        %v4588 = vadd.f32 0.0, %v4587
        %4589 = vmatmul.f32.gmra.mxu0 %v4152
        %v4590 = vpop.f32.mrf.mxu0
        %v4591 = vadd.f32 0.0, %v4590
        %4592 = vmatmul.f32.gmra.mxu0 %v4154
        %v4593 = vpop.f32.mrf.mxu0
        %v4594 = vadd.f32 0.0, %v4593
        %4595 = vmatmul.f32.gmra.mxu0 %v4155
        %v4596 = vpop.f32.mrf.mxu0
        %v4597 = vadd.f32 0.0, %v4596
        %4598 = vdwg.mxu0
        %4599 = vst [vmem:[#allocation3] sm:$0xff] %v4504
        %4600 = vst [vmem:[#allocation3 + $0x8] sm:$0xff] %v4507
        %4601 = vst [vmem:[#allocation3 + $0x10] sm:$0xff] %v4510
        %4602 = vst [vmem:[#allocation3 + $0x18] sm:$0xff] %v4513
        %4603 = vst [vmem:[#allocation3 + $0x20] sm:$0xff] %v4516
        %4604 = vst [vmem:[#allocation3 + $0x28] sm:$0xff] %v4519
        %4605 = vst [vmem:[#allocation3 + $0x30] sm:$0xff] %v4522
        %4606 = vst [vmem:[#allocation3 + $0x38] sm:$0xff] %v4525
        %4607 = vst [vmem:[#allocation3 + $0x40] sm:$0xff] %v4528
        %4608 = vst [vmem:[#allocation3 + $0x48] sm:$0xff] %v4531
        %4609 = vst [vmem:[#allocation3 + $0x50] sm:$0xff] %v4534
        %4610 = vst [vmem:[#allocation3 + $0x58] sm:$0xff] %v4537
        %4611 = vst [vmem:[#allocation3 + $0x60] sm:$0xff] %v4540
        %4612 = vst [vmem:[#allocation3 + $0x68] sm:$0xff] %v4543
        %4613 = vst [vmem:[#allocation3 + $0x70] sm:$0xff] %v4546
        %4614 = vst [vmem:[#allocation3 + $0x78] sm:$0xff] %v4549
        %4615 = vst [vmem:[#allocation3 + $0x80] sm:$0xff] %v4552
        %4616 = vst [vmem:[#allocation3 + $0x88] sm:$0xff] %v4555
        %4617 = vst [vmem:[#allocation3 + $0x90] sm:$0xff] %v4558
        %4618 = vst [vmem:[#allocation3 + $0x98] sm:$0xff] %v4561
        %4619 = vst [vmem:[#allocation3 + $0xa0] sm:$0xff] %v4564
        %4620 = vst [vmem:[#allocation3 + $0xa8] sm:$0xff] %v4567
        %4621 = vst [vmem:[#allocation3 + $0xb0] sm:$0xff] %v4570
        %4622 = vst [vmem:[#allocation3 + $0xb8] sm:$0xff] %v4573
        %4623 = vst [vmem:[#allocation3 + $0xc0] sm:$0xff] %v4576
        %4624 = vst [vmem:[#allocation3 + $0xc8] sm:$0xff] %v4579
        %4625 = vst [vmem:[#allocation3 + $0xd0] sm:$0xff] %v4582
        %4626 = vst [vmem:[#allocation3 + $0xd8] sm:$0xff] %v4585
        %4627 = vst [vmem:[#allocation3 + $0xe0] sm:$0xff] %v4588
        %4628 = vst [vmem:[#allocation3 + $0xe8] sm:$0xff] %v4591
        %4629 = vst [vmem:[#allocation3 + $0xf0] sm:$0xff] %v4594
        %4630 = vst [vmem:[#allocation3 + $0xf8] sm:$0xff] %v4597
        %s4631 = scalar_lea.vmem [#allocation4], 128
        %v4632 = vld [vmem:[%s4631] sm:$0xff]
        %v4633 = vld [vmem:[%s4631 + $0x8] sm:$0xff]
        %v4634 = vld [vmem:[%s4631 + $0x10] sm:$0xff]
        %v4635 = vld [vmem:[%s4631 + $0x18] sm:$0xff]
        %v4636 = vld [vmem:[%s4631 + $0x20] sm:$0xff]
        %v4637 = vld [vmem:[%s4631 + $0x28] sm:$0xff]
        %v4638 = vld [vmem:[%s4631 + $0x30] sm:$0xff]
        %v4639 = vld [vmem:[%s4631 + $0x38] sm:$0xff]
        %v4640 = vld [vmem:[%s4631 + $0x40] sm:$0xff]
        %v4641 = vld [vmem:[%s4631 + $0x48] sm:$0xff]
        %v4642 = vld [vmem:[%s4631 + $0x50] sm:$0xff]
        %v4643 = vld [vmem:[%s4631 + $0x58] sm:$0xff]
        %v4644 = vld [vmem:[%s4631 + $0x60] sm:$0xff]
        %v4645 = vld [vmem:[%s4631 + $0x68] sm:$0xff]
        %v4646 = vld [vmem:[%s4631 + $0x70] sm:$0xff]
        %v4647 = vld [vmem:[%s4631 + $0x78] sm:$0xff]
        %4648 = vmatpush.msra.mxu0 %v4647
        %4649 = vmatpush.msra.mxu0 %v4646
        %4650 = vmatpush.msra.mxu0 %v4645
        %4651 = vmatpush.msra.mxu0 %v4644
        %4652 = vmatpush.msra.mxu0 %v4643
        %4653 = vmatpush.msra.mxu0 %v4642
        %4654 = vmatpush.msra.mxu0 %v4641
        %4655 = vmatpush.msra.mxu0 %v4640
        %4656 = vmatpush.msra.mxu0 %v4639
        %4657 = vmatpush.msra.mxu0 %v4638
        %4658 = vmatpush.msra.mxu0 %v4637
        %4659 = vmatpush.msra.mxu0 %v4636
        %4660 = vmatpush.msra.mxu0 %v4635
        %4661 = vmatpush.msra.mxu0 %v4634
        %4662 = vmatpush.msra.mxu0 %v4633
        %4663 = vmatpush.msra.mxu0 %v4632
        %4664 = vmatmul.f32.gmra.mxu0 %v4219
        %v4665 = vpop.f32.mrf.mxu0
        %v4666 = vadd.f32 0.0, %v4665
        %4667 = vmatmul.f32.gmra.mxu0 %v4221
        %v4668 = vpop.f32.mrf.mxu0
        %v4669 = vadd.f32 0.0, %v4668
        %4670 = vmatmul.f32.gmra.mxu0 %v4224
        %v4671 = vpop.f32.mrf.mxu0
        %v4672 = vadd.f32 0.0, %v4671
        %4673 = vmatmul.f32.gmra.mxu0 %v4226
        %v4674 = vpop.f32.mrf.mxu0
        %v4675 = vadd.f32 0.0, %v4674
        %4676 = vmatmul.f32.gmra.mxu0 %v4229
        %v4677 = vpop.f32.mrf.mxu0
        %v4678 = vadd.f32 0.0, %v4677
        %4679 = vmatmul.f32.gmra.mxu0 %v4231
        %v4680 = vpop.f32.mrf.mxu0
        %v4681 = vadd.f32 0.0, %v4680
        %4682 = vmatmul.f32.gmra.mxu0 %v4234
        %v4683 = vpop.f32.mrf.mxu0
        %v4684 = vadd.f32 0.0, %v4683
        %4685 = vmatmul.f32.gmra.mxu0 %v4236
        %v4686 = vpop.f32.mrf.mxu0
        %v4687 = vadd.f32 0.0, %v4686
        %4688 = vmatmul.f32.gmra.mxu0 %v4239
        %v4689 = vpop.f32.mrf.mxu0
        %v4690 = vadd.f32 0.0, %v4689
        %4691 = vmatmul.f32.gmra.mxu0 %v4241
        %v4692 = vpop.f32.mrf.mxu0
        %v4693 = vadd.f32 0.0, %v4692
        %4694 = vmatmul.f32.gmra.mxu0 %v4244
        %v4695 = vpop.f32.mrf.mxu0
        %v4696 = vadd.f32 0.0, %v4695
        %4697 = vmatmul.f32.gmra.mxu0 %v4246
        %v4698 = vpop.f32.mrf.mxu0
        %v4699 = vadd.f32 0.0, %v4698
        %4700 = vmatmul.f32.gmra.mxu0 %v4249
        %v4701 = vpop.f32.mrf.mxu0
        %v4702 = vadd.f32 0.0, %v4701
        %4703 = vmatmul.f32.gmra.mxu0 %v4251
        %v4704 = vpop.f32.mrf.mxu0
        %v4705 = vadd.f32 0.0, %v4704
        %4706 = vmatmul.f32.gmra.mxu0 %v4254
        %v4707 = vpop.f32.mrf.mxu0
        %v4708 = vadd.f32 0.0, %v4707
        %4709 = vmatmul.f32.gmra.mxu0 %v4256
        %v4710 = vpop.f32.mrf.mxu0
        %v4711 = vadd.f32 0.0, %v4710
        %4712 = vmatmul.f32.gmra.mxu0 %v4259
        %v4713 = vpop.f32.mrf.mxu0
        %v4714 = vadd.f32 0.0, %v4713
        %4715 = vmatmul.f32.gmra.mxu0 %v4261
        %v4716 = vpop.f32.mrf.mxu0
        %v4717 = vadd.f32 0.0, %v4716
        %4718 = vmatmul.f32.gmra.mxu0 %v4264
        %v4719 = vpop.f32.mrf.mxu0
        %v4720 = vadd.f32 0.0, %v4719
        %4721 = vmatmul.f32.gmra.mxu0 %v4266
        %v4722 = vpop.f32.mrf.mxu0
        %v4723 = vadd.f32 0.0, %v4722
        %4724 = vmatmul.f32.gmra.mxu0 %v4269
        %v4725 = vpop.f32.mrf.mxu0
        %v4726 = vadd.f32 0.0, %v4725
        %4727 = vmatmul.f32.gmra.mxu0 %v4271
        %v4728 = vpop.f32.mrf.mxu0
        %v4729 = vadd.f32 0.0, %v4728
        %4730 = vmatmul.f32.gmra.mxu0 %v4274
        %v4731 = vpop.f32.mrf.mxu0
        %v4732 = vadd.f32 0.0, %v4731
        %4733 = vmatmul.f32.gmra.mxu0 %v4276
        %v4734 = vpop.f32.mrf.mxu0
        %v4735 = vadd.f32 0.0, %v4734
        %4736 = vmatmul.f32.gmra.mxu0 %v4279
        %v4737 = vpop.f32.mrf.mxu0
        %v4738 = vadd.f32 0.0, %v4737
        %4739 = vmatmul.f32.gmra.mxu0 %v4281
        %v4740 = vpop.f32.mrf.mxu0
        %v4741 = vadd.f32 0.0, %v4740
        %4742 = vmatmul.f32.gmra.mxu0 %v4284
        %v4743 = vpop.f32.mrf.mxu0
        %v4744 = vadd.f32 0.0, %v4743
        %4745 = vmatmul.f32.gmra.mxu0 %v4286
        %v4746 = vpop.f32.mrf.mxu0
        %v4747 = vadd.f32 0.0, %v4746
        %4748 = vmatmul.f32.gmra.mxu0 %v4289
        %v4749 = vpop.f32.mrf.mxu0
        %v4750 = vadd.f32 0.0, %v4749
        %4751 = vmatmul.f32.gmra.mxu0 %v4291
        %v4752 = vpop.f32.mrf.mxu0
        %v4753 = vadd.f32 0.0, %v4752
        %4754 = vmatmul.f32.gmra.mxu0 %v4294
        %v4755 = vpop.f32.mrf.mxu0
        %v4756 = vadd.f32 0.0, %v4755
        %4757 = vmatmul.f32.gmra.mxu0 %v4296
        %v4758 = vpop.f32.mrf.mxu0
        %v4759 = vadd.f32 0.0, %v4758
        %4760 = vdwg.mxu0
        %v4761 = vld [vmem:[#allocation3] sm:$0xff]
        %v4762 = vld [vmem:[#allocation3 + $0x8] sm:$0xff]
        %v4763 = vld [vmem:[#allocation3 + $0x10] sm:$0xff]
        %v4764 = vld [vmem:[#allocation3 + $0x18] sm:$0xff]
        %v4765 = vld [vmem:[#allocation3 + $0x20] sm:$0xff]
        %v4766 = vld [vmem:[#allocation3 + $0x28] sm:$0xff]
        %v4767 = vld [vmem:[#allocation3 + $0x30] sm:$0xff]
        %v4768 = vld [vmem:[#allocation3 + $0x38] sm:$0xff]
        %v4769 = vld [vmem:[#allocation3 + $0x40] sm:$0xff]
        %v4770 = vld [vmem:[#allocation3 + $0x48] sm:$0xff]
        %v4771 = vld [vmem:[#allocation3 + $0x50] sm:$0xff]
        %v4772 = vld [vmem:[#allocation3 + $0x58] sm:$0xff]
        %v4773 = vld [vmem:[#allocation3 + $0x60] sm:$0xff]
        %v4774 = vld [vmem:[#allocation3 + $0x68] sm:$0xff]
        %v4775 = vld [vmem:[#allocation3 + $0x70] sm:$0xff]
        %v4776 = vld [vmem:[#allocation3 + $0x78] sm:$0xff]
        %v4777 = vld [vmem:[#allocation3 + $0x80] sm:$0xff]
        %v4778 = vld [vmem:[#allocation3 + $0x88] sm:$0xff]
        %v4779 = vld [vmem:[#allocation3 + $0x90] sm:$0xff]
        %v4780 = vld [vmem:[#allocation3 + $0x98] sm:$0xff]
        %v4781 = vld [vmem:[#allocation3 + $0xa0] sm:$0xff]
        %v4782 = vld [vmem:[#allocation3 + $0xa8] sm:$0xff]
        %v4783 = vld [vmem:[#allocation3 + $0xb0] sm:$0xff]
        %v4784 = vld [vmem:[#allocation3 + $0xb8] sm:$0xff]
        %v4785 = vld [vmem:[#allocation3 + $0xc0] sm:$0xff]
        %v4786 = vld [vmem:[#allocation3 + $0xc8] sm:$0xff]
        %v4787 = vld [vmem:[#allocation3 + $0xd0] sm:$0xff]
        %v4788 = vld [vmem:[#allocation3 + $0xd8] sm:$0xff]
        %v4789 = vld [vmem:[#allocation3 + $0xe0] sm:$0xff]
        %v4790 = vld [vmem:[#allocation3 + $0xe8] sm:$0xff]
        %v4791 = vld [vmem:[#allocation3 + $0xf0] sm:$0xff]
        %v4792 = vld [vmem:[#allocation3 + $0xf8] sm:$0xff]
        %v4793 = vadd.f32 %v4761, %v4666
        %v4794 = vadd.f32 %v4762, %v4669
        %v4795 = vadd.f32 %v4763, %v4672
        %v4796 = vadd.f32 %v4764, %v4675
        %v4797 = vadd.f32 %v4765, %v4678
        %v4798 = vadd.f32 %v4766, %v4681
        %v4799 = vadd.f32 %v4767, %v4684
        %v4800 = vadd.f32 %v4768, %v4687
        %v4801 = vadd.f32 %v4769, %v4690
        %v4802 = vadd.f32 %v4770, %v4693
        %v4803 = vadd.f32 %v4771, %v4696
        %v4804 = vadd.f32 %v4772, %v4699
        %v4805 = vadd.f32 %v4773, %v4702
        %v4806 = vadd.f32 %v4774, %v4705
        %v4807 = vadd.f32 %v4775, %v4708
        %v4808 = vadd.f32 %v4776, %v4711
        %v4809 = vadd.f32 %v4777, %v4714
        %v4810 = vadd.f32 %v4778, %v4717
        %v4811 = vadd.f32 %v4779, %v4720
        %v4812 = vadd.f32 %v4780, %v4723
        %v4813 = vadd.f32 %v4781, %v4726
        %v4814 = vadd.f32 %v4782, %v4729
        %v4815 = vadd.f32 %v4783, %v4732
        %v4816 = vadd.f32 %v4784, %v4735
        %v4817 = vadd.f32 %v4785, %v4738
        %v4818 = vadd.f32 %v4786, %v4741
        %v4819 = vadd.f32 %v4787, %v4744
        %v4820 = vadd.f32 %v4788, %v4747
        %v4821 = vadd.f32 %v4789, %v4750
        %v4822 = vadd.f32 %v4790, %v4753
        %v4823 = vadd.f32 %v4791, %v4756
        %v4824 = vadd.f32 %v4792, %v4759
        %4825 = vst [vmem:[#allocation3] sm:$0xff] %v4793
        %4826 = vst [vmem:[#allocation3 + $0x8] sm:$0xff] %v4794
        %4827 = vst [vmem:[#allocation3 + $0x10] sm:$0xff] %v4795
        %4828 = vst [vmem:[#allocation3 + $0x18] sm:$0xff] %v4796
        %4829 = vst [vmem:[#allocation3 + $0x20] sm:$0xff] %v4797
        %4830 = vst [vmem:[#allocation3 + $0x28] sm:$0xff] %v4798
        %4831 = vst [vmem:[#allocation3 + $0x30] sm:$0xff] %v4799
        %4832 = vst [vmem:[#allocation3 + $0x38] sm:$0xff] %v4800
        %4833 = vst [vmem:[#allocation3 + $0x40] sm:$0xff] %v4801
        %4834 = vst [vmem:[#allocation3 + $0x48] sm:$0xff] %v4802
        %4835 = vst [vmem:[#allocation3 + $0x50] sm:$0xff] %v4803
        %4836 = vst [vmem:[#allocation3 + $0x58] sm:$0xff] %v4804
        %4837 = vst [vmem:[#allocation3 + $0x60] sm:$0xff] %v4805
        %4838 = vst [vmem:[#allocation3 + $0x68] sm:$0xff] %v4806
        %4839 = vst [vmem:[#allocation3 + $0x70] sm:$0xff] %v4807
        %4840 = vst [vmem:[#allocation3 + $0x78] sm:$0xff] %v4808
        %4841 = vst [vmem:[#allocation3 + $0x80] sm:$0xff] %v4809
        %4842 = vst [vmem:[#allocation3 + $0x88] sm:$0xff] %v4810
        %4843 = vst [vmem:[#allocation3 + $0x90] sm:$0xff] %v4811
        %4844 = vst [vmem:[#allocation3 + $0x98] sm:$0xff] %v4812
        %4845 = vst [vmem:[#allocation3 + $0xa0] sm:$0xff] %v4813
        %4846 = vst [vmem:[#allocation3 + $0xa8] sm:$0xff] %v4814
        %4847 = vst [vmem:[#allocation3 + $0xb0] sm:$0xff] %v4815
        %4848 = vst [vmem:[#allocation3 + $0xb8] sm:$0xff] %v4816
        %4849 = vst [vmem:[#allocation3 + $0xc0] sm:$0xff] %v4817
        %4850 = vst [vmem:[#allocation3 + $0xc8] sm:$0xff] %v4818
        %4851 = vst [vmem:[#allocation3 + $0xd0] sm:$0xff] %v4819
        %4852 = vst [vmem:[#allocation3 + $0xd8] sm:$0xff] %v4820
        %4853 = vst [vmem:[#allocation3 + $0xe0] sm:$0xff] %v4821
        %4854 = vst [vmem:[#allocation3 + $0xe8] sm:$0xff] %v4822
        %4855 = vst [vmem:[#allocation3 + $0xf0] sm:$0xff] %v4823
        %4856 = vst [vmem:[#allocation3 + $0xf8] sm:$0xff] %v4824
        %s4857 = scalar_lea.vmem [#allocation4], 256
        %v4858 = vld [vmem:[%s4857] sm:$0xff]
        %v4859 = vld [vmem:[%s4857 + $0x8] sm:$0xff]
        %v4860 = vld [vmem:[%s4857 + $0x10] sm:$0xff]
        %v4861 = vld [vmem:[%s4857 + $0x18] sm:$0xff]
        %v4862 = vld [vmem:[%s4857 + $0x20] sm:$0xff]
        %v4863 = vld [vmem:[%s4857 + $0x28] sm:$0xff]
        %v4864 = vld [vmem:[%s4857 + $0x30] sm:$0xff]
        %v4865 = vld [vmem:[%s4857 + $0x38] sm:$0xff]
        %v4866 = vld [vmem:[%s4857 + $0x40] sm:$0xff]
        %v4867 = vld [vmem:[%s4857 + $0x48] sm:$0xff]
        %v4868 = vld [vmem:[%s4857 + $0x50] sm:$0xff]
        %v4869 = vld [vmem:[%s4857 + $0x58] sm:$0xff]
        %v4870 = vld [vmem:[%s4857 + $0x60] sm:$0xff]
        %v4871 = vld [vmem:[%s4857 + $0x68] sm:$0xff]
        %v4872 = vld [vmem:[%s4857 + $0x70] sm:$0xff]
        %v4873 = vld [vmem:[%s4857 + $0x78] sm:$0xff]
        %4874 = vmatpush.msra.mxu0 %v4873
        %4875 = vmatpush.msra.mxu0 %v4872
        %4876 = vmatpush.msra.mxu0 %v4871
        %4877 = vmatpush.msra.mxu0 %v4870
        %4878 = vmatpush.msra.mxu0 %v4869
        %4879 = vmatpush.msra.mxu0 %v4868
        %4880 = vmatpush.msra.mxu0 %v4867
        %4881 = vmatpush.msra.mxu0 %v4866
        %4882 = vmatpush.msra.mxu0 %v4865
        %4883 = vmatpush.msra.mxu0 %v4864
        %4884 = vmatpush.msra.mxu0 %v4863
        %4885 = vmatpush.msra.mxu0 %v4862
        %4886 = vmatpush.msra.mxu0 %v4861
        %4887 = vmatpush.msra.mxu0 %v4860
        %4888 = vmatpush.msra.mxu0 %v4859
        %4889 = vmatpush.msra.mxu0 %v4858
        %4890 = vmatmul.f32.gmra.mxu0 %v4345
        %v4891 = vpop.f32.mrf.mxu0
        %v4892 = vadd.f32 0.0, %v4891
        %4893 = vmatmul.f32.gmra.mxu0 %v4347
        %v4894 = vpop.f32.mrf.mxu0
        %v4895 = vadd.f32 0.0, %v4894
        %4896 = vmatmul.f32.gmra.mxu0 %v4350
        %v4897 = vpop.f32.mrf.mxu0
        %v4898 = vadd.f32 0.0, %v4897
        %4899 = vmatmul.f32.gmra.mxu0 %v4352
        %v4900 = vpop.f32.mrf.mxu0
        %v4901 = vadd.f32 0.0, %v4900
        %4902 = vmatmul.f32.gmra.mxu0 %v4355
        %v4903 = vpop.f32.mrf.mxu0
        %v4904 = vadd.f32 0.0, %v4903
        %4905 = vmatmul.f32.gmra.mxu0 %v4357
        %v4906 = vpop.f32.mrf.mxu0
        %v4907 = vadd.f32 0.0, %v4906
        %4908 = vmatmul.f32.gmra.mxu0 %v4360
        %v4909 = vpop.f32.mrf.mxu0
        %v4910 = vadd.f32 0.0, %v4909
        %4911 = vmatmul.f32.gmra.mxu0 %v4362
        %v4912 = vpop.f32.mrf.mxu0
        %v4913 = vadd.f32 0.0, %v4912
        %4914 = vmatmul.f32.gmra.mxu0 %v4365
        %v4915 = vpop.f32.mrf.mxu0
        %v4916 = vadd.f32 0.0, %v4915
        %4917 = vmatmul.f32.gmra.mxu0 %v4367
        %v4918 = vpop.f32.mrf.mxu0
        %v4919 = vadd.f32 0.0, %v4918
        %4920 = vmatmul.f32.gmra.mxu0 %v4370
        %v4921 = vpop.f32.mrf.mxu0
        %v4922 = vadd.f32 0.0, %v4921
        %4923 = vmatmul.f32.gmra.mxu0 %v4372
        %v4924 = vpop.f32.mrf.mxu0
        %v4925 = vadd.f32 0.0, %v4924
        %4926 = vmatmul.f32.gmra.mxu0 %v4375
        %v4927 = vpop.f32.mrf.mxu0
        %v4928 = vadd.f32 0.0, %v4927
        %4929 = vmatmul.f32.gmra.mxu0 %v4377
        %v4930 = vpop.f32.mrf.mxu0
        %v4931 = vadd.f32 0.0, %v4930
        %4932 = vmatmul.f32.gmra.mxu0 %v4380
        %v4933 = vpop.f32.mrf.mxu0
        %v4934 = vadd.f32 0.0, %v4933
        %4935 = vmatmul.f32.gmra.mxu0 %v4382
        %v4936 = vpop.f32.mrf.mxu0
        %v4937 = vadd.f32 0.0, %v4936
        %4938 = vmatmul.f32.gmra.mxu0 %v4385
        %v4939 = vpop.f32.mrf.mxu0
        %v4940 = vadd.f32 0.0, %v4939
        %4941 = vmatmul.f32.gmra.mxu0 %v4387
        %v4942 = vpop.f32.mrf.mxu0
        %v4943 = vadd.f32 0.0, %v4942
        %4944 = vmatmul.f32.gmra.mxu0 %v4390
        %v4945 = vpop.f32.mrf.mxu0
        %v4946 = vadd.f32 0.0, %v4945
        %4947 = vmatmul.f32.gmra.mxu0 %v4392
        %v4948 = vpop.f32.mrf.mxu0
        %v4949 = vadd.f32 0.0, %v4948
        %4950 = vmatmul.f32.gmra.mxu0 %v4395
        %v4951 = vpop.f32.mrf.mxu0
        %v4952 = vadd.f32 0.0, %v4951
        %4953 = vmatmul.f32.gmra.mxu0 %v4397
        %v4954 = vpop.f32.mrf.mxu0
        %v4955 = vadd.f32 0.0, %v4954
        %4956 = vmatmul.f32.gmra.mxu0 %v4400
        %v4957 = vpop.f32.mrf.mxu0
        %v4958 = vadd.f32 0.0, %v4957
        %4959 = vmatmul.f32.gmra.mxu0 %v4402
        %v4960 = vpop.f32.mrf.mxu0
        %v4961 = vadd.f32 0.0, %v4960
        %4962 = vmatmul.f32.gmra.mxu0 %v4405
        %v4963 = vpop.f32.mrf.mxu0
        %v4964 = vadd.f32 0.0, %v4963
        %4965 = vmatmul.f32.gmra.mxu0 %v4407
        %v4966 = vpop.f32.mrf.mxu0
        %v4967 = vadd.f32 0.0, %v4966
        %4968 = vmatmul.f32.gmra.mxu0 %v4410
        %v4969 = vpop.f32.mrf.mxu0
        %v4970 = vadd.f32 0.0, %v4969
        %4971 = vmatmul.f32.gmra.mxu0 %v4412
        %v4972 = vpop.f32.mrf.mxu0
        %v4973 = vadd.f32 0.0, %v4972
        %4974 = vmatmul.f32.gmra.mxu0 %v4415
        %v4975 = vpop.f32.mrf.mxu0
        %v4976 = vadd.f32 0.0, %v4975
        %4977 = vmatmul.f32.gmra.mxu0 %v4417
        %v4978 = vpop.f32.mrf.mxu0
        %v4979 = vadd.f32 0.0, %v4978
        %4980 = vmatmul.f32.gmra.mxu0 %v4420
        %v4981 = vpop.f32.mrf.mxu0
        %v4982 = vadd.f32 0.0, %v4981
        %4983 = vmatmul.f32.gmra.mxu0 %v4422
        %v4984 = vpop.f32.mrf.mxu0
        %v4985 = vadd.f32 0.0, %v4984
        %4986 = vdwg.mxu0
        %v4987 = vld [vmem:[#allocation3] sm:$0xff]
        %v4988 = vld [vmem:[#allocation3 + $0x8] sm:$0xff]
        %v4989 = vld [vmem:[#allocation3 + $0x10] sm:$0xff]
        %v4990 = vld [vmem:[#allocation3 + $0x18] sm:$0xff]
        %v4991 = vld [vmem:[#allocation3 + $0x20] sm:$0xff]
        %v4992 = vld [vmem:[#allocation3 + $0x28] sm:$0xff]
        %v4993 = vld [vmem:[#allocation3 + $0x30] sm:$0xff]
        %v4994 = vld [vmem:[#allocation3 + $0x38] sm:$0xff]
        %v4995 = vld [vmem:[#allocation3 + $0x40] sm:$0xff]
        %v4996 = vld [vmem:[#allocation3 + $0x48] sm:$0xff]
        %v4997 = vld [vmem:[#allocation3 + $0x50] sm:$0xff]
        %v4998 = vld [vmem:[#allocation3 + $0x58] sm:$0xff]
        %v4999 = vld [vmem:[#allocation3 + $0x60] sm:$0xff]
        %v5000 = vld [vmem:[#allocation3 + $0x68] sm:$0xff]
        %v5001 = vld [vmem:[#allocation3 + $0x70] sm:$0xff]
        %v5002 = vld [vmem:[#allocation3 + $0x78] sm:$0xff]
        %v5003 = vld [vmem:[#allocation3 + $0x80] sm:$0xff]
        %v5004 = vld [vmem:[#allocation3 + $0x88] sm:$0xff]
        %v5005 = vld [vmem:[#allocation3 + $0x90] sm:$0xff]
        %v5006 = vld [vmem:[#allocation3 + $0x98] sm:$0xff]
        %v5007 = vld [vmem:[#allocation3 + $0xa0] sm:$0xff]
        %v5008 = vld [vmem:[#allocation3 + $0xa8] sm:$0xff]
        %v5009 = vld [vmem:[#allocation3 + $0xb0] sm:$0xff]
        %v5010 = vld [vmem:[#allocation3 + $0xb8] sm:$0xff]
        %v5011 = vld [vmem:[#allocation3 + $0xc0] sm:$0xff]
        %v5012 = vld [vmem:[#allocation3 + $0xc8] sm:$0xff]
        %v5013 = vld [vmem:[#allocation3 + $0xd0] sm:$0xff]
        %v5014 = vld [vmem:[#allocation3 + $0xd8] sm:$0xff]
        %v5015 = vld [vmem:[#allocation3 + $0xe0] sm:$0xff]
        %v5016 = vld [vmem:[#allocation3 + $0xe8] sm:$0xff]
        %v5017 = vld [vmem:[#allocation3 + $0xf0] sm:$0xff]
        %v5018 = vld [vmem:[#allocation3 + $0xf8] sm:$0xff]
        %v5019 = vadd.f32 %v4987, %v4892
        %v5020 = vadd.f32 %v4988, %v4895
        %v5021 = vadd.f32 %v4989, %v4898
        %v5022 = vadd.f32 %v4990, %v4901
        %v5023 = vadd.f32 %v4991, %v4904
        %v5024 = vadd.f32 %v4992, %v4907
        %v5025 = vadd.f32 %v4993, %v4910
        %v5026 = vadd.f32 %v4994, %v4913
        %v5027 = vadd.f32 %v4995, %v4916
        %v5028 = vadd.f32 %v4996, %v4919
        %v5029 = vadd.f32 %v4997, %v4922
        %v5030 = vadd.f32 %v4998, %v4925
        %v5031 = vadd.f32 %v4999, %v4928
        %v5032 = vadd.f32 %v5000, %v4931
        %v5033 = vadd.f32 %v5001, %v4934
        %v5034 = vadd.f32 %v5002, %v4937
        %v5035 = vadd.f32 %v5003, %v4940
        %v5036 = vadd.f32 %v5004, %v4943
        %v5037 = vadd.f32 %v5005, %v4946
        %v5038 = vadd.f32 %v5006, %v4949
        %v5039 = vadd.f32 %v5007, %v4952
        %v5040 = vadd.f32 %v5008, %v4955
        %v5041 = vadd.f32 %v5009, %v4958
        %v5042 = vadd.f32 %v5010, %v4961
        %v5043 = vadd.f32 %v5011, %v4964
        %v5044 = vadd.f32 %v5012, %v4967
        %v5045 = vadd.f32 %v5013, %v4970
        %v5046 = vadd.f32 %v5014, %v4973
        %v5047 = vadd.f32 %v5015, %v4976
        %v5048 = vadd.f32 %v5016, %v4979
        %v5049 = vadd.f32 %v5017, %v4982
        %v5050 = vadd.f32 %v5018, %v4985
        %5051 = vst [vmem:[#allocation3] sm:$0xff] %v5019
        %5052 = vst [vmem:[#allocation3 + $0x8] sm:$0xff] %v5020
        %5053 = vst [vmem:[#allocation3 + $0x10] sm:$0xff] %v5021
        %5054 = vst [vmem:[#allocation3 + $0x18] sm:$0xff] %v5022
        %5055 = vst [vmem:[#allocation3 + $0x20] sm:$0xff] %v5023
        %5056 = vst [vmem:[#allocation3 + $0x28] sm:$0xff] %v5024
        %5057 = vst [vmem:[#allocation3 + $0x30] sm:$0xff] %v5025
        %5058 = vst [vmem:[#allocation3 + $0x38] sm:$0xff] %v5026
        %5059 = vst [vmem:[#allocation3 + $0x40] sm:$0xff] %v5027
        %5060 = vst [vmem:[#allocation3 + $0x48] sm:$0xff] %v5028
        %5061 = vst [vmem:[#allocation3 + $0x50] sm:$0xff] %v5029
        %5062 = vst [vmem:[#allocation3 + $0x58] sm:$0xff] %v5030
        %5063 = vst [vmem:[#allocation3 + $0x60] sm:$0xff] %v5031
        %5064 = vst [vmem:[#allocation3 + $0x68] sm:$0xff] %v5032
        %5065 = vst [vmem:[#allocation3 + $0x70] sm:$0xff] %v5033
        %5066 = vst [vmem:[#allocation3 + $0x78] sm:$0xff] %v5034
        %5067 = vst [vmem:[#allocation3 + $0x80] sm:$0xff] %v5035
        %5068 = vst [vmem:[#allocation3 + $0x88] sm:$0xff] %v5036
        %5069 = vst [vmem:[#allocation3 + $0x90] sm:$0xff] %v5037
        %5070 = vst [vmem:[#allocation3 + $0x98] sm:$0xff] %v5038
        %5071 = vst [vmem:[#allocation3 + $0xa0] sm:$0xff] %v5039
        %5072 = vst [vmem:[#allocation3 + $0xa8] sm:$0xff] %v5040
        %5073 = vst [vmem:[#allocation3 + $0xb0] sm:$0xff] %v5041
        %5074 = vst [vmem:[#allocation3 + $0xb8] sm:$0xff] %v5042
        %5075 = vst [vmem:[#allocation3 + $0xc0] sm:$0xff] %v5043
        %5076 = vst [vmem:[#allocation3 + $0xc8] sm:$0xff] %v5044
        %5077 = vst [vmem:[#allocation3 + $0xd0] sm:$0xff] %v5045
        %5078 = vst [vmem:[#allocation3 + $0xd8] sm:$0xff] %v5046
        %5079 = vst [vmem:[#allocation3 + $0xe0] sm:$0xff] %v5047
        %5080 = vst [vmem:[#allocation3 + $0xe8] sm:$0xff] %v5048
        %5081 = vst [vmem:[#allocation3 + $0xf0] sm:$0xff] %v5049
        %5082 = vst [vmem:[#allocation3 + $0xf8] sm:$0xff] %v5050
        %s5083 = scalar_lea.vmem [#allocation4], 384
        %v5084 = vld [vmem:[%s5083] sm:$0xff]
        %v5085 = vld [vmem:[%s5083 + $0x8] sm:$0xff]
        %v5086 = vld [vmem:[%s5083 + $0x10] sm:$0xff]
        %v5087 = vld [vmem:[%s5083 + $0x18] sm:$0xff]
        %v5088 = vld [vmem:[%s5083 + $0x20] sm:$0xff]
        %v5089 = vld [vmem:[%s5083 + $0x28] sm:$0xff]
        %v5090 = vld [vmem:[%s5083 + $0x30] sm:$0xff]
        %v5091 = vld [vmem:[%s5083 + $0x38] sm:$0xff]
        %v5092 = vld [vmem:[%s5083 + $0x40] sm:$0xff]
        %v5093 = vld [vmem:[%s5083 + $0x48] sm:$0xff]
        %v5094 = vld [vmem:[%s5083 + $0x50] sm:$0xff]
        %v5095 = vld [vmem:[%s5083 + $0x58] sm:$0xff]
        %v5096 = vld [vmem:[%s5083 + $0x60] sm:$0xff]
        %v5097 = vld [vmem:[%s5083 + $0x68] sm:$0xff]
        %v5098 = vld [vmem:[%s5083 + $0x70] sm:$0xff]
        %v5099 = vld [vmem:[%s5083 + $0x78] sm:$0xff]
        %5100 = vmatpush.msra.mxu0 %v5099
        %5101 = vmatpush.msra.mxu0 %v5098
        %5102 = vmatpush.msra.mxu0 %v5097
        %5103 = vmatpush.msra.mxu0 %v5096
        %5104 = vmatpush.msra.mxu0 %v5095
        %5105 = vmatpush.msra.mxu0 %v5094
        %5106 = vmatpush.msra.mxu0 %v5093
        %5107 = vmatpush.msra.mxu0 %v5092
        %5108 = vmatpush.msra.mxu0 %v5091
        %5109 = vmatpush.msra.mxu0 %v5090
        %5110 = vmatpush.msra.mxu0 %v5089
        %5111 = vmatpush.msra.mxu0 %v5088
        %5112 = vmatpush.msra.mxu0 %v5087
        %5113 = vmatpush.msra.mxu0 %v5086
        %5114 = vmatpush.msra.mxu0 %v5085
        %5115 = vmatpush.msra.mxu0 %v5084
        %5116 = vmatmul.f32.gmra.mxu0 %v4112
        %v5117 = vpop.f32.mrf.mxu0
        %v5118 = vadd.f32 0.0, %v5117
        %5119 = vmatmul.f32.gmra.mxu0 %v4113
        %v5120 = vpop.f32.mrf.mxu0
        %v5121 = vadd.f32 0.0, %v5120
        %5122 = vmatmul.f32.gmra.mxu0 %v4115
        %v5123 = vpop.f32.mrf.mxu0
        %v5124 = vadd.f32 0.0, %v5123
        %5125 = vmatmul.f32.gmra.mxu0 %v4116
        %v5126 = vpop.f32.mrf.mxu0
        %v5127 = vadd.f32 0.0, %v5126
        %5128 = vmatmul.f32.gmra.mxu0 %v4118
        %v5129 = vpop.f32.mrf.mxu0
        %v5130 = vadd.f32 0.0, %v5129
        %5131 = vmatmul.f32.gmra.mxu0 %v4119
        %v5132 = vpop.f32.mrf.mxu0
        %v5133 = vadd.f32 0.0, %v5132
        %5134 = vmatmul.f32.gmra.mxu0 %v4121
        %v5135 = vpop.f32.mrf.mxu0
        %v5136 = vadd.f32 0.0, %v5135
        %5137 = vmatmul.f32.gmra.mxu0 %v4122
        %v5138 = vpop.f32.mrf.mxu0
        %v5139 = vadd.f32 0.0, %v5138
        %5140 = vmatmul.f32.gmra.mxu0 %v4124
        %v5141 = vpop.f32.mrf.mxu0
        %v5142 = vadd.f32 0.0, %v5141
        %5143 = vmatmul.f32.gmra.mxu0 %v4125
        %v5144 = vpop.f32.mrf.mxu0
        %v5145 = vadd.f32 0.0, %v5144
        %5146 = vmatmul.f32.gmra.mxu0 %v4127
        %v5147 = vpop.f32.mrf.mxu0
        %v5148 = vadd.f32 0.0, %v5147
        %5149 = vmatmul.f32.gmra.mxu0 %v4128
        %v5150 = vpop.f32.mrf.mxu0
        %v5151 = vadd.f32 0.0, %v5150
        %5152 = vmatmul.f32.gmra.mxu0 %v4130
        %v5153 = vpop.f32.mrf.mxu0
        %v5154 = vadd.f32 0.0, %v5153
        %5155 = vmatmul.f32.gmra.mxu0 %v4131
        %v5156 = vpop.f32.mrf.mxu0
        %v5157 = vadd.f32 0.0, %v5156
        %5158 = vmatmul.f32.gmra.mxu0 %v4133
        %v5159 = vpop.f32.mrf.mxu0
        %v5160 = vadd.f32 0.0, %v5159
        %5161 = vmatmul.f32.gmra.mxu0 %v4134
        %v5162 = vpop.f32.mrf.mxu0
        %v5163 = vadd.f32 0.0, %v5162
        %5164 = vmatmul.f32.gmra.mxu0 %v4136
        %v5165 = vpop.f32.mrf.mxu0
        %v5166 = vadd.f32 0.0, %v5165
        %5167 = vmatmul.f32.gmra.mxu0 %v4137
        %v5168 = vpop.f32.mrf.mxu0
        %v5169 = vadd.f32 0.0, %v5168
        %5170 = vmatmul.f32.gmra.mxu0 %v4139
        %v5171 = vpop.f32.mrf.mxu0
        %v5172 = vadd.f32 0.0, %v5171
        %5173 = vmatmul.f32.gmra.mxu0 %v4140
        %v5174 = vpop.f32.mrf.mxu0
        %v5175 = vadd.f32 0.0, %v5174
        %5176 = vmatmul.f32.gmra.mxu0 %v4142
        %v5177 = vpop.f32.mrf.mxu0
        %v5178 = vadd.f32 0.0, %v5177
        %5179 = vmatmul.f32.gmra.mxu0 %v4143
        %v5180 = vpop.f32.mrf.mxu0
        %v5181 = vadd.f32 0.0, %v5180
        %5182 = vmatmul.f32.gmra.mxu0 %v4145
        %v5183 = vpop.f32.mrf.mxu0
        %v5184 = vadd.f32 0.0, %v5183
        %5185 = vmatmul.f32.gmra.mxu0 %v4146
        %v5186 = vpop.f32.mrf.mxu0
        %v5187 = vadd.f32 0.0, %v5186
        %5188 = vmatmul.f32.gmra.mxu0 %v4148
        %v5189 = vpop.f32.mrf.mxu0
        %v5190 = vadd.f32 0.0, %v5189
        %5191 = vmatmul.f32.gmra.mxu0 %v4149
        %v5192 = vpop.f32.mrf.mxu0
        %v5193 = vadd.f32 0.0, %v5192
        %5194 = vmatmul.f32.gmra.mxu0 %v4151
        %v5195 = vpop.f32.mrf.mxu0
        %v5196 = vadd.f32 0.0, %v5195
        %5197 = vmatmul.f32.gmra.mxu0 %v4152
        %v5198 = vpop.f32.mrf.mxu0
        %v5199 = vadd.f32 0.0, %v5198
        %5200 = vmatmul.f32.gmra.mxu0 %v4154
        %v5201 = vpop.f32.mrf.mxu0
        %v5202 = vadd.f32 0.0, %v5201
        %5203 = vmatmul.f32.gmra.mxu0 %v4155
        %v5204 = vpop.f32.mrf.mxu0
        %v5205 = vadd.f32 0.0, %v5204
        %5206 = vmatmul.f32.gmra.mxu0 %v4157
        %v5207 = vpop.f32.mrf.mxu0
        %v5208 = vadd.f32 0.0, %v5207
        %5209 = vmatmul.f32.gmra.mxu0 %v4158
        %v5210 = vpop.f32.mrf.mxu0
        %v5211 = vadd.f32 0.0, %v5210
        %5212 = vdwg.mxu0
        %v5213 = vld [vmem:[#allocation3] sm:$0xff]
        %v5214 = vld [vmem:[#allocation3 + $0x8] sm:$0xff]
        %v5215 = vld [vmem:[#allocation3 + $0x10] sm:$0xff]
        %v5216 = vld [vmem:[#allocation3 + $0x18] sm:$0xff]
        %v5217 = vld [vmem:[#allocation3 + $0x20] sm:$0xff]
        %v5218 = vld [vmem:[#allocation3 + $0x28] sm:$0xff]
        %v5219 = vld [vmem:[#allocation3 + $0x30] sm:$0xff]
        %v5220 = vld [vmem:[#allocation3 + $0x38] sm:$0xff]
        %v5221 = vld [vmem:[#allocation3 + $0x40] sm:$0xff]
        %v5222 = vld [vmem:[#allocation3 + $0x48] sm:$0xff]
        %v5223 = vld [vmem:[#allocation3 + $0x50] sm:$0xff]
        %v5224 = vld [vmem:[#allocation3 + $0x58] sm:$0xff]
        %v5225 = vld [vmem:[#allocation3 + $0x60] sm:$0xff]
        %v5226 = vld [vmem:[#allocation3 + $0x68] sm:$0xff]
        %v5227 = vld [vmem:[#allocation3 + $0x70] sm:$0xff]
        %v5228 = vld [vmem:[#allocation3 + $0x78] sm:$0xff]
        %v5229 = vld [vmem:[#allocation3 + $0x80] sm:$0xff]
        %v5230 = vld [vmem:[#allocation3 + $0x88] sm:$0xff]
        %v5231 = vld [vmem:[#allocation3 + $0x90] sm:$0xff]
        %v5232 = vld [vmem:[#allocation3 + $0x98] sm:$0xff]
        %v5233 = vld [vmem:[#allocation3 + $0xa0] sm:$0xff]
        %v5234 = vld [vmem:[#allocation3 + $0xa8] sm:$0xff]
        %v5235 = vld [vmem:[#allocation3 + $0xb0] sm:$0xff]
        %v5236 = vld [vmem:[#allocation3 + $0xb8] sm:$0xff]
        %v5237 = vld [vmem:[#allocation3 + $0xc0] sm:$0xff]
        %v5238 = vld [vmem:[#allocation3 + $0xc8] sm:$0xff]
        %v5239 = vld [vmem:[#allocation3 + $0xd0] sm:$0xff]
        %v5240 = vld [vmem:[#allocation3 + $0xd8] sm:$0xff]
        %v5241 = vld [vmem:[#allocation3 + $0xe0] sm:$0xff]
        %v5242 = vld [vmem:[#allocation3 + $0xe8] sm:$0xff]
        %v5243 = vld [vmem:[#allocation3 + $0xf0] sm:$0xff]
        %v5244 = vld [vmem:[#allocation3 + $0xf8] sm:$0xff]
        %v5245 = vadd.f32 %v5213, %v5118
        %v5246 = vadd.f32 %v5214, %v5121
        %v5247 = vadd.f32 %v5215, %v5124
        %v5248 = vadd.f32 %v5216, %v5127
        %v5249 = vadd.f32 %v5217, %v5130
        %v5250 = vadd.f32 %v5218, %v5133
        %v5251 = vadd.f32 %v5219, %v5136
        %v5252 = vadd.f32 %v5220, %v5139
        %v5253 = vadd.f32 %v5221, %v5142
        %v5254 = vadd.f32 %v5222, %v5145
        %v5255 = vadd.f32 %v5223, %v5148
        %v5256 = vadd.f32 %v5224, %v5151
        %v5257 = vadd.f32 %v5225, %v5154
        %v5258 = vadd.f32 %v5226, %v5157
        %v5259 = vadd.f32 %v5227, %v5160
        %v5260 = vadd.f32 %v5228, %v5163
        %v5261 = vadd.f32 %v5229, %v5166
        %v5262 = vadd.f32 %v5230, %v5169
        %v5263 = vadd.f32 %v5231, %v5172
        %v5264 = vadd.f32 %v5232, %v5175
        %v5265 = vadd.f32 %v5233, %v5178
        %v5266 = vadd.f32 %v5234, %v5181
        %v5267 = vadd.f32 %v5235, %v5184
        %v5268 = vadd.f32 %v5236, %v5187
        %v5269 = vadd.f32 %v5237, %v5190
        %v5270 = vadd.f32 %v5238, %v5193
        %v5271 = vadd.f32 %v5239, %v5196
        %v5272 = vadd.f32 %v5240, %v5199
        %v5273 = vadd.f32 %v5241, %v5202
        %v5274 = vadd.f32 %v5242, %v5205
        %v5275 = vadd.f32 %v5243, %v5208
        %v5276 = vadd.f32 %v5244, %v5211
        %5277 = vst [vmem:[#allocation3] sm:$0xff] %v5245
        %5278 = vst [vmem:[#allocation3 + $0x8] sm:$0xff] %v5246
        %5279 = vst [vmem:[#allocation3 + $0x10] sm:$0xff] %v5247
        %5280 = vst [vmem:[#allocation3 + $0x18] sm:$0xff] %v5248
        %5281 = vst [vmem:[#allocation3 + $0x20] sm:$0xff] %v5249
        %5282 = vst [vmem:[#allocation3 + $0x28] sm:$0xff] %v5250
        %5283 = vst [vmem:[#allocation3 + $0x30] sm:$0xff] %v5251
        %5284 = vst [vmem:[#allocation3 + $0x38] sm:$0xff] %v5252
        %5285 = vst [vmem:[#allocation3 + $0x40] sm:$0xff] %v5253
        %5286 = vst [vmem:[#allocation3 + $0x48] sm:$0xff] %v5254
        %5287 = vst [vmem:[#allocation3 + $0x50] sm:$0xff] %v5255
        %5288 = vst [vmem:[#allocation3 + $0x58] sm:$0xff] %v5256
        %5289 = vst [vmem:[#allocation3 + $0x60] sm:$0xff] %v5257
        %5290 = vst [vmem:[#allocation3 + $0x68] sm:$0xff] %v5258
        %5291 = vst [vmem:[#allocation3 + $0x70] sm:$0xff] %v5259
        %5292 = vst [vmem:[#allocation3 + $0x78] sm:$0xff] %v5260
        %5293 = vst [vmem:[#allocation3 + $0x80] sm:$0xff] %v5261
        %5294 = vst [vmem:[#allocation3 + $0x88] sm:$0xff] %v5262
        %5295 = vst [vmem:[#allocation3 + $0x90] sm:$0xff] %v5263
        %5296 = vst [vmem:[#allocation3 + $0x98] sm:$0xff] %v5264
        %5297 = vst [vmem:[#allocation3 + $0xa0] sm:$0xff] %v5265
        %5298 = vst [vmem:[#allocation3 + $0xa8] sm:$0xff] %v5266
        %5299 = vst [vmem:[#allocation3 + $0xb0] sm:$0xff] %v5267
        %5300 = vst [vmem:[#allocation3 + $0xb8] sm:$0xff] %v5268
        %5301 = vst [vmem:[#allocation3 + $0xc0] sm:$0xff] %v5269
        %5302 = vst [vmem:[#allocation3 + $0xc8] sm:$0xff] %v5270
        %5303 = vst [vmem:[#allocation3 + $0xd0] sm:$0xff] %v5271
        %5304 = vst [vmem:[#allocation3 + $0xd8] sm:$0xff] %v5272
        %5305 = vst [vmem:[#allocation3 + $0xe0] sm:$0xff] %v5273
        %5306 = vst [vmem:[#allocation3 + $0xe8] sm:$0xff] %v5274
        %5307 = vst [vmem:[#allocation3 + $0xf0] sm:$0xff] %v5275
        %5308 = vst [vmem:[#allocation3 + $0xf8] sm:$0xff] %v5276
        %s5309 = scalar_lea.vmem [#allocation4], 512
        %v5310 = vld [vmem:[%s5309] sm:$0xff]
        %v5311 = vld [vmem:[%s5309 + $0x8] sm:$0xff]
        %v5312 = vld [vmem:[%s5309 + $0x10] sm:$0xff]
        %v5313 = vld [vmem:[%s5309 + $0x18] sm:$0xff]
        %v5314 = vld [vmem:[%s5309 + $0x20] sm:$0xff]
        %v5315 = vld [vmem:[%s5309 + $0x28] sm:$0xff]
        %v5316 = vld [vmem:[%s5309 + $0x30] sm:$0xff]
        %v5317 = vld [vmem:[%s5309 + $0x38] sm:$0xff]
        %v5318 = vld [vmem:[%s5309 + $0x40] sm:$0xff]
        %v5319 = vld [vmem:[%s5309 + $0x48] sm:$0xff]
        %v5320 = vld [vmem:[%s5309 + $0x50] sm:$0xff]
        %v5321 = vld [vmem:[%s5309 + $0x58] sm:$0xff]
        %v5322 = vld [vmem:[%s5309 + $0x60] sm:$0xff]
        %v5323 = vld [vmem:[%s5309 + $0x68] sm:$0xff]
        %v5324 = vld [vmem:[%s5309 + $0x70] sm:$0xff]
        %v5325 = vld [vmem:[%s5309 + $0x78] sm:$0xff]
        %5326 = vmatpush.msra.mxu0 %v5325
        %5327 = vmatpush.msra.mxu0 %v5324
        %5328 = vmatpush.msra.mxu0 %v5323
        %5329 = vmatpush.msra.mxu0 %v5322
        %5330 = vmatpush.msra.mxu0 %v5321
        %5331 = vmatpush.msra.mxu0 %v5320
        %5332 = vmatpush.msra.mxu0 %v5319
        %5333 = vmatpush.msra.mxu0 %v5318
        %5334 = vmatpush.msra.mxu0 %v5317
        %5335 = vmatpush.msra.mxu0 %v5316
        %5336 = vmatpush.msra.mxu0 %v5315
        %5337 = vmatpush.msra.mxu0 %v5314
        %5338 = vmatpush.msra.mxu0 %v5313
        %5339 = vmatpush.msra.mxu0 %v5312
        %5340 = vmatpush.msra.mxu0 %v5311
        %5341 = vmatpush.msra.mxu0 %v5310
        %5342 = vmatmul.f32.gmra.mxu0 %v4224
        %v5343 = vpop.f32.mrf.mxu0
        %v5344 = vadd.f32 0.0, %v5343
        %5345 = vmatmul.f32.gmra.mxu0 %v4226
        %v5346 = vpop.f32.mrf.mxu0
        %v5347 = vadd.f32 0.0, %v5346
        %5348 = vmatmul.f32.gmra.mxu0 %v4229
        %v5349 = vpop.f32.mrf.mxu0
        %v5350 = vadd.f32 0.0, %v5349
        %5351 = vmatmul.f32.gmra.mxu0 %v4231
        %v5352 = vpop.f32.mrf.mxu0
        %v5353 = vadd.f32 0.0, %v5352
        %5354 = vmatmul.f32.gmra.mxu0 %v4234
        %v5355 = vpop.f32.mrf.mxu0
        %v5356 = vadd.f32 0.0, %v5355
        %5357 = vmatmul.f32.gmra.mxu0 %v4236
        %v5358 = vpop.f32.mrf.mxu0
        %v5359 = vadd.f32 0.0, %v5358
        %5360 = vmatmul.f32.gmra.mxu0 %v4239
        %v5361 = vpop.f32.mrf.mxu0
        %v5362 = vadd.f32 0.0, %v5361
        %5363 = vmatmul.f32.gmra.mxu0 %v4241
        %v5364 = vpop.f32.mrf.mxu0
        %v5365 = vadd.f32 0.0, %v5364
        %5366 = vmatmul.f32.gmra.mxu0 %v4244
        %v5367 = vpop.f32.mrf.mxu0
        %v5368 = vadd.f32 0.0, %v5367
        %5369 = vmatmul.f32.gmra.mxu0 %v4246
        %v5370 = vpop.f32.mrf.mxu0
        %v5371 = vadd.f32 0.0, %v5370
        %5372 = vmatmul.f32.gmra.mxu0 %v4249
        %v5373 = vpop.f32.mrf.mxu0
        %v5374 = vadd.f32 0.0, %v5373
        %5375 = vmatmul.f32.gmra.mxu0 %v4251
        %v5376 = vpop.f32.mrf.mxu0
        %v5377 = vadd.f32 0.0, %v5376
        %5378 = vmatmul.f32.gmra.mxu0 %v4254
        %v5379 = vpop.f32.mrf.mxu0
        %v5380 = vadd.f32 0.0, %v5379
        %5381 = vmatmul.f32.gmra.mxu0 %v4256
        %v5382 = vpop.f32.mrf.mxu0
        %v5383 = vadd.f32 0.0, %v5382
        %5384 = vmatmul.f32.gmra.mxu0 %v4259
        %v5385 = vpop.f32.mrf.mxu0
        %v5386 = vadd.f32 0.0, %v5385
        %5387 = vmatmul.f32.gmra.mxu0 %v4261
        %v5388 = vpop.f32.mrf.mxu0
        %v5389 = vadd.f32 0.0, %v5388
        %5390 = vmatmul.f32.gmra.mxu0 %v4264
        %v5391 = vpop.f32.mrf.mxu0
        %v5392 = vadd.f32 0.0, %v5391
        %5393 = vmatmul.f32.gmra.mxu0 %v4266
        %v5394 = vpop.f32.mrf.mxu0
        %v5395 = vadd.f32 0.0, %v5394
        %5396 = vmatmul.f32.gmra.mxu0 %v4269
        %v5397 = vpop.f32.mrf.mxu0
        %v5398 = vadd.f32 0.0, %v5397
        %5399 = vmatmul.f32.gmra.mxu0 %v4271
        %v5400 = vpop.f32.mrf.mxu0
        %v5401 = vadd.f32 0.0, %v5400
        %5402 = vmatmul.f32.gmra.mxu0 %v4274
        %v5403 = vpop.f32.mrf.mxu0
        %v5404 = vadd.f32 0.0, %v5403
        %5405 = vmatmul.f32.gmra.mxu0 %v4276
        %v5406 = vpop.f32.mrf.mxu0
        %v5407 = vadd.f32 0.0, %v5406
        %5408 = vmatmul.f32.gmra.mxu0 %v4279
        %v5409 = vpop.f32.mrf.mxu0
        %v5410 = vadd.f32 0.0, %v5409
        %5411 = vmatmul.f32.gmra.mxu0 %v4281
        %v5412 = vpop.f32.mrf.mxu0
        %v5413 = vadd.f32 0.0, %v5412
        %5414 = vmatmul.f32.gmra.mxu0 %v4284
        %v5415 = vpop.f32.mrf.mxu0
        %v5416 = vadd.f32 0.0, %v5415
        %5417 = vmatmul.f32.gmra.mxu0 %v4286
        %v5418 = vpop.f32.mrf.mxu0
        %v5419 = vadd.f32 0.0, %v5418
        %5420 = vmatmul.f32.gmra.mxu0 %v4289
        %v5421 = vpop.f32.mrf.mxu0
        %v5422 = vadd.f32 0.0, %v5421
        %5423 = vmatmul.f32.gmra.mxu0 %v4291
        %v5424 = vpop.f32.mrf.mxu0
        %v5425 = vadd.f32 0.0, %v5424
        %5426 = vmatmul.f32.gmra.mxu0 %v4294
        %v5427 = vpop.f32.mrf.mxu0
        %v5428 = vadd.f32 0.0, %v5427
        %5429 = vmatmul.f32.gmra.mxu0 %v4296
        %v5430 = vpop.f32.mrf.mxu0
        %v5431 = vadd.f32 0.0, %v5430
        %5432 = vmatmul.f32.gmra.mxu0 %v4299
        %v5433 = vpop.f32.mrf.mxu0
        %v5434 = vadd.f32 0.0, %v5433
        %5435 = vmatmul.f32.gmra.mxu0 %v4301
        %v5436 = vpop.f32.mrf.mxu0
        %v5437 = vadd.f32 0.0, %v5436
        %5438 = vdwg.mxu0
        %v5439 = vld [vmem:[#allocation3] sm:$0xff]
        %v5440 = vld [vmem:[#allocation3 + $0x8] sm:$0xff]
        %v5441 = vld [vmem:[#allocation3 + $0x10] sm:$0xff]
        %v5442 = vld [vmem:[#allocation3 + $0x18] sm:$0xff]
        %v5443 = vld [vmem:[#allocation3 + $0x20] sm:$0xff]
        %v5444 = vld [vmem:[#allocation3 + $0x28] sm:$0xff]
        %v5445 = vld [vmem:[#allocation3 + $0x30] sm:$0xff]
        %v5446 = vld [vmem:[#allocation3 + $0x38] sm:$0xff]
        %v5447 = vld [vmem:[#allocation3 + $0x40] sm:$0xff]
        %v5448 = vld [vmem:[#allocation3 + $0x48] sm:$0xff]
        %v5449 = vld [vmem:[#allocation3 + $0x50] sm:$0xff]
        %v5450 = vld [vmem:[#allocation3 + $0x58] sm:$0xff]
        %v5451 = vld [vmem:[#allocation3 + $0x60] sm:$0xff]
        %v5452 = vld [vmem:[#allocation3 + $0x68] sm:$0xff]
        %v5453 = vld [vmem:[#allocation3 + $0x70] sm:$0xff]
        %v5454 = vld [vmem:[#allocation3 + $0x78] sm:$0xff]
        %v5455 = vld [vmem:[#allocation3 + $0x80] sm:$0xff]
        %v5456 = vld [vmem:[#allocation3 + $0x88] sm:$0xff]
        %v5457 = vld [vmem:[#allocation3 + $0x90] sm:$0xff]
        %v5458 = vld [vmem:[#allocation3 + $0x98] sm:$0xff]
        %v5459 = vld [vmem:[#allocation3 + $0xa0] sm:$0xff]
        %v5460 = vld [vmem:[#allocation3 + $0xa8] sm:$0xff]
        %v5461 = vld [vmem:[#allocation3 + $0xb0] sm:$0xff]
        %v5462 = vld [vmem:[#allocation3 + $0xb8] sm:$0xff]
        %v5463 = vld [vmem:[#allocation3 + $0xc0] sm:$0xff]
        %v5464 = vld [vmem:[#allocation3 + $0xc8] sm:$0xff]
        %v5465 = vld [vmem:[#allocation3 + $0xd0] sm:$0xff]
        %v5466 = vld [vmem:[#allocation3 + $0xd8] sm:$0xff]
        %v5467 = vld [vmem:[#allocation3 + $0xe0] sm:$0xff]
        %v5468 = vld [vmem:[#allocation3 + $0xe8] sm:$0xff]
        %v5469 = vld [vmem:[#allocation3 + $0xf0] sm:$0xff]
        %v5470 = vld [vmem:[#allocation3 + $0xf8] sm:$0xff]
        %v5471 = vadd.f32 %v5439, %v5344
        %v5472 = vadd.f32 %v5440, %v5347
        %v5473 = vadd.f32 %v5441, %v5350
        %v5474 = vadd.f32 %v5442, %v5353
        %v5475 = vadd.f32 %v5443, %v5356
        %v5476 = vadd.f32 %v5444, %v5359
        %v5477 = vadd.f32 %v5445, %v5362
        %v5478 = vadd.f32 %v5446, %v5365
        %v5479 = vadd.f32 %v5447, %v5368
        %v5480 = vadd.f32 %v5448, %v5371
        %v5481 = vadd.f32 %v5449, %v5374
        %v5482 = vadd.f32 %v5450, %v5377
        %v5483 = vadd.f32 %v5451, %v5380
        %v5484 = vadd.f32 %v5452, %v5383
        %v5485 = vadd.f32 %v5453, %v5386
        %v5486 = vadd.f32 %v5454, %v5389
        %v5487 = vadd.f32 %v5455, %v5392
        %v5488 = vadd.f32 %v5456, %v5395
        %v5489 = vadd.f32 %v5457, %v5398
        %v5490 = vadd.f32 %v5458, %v5401
        %v5491 = vadd.f32 %v5459, %v5404
        %v5492 = vadd.f32 %v5460, %v5407
        %v5493 = vadd.f32 %v5461, %v5410
        %v5494 = vadd.f32 %v5462, %v5413
        %v5495 = vadd.f32 %v5463, %v5416
        %v5496 = vadd.f32 %v5464, %v5419
        %v5497 = vadd.f32 %v5465, %v5422
        %v5498 = vadd.f32 %v5466, %v5425
        %v5499 = vadd.f32 %v5467, %v5428
        %v5500 = vadd.f32 %v5468, %v5431
        %v5501 = vadd.f32 %v5469, %v5434
        %v5502 = vadd.f32 %v5470, %v5437
        %5503 = vst [vmem:[#allocation3] sm:$0xff] %v5471
        %5504 = vst [vmem:[#allocation3 + $0x8] sm:$0xff] %v5472
        %5505 = vst [vmem:[#allocation3 + $0x10] sm:$0xff] %v5473
        %5506 = vst [vmem:[#allocation3 + $0x18] sm:$0xff] %v5474
        %5507 = vst [vmem:[#allocation3 + $0x20] sm:$0xff] %v5475
        %5508 = vst [vmem:[#allocation3 + $0x28] sm:$0xff] %v5476
        %5509 = vst [vmem:[#allocation3 + $0x30] sm:$0xff] %v5477
        %5510 = vst [vmem:[#allocation3 + $0x38] sm:$0xff] %v5478
        %5511 = vst [vmem:[#allocation3 + $0x40] sm:$0xff] %v5479
        %5512 = vst [vmem:[#allocation3 + $0x48] sm:$0xff] %v5480
        %5513 = vst [vmem:[#allocation3 + $0x50] sm:$0xff] %v5481
        %5514 = vst [vmem:[#allocation3 + $0x58] sm:$0xff] %v5482
        %5515 = vst [vmem:[#allocation3 + $0x60] sm:$0xff] %v5483
        %5516 = vst [vmem:[#allocation3 + $0x68] sm:$0xff] %v5484
        %5517 = vst [vmem:[#allocation3 + $0x70] sm:$0xff] %v5485
        %5518 = vst [vmem:[#allocation3 + $0x78] sm:$0xff] %v5486
        %5519 = vst [vmem:[#allocation3 + $0x80] sm:$0xff] %v5487
        %5520 = vst [vmem:[#allocation3 + $0x88] sm:$0xff] %v5488
        %5521 = vst [vmem:[#allocation3 + $0x90] sm:$0xff] %v5489
        %5522 = vst [vmem:[#allocation3 + $0x98] sm:$0xff] %v5490
        %5523 = vst [vmem:[#allocation3 + $0xa0] sm:$0xff] %v5491
        %5524 = vst [vmem:[#allocation3 + $0xa8] sm:$0xff] %v5492
        %5525 = vst [vmem:[#allocation3 + $0xb0] sm:$0xff] %v5493
        %5526 = vst [vmem:[#allocation3 + $0xb8] sm:$0xff] %v5494
        %5527 = vst [vmem:[#allocation3 + $0xc0] sm:$0xff] %v5495
        %5528 = vst [vmem:[#allocation3 + $0xc8] sm:$0xff] %v5496
        %5529 = vst [vmem:[#allocation3 + $0xd0] sm:$0xff] %v5497
        %5530 = vst [vmem:[#allocation3 + $0xd8] sm:$0xff] %v5498
        %5531 = vst [vmem:[#allocation3 + $0xe0] sm:$0xff] %v5499
        %5532 = vst [vmem:[#allocation3 + $0xe8] sm:$0xff] %v5500
        %5533 = vst [vmem:[#allocation3 + $0xf0] sm:$0xff] %v5501
        %5534 = vst [vmem:[#allocation3 + $0xf8] sm:$0xff] %v5502
        %s5535 = scalar_lea.vmem [#allocation4], 640
        %v5536 = vld [vmem:[%s5535] sm:$0xff]
        %v5537 = vld [vmem:[%s5535 + $0x8] sm:$0xff]
        %v5538 = vld [vmem:[%s5535 + $0x10] sm:$0xff]
        %v5539 = vld [vmem:[%s5535 + $0x18] sm:$0xff]
        %v5540 = vld [vmem:[%s5535 + $0x20] sm:$0xff]
        %v5541 = vld [vmem:[%s5535 + $0x28] sm:$0xff]
        %v5542 = vld [vmem:[%s5535 + $0x30] sm:$0xff]
        %v5543 = vld [vmem:[%s5535 + $0x38] sm:$0xff]
        %v5544 = vld [vmem:[%s5535 + $0x40] sm:$0xff]
        %v5545 = vld [vmem:[%s5535 + $0x48] sm:$0xff]
        %v5546 = vld [vmem:[%s5535 + $0x50] sm:$0xff]
        %v5547 = vld [vmem:[%s5535 + $0x58] sm:$0xff]
        %v5548 = vld [vmem:[%s5535 + $0x60] sm:$0xff]
        %v5549 = vld [vmem:[%s5535 + $0x68] sm:$0xff]
        %v5550 = vld [vmem:[%s5535 + $0x70] sm:$0xff]
        %v5551 = vld [vmem:[%s5535 + $0x78] sm:$0xff]
        %5552 = vmatpush.msra.mxu0 %v5551
        %5553 = vmatpush.msra.mxu0 %v5550
        %5554 = vmatpush.msra.mxu0 %v5549
        %5555 = vmatpush.msra.mxu0 %v5548
        %5556 = vmatpush.msra.mxu0 %v5547
        %5557 = vmatpush.msra.mxu0 %v5546
        %5558 = vmatpush.msra.mxu0 %v5545
        %5559 = vmatpush.msra.mxu0 %v5544
        %5560 = vmatpush.msra.mxu0 %v5543
        %5561 = vmatpush.msra.mxu0 %v5542
        %5562 = vmatpush.msra.mxu0 %v5541
        %5563 = vmatpush.msra.mxu0 %v5540
        %5564 = vmatpush.msra.mxu0 %v5539
        %5565 = vmatpush.msra.mxu0 %v5538
        %5566 = vmatpush.msra.mxu0 %v5537
        %5567 = vmatpush.msra.mxu0 %v5536
        %5568 = vmatmul.f32.gmra.mxu0 %v4350
        %v5569 = vpop.f32.mrf.mxu0
        %v5570 = vadd.f32 0.0, %v5569
        %5571 = vmatmul.f32.gmra.mxu0 %v4352
        %v5572 = vpop.f32.mrf.mxu0
        %v5573 = vadd.f32 0.0, %v5572
        %5574 = vmatmul.f32.gmra.mxu0 %v4355
        %v5575 = vpop.f32.mrf.mxu0
        %v5576 = vadd.f32 0.0, %v5575
        %5577 = vmatmul.f32.gmra.mxu0 %v4357
        %v5578 = vpop.f32.mrf.mxu0
        %v5579 = vadd.f32 0.0, %v5578
        %5580 = vmatmul.f32.gmra.mxu0 %v4360
        %v5581 = vpop.f32.mrf.mxu0
        %v5582 = vadd.f32 0.0, %v5581
        %5583 = vmatmul.f32.gmra.mxu0 %v4362
        %v5584 = vpop.f32.mrf.mxu0
        %v5585 = vadd.f32 0.0, %v5584
        %5586 = vmatmul.f32.gmra.mxu0 %v4365
        %v5587 = vpop.f32.mrf.mxu0
        %v5588 = vadd.f32 0.0, %v5587
        %5589 = vmatmul.f32.gmra.mxu0 %v4367
        %v5590 = vpop.f32.mrf.mxu0
        %v5591 = vadd.f32 0.0, %v5590
        %5592 = vmatmul.f32.gmra.mxu0 %v4370
        %v5593 = vpop.f32.mrf.mxu0
        %v5594 = vadd.f32 0.0, %v5593
        %5595 = vmatmul.f32.gmra.mxu0 %v4372
        %v5596 = vpop.f32.mrf.mxu0
        %v5597 = vadd.f32 0.0, %v5596
        %5598 = vmatmul.f32.gmra.mxu0 %v4375
        %v5599 = vpop.f32.mrf.mxu0
        %v5600 = vadd.f32 0.0, %v5599
        %5601 = vmatmul.f32.gmra.mxu0 %v4377
        %v5602 = vpop.f32.mrf.mxu0
        %v5603 = vadd.f32 0.0, %v5602
        %5604 = vmatmul.f32.gmra.mxu0 %v4380
        %v5605 = vpop.f32.mrf.mxu0
        %v5606 = vadd.f32 0.0, %v5605
        %5607 = vmatmul.f32.gmra.mxu0 %v4382
        %v5608 = vpop.f32.mrf.mxu0
        %v5609 = vadd.f32 0.0, %v5608
        %5610 = vmatmul.f32.gmra.mxu0 %v4385
        %v5611 = vpop.f32.mrf.mxu0
        %v5612 = vadd.f32 0.0, %v5611
        %5613 = vmatmul.f32.gmra.mxu0 %v4387
        %v5614 = vpop.f32.mrf.mxu0
        %v5615 = vadd.f32 0.0, %v5614
        %5616 = vmatmul.f32.gmra.mxu0 %v4390
        %v5617 = vpop.f32.mrf.mxu0
        %v5618 = vadd.f32 0.0, %v5617
        %5619 = vmatmul.f32.gmra.mxu0 %v4392
        %v5620 = vpop.f32.mrf.mxu0
        %v5621 = vadd.f32 0.0, %v5620
        %5622 = vmatmul.f32.gmra.mxu0 %v4395
        %v5623 = vpop.f32.mrf.mxu0
        %v5624 = vadd.f32 0.0, %v5623
        %5625 = vmatmul.f32.gmra.mxu0 %v4397
        %v5626 = vpop.f32.mrf.mxu0
        %v5627 = vadd.f32 0.0, %v5626
        %5628 = vmatmul.f32.gmra.mxu0 %v4400
        %v5629 = vpop.f32.mrf.mxu0
        %v5630 = vadd.f32 0.0, %v5629
        %5631 = vmatmul.f32.gmra.mxu0 %v4402
        %v5632 = vpop.f32.mrf.mxu0
        %v5633 = vadd.f32 0.0, %v5632
        %5634 = vmatmul.f32.gmra.mxu0 %v4405
        %v5635 = vpop.f32.mrf.mxu0
        %v5636 = vadd.f32 0.0, %v5635
        %5637 = vmatmul.f32.gmra.mxu0 %v4407
        %v5638 = vpop.f32.mrf.mxu0
        %v5639 = vadd.f32 0.0, %v5638
        %5640 = vmatmul.f32.gmra.mxu0 %v4410
        %v5641 = vpop.f32.mrf.mxu0
        %v5642 = vadd.f32 0.0, %v5641
        %5643 = vmatmul.f32.gmra.mxu0 %v4412
        %v5644 = vpop.f32.mrf.mxu0
        %v5645 = vadd.f32 0.0, %v5644
        %5646 = vmatmul.f32.gmra.mxu0 %v4415
        %v5647 = vpop.f32.mrf.mxu0
        %v5648 = vadd.f32 0.0, %v5647
        %5649 = vmatmul.f32.gmra.mxu0 %v4417
        %v5650 = vpop.f32.mrf.mxu0
        %v5651 = vadd.f32 0.0, %v5650
        %5652 = vmatmul.f32.gmra.mxu0 %v4420
        %v5653 = vpop.f32.mrf.mxu0
        %v5654 = vadd.f32 0.0, %v5653
        %5655 = vmatmul.f32.gmra.mxu0 %v4422
        %v5656 = vpop.f32.mrf.mxu0
        %v5657 = vadd.f32 0.0, %v5656
        %5658 = vmatmul.f32.gmra.mxu0 %v4425
        %v5659 = vpop.f32.mrf.mxu0
        %v5660 = vadd.f32 0.0, %v5659
        %5661 = vmatmul.f32.gmra.mxu0 %v4427
        %v5662 = vpop.f32.mrf.mxu0
        %v5663 = vadd.f32 0.0, %v5662
        %5664 = vdwg.mxu0
        %v5665 = vld [vmem:[#allocation3] sm:$0xff]
        %v5666 = vld [vmem:[#allocation3 + $0x8] sm:$0xff]
        %v5667 = vld [vmem:[#allocation3 + $0x10] sm:$0xff]
        %v5668 = vld [vmem:[#allocation3 + $0x18] sm:$0xff]
        %v5669 = vld [vmem:[#allocation3 + $0x20] sm:$0xff]
        %v5670 = vld [vmem:[#allocation3 + $0x28] sm:$0xff]
        %v5671 = vld [vmem:[#allocation3 + $0x30] sm:$0xff]
        %v5672 = vld [vmem:[#allocation3 + $0x38] sm:$0xff]
        %v5673 = vld [vmem:[#allocation3 + $0x40] sm:$0xff]
        %v5674 = vld [vmem:[#allocation3 + $0x48] sm:$0xff]
        %v5675 = vld [vmem:[#allocation3 + $0x50] sm:$0xff]
        %v5676 = vld [vmem:[#allocation3 + $0x58] sm:$0xff]
        %v5677 = vld [vmem:[#allocation3 + $0x60] sm:$0xff]
        %v5678 = vld [vmem:[#allocation3 + $0x68] sm:$0xff]
        %v5679 = vld [vmem:[#allocation3 + $0x70] sm:$0xff]
        %v5680 = vld [vmem:[#allocation3 + $0x78] sm:$0xff]
        %v5681 = vld [vmem:[#allocation3 + $0x80] sm:$0xff]
        %v5682 = vld [vmem:[#allocation3 + $0x88] sm:$0xff]
        %v5683 = vld [vmem:[#allocation3 + $0x90] sm:$0xff]
        %v5684 = vld [vmem:[#allocation3 + $0x98] sm:$0xff]
        %v5685 = vld [vmem:[#allocation3 + $0xa0] sm:$0xff]
        %v5686 = vld [vmem:[#allocation3 + $0xa8] sm:$0xff]
        %v5687 = vld [vmem:[#allocation3 + $0xb0] sm:$0xff]
        %v5688 = vld [vmem:[#allocation3 + $0xb8] sm:$0xff]
        %v5689 = vld [vmem:[#allocation3 + $0xc0] sm:$0xff]
        %v5690 = vld [vmem:[#allocation3 + $0xc8] sm:$0xff]
        %v5691 = vld [vmem:[#allocation3 + $0xd0] sm:$0xff]
        %v5692 = vld [vmem:[#allocation3 + $0xd8] sm:$0xff]
        %v5693 = vld [vmem:[#allocation3 + $0xe0] sm:$0xff]
        %v5694 = vld [vmem:[#allocation3 + $0xe8] sm:$0xff]
        %v5695 = vld [vmem:[#allocation3 + $0xf0] sm:$0xff]
        %v5696 = vld [vmem:[#allocation3 + $0xf8] sm:$0xff]
        %v5697 = vadd.f32 %v5665, %v5570
        %v5698 = vadd.f32 %v5666, %v5573
        %v5699 = vadd.f32 %v5667, %v5576
        %v5700 = vadd.f32 %v5668, %v5579
        %v5701 = vadd.f32 %v5669, %v5582
        %v5702 = vadd.f32 %v5670, %v5585
        %v5703 = vadd.f32 %v5671, %v5588
        %v5704 = vadd.f32 %v5672, %v5591
        %v5705 = vadd.f32 %v5673, %v5594
        %v5706 = vadd.f32 %v5674, %v5597
        %v5707 = vadd.f32 %v5675, %v5600
        %v5708 = vadd.f32 %v5676, %v5603
        %v5709 = vadd.f32 %v5677, %v5606
        %v5710 = vadd.f32 %v5678, %v5609
        %v5711 = vadd.f32 %v5679, %v5612
        %v5712 = vadd.f32 %v5680, %v5615
        %v5713 = vadd.f32 %v5681, %v5618
        %v5714 = vadd.f32 %v5682, %v5621
        %v5715 = vadd.f32 %v5683, %v5624
        %v5716 = vadd.f32 %v5684, %v5627
        %v5717 = vadd.f32 %v5685, %v5630
        %v5718 = vadd.f32 %v5686, %v5633
        %v5719 = vadd.f32 %v5687, %v5636
        %v5720 = vadd.f32 %v5688, %v5639
        %v5721 = vadd.f32 %v5689, %v5642
        %v5722 = vadd.f32 %v5690, %v5645
        %v5723 = vadd.f32 %v5691, %v5648
        %v5724 = vadd.f32 %v5692, %v5651
        %v5725 = vadd.f32 %v5693, %v5654
        %v5726 = vadd.f32 %v5694, %v5657
        %v5727 = vadd.f32 %v5695, %v5660
        %v5728 = vadd.f32 %v5696, %v5663
        %5729 = vst [vmem:[#allocation3] sm:$0xff] %v5697
        %5730 = vst [vmem:[#allocation3 + $0x8] sm:$0xff] %v5698
        %5731 = vst [vmem:[#allocation3 + $0x10] sm:$0xff] %v5699
        %5732 = vst [vmem:[#allocation3 + $0x18] sm:$0xff] %v5700
        %5733 = vst [vmem:[#allocation3 + $0x20] sm:$0xff] %v5701
        %5734 = vst [vmem:[#allocation3 + $0x28] sm:$0xff] %v5702
        %5735 = vst [vmem:[#allocation3 + $0x30] sm:$0xff] %v5703
        %5736 = vst [vmem:[#allocation3 + $0x38] sm:$0xff] %v5704
        %5737 = vst [vmem:[#allocation3 + $0x40] sm:$0xff] %v5705
        %5738 = vst [vmem:[#allocation3 + $0x48] sm:$0xff] %v5706
        %5739 = vst [vmem:[#allocation3 + $0x50] sm:$0xff] %v5707
        %5740 = vst [vmem:[#allocation3 + $0x58] sm:$0xff] %v5708
        %5741 = vst [vmem:[#allocation3 + $0x60] sm:$0xff] %v5709
        %5742 = vst [vmem:[#allocation3 + $0x68] sm:$0xff] %v5710
        %5743 = vst [vmem:[#allocation3 + $0x70] sm:$0xff] %v5711
        %5744 = vst [vmem:[#allocation3 + $0x78] sm:$0xff] %v5712
        %5745 = vst [vmem:[#allocation3 + $0x80] sm:$0xff] %v5713
        %5746 = vst [vmem:[#allocation3 + $0x88] sm:$0xff] %v5714
        %5747 = vst [vmem:[#allocation3 + $0x90] sm:$0xff] %v5715
        %5748 = vst [vmem:[#allocation3 + $0x98] sm:$0xff] %v5716
        %5749 = vst [vmem:[#allocation3 + $0xa0] sm:$0xff] %v5717
        %5750 = vst [vmem:[#allocation3 + $0xa8] sm:$0xff] %v5718
        %5751 = vst [vmem:[#allocation3 + $0xb0] sm:$0xff] %v5719
        %5752 = vst [vmem:[#allocation3 + $0xb8] sm:$0xff] %v5720
        %5753 = vst [vmem:[#allocation3 + $0xc0] sm:$0xff] %v5721
        %5754 = vst [vmem:[#allocation3 + $0xc8] sm:$0xff] %v5722
        %5755 = vst [vmem:[#allocation3 + $0xd0] sm:$0xff] %v5723
        %5756 = vst [vmem:[#allocation3 + $0xd8] sm:$0xff] %v5724
        %5757 = vst [vmem:[#allocation3 + $0xe0] sm:$0xff] %v5725
        %5758 = vst [vmem:[#allocation3 + $0xe8] sm:$0xff] %v5726
        %5759 = vst [vmem:[#allocation3 + $0xf0] sm:$0xff] %v5727
        %5760 = vst [vmem:[#allocation3 + $0xf8] sm:$0xff] %v5728
        %s5761 = scalar_lea.vmem [#allocation4], 768
        %v5762 = vld [vmem:[%s5761] sm:$0xff]
        %v5763 = vld [vmem:[%s5761 + $0x8] sm:$0xff]
        %v5764 = vld [vmem:[%s5761 + $0x10] sm:$0xff]
        %v5765 = vld [vmem:[%s5761 + $0x18] sm:$0xff]
        %v5766 = vld [vmem:[%s5761 + $0x20] sm:$0xff]
        %v5767 = vld [vmem:[%s5761 + $0x28] sm:$0xff]
        %v5768 = vld [vmem:[%s5761 + $0x30] sm:$0xff]
        %v5769 = vld [vmem:[%s5761 + $0x38] sm:$0xff]
        %v5770 = vld [vmem:[%s5761 + $0x40] sm:$0xff]
        %v5771 = vld [vmem:[%s5761 + $0x48] sm:$0xff]
        %v5772 = vld [vmem:[%s5761 + $0x50] sm:$0xff]
        %v5773 = vld [vmem:[%s5761 + $0x58] sm:$0xff]
        %v5774 = vld [vmem:[%s5761 + $0x60] sm:$0xff]
        %v5775 = vld [vmem:[%s5761 + $0x68] sm:$0xff]
        %v5776 = vld [vmem:[%s5761 + $0x70] sm:$0xff]
        %v5777 = vld [vmem:[%s5761 + $0x78] sm:$0xff]
        %5778 = vmatpush.msra.mxu0 %v5777
        %5779 = vmatpush.msra.mxu0 %v5776
        %5780 = vmatpush.msra.mxu0 %v5775
        %5781 = vmatpush.msra.mxu0 %v5774
        %5782 = vmatpush.msra.mxu0 %v5773
        %5783 = vmatpush.msra.mxu0 %v5772
        %5784 = vmatpush.msra.mxu0 %v5771
        %5785 = vmatpush.msra.mxu0 %v5770
        %5786 = vmatpush.msra.mxu0 %v5769
        %5787 = vmatpush.msra.mxu0 %v5768
        %5788 = vmatpush.msra.mxu0 %v5767
        %5789 = vmatpush.msra.mxu0 %v5766
        %5790 = vmatpush.msra.mxu0 %v5765
        %5791 = vmatpush.msra.mxu0 %v5764
        %5792 = vmatpush.msra.mxu0 %v5763
        %5793 = vmatpush.msra.mxu0 %v5762
        %5794 = vmatmul.f32.gmra.mxu0 %v4115
        %v5795 = vpop.f32.mrf.mxu0
        %v5796 = vadd.f32 0.0, %v5795
        %5797 = vmatmul.f32.gmra.mxu0 %v4116
        %v5798 = vpop.f32.mrf.mxu0
        %v5799 = vadd.f32 0.0, %v5798
        %5800 = vmatmul.f32.gmra.mxu0 %v4118
        %v5801 = vpop.f32.mrf.mxu0
        %v5802 = vadd.f32 0.0, %v5801
        %5803 = vmatmul.f32.gmra.mxu0 %v4119
        %v5804 = vpop.f32.mrf.mxu0
        %v5805 = vadd.f32 0.0, %v5804
        %5806 = vmatmul.f32.gmra.mxu0 %v4121
        %v5807 = vpop.f32.mrf.mxu0
        %v5808 = vadd.f32 0.0, %v5807
        %5809 = vmatmul.f32.gmra.mxu0 %v4122
        %v5810 = vpop.f32.mrf.mxu0
        %v5811 = vadd.f32 0.0, %v5810
        %5812 = vmatmul.f32.gmra.mxu0 %v4124
        %v5813 = vpop.f32.mrf.mxu0
        %v5814 = vadd.f32 0.0, %v5813
        %5815 = vmatmul.f32.gmra.mxu0 %v4125
        %v5816 = vpop.f32.mrf.mxu0
        %v5817 = vadd.f32 0.0, %v5816
        %5818 = vmatmul.f32.gmra.mxu0 %v4127
        %v5819 = vpop.f32.mrf.mxu0
        %v5820 = vadd.f32 0.0, %v5819
        %5821 = vmatmul.f32.gmra.mxu0 %v4128
        %v5822 = vpop.f32.mrf.mxu0
        %v5823 = vadd.f32 0.0, %v5822
        %5824 = vmatmul.f32.gmra.mxu0 %v4130
        %v5825 = vpop.f32.mrf.mxu0
        %v5826 = vadd.f32 0.0, %v5825
        %5827 = vmatmul.f32.gmra.mxu0 %v4131
        %v5828 = vpop.f32.mrf.mxu0
        %v5829 = vadd.f32 0.0, %v5828
        %5830 = vmatmul.f32.gmra.mxu0 %v4133
        %v5831 = vpop.f32.mrf.mxu0
        %v5832 = vadd.f32 0.0, %v5831
        %5833 = vmatmul.f32.gmra.mxu0 %v4134
        %v5834 = vpop.f32.mrf.mxu0
        %v5835 = vadd.f32 0.0, %v5834
        %5836 = vmatmul.f32.gmra.mxu0 %v4136
        %v5837 = vpop.f32.mrf.mxu0
        %v5838 = vadd.f32 0.0, %v5837
        %5839 = vmatmul.f32.gmra.mxu0 %v4137
        %v5840 = vpop.f32.mrf.mxu0
        %v5841 = vadd.f32 0.0, %v5840
        %5842 = vmatmul.f32.gmra.mxu0 %v4139
        %v5843 = vpop.f32.mrf.mxu0
        %v5844 = vadd.f32 0.0, %v5843
        %5845 = vmatmul.f32.gmra.mxu0 %v4140
        %v5846 = vpop.f32.mrf.mxu0
        %v5847 = vadd.f32 0.0, %v5846
        %5848 = vmatmul.f32.gmra.mxu0 %v4142
        %v5849 = vpop.f32.mrf.mxu0
        %v5850 = vadd.f32 0.0, %v5849
        %5851 = vmatmul.f32.gmra.mxu0 %v4143
        %v5852 = vpop.f32.mrf.mxu0
        %v5853 = vadd.f32 0.0, %v5852
        %5854 = vmatmul.f32.gmra.mxu0 %v4145
        %v5855 = vpop.f32.mrf.mxu0
        %v5856 = vadd.f32 0.0, %v5855
        %5857 = vmatmul.f32.gmra.mxu0 %v4146
        %v5858 = vpop.f32.mrf.mxu0
        %v5859 = vadd.f32 0.0, %v5858
        %5860 = vmatmul.f32.gmra.mxu0 %v4148
        %v5861 = vpop.f32.mrf.mxu0
        %v5862 = vadd.f32 0.0, %v5861
        %5863 = vmatmul.f32.gmra.mxu0 %v4149
        %v5864 = vpop.f32.mrf.mxu0
        %v5865 = vadd.f32 0.0, %v5864
        %5866 = vmatmul.f32.gmra.mxu0 %v4151
        %v5867 = vpop.f32.mrf.mxu0
        %v5868 = vadd.f32 0.0, %v5867
        %5869 = vmatmul.f32.gmra.mxu0 %v4152
        %v5870 = vpop.f32.mrf.mxu0
        %v5871 = vadd.f32 0.0, %v5870
        %5872 = vmatmul.f32.gmra.mxu0 %v4154
        %v5873 = vpop.f32.mrf.mxu0
        %v5874 = vadd.f32 0.0, %v5873
        %5875 = vmatmul.f32.gmra.mxu0 %v4155
        %v5876 = vpop.f32.mrf.mxu0
        %v5877 = vadd.f32 0.0, %v5876
        %5878 = vmatmul.f32.gmra.mxu0 %v4157
        %v5879 = vpop.f32.mrf.mxu0
        %v5880 = vadd.f32 0.0, %v5879
        %5881 = vmatmul.f32.gmra.mxu0 %v4158
        %v5882 = vpop.f32.mrf.mxu0
        %v5883 = vadd.f32 0.0, %v5882
        %5884 = vmatmul.f32.gmra.mxu0 %v4160
        %v5885 = vpop.f32.mrf.mxu0
        %v5886 = vadd.f32 0.0, %v5885
        %5887 = vmatmul.f32.gmra.mxu0 %v4161
        %v5888 = vpop.f32.mrf.mxu0
        %v5889 = vadd.f32 0.0, %v5888
        %5890 = vdwg.mxu0
        %v5891 = vld [vmem:[#allocation3] sm:$0xff]
        %v5892 = vld [vmem:[#allocation3 + $0x8] sm:$0xff]
        %v5893 = vld [vmem:[#allocation3 + $0x10] sm:$0xff]
        %v5894 = vld [vmem:[#allocation3 + $0x18] sm:$0xff]
        %v5895 = vld [vmem:[#allocation3 + $0x20] sm:$0xff]
        %v5896 = vld [vmem:[#allocation3 + $0x28] sm:$0xff]
        %v5897 = vld [vmem:[#allocation3 + $0x30] sm:$0xff]
        %v5898 = vld [vmem:[#allocation3 + $0x38] sm:$0xff]
        %v5899 = vld [vmem:[#allocation3 + $0x40] sm:$0xff]
        %v5900 = vld [vmem:[#allocation3 + $0x48] sm:$0xff]
        %v5901 = vld [vmem:[#allocation3 + $0x50] sm:$0xff]
        %v5902 = vld [vmem:[#allocation3 + $0x58] sm:$0xff]
        %v5903 = vld [vmem:[#allocation3 + $0x60] sm:$0xff]
        %v5904 = vld [vmem:[#allocation3 + $0x68] sm:$0xff]
        %v5905 = vld [vmem:[#allocation3 + $0x70] sm:$0xff]
        %v5906 = vld [vmem:[#allocation3 + $0x78] sm:$0xff]
        %v5907 = vld [vmem:[#allocation3 + $0x80] sm:$0xff]
        %v5908 = vld [vmem:[#allocation3 + $0x88] sm:$0xff]
        %v5909 = vld [vmem:[#allocation3 + $0x90] sm:$0xff]
        %v5910 = vld [vmem:[#allocation3 + $0x98] sm:$0xff]
        %v5911 = vld [vmem:[#allocation3 + $0xa0] sm:$0xff]
        %v5912 = vld [vmem:[#allocation3 + $0xa8] sm:$0xff]
        %v5913 = vld [vmem:[#allocation3 + $0xb0] sm:$0xff]
        %v5914 = vld [vmem:[#allocation3 + $0xb8] sm:$0xff]
        %v5915 = vld [vmem:[#allocation3 + $0xc0] sm:$0xff]
        %v5916 = vld [vmem:[#allocation3 + $0xc8] sm:$0xff]
        %v5917 = vld [vmem:[#allocation3 + $0xd0] sm:$0xff]
        %v5918 = vld [vmem:[#allocation3 + $0xd8] sm:$0xff]
        %v5919 = vld [vmem:[#allocation3 + $0xe0] sm:$0xff]
        %v5920 = vld [vmem:[#allocation3 + $0xe8] sm:$0xff]
        %v5921 = vld [vmem:[#allocation3 + $0xf0] sm:$0xff]
        %v5922 = vld [vmem:[#allocation3 + $0xf8] sm:$0xff]
        %v5923 = vadd.f32 %v5891, %v5796
        %v5924 = vadd.f32 %v5892, %v5799
        %v5925 = vadd.f32 %v5893, %v5802
        %v5926 = vadd.f32 %v5894, %v5805
        %v5927 = vadd.f32 %v5895, %v5808
        %v5928 = vadd.f32 %v5896, %v5811
        %v5929 = vadd.f32 %v5897, %v5814
        %v5930 = vadd.f32 %v5898, %v5817
        %v5931 = vadd.f32 %v5899, %v5820
        %v5932 = vadd.f32 %v5900, %v5823
        %v5933 = vadd.f32 %v5901, %v5826
        %v5934 = vadd.f32 %v5902, %v5829
        %v5935 = vadd.f32 %v5903, %v5832
        %v5936 = vadd.f32 %v5904, %v5835
        %v5937 = vadd.f32 %v5905, %v5838
        %v5938 = vadd.f32 %v5906, %v5841
        %v5939 = vadd.f32 %v5907, %v5844
        %v5940 = vadd.f32 %v5908, %v5847
        %v5941 = vadd.f32 %v5909, %v5850
        %v5942 = vadd.f32 %v5910, %v5853
        %v5943 = vadd.f32 %v5911, %v5856
        %v5944 = vadd.f32 %v5912, %v5859
        %v5945 = vadd.f32 %v5913, %v5862
        %v5946 = vadd.f32 %v5914, %v5865
        %v5947 = vadd.f32 %v5915, %v5868
        %v5948 = vadd.f32 %v5916, %v5871
        %v5949 = vadd.f32 %v5917, %v5874
        %v5950 = vadd.f32 %v5918, %v5877
        %v5951 = vadd.f32 %v5919, %v5880
        %v5952 = vadd.f32 %v5920, %v5883
        %v5953 = vadd.f32 %v5921, %v5886
        %v5954 = vadd.f32 %v5922, %v5889
        %5955 = vst [vmem:[#allocation3] sm:$0xff] %v5923
        %5956 = vst [vmem:[#allocation3 + $0x8] sm:$0xff] %v5924
        %5957 = vst [vmem:[#allocation3 + $0x10] sm:$0xff] %v5925
        %5958 = vst [vmem:[#allocation3 + $0x18] sm:$0xff] %v5926
        %5959 = vst [vmem:[#allocation3 + $0x20] sm:$0xff] %v5927
        %5960 = vst [vmem:[#allocation3 + $0x28] sm:$0xff] %v5928
        %5961 = vst [vmem:[#allocation3 + $0x30] sm:$0xff] %v5929
        %5962 = vst [vmem:[#allocation3 + $0x38] sm:$0xff] %v5930
        %5963 = vst [vmem:[#allocation3 + $0x40] sm:$0xff] %v5931
        %5964 = vst [vmem:[#allocation3 + $0x48] sm:$0xff] %v5932
        %5965 = vst [vmem:[#allocation3 + $0x50] sm:$0xff] %v5933
        %5966 = vst [vmem:[#allocation3 + $0x58] sm:$0xff] %v5934
        %5967 = vst [vmem:[#allocation3 + $0x60] sm:$0xff] %v5935
        %5968 = vst [vmem:[#allocation3 + $0x68] sm:$0xff] %v5936
        %5969 = vst [vmem:[#allocation3 + $0x70] sm:$0xff] %v5937
        %5970 = vst [vmem:[#allocation3 + $0x78] sm:$0xff] %v5938
        %5971 = vst [vmem:[#allocation3 + $0x80] sm:$0xff] %v5939
        %5972 = vst [vmem:[#allocation3 + $0x88] sm:$0xff] %v5940
        %5973 = vst [vmem:[#allocation3 + $0x90] sm:$0xff] %v5941
        %5974 = vst [vmem:[#allocation3 + $0x98] sm:$0xff] %v5942
        %5975 = vst [vmem:[#allocation3 + $0xa0] sm:$0xff] %v5943
        %5976 = vst [vmem:[#allocation3 + $0xa8] sm:$0xff] %v5944
        %5977 = vst [vmem:[#allocation3 + $0xb0] sm:$0xff] %v5945
        %5978 = vst [vmem:[#allocation3 + $0xb8] sm:$0xff] %v5946
        %5979 = vst [vmem:[#allocation3 + $0xc0] sm:$0xff] %v5947
        %5980 = vst [vmem:[#allocation3 + $0xc8] sm:$0xff] %v5948
        %5981 = vst [vmem:[#allocation3 + $0xd0] sm:$0xff] %v5949
        %5982 = vst [vmem:[#allocation3 + $0xd8] sm:$0xff] %v5950
        %5983 = vst [vmem:[#allocation3 + $0xe0] sm:$0xff] %v5951
        %5984 = vst [vmem:[#allocation3 + $0xe8] sm:$0xff] %v5952
        %5985 = vst [vmem:[#allocation3 + $0xf0] sm:$0xff] %v5953
        %5986 = vst [vmem:[#allocation3 + $0xf8] sm:$0xff] %v5954
        %s5987 = scalar_lea.vmem [#allocation4], 896
        %v5988 = vld [vmem:[%s5987] sm:$0xff]
        %v5989 = vld [vmem:[%s5987 + $0x8] sm:$0xff]
        %v5990 = vld [vmem:[%s5987 + $0x10] sm:$0xff]
        %v5991 = vld [vmem:[%s5987 + $0x18] sm:$0xff]
        %v5992 = vld [vmem:[%s5987 + $0x20] sm:$0xff]
        %v5993 = vld [vmem:[%s5987 + $0x28] sm:$0xff]
        %v5994 = vld [vmem:[%s5987 + $0x30] sm:$0xff]
        %v5995 = vld [vmem:[%s5987 + $0x38] sm:$0xff]
        %v5996 = vld [vmem:[%s5987 + $0x40] sm:$0xff]
        %v5997 = vld [vmem:[%s5987 + $0x48] sm:$0xff]
        %v5998 = vld [vmem:[%s5987 + $0x50] sm:$0xff]
        %v5999 = vld [vmem:[%s5987 + $0x58] sm:$0xff]
        %v6000 = vld [vmem:[%s5987 + $0x60] sm:$0xff]
        %v6001 = vld [vmem:[%s5987 + $0x68] sm:$0xff]
        %v6002 = vld [vmem:[%s5987 + $0x70] sm:$0xff]
        %v6003 = vld [vmem:[%s5987 + $0x78] sm:$0xff]
        %6004 = vmatpush.msra.mxu0 %v6003
        %6005 = vmatpush.msra.mxu0 %v6002
        %6006 = vmatpush.msra.mxu0 %v6001
        %6007 = vmatpush.msra.mxu0 %v6000
        %6008 = vmatpush.msra.mxu0 %v5999
        %6009 = vmatpush.msra.mxu0 %v5998
        %6010 = vmatpush.msra.mxu0 %v5997
        %6011 = vmatpush.msra.mxu0 %v5996
        %6012 = vmatpush.msra.mxu0 %v5995
        %6013 = vmatpush.msra.mxu0 %v5994
        %6014 = vmatpush.msra.mxu0 %v5993
        %6015 = vmatpush.msra.mxu0 %v5992
        %6016 = vmatpush.msra.mxu0 %v5991
        %6017 = vmatpush.msra.mxu0 %v5990
        %6018 = vmatpush.msra.mxu0 %v5989
        %6019 = vmatpush.msra.mxu0 %v5988
        %6020 = vmatmul.f32.gmra.mxu0 %v4229
        %v6021 = vpop.f32.mrf.mxu0
        %v6022 = vadd.f32 0.0, %v6021
        %6023 = vmatmul.f32.gmra.mxu0 %v4231
        %v6024 = vpop.f32.mrf.mxu0
        %v6025 = vadd.f32 0.0, %v6024
        %6026 = vmatmul.f32.gmra.mxu0 %v4234
        %v6027 = vpop.f32.mrf.mxu0
        %v6028 = vadd.f32 0.0, %v6027
        %6029 = vmatmul.f32.gmra.mxu0 %v4236
        %v6030 = vpop.f32.mrf.mxu0
        %v6031 = vadd.f32 0.0, %v6030
        %6032 = vmatmul.f32.gmra.mxu0 %v4239
        %v6033 = vpop.f32.mrf.mxu0
        %v6034 = vadd.f32 0.0, %v6033
        %6035 = vmatmul.f32.gmra.mxu0 %v4241
        %v6036 = vpop.f32.mrf.mxu0
        %v6037 = vadd.f32 0.0, %v6036
        %6038 = vmatmul.f32.gmra.mxu0 %v4244
        %v6039 = vpop.f32.mrf.mxu0
        %v6040 = vadd.f32 0.0, %v6039
        %6041 = vmatmul.f32.gmra.mxu0 %v4246
        %v6042 = vpop.f32.mrf.mxu0
        %v6043 = vadd.f32 0.0, %v6042
        %6044 = vmatmul.f32.gmra.mxu0 %v4249
        %v6045 = vpop.f32.mrf.mxu0
        %v6046 = vadd.f32 0.0, %v6045
        %6047 = vmatmul.f32.gmra.mxu0 %v4251
        %v6048 = vpop.f32.mrf.mxu0
        %v6049 = vadd.f32 0.0, %v6048
        %6050 = vmatmul.f32.gmra.mxu0 %v4254
        %v6051 = vpop.f32.mrf.mxu0
        %v6052 = vadd.f32 0.0, %v6051
        %6053 = vmatmul.f32.gmra.mxu0 %v4256
        %v6054 = vpop.f32.mrf.mxu0
        %v6055 = vadd.f32 0.0, %v6054
        %6056 = vmatmul.f32.gmra.mxu0 %v4259
        %v6057 = vpop.f32.mrf.mxu0
        %v6058 = vadd.f32 0.0, %v6057
        %6059 = vmatmul.f32.gmra.mxu0 %v4261
        %v6060 = vpop.f32.mrf.mxu0
        %v6061 = vadd.f32 0.0, %v6060
        %6062 = vmatmul.f32.gmra.mxu0 %v4264
        %v6063 = vpop.f32.mrf.mxu0
        %v6064 = vadd.f32 0.0, %v6063
        %6065 = vmatmul.f32.gmra.mxu0 %v4266
        %v6066 = vpop.f32.mrf.mxu0
        %v6067 = vadd.f32 0.0, %v6066
        %6068 = vmatmul.f32.gmra.mxu0 %v4269
        %v6069 = vpop.f32.mrf.mxu0
        %v6070 = vadd.f32 0.0, %v6069
        %6071 = vmatmul.f32.gmra.mxu0 %v4271
        %v6072 = vpop.f32.mrf.mxu0
        %v6073 = vadd.f32 0.0, %v6072
        %6074 = vmatmul.f32.gmra.mxu0 %v4274
        %v6075 = vpop.f32.mrf.mxu0
        %v6076 = vadd.f32 0.0, %v6075
        %6077 = vmatmul.f32.gmra.mxu0 %v4276
        %v6078 = vpop.f32.mrf.mxu0
        %v6079 = vadd.f32 0.0, %v6078
        %6080 = vmatmul.f32.gmra.mxu0 %v4279
        %v6081 = vpop.f32.mrf.mxu0
        %v6082 = vadd.f32 0.0, %v6081
        %6083 = vmatmul.f32.gmra.mxu0 %v4281
        %v6084 = vpop.f32.mrf.mxu0
        %v6085 = vadd.f32 0.0, %v6084
        %6086 = vmatmul.f32.gmra.mxu0 %v4284
        %v6087 = vpop.f32.mrf.mxu0
        %v6088 = vadd.f32 0.0, %v6087
        %6089 = vmatmul.f32.gmra.mxu0 %v4286
        %v6090 = vpop.f32.mrf.mxu0
        %v6091 = vadd.f32 0.0, %v6090
        %6092 = vmatmul.f32.gmra.mxu0 %v4289
        %v6093 = vpop.f32.mrf.mxu0
        %v6094 = vadd.f32 0.0, %v6093
        %6095 = vmatmul.f32.gmra.mxu0 %v4291
        %v6096 = vpop.f32.mrf.mxu0
        %v6097 = vadd.f32 0.0, %v6096
        %6098 = vmatmul.f32.gmra.mxu0 %v4294
        %v6099 = vpop.f32.mrf.mxu0
        %v6100 = vadd.f32 0.0, %v6099
        %6101 = vmatmul.f32.gmra.mxu0 %v4296
        %v6102 = vpop.f32.mrf.mxu0
        %v6103 = vadd.f32 0.0, %v6102
        %6104 = vmatmul.f32.gmra.mxu0 %v4299
        %v6105 = vpop.f32.mrf.mxu0
        %v6106 = vadd.f32 0.0, %v6105
        %6107 = vmatmul.f32.gmra.mxu0 %v4301
        %v6108 = vpop.f32.mrf.mxu0
        %v6109 = vadd.f32 0.0, %v6108
        %6110 = vmatmul.f32.gmra.mxu0 %v4304
        %v6111 = vpop.f32.mrf.mxu0
        %v6112 = vadd.f32 0.0, %v6111
        %6113 = vmatmul.f32.gmra.mxu0 %v4306
        %v6114 = vpop.f32.mrf.mxu0
        %v6115 = vadd.f32 0.0, %v6114
        %6116 = vdwg.mxu0
        %v6117 = vld [vmem:[#allocation3] sm:$0xff]
        %v6118 = vld [vmem:[#allocation3 + $0x8] sm:$0xff]
        %v6119 = vld [vmem:[#allocation3 + $0x10] sm:$0xff]
        %v6120 = vld [vmem:[#allocation3 + $0x18] sm:$0xff]
        %v6121 = vld [vmem:[#allocation3 + $0x20] sm:$0xff]
        %v6122 = vld [vmem:[#allocation3 + $0x28] sm:$0xff]
        %v6123 = vld [vmem:[#allocation3 + $0x30] sm:$0xff]
        %v6124 = vld [vmem:[#allocation3 + $0x38] sm:$0xff]
        %v6125 = vld [vmem:[#allocation3 + $0x40] sm:$0xff]
        %v6126 = vld [vmem:[#allocation3 + $0x48] sm:$0xff]
        %v6127 = vld [vmem:[#allocation3 + $0x50] sm:$0xff]
        %v6128 = vld [vmem:[#allocation3 + $0x58] sm:$0xff]
        %v6129 = vld [vmem:[#allocation3 + $0x60] sm:$0xff]
        %v6130 = vld [vmem:[#allocation3 + $0x68] sm:$0xff]
        %v6131 = vld [vmem:[#allocation3 + $0x70] sm:$0xff]
        %v6132 = vld [vmem:[#allocation3 + $0x78] sm:$0xff]
        %v6133 = vld [vmem:[#allocation3 + $0x80] sm:$0xff]
        %v6134 = vld [vmem:[#allocation3 + $0x88] sm:$0xff]
        %v6135 = vld [vmem:[#allocation3 + $0x90] sm:$0xff]
        %v6136 = vld [vmem:[#allocation3 + $0x98] sm:$0xff]
        %v6137 = vld [vmem:[#allocation3 + $0xa0] sm:$0xff]
        %v6138 = vld [vmem:[#allocation3 + $0xa8] sm:$0xff]
        %v6139 = vld [vmem:[#allocation3 + $0xb0] sm:$0xff]
        %v6140 = vld [vmem:[#allocation3 + $0xb8] sm:$0xff]
        %v6141 = vld [vmem:[#allocation3 + $0xc0] sm:$0xff]
        %v6142 = vld [vmem:[#allocation3 + $0xc8] sm:$0xff]
        %v6143 = vld [vmem:[#allocation3 + $0xd0] sm:$0xff]
        %v6144 = vld [vmem:[#allocation3 + $0xd8] sm:$0xff]
        %v6145 = vld [vmem:[#allocation3 + $0xe0] sm:$0xff]
        %v6146 = vld [vmem:[#allocation3 + $0xe8] sm:$0xff]
        %v6147 = vld [vmem:[#allocation3 + $0xf0] sm:$0xff]
        %v6148 = vld [vmem:[#allocation3 + $0xf8] sm:$0xff]
        %v6149 = vadd.f32 %v6117, %v6022
        %v6150 = vadd.f32 %v6118, %v6025
        %v6151 = vadd.f32 %v6119, %v6028
        %v6152 = vadd.f32 %v6120, %v6031
        %v6153 = vadd.f32 %v6121, %v6034
        %v6154 = vadd.f32 %v6122, %v6037
        %v6155 = vadd.f32 %v6123, %v6040
        %v6156 = vadd.f32 %v6124, %v6043
        %v6157 = vadd.f32 %v6125, %v6046
        %v6158 = vadd.f32 %v6126, %v6049
        %v6159 = vadd.f32 %v6127, %v6052
        %v6160 = vadd.f32 %v6128, %v6055
        %v6161 = vadd.f32 %v6129, %v6058
        %v6162 = vadd.f32 %v6130, %v6061
        %v6163 = vadd.f32 %v6131, %v6064
        %v6164 = vadd.f32 %v6132, %v6067
        %v6165 = vadd.f32 %v6133, %v6070
        %v6166 = vadd.f32 %v6134, %v6073
        %v6167 = vadd.f32 %v6135, %v6076
        %v6168 = vadd.f32 %v6136, %v6079
        %v6169 = vadd.f32 %v6137, %v6082
        %v6170 = vadd.f32 %v6138, %v6085
        %v6171 = vadd.f32 %v6139, %v6088
        %v6172 = vadd.f32 %v6140, %v6091
        %v6173 = vadd.f32 %v6141, %v6094
        %v6174 = vadd.f32 %v6142, %v6097
        %v6175 = vadd.f32 %v6143, %v6100
        %v6176 = vadd.f32 %v6144, %v6103
        %v6177 = vadd.f32 %v6145, %v6106
        %v6178 = vadd.f32 %v6146, %v6109
        %v6179 = vadd.f32 %v6147, %v6112
        %v6180 = vadd.f32 %v6148, %v6115
        %6181 = vst [vmem:[#allocation3] sm:$0xff] %v6149
        %6182 = vst [vmem:[#allocation3 + $0x8] sm:$0xff] %v6150
        %6183 = vst [vmem:[#allocation3 + $0x10] sm:$0xff] %v6151
        %6184 = vst [vmem:[#allocation3 + $0x18] sm:$0xff] %v6152
        %6185 = vst [vmem:[#allocation3 + $0x20] sm:$0xff] %v6153
        %6186 = vst [vmem:[#allocation3 + $0x28] sm:$0xff] %v6154
        %6187 = vst [vmem:[#allocation3 + $0x30] sm:$0xff] %v6155
        %6188 = vst [vmem:[#allocation3 + $0x38] sm:$0xff] %v6156
        %6189 = vst [vmem:[#allocation3 + $0x40] sm:$0xff] %v6157
        %6190 = vst [vmem:[#allocation3 + $0x48] sm:$0xff] %v6158
        %6191 = vst [vmem:[#allocation3 + $0x50] sm:$0xff] %v6159
        %6192 = vst [vmem:[#allocation3 + $0x58] sm:$0xff] %v6160
        %6193 = vst [vmem:[#allocation3 + $0x60] sm:$0xff] %v6161
        %6194 = vst [vmem:[#allocation3 + $0x68] sm:$0xff] %v6162
        %6195 = vst [vmem:[#allocation3 + $0x70] sm:$0xff] %v6163
        %6196 = vst [vmem:[#allocation3 + $0x78] sm:$0xff] %v6164
        %6197 = vst [vmem:[#allocation3 + $0x80] sm:$0xff] %v6165
        %6198 = vst [vmem:[#allocation3 + $0x88] sm:$0xff] %v6166
        %6199 = vst [vmem:[#allocation3 + $0x90] sm:$0xff] %v6167
        %6200 = vst [vmem:[#allocation3 + $0x98] sm:$0xff] %v6168
        %6201 = vst [vmem:[#allocation3 + $0xa0] sm:$0xff] %v6169
        %6202 = vst [vmem:[#allocation3 + $0xa8] sm:$0xff] %v6170
        %6203 = vst [vmem:[#allocation3 + $0xb0] sm:$0xff] %v6171
        %6204 = vst [vmem:[#allocation3 + $0xb8] sm:$0xff] %v6172
        %6205 = vst [vmem:[#allocation3 + $0xc0] sm:$0xff] %v6173
        %6206 = vst [vmem:[#allocation3 + $0xc8] sm:$0xff] %v6174
        %6207 = vst [vmem:[#allocation3 + $0xd0] sm:$0xff] %v6175
        %6208 = vst [vmem:[#allocation3 + $0xd8] sm:$0xff] %v6176
        %6209 = vst [vmem:[#allocation3 + $0xe0] sm:$0xff] %v6177
        %6210 = vst [vmem:[#allocation3 + $0xe8] sm:$0xff] %v6178
        %6211 = vst [vmem:[#allocation3 + $0xf0] sm:$0xff] %v6179
        %6212 = vst [vmem:[#allocation3 + $0xf8] sm:$0xff] %v6180
        %s6213 = scalar_lea.vmem [#allocation4], 1024
        %v6214 = vld [vmem:[%s6213] sm:$0xff]
        %v6215 = vld [vmem:[%s6213 + $0x8] sm:$0xff]
        %v6216 = vld [vmem:[%s6213 + $0x10] sm:$0xff]
        %v6217 = vld [vmem:[%s6213 + $0x18] sm:$0xff]
        %v6218 = vld [vmem:[%s6213 + $0x20] sm:$0xff]
        %v6219 = vld [vmem:[%s6213 + $0x28] sm:$0xff]
        %v6220 = vld [vmem:[%s6213 + $0x30] sm:$0xff]
        %v6221 = vld [vmem:[%s6213 + $0x38] sm:$0xff]
        %v6222 = vld [vmem:[%s6213 + $0x40] sm:$0xff]
        %v6223 = vld [vmem:[%s6213 + $0x48] sm:$0xff]
        %v6224 = vld [vmem:[%s6213 + $0x50] sm:$0xff]
        %v6225 = vld [vmem:[%s6213 + $0x58] sm:$0xff]
        %v6226 = vld [vmem:[%s6213 + $0x60] sm:$0xff]
        %v6227 = vld [vmem:[%s6213 + $0x68] sm:$0xff]
        %v6228 = vld [vmem:[%s6213 + $0x70] sm:$0xff]
        %v6229 = vld [vmem:[%s6213 + $0x78] sm:$0xff]
        %6230 = vmatpush.msra.mxu0 %v6229
        %6231 = vmatpush.msra.mxu0 %v6228
        %6232 = vmatpush.msra.mxu0 %v6227
        %6233 = vmatpush.msra.mxu0 %v6226
        %6234 = vmatpush.msra.mxu0 %v6225
        %6235 = vmatpush.msra.mxu0 %v6224
        %6236 = vmatpush.msra.mxu0 %v6223
        %6237 = vmatpush.msra.mxu0 %v6222
        %6238 = vmatpush.msra.mxu0 %v6221
        %6239 = vmatpush.msra.mxu0 %v6220
        %6240 = vmatpush.msra.mxu0 %v6219
        %6241 = vmatpush.msra.mxu0 %v6218
        %6242 = vmatpush.msra.mxu0 %v6217
        %6243 = vmatpush.msra.mxu0 %v6216
        %6244 = vmatpush.msra.mxu0 %v6215
        %6245 = vmatpush.msra.mxu0 %v6214
        %6246 = vmatmul.f32.gmra.mxu0 %v4355
        %v6247 = vpop.f32.mrf.mxu0
        %v6248 = vadd.f32 0.0, %v6247
        %6249 = vmatmul.f32.gmra.mxu0 %v4357
        %v6250 = vpop.f32.mrf.mxu0
        %v6251 = vadd.f32 0.0, %v6250
        %6252 = vmatmul.f32.gmra.mxu0 %v4360
        %v6253 = vpop.f32.mrf.mxu0
        %v6254 = vadd.f32 0.0, %v6253
        %6255 = vmatmul.f32.gmra.mxu0 %v4362
        %v6256 = vpop.f32.mrf.mxu0
        %v6257 = vadd.f32 0.0, %v6256
        %6258 = vmatmul.f32.gmra.mxu0 %v4365
        %v6259 = vpop.f32.mrf.mxu0
        %v6260 = vadd.f32 0.0, %v6259
        %6261 = vmatmul.f32.gmra.mxu0 %v4367
        %v6262 = vpop.f32.mrf.mxu0
        %v6263 = vadd.f32 0.0, %v6262
        %6264 = vmatmul.f32.gmra.mxu0 %v4370
        %v6265 = vpop.f32.mrf.mxu0
        %v6266 = vadd.f32 0.0, %v6265
        %6267 = vmatmul.f32.gmra.mxu0 %v4372
        %v6268 = vpop.f32.mrf.mxu0
        %v6269 = vadd.f32 0.0, %v6268
        %6270 = vmatmul.f32.gmra.mxu0 %v4375
        %v6271 = vpop.f32.mrf.mxu0
        %v6272 = vadd.f32 0.0, %v6271
        %6273 = vmatmul.f32.gmra.mxu0 %v4377
        %v6274 = vpop.f32.mrf.mxu0
        %v6275 = vadd.f32 0.0, %v6274
        %6276 = vmatmul.f32.gmra.mxu0 %v4380
        %v6277 = vpop.f32.mrf.mxu0
        %v6278 = vadd.f32 0.0, %v6277
        %6279 = vmatmul.f32.gmra.mxu0 %v4382
        %v6280 = vpop.f32.mrf.mxu0
        %v6281 = vadd.f32 0.0, %v6280
        %6282 = vmatmul.f32.gmra.mxu0 %v4385
        %v6283 = vpop.f32.mrf.mxu0
        %v6284 = vadd.f32 0.0, %v6283
        %6285 = vmatmul.f32.gmra.mxu0 %v4387
        %v6286 = vpop.f32.mrf.mxu0
        %v6287 = vadd.f32 0.0, %v6286
        %6288 = vmatmul.f32.gmra.mxu0 %v4390
        %v6289 = vpop.f32.mrf.mxu0
        %v6290 = vadd.f32 0.0, %v6289
        %6291 = vmatmul.f32.gmra.mxu0 %v4392
        %v6292 = vpop.f32.mrf.mxu0
        %v6293 = vadd.f32 0.0, %v6292
        %6294 = vmatmul.f32.gmra.mxu0 %v4395
        %v6295 = vpop.f32.mrf.mxu0
        %v6296 = vadd.f32 0.0, %v6295
        %6297 = vmatmul.f32.gmra.mxu0 %v4397
        %v6298 = vpop.f32.mrf.mxu0
        %v6299 = vadd.f32 0.0, %v6298
        %6300 = vmatmul.f32.gmra.mxu0 %v4400
        %v6301 = vpop.f32.mrf.mxu0
        %v6302 = vadd.f32 0.0, %v6301
        %6303 = vmatmul.f32.gmra.mxu0 %v4402
        %v6304 = vpop.f32.mrf.mxu0
        %v6305 = vadd.f32 0.0, %v6304
        %6306 = vmatmul.f32.gmra.mxu0 %v4405
        %v6307 = vpop.f32.mrf.mxu0
        %v6308 = vadd.f32 0.0, %v6307
        %6309 = vmatmul.f32.gmra.mxu0 %v4407
        %v6310 = vpop.f32.mrf.mxu0
        %v6311 = vadd.f32 0.0, %v6310
        %6312 = vmatmul.f32.gmra.mxu0 %v4410
        %v6313 = vpop.f32.mrf.mxu0
        %v6314 = vadd.f32 0.0, %v6313
        %6315 = vmatmul.f32.gmra.mxu0 %v4412
        %v6316 = vpop.f32.mrf.mxu0
        %v6317 = vadd.f32 0.0, %v6316
        %6318 = vmatmul.f32.gmra.mxu0 %v4415
        %v6319 = vpop.f32.mrf.mxu0
        %v6320 = vadd.f32 0.0, %v6319
        %6321 = vmatmul.f32.gmra.mxu0 %v4417
        %v6322 = vpop.f32.mrf.mxu0
        %v6323 = vadd.f32 0.0, %v6322
        %6324 = vmatmul.f32.gmra.mxu0 %v4420
        %v6325 = vpop.f32.mrf.mxu0
        %v6326 = vadd.f32 0.0, %v6325
        %6327 = vmatmul.f32.gmra.mxu0 %v4422
        %v6328 = vpop.f32.mrf.mxu0
        %v6329 = vadd.f32 0.0, %v6328
        %6330 = vmatmul.f32.gmra.mxu0 %v4425
        %v6331 = vpop.f32.mrf.mxu0
        %v6332 = vadd.f32 0.0, %v6331
        %6333 = vmatmul.f32.gmra.mxu0 %v4427
        %v6334 = vpop.f32.mrf.mxu0
        %v6335 = vadd.f32 0.0, %v6334
        %6336 = vmatmul.f32.gmra.mxu0 %v4430
        %v6337 = vpop.f32.mrf.mxu0
        %v6338 = vadd.f32 0.0, %v6337
        %6339 = vmatmul.f32.gmra.mxu0 %v4432
        %v6340 = vpop.f32.mrf.mxu0
        %v6341 = vadd.f32 0.0, %v6340
        %6342 = vdwg.mxu0
        %v6343 = vld [vmem:[#allocation3] sm:$0xff]
        %v6344 = vld [vmem:[#allocation3 + $0x8] sm:$0xff]
        %v6345 = vld [vmem:[#allocation3 + $0x10] sm:$0xff]
        %v6346 = vld [vmem:[#allocation3 + $0x18] sm:$0xff]
        %v6347 = vld [vmem:[#allocation3 + $0x20] sm:$0xff]
        %v6348 = vld [vmem:[#allocation3 + $0x28] sm:$0xff]
        %v6349 = vld [vmem:[#allocation3 + $0x30] sm:$0xff]
        %v6350 = vld [vmem:[#allocation3 + $0x38] sm:$0xff]
        %v6351 = vld [vmem:[#allocation3 + $0x40] sm:$0xff]
        %v6352 = vld [vmem:[#allocation3 + $0x48] sm:$0xff]
        %v6353 = vld [vmem:[#allocation3 + $0x50] sm:$0xff]
        %v6354 = vld [vmem:[#allocation3 + $0x58] sm:$0xff]
        %v6355 = vld [vmem:[#allocation3 + $0x60] sm:$0xff]
        %v6356 = vld [vmem:[#allocation3 + $0x68] sm:$0xff]
        %v6357 = vld [vmem:[#allocation3 + $0x70] sm:$0xff]
        %v6358 = vld [vmem:[#allocation3 + $0x78] sm:$0xff]
        %v6359 = vld [vmem:[#allocation3 + $0x80] sm:$0xff]
        %v6360 = vld [vmem:[#allocation3 + $0x88] sm:$0xff]
        %v6361 = vld [vmem:[#allocation3 + $0x90] sm:$0xff]
        %v6362 = vld [vmem:[#allocation3 + $0x98] sm:$0xff]
        %v6363 = vld [vmem:[#allocation3 + $0xa0] sm:$0xff]
        %v6364 = vld [vmem:[#allocation3 + $0xa8] sm:$0xff]
        %v6365 = vld [vmem:[#allocation3 + $0xb0] sm:$0xff]
        %v6366 = vld [vmem:[#allocation3 + $0xb8] sm:$0xff]
        %v6367 = vld [vmem:[#allocation3 + $0xc0] sm:$0xff]
        %v6368 = vld [vmem:[#allocation3 + $0xc8] sm:$0xff]
        %v6369 = vld [vmem:[#allocation3 + $0xd0] sm:$0xff]
        %v6370 = vld [vmem:[#allocation3 + $0xd8] sm:$0xff]
        %v6371 = vld [vmem:[#allocation3 + $0xe0] sm:$0xff]
        %v6372 = vld [vmem:[#allocation3 + $0xe8] sm:$0xff]
        %v6373 = vld [vmem:[#allocation3 + $0xf0] sm:$0xff]
        %v6374 = vld [vmem:[#allocation3 + $0xf8] sm:$0xff]
        %v6375 = vadd.f32 %v6343, %v6248
        %v6376 = vadd.f32 %v6344, %v6251
        %v6377 = vadd.f32 %v6345, %v6254
        %v6378 = vadd.f32 %v6346, %v6257
        %v6379 = vadd.f32 %v6347, %v6260
        %v6380 = vadd.f32 %v6348, %v6263
        %v6381 = vadd.f32 %v6349, %v6266
        %v6382 = vadd.f32 %v6350, %v6269
        %v6383 = vadd.f32 %v6351, %v6272
        %v6384 = vadd.f32 %v6352, %v6275
        %v6385 = vadd.f32 %v6353, %v6278
        %v6386 = vadd.f32 %v6354, %v6281
        %v6387 = vadd.f32 %v6355, %v6284
        %v6388 = vadd.f32 %v6356, %v6287
        %v6389 = vadd.f32 %v6357, %v6290
        %v6390 = vadd.f32 %v6358, %v6293
        %v6391 = vadd.f32 %v6359, %v6296
        %v6392 = vadd.f32 %v6360, %v6299
        %v6393 = vadd.f32 %v6361, %v6302
        %v6394 = vadd.f32 %v6362, %v6305
        %v6395 = vadd.f32 %v6363, %v6308
        %v6396 = vadd.f32 %v6364, %v6311
        %v6397 = vadd.f32 %v6365, %v6314
        %v6398 = vadd.f32 %v6366, %v6317
        %v6399 = vadd.f32 %v6367, %v6320
        %v6400 = vadd.f32 %v6368, %v6323
        %v6401 = vadd.f32 %v6369, %v6326
        %v6402 = vadd.f32 %v6370, %v6329
        %v6403 = vadd.f32 %v6371, %v6332
        %v6404 = vadd.f32 %v6372, %v6335
        %v6405 = vadd.f32 %v6373, %v6338
        %v6406 = vadd.f32 %v6374, %v6341
        %6407 = vst [vmem:[#allocation3] sm:$0xff] %v6375
        %6408 = vst [vmem:[#allocation3 + $0x8] sm:$0xff] %v6376
        %6409 = vst [vmem:[#allocation3 + $0x10] sm:$0xff] %v6377
        %6410 = vst [vmem:[#allocation3 + $0x18] sm:$0xff] %v6378
        %6411 = vst [vmem:[#allocation3 + $0x20] sm:$0xff] %v6379
        %6412 = vst [vmem:[#allocation3 + $0x28] sm:$0xff] %v6380
        %6413 = vst [vmem:[#allocation3 + $0x30] sm:$0xff] %v6381
        %6414 = vst [vmem:[#allocation3 + $0x38] sm:$0xff] %v6382
        %6415 = vst [vmem:[#allocation3 + $0x40] sm:$0xff] %v6383
        %6416 = vst [vmem:[#allocation3 + $0x48] sm:$0xff] %v6384
        %6417 = vst [vmem:[#allocation3 + $0x50] sm:$0xff] %v6385
        %6418 = vst [vmem:[#allocation3 + $0x58] sm:$0xff] %v6386
        %6419 = vst [vmem:[#allocation3 + $0x60] sm:$0xff] %v6387
        %6420 = vst [vmem:[#allocation3 + $0x68] sm:$0xff] %v6388
        %6421 = vst [vmem:[#allocation3 + $0x70] sm:$0xff] %v6389
        %6422 = vst [vmem:[#allocation3 + $0x78] sm:$0xff] %v6390
        %6423 = vst [vmem:[#allocation3 + $0x80] sm:$0xff] %v6391
        %6424 = vst [vmem:[#allocation3 + $0x88] sm:$0xff] %v6392
        %6425 = vst [vmem:[#allocation3 + $0x90] sm:$0xff] %v6393
        %6426 = vst [vmem:[#allocation3 + $0x98] sm:$0xff] %v6394
        %6427 = vst [vmem:[#allocation3 + $0xa0] sm:$0xff] %v6395
        %6428 = vst [vmem:[#allocation3 + $0xa8] sm:$0xff] %v6396
        %6429 = vst [vmem:[#allocation3 + $0xb0] sm:$0xff] %v6397
        %6430 = vst [vmem:[#allocation3 + $0xb8] sm:$0xff] %v6398
        %6431 = vst [vmem:[#allocation3 + $0xc0] sm:$0xff] %v6399
        %6432 = vst [vmem:[#allocation3 + $0xc8] sm:$0xff] %v6400
        %6433 = vst [vmem:[#allocation3 + $0xd0] sm:$0xff] %v6401
        %6434 = vst [vmem:[#allocation3 + $0xd8] sm:$0xff] %v6402
        %6435 = vst [vmem:[#allocation3 + $0xe0] sm:$0xff] %v6403
        %6436 = vst [vmem:[#allocation3 + $0xe8] sm:$0xff] %v6404
        %6437 = vst [vmem:[#allocation3 + $0xf0] sm:$0xff] %v6405
        %6438 = vst [vmem:[#allocation3 + $0xf8] sm:$0xff] %v6406
        %v6439 = vld [vmem:[#allocation3] sm:$0xff]
        %v6440 = vld [vmem:[#allocation3 + $0x8] sm:$0xff]
        %v6441 = vld [vmem:[#allocation3 + $0x10] sm:$0xff]
        %v6442 = vld [vmem:[#allocation3 + $0x18] sm:$0xff]
        %v6443 = vld [vmem:[#allocation3 + $0x20] sm:$0xff]
        %v6444 = vld [vmem:[#allocation3 + $0x28] sm:$0xff]
        %v6445 = vld [vmem:[#allocation3 + $0x30] sm:$0xff]
        %v6446 = vld [vmem:[#allocation3 + $0x38] sm:$0xff]
        %v6447 = vld [vmem:[#allocation3 + $0x40] sm:$0xff]
        %v6448 = vld [vmem:[#allocation3 + $0x48] sm:$0xff]
        %v6449 = vld [vmem:[#allocation3 + $0x50] sm:$0xff]
        %v6450 = vld [vmem:[#allocation3 + $0x58] sm:$0xff]
        %v6451 = vld [vmem:[#allocation3 + $0x60] sm:$0xff]
        %v6452 = vld [vmem:[#allocation3 + $0x68] sm:$0xff]
        %v6453 = vld [vmem:[#allocation3 + $0x70] sm:$0xff]
        %v6454 = vld [vmem:[#allocation3 + $0x78] sm:$0xff]
        %v6455 = vld [vmem:[#allocation3 + $0x80] sm:$0xff]
        %v6456 = vld [vmem:[#allocation3 + $0x88] sm:$0xff]
        %v6457 = vld [vmem:[#allocation3 + $0x90] sm:$0xff]
        %v6458 = vld [vmem:[#allocation3 + $0x98] sm:$0xff]
        %v6459 = vld [vmem:[#allocation3 + $0xa0] sm:$0xff]
        %v6460 = vld [vmem:[#allocation3 + $0xa8] sm:$0xff]
        %v6461 = vld [vmem:[#allocation3 + $0xb0] sm:$0xff]
        %v6462 = vld [vmem:[#allocation3 + $0xb8] sm:$0xff]
        %v6463 = vld [vmem:[#allocation3 + $0xc0] sm:$0xff]
        %v6464 = vld [vmem:[#allocation3 + $0xc8] sm:$0xff]
        %v6465 = vld [vmem:[#allocation3 + $0xd0] sm:$0xff]
        %v6466 = vld [vmem:[#allocation3 + $0xd8] sm:$0xff]
        %v6467 = vld [vmem:[#allocation3 + $0xe0] sm:$0xff]
        %v6468 = vld [vmem:[#allocation3 + $0xe8] sm:$0xff]
        %v6469 = vld [vmem:[#allocation3 + $0xf0] sm:$0xff]
        %v6470 = vld [vmem:[#allocation3 + $0xf8] sm:$0xff]
        %v6472 = vperm.slane %v4469, 0
        %v6474 = vadd.f32 %v6439, %v6472
        %v6475 = vadd.f32 %v6440, %v6472
        %v6476 = vadd.f32 %v6441, %v6472
        %v6477 = vadd.f32 %v6442, %v6472
        %v6478 = vadd.f32 %v6443, %v6472
        %v6479 = vadd.f32 %v6444, %v6472
        %v6480 = vadd.f32 %v6445, %v6472
        %v6481 = vadd.f32 %v6446, %v6472
        %v6482 = vadd.f32 %v6447, %v6472
        %v6483 = vadd.f32 %v6448, %v6472
        %v6484 = vadd.f32 %v6449, %v6472
        %v6485 = vadd.f32 %v6450, %v6472
        %v6486 = vadd.f32 %v6451, %v6472
        %v6487 = vadd.f32 %v6452, %v6472
        %v6488 = vadd.f32 %v6453, %v6472
        %v6489 = vadd.f32 %v6454, %v6472
        %v6490 = vadd.f32 %v6455, %v6472
        %v6491 = vadd.f32 %v6456, %v6472
        %v6492 = vadd.f32 %v6457, %v6472
        %v6493 = vadd.f32 %v6458, %v6472
        %v6494 = vadd.f32 %v6459, %v6472
        %v6495 = vadd.f32 %v6460, %v6472
        %v6496 = vadd.f32 %v6461, %v6472
        %v6497 = vadd.f32 %v6462, %v6472
        %v6498 = vadd.f32 %v6463, %v6472
        %v6499 = vadd.f32 %v6464, %v6472
        %v6500 = vadd.f32 %v6465, %v6472
        %v6501 = vadd.f32 %v6466, %v6472
        %v6502 = vadd.f32 %v6467, %v6472
        %v6503 = vadd.f32 %v6468, %v6472
        %v6504 = vadd.f32 %v6469, %v6472
        %v6505 = vadd.f32 %v6470, %v6472
        %v6506 = vld [vmem:[%s9] sm:$0x1]
        %v6507 = vld [vmem:[%s10] sm:$0x1]
        %v6508 = vadd.f32 %v6474, %v6475
        %v6509 = vadd.f32 %v6508, %v6476
        %v6510 = vadd.f32 %v6509, %v6477
        %v6511 = vadd.f32 %v6510, %v6478
        %v6512 = vadd.f32 %v6511, %v6479
        %v6513 = vadd.f32 %v6512, %v6480
        %v6514 = vadd.f32 %v6513, %v6481
        %v6515 = vadd.f32 %v6514, %v6482
        %v6516 = vadd.f32 %v6515, %v6483
        %v6517 = vadd.f32 %v6516, %v6484
        %v6518 = vadd.f32 %v6517, %v6485
        %v6519 = vadd.f32 %v6518, %v6486
        %v6520 = vadd.f32 %v6519, %v6487
        %v6521 = vadd.f32 %v6520, %v6488
        %v6522 = vadd.f32 %v6521, %v6489
        %v6523 = vadd.f32 %v6522, %v6490
        %v6524 = vadd.f32 %v6523, %v6491
        %v6525 = vadd.f32 %v6524, %v6492
        %v6526 = vadd.f32 %v6525, %v6493
        %v6527 = vadd.f32 %v6526, %v6494
        %v6528 = vadd.f32 %v6527, %v6495
        %v6529 = vadd.f32 %v6528, %v6496
        %v6530 = vadd.f32 %v6529, %v6497
        %v6531 = vadd.f32 %v6530, %v6498
        %v6532 = vadd.f32 %v6531, %v6499
        %v6533 = vadd.f32 %v6532, %v6500
        %v6534 = vadd.f32 %v6533, %v6501
        %v6535 = vadd.f32 %v6534, %v6502
        %v6536 = vadd.f32 %v6535, %v6503
        %v6537 = vadd.f32 %v6536, %v6504
        %v6538 = vadd.f32 %v6537, %v6505
        %v6539 = vrot.slane %v6538, 4
        %v6540 = vadd.f32 %v6538, %v6539
        %v6541 = vrot.slane %v6540, 2
        %v6542 = vadd.f32 %v6540, %v6541
        %v6543 = vrot.slane %v6542, 1
        %v6544 = vadd.f32 %v6542, %v6543
        %v6545 = vmul.f32 %v6544, 0.00390625
        %6546 = vmatpush.msra.mxu0 %v570
        %6547 = vmatpush.msra.mxu0 %v569
        %6548 = vmatpush.msra.mxu0 %v568
        %6549 = vmatpush.msra.mxu0 %v567
        %6550 = vmatpush.msra.mxu0 %v566
        %6551 = vmatpush.msra.mxu0 %v565
        %6552 = vmatpush.msra.mxu0 %v564
        %6553 = vmatpush.msra.mxu0 %v563
        %6554 = vmatpush.msra.mxu0 %v562
        %6555 = vmatpush.msra.mxu0 %v561
        %6556 = vmatpush.msra.mxu0 %v560
        %6557 = vmatpush.msra.mxu0 %v559
        %6558 = vmatpush.msra.mxu0 %v558
        %6559 = vmatpush.msra.mxu0 %v557
        %6560 = vmatpush.msra.mxu0 %v556
        %6561 = vmatpush.msra.mxu0 %v555
        %6562 = vmatmul.f32.gmra.mxu0 %v6545
        %v6563 = vpop.f32.mrf.mxu0
        %v6564 = vadd.f32 0.0, %v6563
        %6565 = vdwg.mxu0
        %6566 = vmatpush.msra.mxu0 %v586
        %6567 = vmatpush.msra.mxu0 %v585
        %6568 = vmatpush.msra.mxu0 %v584
        %6569 = vmatpush.msra.mxu0 %v583
        %6570 = vmatpush.msra.mxu0 %v582
        %6571 = vmatpush.msra.mxu0 %v581
        %6572 = vmatpush.msra.mxu0 %v580
        %6573 = vmatpush.msra.mxu0 %v579
        %6574 = vmatpush.msra.mxu0 %v578
        %6575 = vmatpush.msra.mxu0 %v577
        %6576 = vmatpush.msra.mxu0 %v576
        %6577 = vmatpush.msra.mxu0 %v575
        %6578 = vmatpush.msra.mxu0 %v574
        %6579 = vmatpush.msra.mxu0 %v573
        %6580 = vmatpush.msra.mxu0 %v572
        %6581 = vmatpush.msra.mxu0 %v571
        %6582 = vmatmul.f32.gmra.mxu0 %v6564
        %v6583 = vpop.f32.mrf.mxu0
        %v6584 = vadd.f32 0.0, %v6583
        %6585 = vdwg.mxu0
        %v6586 = vperm.slane %v6584, 0
        %v6587 = vsub.f32 %v6474, %v6586
        %v6588 = vsub.f32 %v6475, %v6586
        %v6589 = vsub.f32 %v6476, %v6586
        %v6590 = vsub.f32 %v6477, %v6586
        %v6591 = vsub.f32 %v6478, %v6586
        %v6592 = vsub.f32 %v6479, %v6586
        %v6593 = vsub.f32 %v6480, %v6586
        %v6594 = vsub.f32 %v6481, %v6586
        %v6595 = vsub.f32 %v6482, %v6586
        %v6596 = vsub.f32 %v6483, %v6586
        %v6597 = vsub.f32 %v6484, %v6586
        %v6598 = vsub.f32 %v6485, %v6586
        %v6599 = vsub.f32 %v6486, %v6586
        %v6600 = vsub.f32 %v6487, %v6586
        %v6601 = vsub.f32 %v6488, %v6586
        %v6602 = vsub.f32 %v6489, %v6586
        %v6603 = vsub.f32 %v6490, %v6586
        %v6604 = vsub.f32 %v6491, %v6586
        %v6605 = vsub.f32 %v6492, %v6586
        %v6606 = vsub.f32 %v6493, %v6586
        %v6607 = vsub.f32 %v6494, %v6586
        %v6608 = vsub.f32 %v6495, %v6586
        %v6609 = vsub.f32 %v6496, %v6586
        %v6610 = vsub.f32 %v6497, %v6586
        %v6611 = vsub.f32 %v6498, %v6586
        %v6612 = vsub.f32 %v6499, %v6586
        %v6613 = vsub.f32 %v6500, %v6586
        %v6614 = vsub.f32 %v6501, %v6586
        %v6615 = vsub.f32 %v6502, %v6586
        %v6616 = vsub.f32 %v6503, %v6586
        %v6617 = vsub.f32 %v6504, %v6586
        %v6618 = vsub.f32 %v6505, %v6586
        %v6619 = vmul.f32 %v6587, %v6587
        %v6620 = vmul.f32 %v6588, %v6588
        %v6621 = vmul.f32 %v6589, %v6589
        %v6622 = vmul.f32 %v6590, %v6590
        %v6623 = vmul.f32 %v6591, %v6591
        %v6624 = vmul.f32 %v6592, %v6592
        %v6625 = vmul.f32 %v6593, %v6593
        %v6626 = vmul.f32 %v6594, %v6594
        %v6627 = vmul.f32 %v6595, %v6595
        %v6628 = vmul.f32 %v6596, %v6596
        %v6629 = vmul.f32 %v6597, %v6597
        %v6630 = vmul.f32 %v6598, %v6598
        %v6631 = vmul.f32 %v6599, %v6599
        %v6632 = vmul.f32 %v6600, %v6600
        %v6633 = vmul.f32 %v6601, %v6601
        %v6634 = vmul.f32 %v6602, %v6602
        %v6635 = vmul.f32 %v6603, %v6603
        %v6636 = vmul.f32 %v6604, %v6604
        %v6637 = vmul.f32 %v6605, %v6605
        %v6638 = vmul.f32 %v6606, %v6606
        %v6639 = vmul.f32 %v6607, %v6607
        %v6640 = vmul.f32 %v6608, %v6608
        %v6641 = vmul.f32 %v6609, %v6609
        %v6642 = vmul.f32 %v6610, %v6610
        %v6643 = vmul.f32 %v6611, %v6611
        %v6644 = vmul.f32 %v6612, %v6612
        %v6645 = vmul.f32 %v6613, %v6613
        %v6646 = vmul.f32 %v6614, %v6614
        %v6647 = vmul.f32 %v6615, %v6615
        %v6648 = vmul.f32 %v6616, %v6616
        %v6649 = vmul.f32 %v6617, %v6617
        %v6650 = vmul.f32 %v6618, %v6618
        %v6651 = vadd.f32 %v6619, %v6620
        %v6652 = vadd.f32 %v6651, %v6621
        %v6653 = vadd.f32 %v6652, %v6622
        %v6654 = vadd.f32 %v6653, %v6623
        %v6655 = vadd.f32 %v6654, %v6624
        %v6656 = vadd.f32 %v6655, %v6625
        %v6657 = vadd.f32 %v6656, %v6626
        %v6658 = vadd.f32 %v6657, %v6627
        %v6659 = vadd.f32 %v6658, %v6628
        %v6660 = vadd.f32 %v6659, %v6629
        %v6661 = vadd.f32 %v6660, %v6630
        %v6662 = vadd.f32 %v6661, %v6631
        %v6663 = vadd.f32 %v6662, %v6632
        %v6664 = vadd.f32 %v6663, %v6633
        %v6665 = vadd.f32 %v6664, %v6634
        %v6666 = vadd.f32 %v6665, %v6635
        %v6667 = vadd.f32 %v6666, %v6636
        %v6668 = vadd.f32 %v6667, %v6637
        %v6669 = vadd.f32 %v6668, %v6638
        %v6670 = vadd.f32 %v6669, %v6639
        %v6671 = vadd.f32 %v6670, %v6640
        %v6672 = vadd.f32 %v6671, %v6641
        %v6673 = vadd.f32 %v6672, %v6642
        %v6674 = vadd.f32 %v6673, %v6643
        %v6675 = vadd.f32 %v6674, %v6644
        %v6676 = vadd.f32 %v6675, %v6645
        %v6677 = vadd.f32 %v6676, %v6646
        %v6678 = vadd.f32 %v6677, %v6647
        %v6679 = vadd.f32 %v6678, %v6648
        %v6680 = vadd.f32 %v6679, %v6649
        %v6681 = vadd.f32 %v6680, %v6650
        %v6682 = vrot.slane %v6681, 4
        %v6683 = vadd.f32 %v6681, %v6682
        %v6684 = vrot.slane %v6683, 2
        %v6685 = vadd.f32 %v6683, %v6684
        %v6686 = vrot.slane %v6685, 1
        %v6687 = vadd.f32 %v6685, %v6686
        %v6688 = vmul.f32 %v6687, 0.00390625
        %6689 = vmatpush.msra.mxu0 %v570
        %6690 = vmatpush.msra.mxu0 %v569
        %6691 = vmatpush.msra.mxu0 %v568
        %6692 = vmatpush.msra.mxu0 %v567
        %6693 = vmatpush.msra.mxu0 %v566
        %6694 = vmatpush.msra.mxu0 %v565
        %6695 = vmatpush.msra.mxu0 %v564
        %6696 = vmatpush.msra.mxu0 %v563
        %6697 = vmatpush.msra.mxu0 %v562
        %6698 = vmatpush.msra.mxu0 %v561
        %6699 = vmatpush.msra.mxu0 %v560
        %6700 = vmatpush.msra.mxu0 %v559
        %6701 = vmatpush.msra.mxu0 %v558
        %6702 = vmatpush.msra.mxu0 %v557
        %6703 = vmatpush.msra.mxu0 %v556
        %6704 = vmatpush.msra.mxu0 %v555
        %6705 = vmatmul.f32.gmra.mxu0 %v6688
        %v6706 = vpop.f32.mrf.mxu0
        %v6707 = vadd.f32 0.0, %v6706
        %6708 = vdwg.mxu0
        %6709 = vmatpush.msra.mxu0 %v586
        %6710 = vmatpush.msra.mxu0 %v585
        %6711 = vmatpush.msra.mxu0 %v584
        %6712 = vmatpush.msra.mxu0 %v583
        %6713 = vmatpush.msra.mxu0 %v582
        %6714 = vmatpush.msra.mxu0 %v581
        %6715 = vmatpush.msra.mxu0 %v580
        %6716 = vmatpush.msra.mxu0 %v579
        %6717 = vmatpush.msra.mxu0 %v578
        %6718 = vmatpush.msra.mxu0 %v577
        %6719 = vmatpush.msra.mxu0 %v576
        %6720 = vmatpush.msra.mxu0 %v575
        %6721 = vmatpush.msra.mxu0 %v574
        %6722 = vmatpush.msra.mxu0 %v573
        %6723 = vmatpush.msra.mxu0 %v572
        %6724 = vmatpush.msra.mxu0 %v571
        %6725 = vmatmul.f32.gmra.mxu0 %v6707
        %v6726 = vpop.f32.mrf.mxu0
        %v6727 = vadd.f32 0.0, %v6726
        %6728 = vdwg.mxu0
        %v6729 = vmax.f32 %v6727, 0.0
        %v6730 = vadd.f32 %v6729, 1e-05
        %v6731 = vrsqrt.pop %v6730
        %v6732 = vmul.f32 %v6731, %v6730
        %v6733 = vmul.f32 %v6732, %v6731
        %v6734 = vmul.f32 0.5, %v6733
        %v6735 = vsub.f32 1.5, %v6734
        %v6736 = vmul.f32 %v6731, %v6735
        %vm6737 = vweird.f32 %v6730
        %vm6738 = vweird.f32 %v6731
        %vm6739 = vmor %vm6737, %vm6738
        %v6740 = vsel %vm6739, %v6731, %v6736
        %v6741 = vperm.slane %v6740, 0
        %v6742 = vmul.f32 %v6587, %v6741
        %v6743 = vmul.f32 %v6588, %v6741
        %v6744 = vmul.f32 %v6589, %v6741
        %v6745 = vmul.f32 %v6590, %v6741
        %v6746 = vmul.f32 %v6591, %v6741
        %v6747 = vmul.f32 %v6592, %v6741
        %v6748 = vmul.f32 %v6593, %v6741
        %v6749 = vmul.f32 %v6594, %v6741
        %v6750 = vmul.f32 %v6595, %v6741
        %v6751 = vmul.f32 %v6596, %v6741
        %v6752 = vmul.f32 %v6597, %v6741
        %v6753 = vmul.f32 %v6598, %v6741
        %v6754 = vmul.f32 %v6599, %v6741
        %v6755 = vmul.f32 %v6600, %v6741
        %v6756 = vmul.f32 %v6601, %v6741
        %v6757 = vmul.f32 %v6602, %v6741
        %v6758 = vmul.f32 %v6603, %v6741
        %v6759 = vmul.f32 %v6604, %v6741
        %v6760 = vmul.f32 %v6605, %v6741
        %v6761 = vmul.f32 %v6606, %v6741
        %v6762 = vmul.f32 %v6607, %v6741
        %v6763 = vmul.f32 %v6608, %v6741
        %v6764 = vmul.f32 %v6609, %v6741
        %v6765 = vmul.f32 %v6610, %v6741
        %v6766 = vmul.f32 %v6611, %v6741
        %v6767 = vmul.f32 %v6612, %v6741
        %v6768 = vmul.f32 %v6613, %v6741
        %v6769 = vmul.f32 %v6614, %v6741
        %v6770 = vmul.f32 %v6615, %v6741
        %v6771 = vmul.f32 %v6616, %v6741
        %v6772 = vmul.f32 %v6617, %v6741
        %v6773 = vmul.f32 %v6618, %v6741
        %v6775 = vperm.slane %v6506, 0
        %v6777 = vmul.f32 %v6742, %v6775
        %v6778 = vmul.f32 %v6743, %v6775
        %v6779 = vmul.f32 %v6744, %v6775
        %v6780 = vmul.f32 %v6745, %v6775
        %v6781 = vmul.f32 %v6746, %v6775
        %v6782 = vmul.f32 %v6747, %v6775
        %v6783 = vmul.f32 %v6748, %v6775
        %v6784 = vmul.f32 %v6749, %v6775
        %v6785 = vmul.f32 %v6750, %v6775
        %v6786 = vmul.f32 %v6751, %v6775
        %v6787 = vmul.f32 %v6752, %v6775
        %v6788 = vmul.f32 %v6753, %v6775
        %v6789 = vmul.f32 %v6754, %v6775
        %v6790 = vmul.f32 %v6755, %v6775
        %v6791 = vmul.f32 %v6756, %v6775
        %v6792 = vmul.f32 %v6757, %v6775
        %v6793 = vmul.f32 %v6758, %v6775
        %v6794 = vmul.f32 %v6759, %v6775
        %v6795 = vmul.f32 %v6760, %v6775
        %v6796 = vmul.f32 %v6761, %v6775
        %v6797 = vmul.f32 %v6762, %v6775
        %v6798 = vmul.f32 %v6763, %v6775
        %v6799 = vmul.f32 %v6764, %v6775
        %v6800 = vmul.f32 %v6765, %v6775
        %v6801 = vmul.f32 %v6766, %v6775
        %v6802 = vmul.f32 %v6767, %v6775
        %v6803 = vmul.f32 %v6768, %v6775
        %v6804 = vmul.f32 %v6769, %v6775
        %v6805 = vmul.f32 %v6770, %v6775
        %v6806 = vmul.f32 %v6771, %v6775
        %v6807 = vmul.f32 %v6772, %v6775
        %v6808 = vmul.f32 %v6773, %v6775
        %v6810 = vperm.slane %v6507, 0
        %v6812 = vadd.f32 %v6777, %v6810
        %v6813 = vadd.f32 %v6778, %v6810
        %v6814 = vadd.f32 %v6779, %v6810
        %v6815 = vadd.f32 %v6780, %v6810
        %v6816 = vadd.f32 %v6781, %v6810
        %v6817 = vadd.f32 %v6782, %v6810
        %v6818 = vadd.f32 %v6783, %v6810
        %v6819 = vadd.f32 %v6784, %v6810
        %v6820 = vadd.f32 %v6785, %v6810
        %v6821 = vadd.f32 %v6786, %v6810
        %v6822 = vadd.f32 %v6787, %v6810
        %v6823 = vadd.f32 %v6788, %v6810
        %v6824 = vadd.f32 %v6789, %v6810
        %v6825 = vadd.f32 %v6790, %v6810
        %v6826 = vadd.f32 %v6791, %v6810
        %v6827 = vadd.f32 %v6792, %v6810
        %v6828 = vadd.f32 %v6793, %v6810
        %v6829 = vadd.f32 %v6794, %v6810
        %v6830 = vadd.f32 %v6795, %v6810
        %v6831 = vadd.f32 %v6796, %v6810
        %v6832 = vadd.f32 %v6797, %v6810
        %v6833 = vadd.f32 %v6798, %v6810
        %v6834 = vadd.f32 %v6799, %v6810
        %v6835 = vadd.f32 %v6800, %v6810
        %v6836 = vadd.f32 %v6801, %v6810
        %v6837 = vadd.f32 %v6802, %v6810
        %v6838 = vadd.f32 %v6803, %v6810
        %v6839 = vadd.f32 %v6804, %v6810
        %v6840 = vadd.f32 %v6805, %v6810
        %v6841 = vadd.f32 %v6806, %v6810
        %v6842 = vadd.f32 %v6807, %v6810
        %v6843 = vadd.f32 %v6808, %v6810
        %v6844 = vxor.u32 %v6812, 2147483648
        %v6845 = vxor.u32 %v6813, 2147483648
        %v6846 = vxor.u32 %v6814, 2147483648
        %v6847 = vxor.u32 %v6815, 2147483648
        %v6848 = vxor.u32 %v6816, 2147483648
        %v6849 = vxor.u32 %v6817, 2147483648
        %v6850 = vxor.u32 %v6818, 2147483648
        %v6851 = vxor.u32 %v6819, 2147483648
        %v6852 = vxor.u32 %v6820, 2147483648
        %v6853 = vxor.u32 %v6821, 2147483648
        %v6854 = vxor.u32 %v6822, 2147483648
        %v6855 = vxor.u32 %v6823, 2147483648
        %v6856 = vxor.u32 %v6824, 2147483648
        %v6857 = vxor.u32 %v6825, 2147483648
        %v6858 = vxor.u32 %v6826, 2147483648
        %v6859 = vxor.u32 %v6827, 2147483648
        %v6860 = vxor.u32 %v6828, 2147483648
        %v6861 = vxor.u32 %v6829, 2147483648
        %v6862 = vxor.u32 %v6830, 2147483648
        %v6863 = vxor.u32 %v6831, 2147483648
        %v6864 = vxor.u32 %v6832, 2147483648
        %v6865 = vxor.u32 %v6833, 2147483648
        %v6866 = vxor.u32 %v6834, 2147483648
        %v6867 = vxor.u32 %v6835, 2147483648
        %v6868 = vxor.u32 %v6836, 2147483648
        %v6869 = vxor.u32 %v6837, 2147483648
        %v6870 = vxor.u32 %v6838, 2147483648
        %v6871 = vxor.u32 %v6839, 2147483648
        %v6872 = vxor.u32 %v6840, 2147483648
        %v6873 = vxor.u32 %v6841, 2147483648
        %v6874 = vxor.u32 %v6842, 2147483648
        %v6875 = vxor.u32 %v6843, 2147483648
        %v6876 = vmul.f32 %v6844, 1.442695
        %v6877 = vpow.pop %v6876
        %v6878 = vmul.f32 %v6845, 1.442695
        %v6879 = vpow.pop %v6878
        %v6880 = vmul.f32 %v6846, 1.442695
        %v6881 = vpow.pop %v6880
        %v6882 = vmul.f32 %v6847, 1.442695
        %v6883 = vpow.pop %v6882
        %v6884 = vmul.f32 %v6848, 1.442695
        %v6885 = vpow.pop %v6884
        %v6886 = vmul.f32 %v6849, 1.442695
        %v6887 = vpow.pop %v6886
        %v6888 = vmul.f32 %v6850, 1.442695
        %v6889 = vpow.pop %v6888
        %v6890 = vmul.f32 %v6851, 1.442695
        %v6891 = vpow.pop %v6890
        %v6892 = vmul.f32 %v6852, 1.442695
        %v6893 = vpow.pop %v6892
        %v6894 = vmul.f32 %v6853, 1.442695
        %v6895 = vpow.pop %v6894
        %v6896 = vmul.f32 %v6854, 1.442695
        %v6897 = vpow.pop %v6896
        %v6898 = vmul.f32 %v6855, 1.442695
        %v6899 = vpow.pop %v6898
        %v6900 = vmul.f32 %v6856, 1.442695
        %v6901 = vpow.pop %v6900
        %v6902 = vmul.f32 %v6857, 1.442695
        %v6903 = vpow.pop %v6902
        %v6904 = vmul.f32 %v6858, 1.442695
        %v6905 = vpow.pop %v6904
        %v6906 = vmul.f32 %v6859, 1.442695
        %v6907 = vpow.pop %v6906
        %v6908 = vmul.f32 %v6860, 1.442695
        %v6909 = vpow.pop %v6908
        %v6910 = vmul.f32 %v6861, 1.442695
        %v6911 = vpow.pop %v6910
        %v6912 = vmul.f32 %v6862, 1.442695
        %v6913 = vpow.pop %v6912
        %v6914 = vmul.f32 %v6863, 1.442695
        %v6915 = vpow.pop %v6914
        %v6916 = vmul.f32 %v6864, 1.442695
        %v6917 = vpow.pop %v6916
        %v6918 = vmul.f32 %v6865, 1.442695
        %v6919 = vpow.pop %v6918
        %v6920 = vmul.f32 %v6866, 1.442695
        %v6921 = vpow.pop %v6920
        %v6922 = vmul.f32 %v6867, 1.442695
        %v6923 = vpow.pop %v6922
        %v6924 = vmul.f32 %v6868, 1.442695
        %v6925 = vpow.pop %v6924
        %v6926 = vmul.f32 %v6869, 1.442695
        %v6927 = vpow.pop %v6926
        %v6928 = vmul.f32 %v6870, 1.442695
        %v6929 = vpow.pop %v6928
        %v6930 = vmul.f32 %v6871, 1.442695
        %v6931 = vpow.pop %v6930
        %v6932 = vmul.f32 %v6872, 1.442695
        %v6933 = vpow.pop %v6932
        %v6934 = vmul.f32 %v6873, 1.442695
        %v6935 = vpow.pop %v6934
        %v6936 = vmul.f32 %v6874, 1.442695
        %v6937 = vpow.pop %v6936
        %v6938 = vmul.f32 %v6875, 1.442695
        %v6939 = vpow.pop %v6938
        %v6940 = vadd.f32 %v6877, 1.0
        %v6941 = vadd.f32 %v6879, 1.0
        %v6942 = vadd.f32 %v6881, 1.0
        %v6943 = vadd.f32 %v6883, 1.0
        %v6944 = vadd.f32 %v6885, 1.0
        %v6945 = vadd.f32 %v6887, 1.0
        %v6946 = vadd.f32 %v6889, 1.0
        %v6947 = vadd.f32 %v6891, 1.0
        %v6948 = vadd.f32 %v6893, 1.0
        %v6949 = vadd.f32 %v6895, 1.0
        %v6950 = vadd.f32 %v6897, 1.0
        %v6951 = vadd.f32 %v6899, 1.0
        %v6952 = vadd.f32 %v6901, 1.0
        %v6953 = vadd.f32 %v6903, 1.0
        %v6954 = vadd.f32 %v6905, 1.0
        %v6955 = vadd.f32 %v6907, 1.0
        %v6956 = vadd.f32 %v6909, 1.0
        %v6957 = vadd.f32 %v6911, 1.0
        %v6958 = vadd.f32 %v6913, 1.0
        %v6959 = vadd.f32 %v6915, 1.0
        %v6960 = vadd.f32 %v6917, 1.0
        %v6961 = vadd.f32 %v6919, 1.0
        %v6962 = vadd.f32 %v6921, 1.0
        %v6963 = vadd.f32 %v6923, 1.0
        %v6964 = vadd.f32 %v6925, 1.0
        %v6965 = vadd.f32 %v6927, 1.0
        %v6966 = vadd.f32 %v6929, 1.0
        %v6967 = vadd.f32 %v6931, 1.0
        %v6968 = vadd.f32 %v6933, 1.0
        %v6969 = vadd.f32 %v6935, 1.0
        %v6970 = vadd.f32 %v6937, 1.0
        %v6971 = vadd.f32 %v6939, 1.0
        %v6972 = vrcp.pop %v6940
        %v6973 = vmul.f32 %v6940, %v6972
        %v6974 = vsub.f32 1.0, %v6973
        %v6975 = vmul.f32 %v6972, %v6974
        %v6976 = vadd.f32 %v6972, %v6975
        %vm6977 = vweird.f32 %v6940
        %vm6978 = vweird.f32 %v6972
        %vm6979 = vmor %vm6977, %vm6978
        %v6980 = vsel %vm6979, %v6972, %v6976
        %v6981 = vand.u32 2147483647, %v6940
        %vm6982 = vcmp.eq.f32.partialorder %v6981, 8.507059e+37
        %v6983 = vand.u32 %v6940, 2147483648
        %v6984 = vor.u32 1.1754944e-38, %v6983
        %v6985 = vsel %vm6982, %v6984, %v6980
        %v6986 = vmul.f32 1.0, %v6985
        %v6987 = vrcp.pop %v6941
        %v6988 = vmul.f32 %v6941, %v6987
        %v6989 = vsub.f32 1.0, %v6988
        %v6990 = vmul.f32 %v6987, %v6989
        %v6991 = vadd.f32 %v6987, %v6990
        %vm6992 = vweird.f32 %v6941
        %vm6993 = vweird.f32 %v6987
        %vm6994 = vmor %vm6992, %vm6993
        %v6995 = vsel %vm6994, %v6987, %v6991
        %v6996 = vand.u32 2147483647, %v6941
        %vm6997 = vcmp.eq.f32.partialorder %v6996, 8.507059e+37
        %v6998 = vand.u32 %v6941, 2147483648
        %v6999 = vor.u32 1.1754944e-38, %v6998
        %v7000 = vsel %vm6997, %v6999, %v6995
        %v7001 = vmul.f32 1.0, %v7000
        %v7002 = vrcp.pop %v6942
        %v7003 = vmul.f32 %v6942, %v7002
        %v7004 = vsub.f32 1.0, %v7003
        %v7005 = vmul.f32 %v7002, %v7004
        %v7006 = vadd.f32 %v7002, %v7005
        %vm7007 = vweird.f32 %v6942
        %vm7008 = vweird.f32 %v7002
        %vm7009 = vmor %vm7007, %vm7008
        %v7010 = vsel %vm7009, %v7002, %v7006
        %v7011 = vand.u32 2147483647, %v6942
        %vm7012 = vcmp.eq.f32.partialorder %v7011, 8.507059e+37
        %v7013 = vand.u32 %v6942, 2147483648
        %v7014 = vor.u32 1.1754944e-38, %v7013
        %v7015 = vsel %vm7012, %v7014, %v7010
        %v7016 = vmul.f32 1.0, %v7015
        %v7017 = vrcp.pop %v6943
        %v7018 = vmul.f32 %v6943, %v7017
        %v7019 = vsub.f32 1.0, %v7018
        %v7020 = vmul.f32 %v7017, %v7019
        %v7021 = vadd.f32 %v7017, %v7020
        %vm7022 = vweird.f32 %v6943
        %vm7023 = vweird.f32 %v7017
        %vm7024 = vmor %vm7022, %vm7023
        %v7025 = vsel %vm7024, %v7017, %v7021
        %v7026 = vand.u32 2147483647, %v6943
        %vm7027 = vcmp.eq.f32.partialorder %v7026, 8.507059e+37
        %v7028 = vand.u32 %v6943, 2147483648
        %v7029 = vor.u32 1.1754944e-38, %v7028
        %v7030 = vsel %vm7027, %v7029, %v7025
        %v7031 = vmul.f32 1.0, %v7030
        %v7032 = vrcp.pop %v6944
        %v7033 = vmul.f32 %v6944, %v7032
        %v7034 = vsub.f32 1.0, %v7033
        %v7035 = vmul.f32 %v7032, %v7034
        %v7036 = vadd.f32 %v7032, %v7035
        %vm7037 = vweird.f32 %v6944
        %vm7038 = vweird.f32 %v7032
        %vm7039 = vmor %vm7037, %vm7038
        %v7040 = vsel %vm7039, %v7032, %v7036
        %v7041 = vand.u32 2147483647, %v6944
        %vm7042 = vcmp.eq.f32.partialorder %v7041, 8.507059e+37
        %v7043 = vand.u32 %v6944, 2147483648
        %v7044 = vor.u32 1.1754944e-38, %v7043
        %v7045 = vsel %vm7042, %v7044, %v7040
        %v7046 = vmul.f32 1.0, %v7045
        %v7047 = vrcp.pop %v6945
        %v7048 = vmul.f32 %v6945, %v7047
        %v7049 = vsub.f32 1.0, %v7048
        %v7050 = vmul.f32 %v7047, %v7049
        %v7051 = vadd.f32 %v7047, %v7050
        %vm7052 = vweird.f32 %v6945
        %vm7053 = vweird.f32 %v7047
        %vm7054 = vmor %vm7052, %vm7053
        %v7055 = vsel %vm7054, %v7047, %v7051
        %v7056 = vand.u32 2147483647, %v6945
        %vm7057 = vcmp.eq.f32.partialorder %v7056, 8.507059e+37
        %v7058 = vand.u32 %v6945, 2147483648
        %v7059 = vor.u32 1.1754944e-38, %v7058
        %v7060 = vsel %vm7057, %v7059, %v7055
        %v7061 = vmul.f32 1.0, %v7060
        %v7062 = vrcp.pop %v6946
        %v7063 = vmul.f32 %v6946, %v7062
        %v7064 = vsub.f32 1.0, %v7063
        %v7065 = vmul.f32 %v7062, %v7064
        %v7066 = vadd.f32 %v7062, %v7065
        %vm7067 = vweird.f32 %v6946
        %vm7068 = vweird.f32 %v7062
        %vm7069 = vmor %vm7067, %vm7068
        %v7070 = vsel %vm7069, %v7062, %v7066
        %v7071 = vand.u32 2147483647, %v6946
        %vm7072 = vcmp.eq.f32.partialorder %v7071, 8.507059e+37
        %v7073 = vand.u32 %v6946, 2147483648
        %v7074 = vor.u32 1.1754944e-38, %v7073
        %v7075 = vsel %vm7072, %v7074, %v7070
        %v7076 = vmul.f32 1.0, %v7075
        %v7077 = vrcp.pop %v6947
        %v7078 = vmul.f32 %v6947, %v7077
        %v7079 = vsub.f32 1.0, %v7078
        %v7080 = vmul.f32 %v7077, %v7079
        %v7081 = vadd.f32 %v7077, %v7080
        %vm7082 = vweird.f32 %v6947
        %vm7083 = vweird.f32 %v7077
        %vm7084 = vmor %vm7082, %vm7083
        %v7085 = vsel %vm7084, %v7077, %v7081
        %v7086 = vand.u32 2147483647, %v6947
        %vm7087 = vcmp.eq.f32.partialorder %v7086, 8.507059e+37
        %v7088 = vand.u32 %v6947, 2147483648
        %v7089 = vor.u32 1.1754944e-38, %v7088
        %v7090 = vsel %vm7087, %v7089, %v7085
        %v7091 = vmul.f32 1.0, %v7090
        %v7092 = vrcp.pop %v6948
        %v7093 = vmul.f32 %v6948, %v7092
        %v7094 = vsub.f32 1.0, %v7093
        %v7095 = vmul.f32 %v7092, %v7094
        %v7096 = vadd.f32 %v7092, %v7095
        %vm7097 = vweird.f32 %v6948
        %vm7098 = vweird.f32 %v7092
        %vm7099 = vmor %vm7097, %vm7098
        %v7100 = vsel %vm7099, %v7092, %v7096
        %v7101 = vand.u32 2147483647, %v6948
        %vm7102 = vcmp.eq.f32.partialorder %v7101, 8.507059e+37
        %v7103 = vand.u32 %v6948, 2147483648
        %v7104 = vor.u32 1.1754944e-38, %v7103
        %v7105 = vsel %vm7102, %v7104, %v7100
        %v7106 = vmul.f32 1.0, %v7105
        %v7107 = vrcp.pop %v6949
        %v7108 = vmul.f32 %v6949, %v7107
        %v7109 = vsub.f32 1.0, %v7108
        %v7110 = vmul.f32 %v7107, %v7109
        %v7111 = vadd.f32 %v7107, %v7110
        %vm7112 = vweird.f32 %v6949
        %vm7113 = vweird.f32 %v7107
        %vm7114 = vmor %vm7112, %vm7113
        %v7115 = vsel %vm7114, %v7107, %v7111
        %v7116 = vand.u32 2147483647, %v6949
        %vm7117 = vcmp.eq.f32.partialorder %v7116, 8.507059e+37
        %v7118 = vand.u32 %v6949, 2147483648
        %v7119 = vor.u32 1.1754944e-38, %v7118
        %v7120 = vsel %vm7117, %v7119, %v7115
        %v7121 = vmul.f32 1.0, %v7120
        %v7122 = vrcp.pop %v6950
        %v7123 = vmul.f32 %v6950, %v7122
        %v7124 = vsub.f32 1.0, %v7123
        %v7125 = vmul.f32 %v7122, %v7124
        %v7126 = vadd.f32 %v7122, %v7125
        %vm7127 = vweird.f32 %v6950
        %vm7128 = vweird.f32 %v7122
        %vm7129 = vmor %vm7127, %vm7128
        %v7130 = vsel %vm7129, %v7122, %v7126
        %v7131 = vand.u32 2147483647, %v6950
        %vm7132 = vcmp.eq.f32.partialorder %v7131, 8.507059e+37
        %v7133 = vand.u32 %v6950, 2147483648
        %v7134 = vor.u32 1.1754944e-38, %v7133
        %v7135 = vsel %vm7132, %v7134, %v7130
        %v7136 = vmul.f32 1.0, %v7135
        %v7137 = vrcp.pop %v6951
        %v7138 = vmul.f32 %v6951, %v7137
        %v7139 = vsub.f32 1.0, %v7138
        %v7140 = vmul.f32 %v7137, %v7139
        %v7141 = vadd.f32 %v7137, %v7140
        %vm7142 = vweird.f32 %v6951
        %vm7143 = vweird.f32 %v7137
        %vm7144 = vmor %vm7142, %vm7143
        %v7145 = vsel %vm7144, %v7137, %v7141
        %v7146 = vand.u32 2147483647, %v6951
        %vm7147 = vcmp.eq.f32.partialorder %v7146, 8.507059e+37
        %v7148 = vand.u32 %v6951, 2147483648
        %v7149 = vor.u32 1.1754944e-38, %v7148
        %v7150 = vsel %vm7147, %v7149, %v7145
        %v7151 = vmul.f32 1.0, %v7150
        %v7152 = vrcp.pop %v6952
        %v7153 = vmul.f32 %v6952, %v7152
        %v7154 = vsub.f32 1.0, %v7153
        %v7155 = vmul.f32 %v7152, %v7154
        %v7156 = vadd.f32 %v7152, %v7155
        %vm7157 = vweird.f32 %v6952
        %vm7158 = vweird.f32 %v7152
        %vm7159 = vmor %vm7157, %vm7158
        %v7160 = vsel %vm7159, %v7152, %v7156
        %v7161 = vand.u32 2147483647, %v6952
        %vm7162 = vcmp.eq.f32.partialorder %v7161, 8.507059e+37
        %v7163 = vand.u32 %v6952, 2147483648
        %v7164 = vor.u32 1.1754944e-38, %v7163
        %v7165 = vsel %vm7162, %v7164, %v7160
        %v7166 = vmul.f32 1.0, %v7165
        %v7167 = vrcp.pop %v6953
        %v7168 = vmul.f32 %v6953, %v7167
        %v7169 = vsub.f32 1.0, %v7168
        %v7170 = vmul.f32 %v7167, %v7169
        %v7171 = vadd.f32 %v7167, %v7170
        %vm7172 = vweird.f32 %v6953
        %vm7173 = vweird.f32 %v7167
        %vm7174 = vmor %vm7172, %vm7173
        %v7175 = vsel %vm7174, %v7167, %v7171
        %v7176 = vand.u32 2147483647, %v6953
        %vm7177 = vcmp.eq.f32.partialorder %v7176, 8.507059e+37
        %v7178 = vand.u32 %v6953, 2147483648
        %v7179 = vor.u32 1.1754944e-38, %v7178
        %v7180 = vsel %vm7177, %v7179, %v7175
        %v7181 = vmul.f32 1.0, %v7180
        %v7182 = vrcp.pop %v6954
        %v7183 = vmul.f32 %v6954, %v7182
        %v7184 = vsub.f32 1.0, %v7183
        %v7185 = vmul.f32 %v7182, %v7184
        %v7186 = vadd.f32 %v7182, %v7185
        %vm7187 = vweird.f32 %v6954
        %vm7188 = vweird.f32 %v7182
        %vm7189 = vmor %vm7187, %vm7188
        %v7190 = vsel %vm7189, %v7182, %v7186
        %v7191 = vand.u32 2147483647, %v6954
        %vm7192 = vcmp.eq.f32.partialorder %v7191, 8.507059e+37
        %v7193 = vand.u32 %v6954, 2147483648
        %v7194 = vor.u32 1.1754944e-38, %v7193
        %v7195 = vsel %vm7192, %v7194, %v7190
        %v7196 = vmul.f32 1.0, %v7195
        %v7197 = vrcp.pop %v6955
        %v7198 = vmul.f32 %v6955, %v7197
        %v7199 = vsub.f32 1.0, %v7198
        %v7200 = vmul.f32 %v7197, %v7199
        %v7201 = vadd.f32 %v7197, %v7200
        %vm7202 = vweird.f32 %v6955
        %vm7203 = vweird.f32 %v7197
        %vm7204 = vmor %vm7202, %vm7203
        %v7205 = vsel %vm7204, %v7197, %v7201
        %v7206 = vand.u32 2147483647, %v6955
        %vm7207 = vcmp.eq.f32.partialorder %v7206, 8.507059e+37
        %v7208 = vand.u32 %v6955, 2147483648
        %v7209 = vor.u32 1.1754944e-38, %v7208
        %v7210 = vsel %vm7207, %v7209, %v7205
        %v7211 = vmul.f32 1.0, %v7210
        %v7212 = vrcp.pop %v6956
        %v7213 = vmul.f32 %v6956, %v7212
        %v7214 = vsub.f32 1.0, %v7213
        %v7215 = vmul.f32 %v7212, %v7214
        %v7216 = vadd.f32 %v7212, %v7215
        %vm7217 = vweird.f32 %v6956
        %vm7218 = vweird.f32 %v7212
        %vm7219 = vmor %vm7217, %vm7218
        %v7220 = vsel %vm7219, %v7212, %v7216
        %v7221 = vand.u32 2147483647, %v6956
        %vm7222 = vcmp.eq.f32.partialorder %v7221, 8.507059e+37
        %v7223 = vand.u32 %v6956, 2147483648
        %v7224 = vor.u32 1.1754944e-38, %v7223
        %v7225 = vsel %vm7222, %v7224, %v7220
        %v7226 = vmul.f32 1.0, %v7225
        %v7227 = vrcp.pop %v6957
        %v7228 = vmul.f32 %v6957, %v7227
        %v7229 = vsub.f32 1.0, %v7228
        %v7230 = vmul.f32 %v7227, %v7229
        %v7231 = vadd.f32 %v7227, %v7230
        %vm7232 = vweird.f32 %v6957
        %vm7233 = vweird.f32 %v7227
        %vm7234 = vmor %vm7232, %vm7233
        %v7235 = vsel %vm7234, %v7227, %v7231
        %v7236 = vand.u32 2147483647, %v6957
        %vm7237 = vcmp.eq.f32.partialorder %v7236, 8.507059e+37
        %v7238 = vand.u32 %v6957, 2147483648
        %v7239 = vor.u32 1.1754944e-38, %v7238
        %v7240 = vsel %vm7237, %v7239, %v7235
        %v7241 = vmul.f32 1.0, %v7240
        %v7242 = vrcp.pop %v6958
        %v7243 = vmul.f32 %v6958, %v7242
        %v7244 = vsub.f32 1.0, %v7243
        %v7245 = vmul.f32 %v7242, %v7244
        %v7246 = vadd.f32 %v7242, %v7245
        %vm7247 = vweird.f32 %v6958
        %vm7248 = vweird.f32 %v7242
        %vm7249 = vmor %vm7247, %vm7248
        %v7250 = vsel %vm7249, %v7242, %v7246
        %v7251 = vand.u32 2147483647, %v6958
        %vm7252 = vcmp.eq.f32.partialorder %v7251, 8.507059e+37
        %v7253 = vand.u32 %v6958, 2147483648
        %v7254 = vor.u32 1.1754944e-38, %v7253
        %v7255 = vsel %vm7252, %v7254, %v7250
        %v7256 = vmul.f32 1.0, %v7255
        %v7257 = vrcp.pop %v6959
        %v7258 = vmul.f32 %v6959, %v7257
        %v7259 = vsub.f32 1.0, %v7258
        %v7260 = vmul.f32 %v7257, %v7259
        %v7261 = vadd.f32 %v7257, %v7260
        %vm7262 = vweird.f32 %v6959
        %vm7263 = vweird.f32 %v7257
        %vm7264 = vmor %vm7262, %vm7263
        %v7265 = vsel %vm7264, %v7257, %v7261
        %v7266 = vand.u32 2147483647, %v6959
        %vm7267 = vcmp.eq.f32.partialorder %v7266, 8.507059e+37
        %v7268 = vand.u32 %v6959, 2147483648
        %v7269 = vor.u32 1.1754944e-38, %v7268
        %v7270 = vsel %vm7267, %v7269, %v7265
        %v7271 = vmul.f32 1.0, %v7270
        %v7272 = vrcp.pop %v6960
        %v7273 = vmul.f32 %v6960, %v7272
        %v7274 = vsub.f32 1.0, %v7273
        %v7275 = vmul.f32 %v7272, %v7274
        %v7276 = vadd.f32 %v7272, %v7275
        %vm7277 = vweird.f32 %v6960
        %vm7278 = vweird.f32 %v7272
        %vm7279 = vmor %vm7277, %vm7278
        %v7280 = vsel %vm7279, %v7272, %v7276
        %v7281 = vand.u32 2147483647, %v6960
        %vm7282 = vcmp.eq.f32.partialorder %v7281, 8.507059e+37
        %v7283 = vand.u32 %v6960, 2147483648
        %v7284 = vor.u32 1.1754944e-38, %v7283
        %v7285 = vsel %vm7282, %v7284, %v7280
        %v7286 = vmul.f32 1.0, %v7285
        %v7287 = vrcp.pop %v6961
        %v7288 = vmul.f32 %v6961, %v7287
        %v7289 = vsub.f32 1.0, %v7288
        %v7290 = vmul.f32 %v7287, %v7289
        %v7291 = vadd.f32 %v7287, %v7290
        %vm7292 = vweird.f32 %v6961
        %vm7293 = vweird.f32 %v7287
        %vm7294 = vmor %vm7292, %vm7293
        %v7295 = vsel %vm7294, %v7287, %v7291
        %v7296 = vand.u32 2147483647, %v6961
        %vm7297 = vcmp.eq.f32.partialorder %v7296, 8.507059e+37
        %v7298 = vand.u32 %v6961, 2147483648
        %v7299 = vor.u32 1.1754944e-38, %v7298
        %v7300 = vsel %vm7297, %v7299, %v7295
        %v7301 = vmul.f32 1.0, %v7300
        %v7302 = vrcp.pop %v6962
        %v7303 = vmul.f32 %v6962, %v7302
        %v7304 = vsub.f32 1.0, %v7303
        %v7305 = vmul.f32 %v7302, %v7304
        %v7306 = vadd.f32 %v7302, %v7305
        %vm7307 = vweird.f32 %v6962
        %vm7308 = vweird.f32 %v7302
        %vm7309 = vmor %vm7307, %vm7308
        %v7310 = vsel %vm7309, %v7302, %v7306
        %v7311 = vand.u32 2147483647, %v6962
        %vm7312 = vcmp.eq.f32.partialorder %v7311, 8.507059e+37
        %v7313 = vand.u32 %v6962, 2147483648
        %v7314 = vor.u32 1.1754944e-38, %v7313
        %v7315 = vsel %vm7312, %v7314, %v7310
        %v7316 = vmul.f32 1.0, %v7315
        %v7317 = vrcp.pop %v6963
        %v7318 = vmul.f32 %v6963, %v7317
        %v7319 = vsub.f32 1.0, %v7318
        %v7320 = vmul.f32 %v7317, %v7319
        %v7321 = vadd.f32 %v7317, %v7320
        %vm7322 = vweird.f32 %v6963
        %vm7323 = vweird.f32 %v7317
        %vm7324 = vmor %vm7322, %vm7323
        %v7325 = vsel %vm7324, %v7317, %v7321
        %v7326 = vand.u32 2147483647, %v6963
        %vm7327 = vcmp.eq.f32.partialorder %v7326, 8.507059e+37
        %v7328 = vand.u32 %v6963, 2147483648
        %v7329 = vor.u32 1.1754944e-38, %v7328
        %v7330 = vsel %vm7327, %v7329, %v7325
        %v7331 = vmul.f32 1.0, %v7330
        %v7332 = vrcp.pop %v6964
        %v7333 = vmul.f32 %v6964, %v7332
        %v7334 = vsub.f32 1.0, %v7333
        %v7335 = vmul.f32 %v7332, %v7334
        %v7336 = vadd.f32 %v7332, %v7335
        %vm7337 = vweird.f32 %v6964
        %vm7338 = vweird.f32 %v7332
        %vm7339 = vmor %vm7337, %vm7338
        %v7340 = vsel %vm7339, %v7332, %v7336
        %v7341 = vand.u32 2147483647, %v6964
        %vm7342 = vcmp.eq.f32.partialorder %v7341, 8.507059e+37
        %v7343 = vand.u32 %v6964, 2147483648
        %v7344 = vor.u32 1.1754944e-38, %v7343
        %v7345 = vsel %vm7342, %v7344, %v7340
        %v7346 = vmul.f32 1.0, %v7345
        %v7347 = vrcp.pop %v6965
        %v7348 = vmul.f32 %v6965, %v7347
        %v7349 = vsub.f32 1.0, %v7348
        %v7350 = vmul.f32 %v7347, %v7349
        %v7351 = vadd.f32 %v7347, %v7350
        %vm7352 = vweird.f32 %v6965
        %vm7353 = vweird.f32 %v7347
        %vm7354 = vmor %vm7352, %vm7353
        %v7355 = vsel %vm7354, %v7347, %v7351
        %v7356 = vand.u32 2147483647, %v6965
        %vm7357 = vcmp.eq.f32.partialorder %v7356, 8.507059e+37
        %v7358 = vand.u32 %v6965, 2147483648
        %v7359 = vor.u32 1.1754944e-38, %v7358
        %v7360 = vsel %vm7357, %v7359, %v7355
        %v7361 = vmul.f32 1.0, %v7360
        %v7362 = vrcp.pop %v6966
        %v7363 = vmul.f32 %v6966, %v7362
        %v7364 = vsub.f32 1.0, %v7363
        %v7365 = vmul.f32 %v7362, %v7364
        %v7366 = vadd.f32 %v7362, %v7365
        %vm7367 = vweird.f32 %v6966
        %vm7368 = vweird.f32 %v7362
        %vm7369 = vmor %vm7367, %vm7368
        %v7370 = vsel %vm7369, %v7362, %v7366
        %v7371 = vand.u32 2147483647, %v6966
        %vm7372 = vcmp.eq.f32.partialorder %v7371, 8.507059e+37
        %v7373 = vand.u32 %v6966, 2147483648
        %v7374 = vor.u32 1.1754944e-38, %v7373
        %v7375 = vsel %vm7372, %v7374, %v7370
        %v7376 = vmul.f32 1.0, %v7375
        %v7377 = vrcp.pop %v6967
        %v7378 = vmul.f32 %v6967, %v7377
        %v7379 = vsub.f32 1.0, %v7378
        %v7380 = vmul.f32 %v7377, %v7379
        %v7381 = vadd.f32 %v7377, %v7380
        %vm7382 = vweird.f32 %v6967
        %vm7383 = vweird.f32 %v7377
        %vm7384 = vmor %vm7382, %vm7383
        %v7385 = vsel %vm7384, %v7377, %v7381
        %v7386 = vand.u32 2147483647, %v6967
        %vm7387 = vcmp.eq.f32.partialorder %v7386, 8.507059e+37
        %v7388 = vand.u32 %v6967, 2147483648
        %v7389 = vor.u32 1.1754944e-38, %v7388
        %v7390 = vsel %vm7387, %v7389, %v7385
        %v7391 = vmul.f32 1.0, %v7390
        %v7392 = vrcp.pop %v6968
        %v7393 = vmul.f32 %v6968, %v7392
        %v7394 = vsub.f32 1.0, %v7393
        %v7395 = vmul.f32 %v7392, %v7394
        %v7396 = vadd.f32 %v7392, %v7395
        %vm7397 = vweird.f32 %v6968
        %vm7398 = vweird.f32 %v7392
        %vm7399 = vmor %vm7397, %vm7398
        %v7400 = vsel %vm7399, %v7392, %v7396
        %v7401 = vand.u32 2147483647, %v6968
        %vm7402 = vcmp.eq.f32.partialorder %v7401, 8.507059e+37
        %v7403 = vand.u32 %v6968, 2147483648
        %v7404 = vor.u32 1.1754944e-38, %v7403
        %v7405 = vsel %vm7402, %v7404, %v7400
        %v7406 = vmul.f32 1.0, %v7405
        %v7407 = vrcp.pop %v6969
        %v7408 = vmul.f32 %v6969, %v7407
        %v7409 = vsub.f32 1.0, %v7408
        %v7410 = vmul.f32 %v7407, %v7409
        %v7411 = vadd.f32 %v7407, %v7410
        %vm7412 = vweird.f32 %v6969
        %vm7413 = vweird.f32 %v7407
        %vm7414 = vmor %vm7412, %vm7413
        %v7415 = vsel %vm7414, %v7407, %v7411
        %v7416 = vand.u32 2147483647, %v6969
        %vm7417 = vcmp.eq.f32.partialorder %v7416, 8.507059e+37
        %v7418 = vand.u32 %v6969, 2147483648
        %v7419 = vor.u32 1.1754944e-38, %v7418
        %v7420 = vsel %vm7417, %v7419, %v7415
        %v7421 = vmul.f32 1.0, %v7420
        %v7422 = vrcp.pop %v6970
        %v7423 = vmul.f32 %v6970, %v7422
        %v7424 = vsub.f32 1.0, %v7423
        %v7425 = vmul.f32 %v7422, %v7424
        %v7426 = vadd.f32 %v7422, %v7425
        %vm7427 = vweird.f32 %v6970
        %vm7428 = vweird.f32 %v7422
        %vm7429 = vmor %vm7427, %vm7428
        %v7430 = vsel %vm7429, %v7422, %v7426
        %v7431 = vand.u32 2147483647, %v6970
        %vm7432 = vcmp.eq.f32.partialorder %v7431, 8.507059e+37
        %v7433 = vand.u32 %v6970, 2147483648
        %v7434 = vor.u32 1.1754944e-38, %v7433
        %v7435 = vsel %vm7432, %v7434, %v7430
        %v7436 = vmul.f32 1.0, %v7435
        %v7437 = vrcp.pop %v6971
        %v7438 = vmul.f32 %v6971, %v7437
        %v7439 = vsub.f32 1.0, %v7438
        %v7440 = vmul.f32 %v7437, %v7439
        %v7441 = vadd.f32 %v7437, %v7440
        %vm7442 = vweird.f32 %v6971
        %vm7443 = vweird.f32 %v7437
        %vm7444 = vmor %vm7442, %vm7443
        %v7445 = vsel %vm7444, %v7437, %v7441
        %v7446 = vand.u32 2147483647, %v6971
        %vm7447 = vcmp.eq.f32.partialorder %v7446, 8.507059e+37
        %v7448 = vand.u32 %v6971, 2147483648
        %v7449 = vor.u32 1.1754944e-38, %v7448
        %v7450 = vsel %vm7447, %v7449, %v7445
        %v7451 = vmul.f32 1.0, %v7450
        %v7452 = vmul.f32 %v6812, %v6986
        %v7453 = vmul.f32 %v6813, %v7001
        %v7454 = vmul.f32 %v6814, %v7016
        %v7455 = vmul.f32 %v6815, %v7031
        %v7456 = vmul.f32 %v6816, %v7046
        %v7457 = vmul.f32 %v6817, %v7061
        %v7458 = vmul.f32 %v6818, %v7076
        %v7459 = vmul.f32 %v6819, %v7091
        %v7460 = vmul.f32 %v6820, %v7106
        %v7461 = vmul.f32 %v6821, %v7121
        %v7462 = vmul.f32 %v6822, %v7136
        %v7463 = vmul.f32 %v6823, %v7151
        %v7464 = vmul.f32 %v6824, %v7166
        %v7465 = vmul.f32 %v6825, %v7181
        %v7466 = vmul.f32 %v6826, %v7196
        %v7467 = vmul.f32 %v6827, %v7211
        %v7468 = vmul.f32 %v6828, %v7226
        %v7469 = vmul.f32 %v6829, %v7241
        %v7470 = vmul.f32 %v6830, %v7256
        %v7471 = vmul.f32 %v6831, %v7271
        %v7472 = vmul.f32 %v6832, %v7286
        %v7473 = vmul.f32 %v6833, %v7301
        %v7474 = vmul.f32 %v6834, %v7316
        %v7475 = vmul.f32 %v6835, %v7331
        %v7476 = vmul.f32 %v6836, %v7346
        %v7477 = vmul.f32 %v6837, %v7361
        %v7478 = vmul.f32 %v6838, %v7376
        %v7479 = vmul.f32 %v6839, %v7391
        %v7480 = vmul.f32 %v6840, %v7406
        %v7481 = vmul.f32 %v6841, %v7421
        %v7482 = vmul.f32 %v6842, %v7436
        %v7483 = vmul.f32 %v6843, %v7451
        %v7484 = vld [vmem:[#allocation7] sm:$0xff]
        %v7485 = vld [vmem:[#allocation7 + $0x8] sm:$0xff]
        %v7486 = vld [vmem:[#allocation7 + $0x10] sm:$0xff]
        %v7487 = vld [vmem:[#allocation7 + $0x18] sm:$0xff]
        %v7488 = vld [vmem:[#allocation7 + $0x20] sm:$0xff]
        %v7489 = vld [vmem:[#allocation7 + $0x28] sm:$0xff]
        %v7490 = vld [vmem:[#allocation7 + $0x30] sm:$0xff]
        %v7491 = vld [vmem:[#allocation7 + $0x38] sm:$0xff]
        %v7492 = vld [vmem:[#allocation7 + $0x40] sm:$0xff]
        %v7493 = vld [vmem:[#allocation7 + $0x48] sm:$0xff]
        %v7494 = vld [vmem:[#allocation7 + $0x50] sm:$0xff]
        %v7495 = vld [vmem:[#allocation7 + $0x58] sm:$0xff]
        %v7496 = vld [vmem:[#allocation7 + $0x60] sm:$0xff]
        %v7497 = vld [vmem:[#allocation7 + $0x68] sm:$0xff]
        %v7498 = vld [vmem:[#allocation7 + $0x70] sm:$0xff]
        %v7499 = vld [vmem:[#allocation7 + $0x78] sm:$0xff]
        %v7500 = vld [vmem:[%s14] sm:$0x1]
        %v7502 = vperm.slane %v7500, 0
        %7504 = vmatpush.msra.mxu0 %v7499
        %7505 = vmatpush.msra.mxu0 %v7498
        %7506 = vmatpush.msra.mxu0 %v7497
        %7507 = vmatpush.msra.mxu0 %v7496
        %7508 = vmatpush.msra.mxu0 %v7495
        %7509 = vmatpush.msra.mxu0 %v7494
        %7510 = vmatpush.msra.mxu0 %v7493
        %7511 = vmatpush.msra.mxu0 %v7492
        %7512 = vmatpush.msra.mxu0 %v7491
        %7513 = vmatpush.msra.mxu0 %v7490
        %7514 = vmatpush.msra.mxu0 %v7489
        %7515 = vmatpush.msra.mxu0 %v7488
        %7516 = vmatpush.msra.mxu0 %v7487
        %7517 = vmatpush.msra.mxu0 %v7486
        %7518 = vmatpush.msra.mxu0 %v7485
        %7519 = vmatpush.msra.mxu0 %v7484
        %7520 = vmatmul.f32.gmra.mxu0 %v703
        %v7521 = vpop.f32.mrf.mxu0
        %v7522 = vadd.f32 %v7502, %v7521
        %7523 = vmatmul.f32.gmra.mxu0 %v705
        %v7524 = vpop.f32.mrf.mxu0
        %v7525 = vadd.f32 %v7502, %v7524
        %7526 = vmatmul.f32.gmra.mxu0 %v708
        %v7527 = vpop.f32.mrf.mxu0
        %v7528 = vadd.f32 %v7502, %v7527
        %7529 = vmatmul.f32.gmra.mxu0 %v710
        %v7530 = vpop.f32.mrf.mxu0
        %v7531 = vadd.f32 %v7502, %v7530
        %7532 = vmatmul.f32.gmra.mxu0 %v713
        %v7533 = vpop.f32.mrf.mxu0
        %v7534 = vadd.f32 %v7502, %v7533
        %7535 = vmatmul.f32.gmra.mxu0 %v715
        %v7536 = vpop.f32.mrf.mxu0
        %v7537 = vadd.f32 %v7502, %v7536
        %7538 = vmatmul.f32.gmra.mxu0 %v718
        %v7539 = vpop.f32.mrf.mxu0
        %v7540 = vadd.f32 %v7502, %v7539
        %7541 = vmatmul.f32.gmra.mxu0 %v720
        %v7542 = vpop.f32.mrf.mxu0
        %v7543 = vadd.f32 %v7502, %v7542
        %7544 = vmatmul.f32.gmra.mxu0 %v723
        %v7545 = vpop.f32.mrf.mxu0
        %v7546 = vadd.f32 %v7502, %v7545
        %7547 = vmatmul.f32.gmra.mxu0 %v725
        %v7548 = vpop.f32.mrf.mxu0
        %v7549 = vadd.f32 %v7502, %v7548
        %7550 = vmatmul.f32.gmra.mxu0 %v728
        %v7551 = vpop.f32.mrf.mxu0
        %v7552 = vadd.f32 %v7502, %v7551
        %7553 = vmatmul.f32.gmra.mxu0 %v730
        %v7554 = vpop.f32.mrf.mxu0
        %v7555 = vadd.f32 %v7502, %v7554
        %7556 = vmatmul.f32.gmra.mxu0 %v733
        %v7557 = vpop.f32.mrf.mxu0
        %v7558 = vadd.f32 %v7502, %v7557
        %7559 = vmatmul.f32.gmra.mxu0 %v735
        %v7560 = vpop.f32.mrf.mxu0
        %v7561 = vadd.f32 %v7502, %v7560
        %7562 = vmatmul.f32.gmra.mxu0 %v738
        %v7563 = vpop.f32.mrf.mxu0
        %v7564 = vadd.f32 %v7502, %v7563
        %7565 = vmatmul.f32.gmra.mxu0 %v740
        %v7566 = vpop.f32.mrf.mxu0
        %v7567 = vadd.f32 %v7502, %v7566
        %7568 = vmatmul.f32.gmra.mxu0 %v743
        %v7569 = vpop.f32.mrf.mxu0
        %v7570 = vadd.f32 %v7502, %v7569
        %7571 = vmatmul.f32.gmra.mxu0 %v745
        %v7572 = vpop.f32.mrf.mxu0
        %v7573 = vadd.f32 %v7502, %v7572
        %7574 = vmatmul.f32.gmra.mxu0 %v748
        %v7575 = vpop.f32.mrf.mxu0
        %v7576 = vadd.f32 %v7502, %v7575
        %7577 = vmatmul.f32.gmra.mxu0 %v750
        %v7578 = vpop.f32.mrf.mxu0
        %v7579 = vadd.f32 %v7502, %v7578
        %7580 = vmatmul.f32.gmra.mxu0 %v753
        %v7581 = vpop.f32.mrf.mxu0
        %v7582 = vadd.f32 %v7502, %v7581
        %7583 = vmatmul.f32.gmra.mxu0 %v755
        %v7584 = vpop.f32.mrf.mxu0
        %v7585 = vadd.f32 %v7502, %v7584
        %7586 = vmatmul.f32.gmra.mxu0 %v758
        %v7587 = vpop.f32.mrf.mxu0
        %v7588 = vadd.f32 %v7502, %v7587
        %7589 = vmatmul.f32.gmra.mxu0 %v760
        %v7590 = vpop.f32.mrf.mxu0
        %v7591 = vadd.f32 %v7502, %v7590
        %7592 = vmatmul.f32.gmra.mxu0 %v763
        %v7593 = vpop.f32.mrf.mxu0
        %v7594 = vadd.f32 %v7502, %v7593
        %7595 = vmatmul.f32.gmra.mxu0 %v765
        %v7596 = vpop.f32.mrf.mxu0
        %v7597 = vadd.f32 %v7502, %v7596
        %7598 = vmatmul.f32.gmra.mxu0 %v768
        %v7599 = vpop.f32.mrf.mxu0
        %v7600 = vadd.f32 %v7502, %v7599
        %7601 = vmatmul.f32.gmra.mxu0 %v770
        %v7602 = vpop.f32.mrf.mxu0
        %v7603 = vadd.f32 %v7502, %v7602
        %7604 = vmatmul.f32.gmra.mxu0 %v773
        %v7605 = vpop.f32.mrf.mxu0
        %v7606 = vadd.f32 %v7502, %v7605
        %7607 = vmatmul.f32.gmra.mxu0 %v775
        %v7608 = vpop.f32.mrf.mxu0
        %v7609 = vadd.f32 %v7502, %v7608
        %7610 = vmatmul.f32.gmra.mxu0 %v778
        %v7611 = vpop.f32.mrf.mxu0
        %v7612 = vadd.f32 %v7502, %v7611
        %7613 = vmatmul.f32.gmra.mxu0 %v780
        %v7614 = vpop.f32.mrf.mxu0
        %v7615 = vadd.f32 %v7502, %v7614
        %7616 = vdwg.mxu0
        %v7617 = vadd.f32 %v7452, %v7522
        %v7618 = vadd.f32 %v7453, %v7525
        %v7619 = vadd.f32 %v7454, %v7528
        %v7620 = vadd.f32 %v7455, %v7531
        %v7621 = vadd.f32 %v7456, %v7534
        %v7622 = vadd.f32 %v7457, %v7537
        %v7623 = vadd.f32 %v7458, %v7540
        %v7624 = vadd.f32 %v7459, %v7543
        %v7625 = vadd.f32 %v7460, %v7546
        %v7626 = vadd.f32 %v7461, %v7549
        %v7627 = vadd.f32 %v7462, %v7552
        %v7628 = vadd.f32 %v7463, %v7555
        %v7629 = vadd.f32 %v7464, %v7558
        %v7630 = vadd.f32 %v7465, %v7561
        %v7631 = vadd.f32 %v7466, %v7564
        %v7632 = vadd.f32 %v7467, %v7567
        %v7633 = vadd.f32 %v7468, %v7570
        %v7634 = vadd.f32 %v7469, %v7573
        %v7635 = vadd.f32 %v7470, %v7576
        %v7636 = vadd.f32 %v7471, %v7579
        %v7637 = vadd.f32 %v7472, %v7582
        %v7638 = vadd.f32 %v7473, %v7585
        %v7639 = vadd.f32 %v7474, %v7588
        %v7640 = vadd.f32 %v7475, %v7591
        %v7641 = vadd.f32 %v7476, %v7594
        %v7642 = vadd.f32 %v7477, %v7597
        %v7643 = vadd.f32 %v7478, %v7600
        %v7644 = vadd.f32 %v7479, %v7603
        %v7645 = vadd.f32 %v7480, %v7606
        %v7646 = vadd.f32 %v7481, %v7609
        %v7647 = vadd.f32 %v7482, %v7612
        %v7648 = vadd.f32 %v7483, %v7615
        %7649 = vst [vmem:[%s543] sm:$0xff] %v7617
        %7650 = vst [vmem:[%s543 + $0x8] sm:$0xff] %v7618
        %7651 = vst [vmem:[%s543 + $0x10] sm:$0xff] %v7619
        %7652 = vst [vmem:[%s543 + $0x18] sm:$0xff] %v7620
        %7653 = vst [vmem:[%s543 + $0x20] sm:$0xff] %v7621
        %7654 = vst [vmem:[%s543 + $0x28] sm:$0xff] %v7622
        %7655 = vst [vmem:[%s543 + $0x30] sm:$0xff] %v7623
        %7656 = vst [vmem:[%s543 + $0x38] sm:$0xff] %v7624
        %7657 = vst [vmem:[%s543 + $0x40] sm:$0xff] %v7625
        %7658 = vst [vmem:[%s543 + $0x48] sm:$0xff] %v7626
        %7659 = vst [vmem:[%s543 + $0x50] sm:$0xff] %v7627
        %7660 = vst [vmem:[%s543 + $0x58] sm:$0xff] %v7628
        %7661 = vst [vmem:[%s543 + $0x60] sm:$0xff] %v7629
        %7662 = vst [vmem:[%s543 + $0x68] sm:$0xff] %v7630
        %7663 = vst [vmem:[%s543 + $0x70] sm:$0xff] %v7631
        %7664 = vst [vmem:[%s543 + $0x78] sm:$0xff] %v7632
        %7665 = vst [vmem:[%s543 + $0x80] sm:$0xff] %v7633
        %7666 = vst [vmem:[%s543 + $0x88] sm:$0xff] %v7634
        %7667 = vst [vmem:[%s543 + $0x90] sm:$0xff] %v7635
        %7668 = vst [vmem:[%s543 + $0x98] sm:$0xff] %v7636
        %7669 = vst [vmem:[%s543 + $0xa0] sm:$0xff] %v7637
        %7670 = vst [vmem:[%s543 + $0xa8] sm:$0xff] %v7638
        %7671 = vst [vmem:[%s543 + $0xb0] sm:$0xff] %v7639
        %7672 = vst [vmem:[%s543 + $0xb8] sm:$0xff] %v7640
        %7673 = vst [vmem:[%s543 + $0xc0] sm:$0xff] %v7641
        %7674 = vst [vmem:[%s543 + $0xc8] sm:$0xff] %v7642
        %7675 = vst [vmem:[%s543 + $0xd0] sm:$0xff] %v7643
        %7676 = vst [vmem:[%s543 + $0xd8] sm:$0xff] %v7644
        %7677 = vst [vmem:[%s543 + $0xe0] sm:$0xff] %v7645
        %7678 = vst [vmem:[%s543 + $0xe8] sm:$0xff] %v7646
        %7679 = vst [vmem:[%s543 + $0xf0] sm:$0xff] %v7647
        %7680 = vst [vmem:[%s543 + $0xf8] sm:$0xff] %v7648
        %s7681 = sand.u32 %s369, 1
        %s7682 = scalar_lea.sflag [#allocation6], %s7681
        %s7683 = sand.u32 %s369, 1
        %s7684 = smul.addr %s7683, 256
        %s7685 = scalar_lea.vmem [#allocation9], %s7684
        // Predicated region
        $region89: #{tpu_custom_call.1} parent=79 // pred_check
          %p7686 = pneg %p379
        $region90: #{tpu_custom_call.1} parent=79 // pred_check_branch
          %7688 = sbr.rel (%p7686) target = $region92
        $region91: #{tpu_custom_call.1} parent=79 // pred_region
          %7690 = vsyncadd %s7682, 0
          %s7691 = smul.addr %s31, 32
          %s7692 = smul.addr %s7691, 8
          %s7693 = scalar_lea.hbm %s15, %s7692
          %s7694 = sshll.u32 %s7685, 4
          %s7695 = int_to_ptr.vmem [resolvable:$true] %s7694
          %s7696 = sshll.u32 %s7693, 4
          %s7697 = int_to_ptr.hbm [resolvable:$true] %s7696
          %7702 = dma.vmem_to_hbm [thread:$0]  %s7695, 4096, %s7697, %s7682, 128, 128, 8
        $region92: #{tpu_custom_call.1} parent=79 // pred_fallthru
          _
      $region80: #{tpu_custom_call.1} parent=5 // pred_fallthru
        _
      %p7703 = scmp.le.s32.totalorder 2, %s26
      // Predicated region
      $region93: #{tpu_custom_call.1} parent=5 // pred_check
        %p7704 = pneg %p7703
      $region94: #{tpu_custom_call.1} parent=5 // pred_check_branch
        %7706 = sbr.rel (%p7704) target = $region96
      $region95: #{tpu_custom_call.1} parent=5 // pred_region
        %s7707 = ssub.s32 %s26, 2
        // Predicated region
        $region97: #{tpu_custom_call.1} parent=95 // pred_check
          %p7708 = pneg %p385
        $region98: #{tpu_custom_call.1} parent=95 // pred_check_branch
          %7710 = sbr.rel (%p7708) target = $region100
        $region99: #{tpu_custom_call.1} parent=95 // pred_region
          %s7711 = sand.u32 %s370, 1
          %s7712 = scalar_lea.sflag [#allocation6], %s7711
          %s7713 = sand.u32 %s370, 1
          %s7714 = smul.addr %s7713, 256
          %s7715 = scalar_lea.vmem [#allocation9], %s7714
          %7717 = dma.done %s7712, 4096
        $region100: #{tpu_custom_call.1} parent=95 // pred_fallthru
          _
      $region96: #{tpu_custom_call.1} parent=5 // pred_fallthru
        _
    $region6: #{tpu_custom_call.1} parent=1 // loop_footer
      %s30 = sadd.s32 1, %s26
    $region7: #{tpu_custom_call.1} parent=1 // loop_footer_branch
      %25 = sbr.rel target = $region3
    $region8: #{tpu_custom_call.1} parent=1 // loop_exit
      _
    %7718 = vsyncpa [#allocation5], 1
    %s7719 = scalar_lea.sflag [#allocation5], 1
    %7720 = vsyncpa %s7719, 1
    %7721 = vsyncpa [#allocation8], 1
    %7722 = vsyncpa [#allocation6], 1
    %s7723 = scalar_lea.sflag [#allocation6], 1
    %7724 = vsyncpa %s7723, 1

</llo_original>
